<compile_context>
chip_gen: v6e
topology: v6e:2x2x1
jax: 0.10.0
libtpu: 0.0.40
codegen_flags: <defaults>
</compile_context>

<pallas_src>
import math
import numpy as np
import jax
import jax.numpy as jnp
from jax.experimental import pallas as pl
from jax.experimental.pallas import tpu as pltpu

MODEL_DIM = 32
NUM_HEADS = 4
KEY_DIM = MODEL_DIM // NUM_HEADS      # 8
VAL_DIM = KEY_DIM                     # 8 (asserted equal in the module)
HIDDEN_DIM = 64
SEQ_LEN = 8
LN_EPS = 1e-5                         # nn.LayerNorm default

ROW = SEQ_LEN * MODEL_DIM             # 256  : one sequence as a lane-dense row
QVW = SEQ_LEN * 2 * MODEL_DIM         # 512  : per-row width of [q | v]
HROW = SEQ_LEN * HIDDEN_DIM           # 512  : per-row FFN hidden width
EXP = NUM_HEADS * SEQ_LEN * SEQ_LEN * KEY_DIM   # 2048 : expanded attention lanes


# ------------------------------- kernel --------------------------------------
def encoder_layer_kernel(x_ref, a1_ref, a2q_ref, a2k_ref, a2v_ref,
                         e1_ref, e2_ref, g8_ref, s8_ref, ao_ref, mln_ref,
                         f1_ref, fb1_ref, f2_ref, fb2_ref,
                         ln1g_ref, ln1b_ref, ln2g_ref, ln2b_ref, o_ref):
    f32 = jnp.float32
    x = x_ref[...]                                                 # (bt, 256)

    # Encoder-level projections (per token, block-diagonal): [q | v].
    qv = jnp.dot(x, a1_ref[...], preferred_element_type=f32)      # (bt, 512)
    # Per-head projections, emitted in attention-friendly lane orders.
    qp = jnp.dot(qv, a2q_ref[...], preferred_element_type=f32)    # (bt,256) (h,q,d)
    kp = jnp.dot(qv, a2k_ref[...], preferred_element_type=f32)    # (bt,256) (h,k,d)  K from Q (quirk)
    vp = jnp.dot(qv, a2v_ref[...], preferred_element_type=f32)    # (bt,256) (h,d,k)

    # scores[h,q,k] = sum_d qp[h,q,d] * kp[h,k,d]   (lane-dense, no reshapes)
    qe = jnp.dot(qp, e1_ref[...], preferred_element_type=f32)     # (bt,2048) (h,q,k,d)
    ke = jnp.dot(kp, e2_ref[...], preferred_element_type=f32)     # (bt,2048) (h,q,k,d)
    sc = jnp.dot(qe * ke, g8_ref[...], preferred_element_type=f32)  # (bt,256) (h,q,k)
    sc = sc / jnp.sqrt(jnp.float32(KEY_DIM))

    # Softmax over k.  Subtracting the per-sequence max (constant within every
    # (h,q) group) is mathematically identical to the per-group max and keeps
    # exp() from overflowing.
    m = jnp.max(sc, axis=-1, keepdims=True)                       # (bt, 1)
    e = jnp.exp(sc - m)
    denom = jnp.dot(e, s8_ref[...], preferred_element_type=f32)   # group sums, broadcast
    p = e * pl.reciprocal(denom, approx=False)

    # ctx[h,q,d] = sum_k p[h,q,k] * vp[h,k,d]
    pe = jnp.dot(p, e1_ref[...], preferred_element_type=f32)      # (bt,2048) (h,q,d,k)
    ve = jnp.dot(vp, e2_ref[...], preferred_element_type=f32)     # (bt,2048) (h,q,d,k)
    ctx = jnp.dot(pe * ve, g8_ref[...], preferred_element_type=f32)  # (bt,256) (h,q,d)
    att = jnp.dot(ctx, ao_ref[...], preferred_element_type=f32)      # (bt,256) (t, j)

    # Residual + LayerNorm 1 (per-token stats via the constant mean matrix).
    y = att + x
    mu = jnp.dot(y, mln_ref[...], preferred_element_type=f32)
    yc = y - mu
    var = jnp.dot(yc * yc, mln_ref[...], preferred_element_type=f32)
    out1 = yc * jax.lax.rsqrt(var + LN_EPS) * ln1g_ref[...] + ln1b_ref[...]

    # Feed-forward (block-diagonal, per token) + residual + LayerNorm 2.
    h1 = jnp.dot(out1, f1_ref[...], preferred_element_type=f32) + fb1_ref[...]
    h1 = jnp.maximum(h1, 0.0)
    h2 = jnp.dot(h1, f2_ref[...], preferred_element_type=f32) + fb2_ref[...]
    y2 = h2 + out1
    mu2 = jnp.dot(y2, mln_ref[...], preferred_element_type=f32)
    yc2 = y2 - mu2
    var2 = jnp.dot(yc2 * yc2, mln_ref[...], preferred_element_type=f32)
    o_ref[...] = (yc2 * jax.lax.rsqrt(var2 + LN_EPS)
                  * ln2g_ref[...] + ln2b_ref[...]).astype(o_ref.dtype)


# ------------------------------- wrapper --------------------------------------
CONST_ORDER = ('a1', 'a2q', 'a2k', 'a2v', 'e1', 'e2', 'g8', 's8', 'ao', 'mln',
               'f1', 'fb1', 'f2', 'fb2', 'ln1g', 'ln1b', 'ln2g', 'ln2b')


def encoder_layer(x, consts, *, block_b=None, core_parallel=False,
                  vmem_limit_bytes=48 * 1024 * 1024):
    """x: (B, SEQ_LEN, MODEL_DIM) f32.  consts: dict from build_kernel_consts()."""
    B, S, D = x.shape
    assert S == SEQ_LEN and D == MODEL_DIM
    xr = x.reshape(B, ROW)                       # lane-dense (B, 256) slab (free reshape)
    if block_b is None:
        block_b = min(B, 256)                    # production: 256 (v7x) .. 512+ (v5e/v6e)
    assert B % block_b == 0, "batch must be a multiple of block_b"
    assert block_b % 8 == 0 or block_b == B

    weights = tuple(consts[k] for k in CONST_ORDER)
    x_spec = pl.BlockSpec((block_b, ROW), lambda b: (b, 0))
    # Constant index_map -> constants stay resident in VMEM across grid steps.
    w_specs = [pl.BlockSpec(w.shape, lambda b: (0, 0)) for w in weights]

    flops_row = (2 * sum(int(consts[k].size) for k in
                         ('a1', 'a2q', 'a2k', 'a2v', 's8', 'ao', 'f1', 'f2'))
                 + 4 * sum(int(consts[k].size) for k in ('e1', 'e2', 'g8'))
                 + 8 * int(consts['mln'].size))
    cost = pl.CostEstimate(
        flops=B * flops_row,
        transcendentals=B * 3 * ROW,
        bytes_accessed=2 * int(xr.size) * xr.dtype.itemsize
                       + sum(int(w.size) * 4 for w in weights))

    # v7x: CORE_PARALLEL actually shards the batch grid over the 2 TensorCores;
    # on single-core chips plain "parallel" is used.
    sem = (pltpu.CORE_PARALLEL,) if core_parallel else ("parallel",)

    out = pl.pallas_call(
        encoder_layer_kernel,
        out_shape=jax.ShapeDtypeStruct((B, ROW), jnp.float32),
        grid=(B // block_b,),
        in_specs=[x_spec] + w_specs,
        out_specs=x_spec,
        compiler_params=pltpu.CompilerParams(
            dimension_semantics=sem,
            vmem_limit_bytes=vmem_limit_bytes),
        cost_estimate=cost,
    )(xr, *weights)
    return out.reshape(B, S, D)


# ------------------------- parameter init & constant build --------------------
def init_params(key):
    ks = jax.random.split(key, 10)

    def w(k, shape, fan_in):
        bound = 1.0 / math.sqrt(fan_in)
        return jax.random.uniform(k, shape, jnp.float32, -bound, bound)

    p = {}
    p['wq'] = w(ks[0], (MODEL_DIM, MODEL_DIM), MODEL_DIM)             # linear_q
    p['wv'] = w(ks[1], (MODEL_DIM, MODEL_DIM), MODEL_DIM)             # linear_v
    p['hwq'] = w(ks[2], (MODEL_DIM, NUM_HEADS * KEY_DIM), MODEL_DIM)  # per-head q
    p['hwk'] = w(ks[3], (MODEL_DIM, NUM_HEADS * KEY_DIM), MODEL_DIM)  # per-head k
    p['hwv'] = w(ks[4], (MODEL_DIM, NUM_HEADS * VAL_DIM), MODEL_DIM)  # per-head v
    p['wo'] = w(ks[5], (MODEL_DIM, MODEL_DIM), MODEL_DIM)             # linear_o
    p['ln1_g'] = jnp.ones((1, MODEL_DIM), jnp.float32)
    p['ln1_b'] = jnp.zeros((1, MODEL_DIM), jnp.float32)
    p['ln2_g'] = jnp.ones((1, MODEL_DIM), jnp.float32)
    p['ln2_b'] = jnp.zeros((1, MODEL_DIM), jnp.float32)
    p['fc1_w'] = w(ks[6], (MODEL_DIM, HIDDEN_DIM), MODEL_DIM)
    p['fc1_b'] = w(ks[7], (1, HIDDEN_DIM), MODEL_DIM)
    p['fc2_w'] = w(ks[8], (HIDDEN_DIM, MODEL_DIM), HIDDEN_DIM)
    p['fc2_b'] = w(ks[9], (1, MODEL_DIM), HIDDEN_DIM)
    return p


def build_kernel_consts(p):
    """Pack module weights into the row-layout constant matrices used by the kernel."""
    S, D, H, Kd, HID = SEQ_LEN, MODEL_DIM, NUM_HEADS, KEY_DIM, HIDDEN_DIM
    assert S == Kd, "shared expansion/group-sum matrices rely on SEQ_LEN == KEY_DIM"
    npf = lambda a: np.asarray(a, np.float32)
    wq, wv = npf(p['wq']), npf(p['wv'])
    hwq, hwk, hwv, wo = npf(p['hwq']), npf(p['hwk']), npf(p['hwv']), npf(p['wo'])
    fc1_w, fc1_b = npf(p['fc1_w']), npf(p['fc1_b'])
    fc2_w, fc2_b = npf(p['fc2_w']), npf(p['fc2_b'])

    # Stage A: per-token x(32) -> [q | v](64), block-diagonal over the 8 tokens.
    a1 = np.zeros((ROW, QVW), np.float32)
    for t in range(S):
        a1[t * D:(t + 1) * D, t * 2 * D:t * 2 * D + D] = wq
        a1[t * D:(t + 1) * D, t * 2 * D + D:(t + 1) * 2 * D] = wv

    # Stage B: per-token [q|v](64) -> qp/kp/vp in attention-friendly lane orders:
    #   qp lane = h*64 + q*8 + d, kp lane = h*64 + k*8 + d, vp lane = h*64 + d*8 + k.
    a2q = np.zeros((QVW, ROW), np.float32)
    a2k = np.zeros((QVW, ROW), np.float32)
    a2v = np.zeros((QVW, ROW), np.float32)
    for t in range(S):
        for h in range(H):
            a2q[t * 2 * D:t * 2 * D + D,
                h * S * Kd + t * Kd:h * S * Kd + (t + 1) * Kd] = hwq[:, h * Kd:(h + 1) * Kd]
            a2k[t * 2 * D:t * 2 * D + D,
                h * S * Kd + t * Kd:h * S * Kd + (t + 1) * Kd] = hwk[:, h * Kd:(h + 1) * Kd]
            for d in range(Kd):
                a2v[t * 2 * D + D:(t + 1) * 2 * D,
                    h * S * Kd + d * S + t] = hwv[:, h * Kd + d]

    # Expansion / reduction matrices (all 0/1).
    # e1: (h,q,d)->(h,q,k,d) repeat over k  (also serves (h,q,k)->(h,q,d,k)).
    e1 = np.zeros((ROW, EXP), np.float32)
    for i in range(ROW):
        base = (i // Kd) * (S * Kd) + (i % Kd)
        for m_ in range(S):
            e1[i, base + m_ * Kd] = 1.0
    # e2: (h,k,d)->(h,q,k,d) repeat over q  (also serves (h,d,k)->(h,q,d,k)).
    e2 = np.zeros((ROW, EXP), np.float32)
    for i in range(ROW):
        base = (i // (S * Kd)) * (S * S * Kd) + (i % (S * Kd))
        for m_ in range(S):
            e2[i, base + m_ * S * Kd] = 1.0
    # g8: sum trailing groups of 8 lanes (d for scores, k for the context).
    g8 = np.zeros((EXP, ROW), np.float32)
    for i in range(EXP):
        g8[i, i // Kd] = 1.0
    # s8: per-(h,q) softmax-group sum, broadcast back to the 8 key lanes.
    s8 = np.zeros((ROW, ROW), np.float32)
    for i in range(ROW):
        g = i // S
        s8[i, g * S:(g + 1) * S] = 1.0
    # ao: ctx lanes (h,q,d) -> per-token output lanes (q, j) through linear_o.
    ao = np.zeros((ROW, ROW), np.float32)
    for q in range(S):
        for h in range(H):
            ao[h * S * Kd + q * Kd:h * S * Kd + (q + 1) * Kd,
               q * D:(q + 1) * D] = wo[h * Kd:(h + 1) * Kd, :]
    # mln: per-token mean (broadcast back to the token's 32 lanes).
    mln = np.zeros((ROW, ROW), np.float32)
    for t in range(S):
        mln[t * D:(t + 1) * D, t * D:(t + 1) * D] = 1.0 / D
    # FFN block-diagonals.
    f1 = np.zeros((ROW, HROW), np.float32)
    f2 = np.zeros((HROW, ROW), np.float32)
    for t in range(S):
        f1[t * D:(t + 1) * D, t * HID:(t + 1) * HID] = fc1_w
        f2[t * HID:(t + 1) * HID, t * D:(t + 1) * D] = fc2_w

    consts = dict(
        a1=a1, a2q=a2q, a2k=a2k, a2v=a2v, e1=e1, e2=e2, g8=g8, s8=s8, ao=ao,
        mln=mln, f1=f1, fb1=np.tile(fc1_b, (1, S)), f2=f2, fb2=np.tile(fc2_b, (1, S)),
        ln1g=np.tile(npf(p['ln1_g']), (1, S)), ln1b=np.tile(npf(p['ln1_b']), (1, S)),
        ln2g=np.tile(npf(p['ln2_g']), (1, S)), ln2b=np.tile(npf(p['ln2_b']), (1, S)))
    return {k: jnp.asarray(v) for k, v in consts.items()}


# ----------------------- pure-JAX reference (for checking) --------------------
def _layer_norm(x, gamma, beta):
    mean = jnp.mean(x, axis=-1, keepdims=True)
    var = jnp.mean(jnp.square(x - mean), axis=-1, keepdims=True)
    return (x - mean) * jax.lax.rsqrt(var + LN_EPS) * gamma + beta


def _encoder_layer_ref_2d(x, p):
    q = x @ p['wq']
    k = x @ p['wq']            # quirk: K uses linear_q, as in the module
    v = x @ p['wv']
    heads = []
    for h in range(NUM_HEADS):
        sl = slice(h * KEY_DIM, (h + 1) * KEY_DIM)
        qp = q @ p['hwq'][:, sl]
        kp = k @ p['hwk'][:, sl]
        vp = v @ p['hwv'][:, sl]
        s = (qp @ kp.T) / jnp.sqrt(jnp.float32(KEY_DIM))
        heads.append(jax.nn.softmax(s, axis=1) @ vp)
    att = jnp.concatenate(heads, axis=1) @ p['wo']
    out = _layer_norm(att + x, p['ln1_g'], p['ln1_b'])
    sc = out
    h1 = jax.nn.relu(out @ p['fc1_w'] + p['fc1_b'])
    out = h1 @ p['fc2_w'] + p['fc2_b'] + sc
    return _layer_norm(out, p['ln2_g'], p['ln2_b'])


def encoder_layer_ref(x, p):
    return jax.vmap(lambda xi: _encoder_layer_ref_2d(xi, p))(x)


# ----------------------------------- main --------------------------------------
if __name__ == "__main__":
    key = jax.random.PRNGKey(0)
    k_x, k_p = jax.random.split(key)

    BATCH = 16          # small demo batch; production would use hundreds
    x = jax.random.normal(k_x, (BATCH, SEQ_LEN, MODEL_DIM), jnp.float32)
    params = init_params(k_p)
    consts = build_kernel_consts(params)
    ref = encoder_layer_ref(x, params)

    def run(core_parallel):
        return jax.block_until_ready(
            encoder_layer(x, consts, block_b=8, core_parallel=core_parallel))

    out = None
    try:
        out = run(core_parallel=True)       # v7x: shard batch grid over both TCs
    except Exception:
        out = None
    if out is None or not bool(jnp.allclose(out, ref, atol=1e-4, rtol=1e-4)):
        out = run(core_parallel=False)      # single-TC chips / older jax

    assert out.shape == (BATCH, SEQ_LEN, MODEL_DIM)
    assert bool(jnp.allclose(out, ref, atol=1e-4, rtol=1e-4)), "kernel mismatch vs reference"
    print("KERNEL_OK")
</pallas_src>

<mosaic_0001>
module attributes {stable_mosaic.version = 11 : i64} {
  func.func @encoder_layer_kernel(%arg0: i32, %arg1: memref<8x256xf32, #tpu.memory_space<vmem>>, %arg2: memref<256x512xf32, #tpu.memory_space<vmem>>, %arg3: memref<512x256xf32, #tpu.memory_space<vmem>>, %arg4: memref<512x256xf32, #tpu.memory_space<vmem>>, %arg5: memref<512x256xf32, #tpu.memory_space<vmem>>, %arg6: memref<256x2048xf32, #tpu.memory_space<vmem>>, %arg7: memref<256x2048xf32, #tpu.memory_space<vmem>>, %arg8: memref<2048x256xf32, #tpu.memory_space<vmem>>, %arg9: memref<256x256xf32, #tpu.memory_space<vmem>>, %arg10: memref<256x256xf32, #tpu.memory_space<vmem>>, %arg11: memref<256x256xf32, #tpu.memory_space<vmem>>, %arg12: memref<256x512xf32, #tpu.memory_space<vmem>>, %arg13: memref<1x512xf32, #tpu.memory_space<vmem>>, %arg14: memref<512x256xf32, #tpu.memory_space<vmem>>, %arg15: memref<1x256xf32, #tpu.memory_space<vmem>>, %arg16: memref<1x256xf32, #tpu.memory_space<vmem>>, %arg17: memref<1x256xf32, #tpu.memory_space<vmem>>, %arg18: memref<1x256xf32, #tpu.memory_space<vmem>>, %arg19: memref<1x256xf32, #tpu.memory_space<vmem>>, %arg20: memref<8x256xf32, #tpu.memory_space<vmem>>) attributes {dimension_semantics = [#tpu.dimension_semantics<core_parallel>], iteration_bounds = array<i64: 2>, scalar_prefetch = 0 : i64, scratch_operands = 0 : i64, tpu.core_type = #tpu.core_type<tc>, window_params = [{transform_indices = @transform_0, window_bounds = array<i64: 8, 256>}, {pipeline_mode = #tpu.pipeline_mode<synchronous>, transform_indices = @transform_1, window_bounds = array<i64: 256, 512>}, {pipeline_mode = #tpu.pipeline_mode<synchronous>, transform_indices = @transform_2, window_bounds = array<i64: 512, 256>}, {pipeline_mode = #tpu.pipeline_mode<synchronous>, transform_indices = @transform_3, window_bounds = array<i64: 512, 256>}, {pipeline_mode = #tpu.pipeline_mode<synchronous>, transform_indices = @transform_4, window_bounds = array<i64: 512, 256>}, {pipeline_mode = #tpu.pipeline_mode<synchronous>, transform_indices = @transform_5, window_bounds = array<i64: 256, 2048>}, {pipeline_mode = #tpu.pipeline_mode<synchronous>, transform_indices = @transform_6, window_bounds = array<i64: 256, 2048>}, {pipeline_mode = #tpu.pipeline_mode<synchronous>, transform_indices = @transform_7, window_bounds = array<i64: 2048, 256>}, {pipeline_mode = #tpu.pipeline_mode<synchronous>, transform_indices = @transform_8, window_bounds = array<i64: 256, 256>}, {pipeline_mode = #tpu.pipeline_mode<synchronous>, transform_indices = @transform_9, window_bounds = array<i64: 256, 256>}, {pipeline_mode = #tpu.pipeline_mode<synchronous>, transform_indices = @transform_10, window_bounds = array<i64: 256, 256>}, {pipeline_mode = #tpu.pipeline_mode<synchronous>, transform_indices = @transform_11, window_bounds = array<i64: 256, 512>}, {pipeline_mode = #tpu.pipeline_mode<synchronous>, transform_indices = @transform_12, window_bounds = array<i64: 1, 512>}, {pipeline_mode = #tpu.pipeline_mode<synchronous>, transform_indices = @transform_13, window_bounds = array<i64: 512, 256>}, {pipeline_mode = #tpu.pipeline_mode<synchronous>, transform_indices = @transform_14, window_bounds = array<i64: 1, 256>}, {pipeline_mode = #tpu.pipeline_mode<synchronous>, transform_indices = @transform_15, window_bounds = array<i64: 1, 256>}, {pipeline_mode = #tpu.pipeline_mode<synchronous>, transform_indices = @transform_16, window_bounds = array<i64: 1, 256>}, {pipeline_mode = #tpu.pipeline_mode<synchronous>, transform_indices = @transform_17, window_bounds = array<i64: 1, 256>}, {pipeline_mode = #tpu.pipeline_mode<synchronous>, transform_indices = @transform_18, window_bounds = array<i64: 1, 256>}, {transform_indices = @transform_19, window_bounds = array<i64: 8, 256>}]} {
    %c0 = arith.constant 0 : index
    %c0_0 = arith.constant 0 : index
    %0 = vector.load %arg1[%c0, %c0_0] : memref<8x256xf32, #tpu.memory_space<vmem>>, vector<8x256xf32>
    %c0_1 = arith.constant 0 : index
    %c0_2 = arith.constant 0 : index
    %1 = vector.load %arg2[%c0_1, %c0_2] : memref<256x512xf32, #tpu.memory_space<vmem>>, vector<256x512xf32>
    %cst = arith.constant dense<0.000000e+00> : vector<8x512xf32>
    %2 = tpu.matmul %0, %1, %cst {dimension_numbers = #tpu.dot_dimension_numbers<[1], [0], [0], [1], [0, 0, 1, 1], [], []>} : vector<8x256xf32>, vector<256x512xf32>, vector<8x512xf32> -> vector<8x512xf32>
    %c0_3 = arith.constant 0 : index
    %c0_4 = arith.constant 0 : index
    %3 = vector.load %arg3[%c0_3, %c0_4] : memref<512x256xf32, #tpu.memory_space<vmem>>, vector<512x256xf32>
    %cst_5 = arith.constant dense<0.000000e+00> : vector<8x256xf32>
    %4 = tpu.matmul %2, %3, %cst_5 {dimension_numbers = #tpu.dot_dimension_numbers<[1], [0], [0], [1], [0, 0, 1, 1], [], []>} : vector<8x512xf32>, vector<512x256xf32>, vector<8x256xf32> -> vector<8x256xf32>
    %c0_6 = arith.constant 0 : index
    %c0_7 = arith.constant 0 : index
    %5 = vector.load %arg4[%c0_6, %c0_7] : memref<512x256xf32, #tpu.memory_space<vmem>>, vector<512x256xf32>
    %cst_8 = arith.constant dense<0.000000e+00> : vector<8x256xf32>
    %6 = tpu.matmul %2, %5, %cst_8 {dimension_numbers = #tpu.dot_dimension_numbers<[1], [0], [0], [1], [0, 0, 1, 1], [], []>} : vector<8x512xf32>, vector<512x256xf32>, vector<8x256xf32> -> vector<8x256xf32>
    %c0_9 = arith.constant 0 : index
    %c0_10 = arith.constant 0 : index
    %7 = vector.load %arg5[%c0_9, %c0_10] : memref<512x256xf32, #tpu.memory_space<vmem>>, vector<512x256xf32>
    %cst_11 = arith.constant dense<0.000000e+00> : vector<8x256xf32>
    %8 = tpu.matmul %2, %7, %cst_11 {dimension_numbers = #tpu.dot_dimension_numbers<[1], [0], [0], [1], [0, 0, 1, 1], [], []>} : vector<8x512xf32>, vector<512x256xf32>, vector<8x256xf32> -> vector<8x256xf32>
    %c0_12 = arith.constant 0 : index
    %c0_13 = arith.constant 0 : index
    %9 = vector.load %arg6[%c0_12, %c0_13] : memref<256x2048xf32, #tpu.memory_space<vmem>>, vector<256x2048xf32>
    %cst_14 = arith.constant dense<0.000000e+00> : vector<8x2048xf32>
    %10 = tpu.matmul %4, %9, %cst_14 {dimension_numbers = #tpu.dot_dimension_numbers<[1], [0], [0], [1], [0, 0, 1, 1], [], []>} : vector<8x256xf32>, vector<256x2048xf32>, vector<8x2048xf32> -> vector<8x2048xf32>
    %c0_15 = arith.constant 0 : index
    %c0_16 = arith.constant 0 : index
    %11 = vector.load %arg7[%c0_15, %c0_16] : memref<256x2048xf32, #tpu.memory_space<vmem>>, vector<256x2048xf32>
    %cst_17 = arith.constant dense<0.000000e+00> : vector<8x2048xf32>
    %12 = tpu.matmul %6, %11, %cst_17 {dimension_numbers = #tpu.dot_dimension_numbers<[1], [0], [0], [1], [0, 0, 1, 1], [], []>} : vector<8x256xf32>, vector<256x2048xf32>, vector<8x2048xf32> -> vector<8x2048xf32>
    %13 = arith.mulf %10, %12 : vector<8x2048xf32>
    %c0_18 = arith.constant 0 : index
    %c0_19 = arith.constant 0 : index
    %14 = vector.load %arg8[%c0_18, %c0_19] : memref<2048x256xf32, #tpu.memory_space<vmem>>, vector<2048x256xf32>
    %cst_20 = arith.constant dense<0.000000e+00> : vector<8x256xf32>
    %15 = tpu.matmul %13, %14, %cst_20 {dimension_numbers = #tpu.dot_dimension_numbers<[1], [0], [0], [1], [0, 0, 1, 1], [], []>} : vector<8x2048xf32>, vector<2048x256xf32>, vector<8x256xf32> -> vector<8x256xf32>
    %cst_21 = arith.constant 8.000000e+00 : f32
    %16 = math.sqrt %cst_21 : f32
    %17 = vector.broadcast %16 : f32 to vector<8x256xf32>
    %18 = arith.divf %15, %17 : vector<8x256xf32>
    %cst_22 = arith.constant dense<0xFF800000> : vector<8xf32>
    %19 = vector.multi_reduction <maximumf>, %18, %cst_22 [1] : vector<8x256xf32> to vector<8xf32>
    %20 = vector.shape_cast %19 : vector<8xf32> to vector<8x1xf32>
    %21 = vector.broadcast %20 : vector<8x1xf32> to vector<8x256xf32>
    %22 = arith.subf %18, %21 : vector<8x256xf32>
    %23 = math.exp %22 : vector<8x256xf32>
    %c0_23 = arith.constant 0 : index
    %c0_24 = arith.constant 0 : index
    %24 = vector.load %arg9[%c0_23, %c0_24] : memref<256x256xf32, #tpu.memory_space<vmem>>, vector<256x256xf32>
    %cst_25 = arith.constant dense<0.000000e+00> : vector<8x256xf32>
    %25 = tpu.matmul %23, %24, %cst_25 {dimension_numbers = #tpu.dot_dimension_numbers<[1], [0], [0], [1], [0, 0, 1, 1], [], []>} : vector<8x256xf32>, vector<256x256xf32>, vector<8x256xf32> -> vector<8x256xf32>
    %26 = tpu.reciprocal %25 : vector<8x256xf32> -> vector<8x256xf32>
    %27 = arith.mulf %23, %26 : vector<8x256xf32>
    %c0_26 = arith.constant 0 : index
    %c0_27 = arith.constant 0 : index
    %28 = vector.load %arg6[%c0_26, %c0_27] : memref<256x2048xf32, #tpu.memory_space<vmem>>, vector<256x2048xf32>
    %cst_28 = arith.constant dense<0.000000e+00> : vector<8x2048xf32>
    %29 = tpu.matmul %27, %28, %cst_28 {dimension_numbers = #tpu.dot_dimension_numbers<[1], [0], [0], [1], [0, 0, 1, 1], [], []>} : vector<8x256xf32>, vector<256x2048xf32>, vector<8x2048xf32> -> vector<8x2048xf32>
    %c0_29 = arith.constant 0 : index
    %c0_30 = arith.constant 0 : index
    %30 = vector.load %arg7[%c0_29, %c0_30] : memref<256x2048xf32, #tpu.memory_space<vmem>>, vector<256x2048xf32>
    %cst_31 = arith.constant dense<0.000000e+00> : vector<8x2048xf32>
    %31 = tpu.matmul %8, %30, %cst_31 {dimension_numbers = #tpu.dot_dimension_numbers<[1], [0], [0], [1], [0, 0, 1, 1], [], []>} : vector<8x256xf32>, vector<256x2048xf32>, vector<8x2048xf32> -> vector<8x2048xf32>
    %32 = arith.mulf %29, %31 : vector<8x2048xf32>
    %c0_32 = arith.constant 0 : index
    %c0_33 = arith.constant 0 : index
    %33 = vector.load %arg8[%c0_32, %c0_33] : memref<2048x256xf32, #tpu.memory_space<vmem>>, vector<2048x256xf32>
    %cst_34 = arith.constant dense<0.000000e+00> : vector<8x256xf32>
    %34 = tpu.matmul %32, %33, %cst_34 {dimension_numbers = #tpu.dot_dimension_numbers<[1], [0], [0], [1], [0, 0, 1, 1], [], []>} : vector<8x2048xf32>, vector<2048x256xf32>, vector<8x256xf32> -> vector<8x256xf32>
    %c0_35 = arith.constant 0 : index
    %c0_36 = arith.constant 0 : index
    %35 = vector.load %arg10[%c0_35, %c0_36] : memref<256x256xf32, #tpu.memory_space<vmem>>, vector<256x256xf32>
    %cst_37 = arith.constant dense<0.000000e+00> : vector<8x256xf32>
    %36 = tpu.matmul %34, %35, %cst_37 {dimension_numbers = #tpu.dot_dimension_numbers<[1], [0], [0], [1], [0, 0, 1, 1], [], []>} : vector<8x256xf32>, vector<256x256xf32>, vector<8x256xf32> -> vector<8x256xf32>
    %37 = arith.addf %36, %0 : vector<8x256xf32>
    %c0_38 = arith.constant 0 : index
    %c0_39 = arith.constant 0 : index
    %38 = vector.load %arg11[%c0_38, %c0_39] : memref<256x256xf32, #tpu.memory_space<vmem>>, vector<256x256xf32>
    %cst_40 = arith.constant dense<0.000000e+00> : vector<8x256xf32>
    %39 = tpu.matmul %37, %38, %cst_40 {dimension_numbers = #tpu.dot_dimension_numbers<[1], [0], [0], [1], [0, 0, 1, 1], [], []>} : vector<8x256xf32>, vector<256x256xf32>, vector<8x256xf32> -> vector<8x256xf32>
    %40 = arith.subf %37, %39 : vector<8x256xf32>
    %41 = arith.mulf %40, %40 : vector<8x256xf32>
    %c0_41 = arith.constant 0 : index
    %c0_42 = arith.constant 0 : index
    %42 = vector.load %arg11[%c0_41, %c0_42] : memref<256x256xf32, #tpu.memory_space<vmem>>, vector<256x256xf32>
    %cst_43 = arith.constant dense<0.000000e+00> : vector<8x256xf32>
    %43 = tpu.matmul %41, %42, %cst_43 {dimension_numbers = #tpu.dot_dimension_numbers<[1], [0], [0], [1], [0, 0, 1, 1], [], []>} : vector<8x256xf32>, vector<256x256xf32>, vector<8x256xf32> -> vector<8x256xf32>
    %cst_44 = arith.constant 9.99999974E-6 : f32
    %44 = vector.broadcast %cst_44 : f32 to vector<8x256xf32>
    %45 = arith.addf %43, %44 : vector<8x256xf32>
    %46 = math.rsqrt %45 : vector<8x256xf32>
    %47 = arith.mulf %40, %46 : vector<8x256xf32>
    %c0_45 = arith.constant 0 : index
    %c0_46 = arith.constant 0 : index
    %48 = vector.load %arg16[%c0_45, %c0_46] : memref<1x256xf32, #tpu.memory_space<vmem>>, vector<1x256xf32>
    %49 = vector.broadcast %48 : vector<1x256xf32> to vector<8x256xf32>
    %50 = arith.mulf %47, %49 : vector<8x256xf32>
    %c0_47 = arith.constant 0 : index
    %c0_48 = arith.constant 0 : index
    %51 = vector.load %arg17[%c0_47, %c0_48] : memref<1x256xf32, #tpu.memory_space<vmem>>, vector<1x256xf32>
    %52 = vector.broadcast %51 : vector<1x256xf32> to vector<8x256xf32>
    %53 = arith.addf %50, %52 : vector<8x256xf32>
    %c0_49 = arith.constant 0 : index
    %c0_50 = arith.constant 0 : index
    %54 = vector.load %arg12[%c0_49, %c0_50] : memref<256x512xf32, #tpu.memory_space<vmem>>, vector<256x512xf32>
    %cst_51 = arith.constant dense<0.000000e+00> : vector<8x512xf32>
    %55 = tpu.matmul %53, %54, %cst_51 {dimension_numbers = #tpu.dot_dimension_numbers<[1], [0], [0], [1], [0, 0, 1, 1], [], []>} : vector<8x256xf32>, vector<256x512xf32>, vector<8x512xf32> -> vector<8x512xf32>
    %c0_52 = arith.constant 0 : index
    %c0_53 = arith.constant 0 : index
    %56 = vector.load %arg13[%c0_52, %c0_53] : memref<1x512xf32, #tpu.memory_space<vmem>>, vector<1x512xf32>
    %57 = vector.broadcast %56 : vector<1x512xf32> to vector<8x512xf32>
    %58 = arith.addf %55, %57 : vector<8x512xf32>
    %cst_54 = arith.constant 0.000000e+00 : f32
    %59 = vector.broadcast %cst_54 : f32 to vector<8x512xf32>
    %60 = arith.maximumf %58, %59 : vector<8x512xf32>
    %c0_55 = arith.constant 0 : index
    %c0_56 = arith.constant 0 : index
    %61 = vector.load %arg14[%c0_55, %c0_56] : memref<512x256xf32, #tpu.memory_space<vmem>>, vector<512x256xf32>
    %cst_57 = arith.constant dense<0.000000e+00> : vector<8x256xf32>
    %62 = tpu.matmul %60, %61, %cst_57 {dimension_numbers = #tpu.dot_dimension_numbers<[1], [0], [0], [1], [0, 0, 1, 1], [], []>} : vector<8x512xf32>, vector<512x256xf32>, vector<8x256xf32> -> vector<8x256xf32>
    %c0_58 = arith.constant 0 : index
    %c0_59 = arith.constant 0 : index
    %63 = vector.load %arg15[%c0_58, %c0_59] : memref<1x256xf32, #tpu.memory_space<vmem>>, vector<1x256xf32>
    %64 = vector.broadcast %63 : vector<1x256xf32> to vector<8x256xf32>
    %65 = arith.addf %62, %64 : vector<8x256xf32>
    %66 = arith.addf %65, %53 : vector<8x256xf32>
    %c0_60 = arith.constant 0 : index
    %c0_61 = arith.constant 0 : index
    %67 = vector.load %arg11[%c0_60, %c0_61] : memref<256x256xf32, #tpu.memory_space<vmem>>, vector<256x256xf32>
    %cst_62 = arith.constant dense<0.000000e+00> : vector<8x256xf32>
    %68 = tpu.matmul %66, %67, %cst_62 {dimension_numbers = #tpu.dot_dimension_numbers<[1], [0], [0], [1], [0, 0, 1, 1], [], []>} : vector<8x256xf32>, vector<256x256xf32>, vector<8x256xf32> -> vector<8x256xf32>
    %69 = arith.subf %66, %68 : vector<8x256xf32>
    %70 = arith.mulf %69, %69 : vector<8x256xf32>
    %c0_63 = arith.constant 0 : index
    %c0_64 = arith.constant 0 : index
    %71 = vector.load %arg11[%c0_63, %c0_64] : memref<256x256xf32, #tpu.memory_space<vmem>>, vector<256x256xf32>
    %cst_65 = arith.constant dense<0.000000e+00> : vector<8x256xf32>
    %72 = tpu.matmul %70, %71, %cst_65 {dimension_numbers = #tpu.dot_dimension_numbers<[1], [0], [0], [1], [0, 0, 1, 1], [], []>} : vector<8x256xf32>, vector<256x256xf32>, vector<8x256xf32> -> vector<8x256xf32>
    %cst_66 = arith.constant 9.99999974E-6 : f32
    %73 = vector.broadcast %cst_66 : f32 to vector<8x256xf32>
    %74 = arith.addf %72, %73 : vector<8x256xf32>
    %75 = math.rsqrt %74 : vector<8x256xf32>
    %76 = arith.mulf %69, %75 : vector<8x256xf32>
    %c0_67 = arith.constant 0 : index
    %c0_68 = arith.constant 0 : index
    %77 = vector.load %arg18[%c0_67, %c0_68] : memref<1x256xf32, #tpu.memory_space<vmem>>, vector<1x256xf32>
    %78 = vector.broadcast %77 : vector<1x256xf32> to vector<8x256xf32>
    %79 = arith.mulf %76, %78 : vector<8x256xf32>
    %c0_69 = arith.constant 0 : index
    %c0_70 = arith.constant 0 : index
    %80 = vector.load %arg19[%c0_69, %c0_70] : memref<1x256xf32, #tpu.memory_space<vmem>>, vector<1x256xf32>
    %81 = vector.broadcast %80 : vector<1x256xf32> to vector<8x256xf32>
    %82 = arith.addf %79, %81 : vector<8x256xf32>
    %c0_71 = arith.constant 0 : index
    %c0_72 = arith.constant 0 : index
    %83 = vector.load %arg20[%c0_71, %c0_72] : memref<8x256xf32, #tpu.memory_space<vmem>>, vector<8x256xf32>
    tpu.vector_store %arg20[%c0_71, %c0_72], %82 {strides = array<i32>} : memref<8x256xf32, #tpu.memory_space<vmem>>, vector<8x256xf32>,
    return
  }
  func.func @transform_0(%arg0: i32) -> (i32, i32) {
    %c0_i32 = arith.constant 0 : i32
    %c0_i32_0 = arith.constant 0 : i32
    return %arg0, %c0_i32 : i32, i32
  }
  func.func @transform_1(%arg0: i32) -> (i32, i32) {
    %c0_i32 = arith.constant 0 : i32
    %c0_i32_0 = arith.constant 0 : i32
    %c0_i32_1 = arith.constant 0 : i32
    return %c0_i32, %c0_i32_0 : i32, i32
  }
  func.func @transform_2(%arg0: i32) -> (i32, i32) {
    %c0_i32 = arith.constant 0 : i32
    %c0_i32_0 = arith.constant 0 : i32
    %c0_i32_1 = arith.constant 0 : i32
    return %c0_i32, %c0_i32_0 : i32, i32
  }
  func.func @transform_3(%arg0: i32) -> (i32, i32) {
    %c0_i32 = arith.constant 0 : i32
    %c0_i32_0 = arith.constant 0 : i32
    %c0_i32_1 = arith.constant 0 : i32
    return %c0_i32, %c0_i32_0 : i32, i32
  }
  func.func @transform_4(%arg0: i32) -> (i32, i32) {
    %c0_i32 = arith.constant 0 : i32
    %c0_i32_0 = arith.constant 0 : i32
    %c0_i32_1 = arith.constant 0 : i32
    return %c0_i32, %c0_i32_0 : i32, i32
  }
  func.func @transform_5(%arg0: i32) -> (i32, i32) {
    %c0_i32 = arith.constant 0 : i32
    %c0_i32_0 = arith.constant 0 : i32
    %c0_i32_1 = arith.constant 0 : i32
    return %c0_i32, %c0_i32_0 : i32, i32
  }
  func.func @transform_6(%arg0: i32) -> (i32, i32) {
    %c0_i32 = arith.constant 0 : i32
    %c0_i32_0 = arith.constant 0 : i32
    %c0_i32_1 = arith.constant 0 : i32
    return %c0_i32, %c0_i32_0 : i32, i32
  }
  func.func @transform_7(%arg0: i32) -> (i32, i32) {
    %c0_i32 = arith.constant 0 : i32
    %c0_i32_0 = arith.constant 0 : i32
    %c0_i32_1 = arith.constant 0 : i32
    return %c0_i32, %c0_i32_0 : i32, i32
  }
  func.func @transform_8(%arg0: i32) -> (i32, i32) {
    %c0_i32 = arith.constant 0 : i32
    %c0_i32_0 = arith.constant 0 : i32
    %c0_i32_1 = arith.constant 0 : i32
    return %c0_i32, %c0_i32_0 : i32, i32
  }
  func.func @transform_9(%arg0: i32) -> (i32, i32) {
    %c0_i32 = arith.constant 0 : i32
    %c0_i32_0 = arith.constant 0 : i32
    %c0_i32_1 = arith.constant 0 : i32
    return %c0_i32, %c0_i32_0 : i32, i32
  }
  func.func @transform_10(%arg0: i32) -> (i32, i32) {
    %c0_i32 = arith.constant 0 : i32
    %c0_i32_0 = arith.constant 0 : i32
    %c0_i32_1 = arith.constant 0 : i32
    return %c0_i32, %c0_i32_0 : i32, i32
  }
  func.func @transform_11(%arg0: i32) -> (i32, i32) {
    %c0_i32 = arith.constant 0 : i32
    %c0_i32_0 = arith.constant 0 : i32
    %c0_i32_1 = arith.constant 0 : i32
    return %c0_i32, %c0_i32_0 : i32, i32
  }
  func.func @transform_12(%arg0: i32) -> (i32, i32) {
    %c0_i32 = arith.constant 0 : i32
    %c0_i32_0 = arith.constant 0 : i32
    %c0_i32_1 = arith.constant 0 : i32
    return %c0_i32, %c0_i32_0 : i32, i32
  }
  func.func @transform_13(%arg0: i32) -> (i32, i32) {
    %c0_i32 = arith.constant 0 : i32
    %c0_i32_0 = arith.constant 0 : i32
    %c0_i32_1 = arith.constant 0 : i32
    return %c0_i32, %c0_i32_0 : i32, i32
  }
  func.func @transform_14(%arg0: i32) -> (i32, i32) {
    %c0_i32 = arith.constant 0 : i32
    %c0_i32_0 = arith.constant 0 : i32
    %c0_i32_1 = arith.constant 0 : i32
    return %c0_i32, %c0_i32_0 : i32, i32
  }
  func.func @transform_15(%arg0: i32) -> (i32, i32) {
    %c0_i32 = arith.constant 0 : i32
    %c0_i32_0 = arith.constant 0 : i32
    %c0_i32_1 = arith.constant 0 : i32
    return %c0_i32, %c0_i32_0 : i32, i32
  }
  func.func @transform_16(%arg0: i32) -> (i32, i32) {
    %c0_i32 = arith.constant 0 : i32
    %c0_i32_0 = arith.constant 0 : i32
    %c0_i32_1 = arith.constant 0 : i32
    return %c0_i32, %c0_i32_0 : i32, i32
  }
  func.func @transform_17(%arg0: i32) -> (i32, i32) {
    %c0_i32 = arith.constant 0 : i32
    %c0_i32_0 = arith.constant 0 : i32
    %c0_i32_1 = arith.constant 0 : i32
    return %c0_i32, %c0_i32_0 : i32, i32
  }
  func.func @transform_18(%arg0: i32) -> (i32, i32) {
    %c0_i32 = arith.constant 0 : i32
    %c0_i32_0 = arith.constant 0 : i32
    %c0_i32_1 = arith.constant 0 : i32
    return %c0_i32, %c0_i32_0 : i32, i32
  }
  func.func @transform_19(%arg0: i32) -> (i32, i32) {
    %c0_i32 = arith.constant 0 : i32
    %c0_i32_0 = arith.constant 0 : i32
    return %arg0, %c0_i32 : i32, i32
  }
}

module attributes {stable_mosaic.version = 11 : i64} {
  func.func @encoder_layer_kernel(%arg0: i32, %arg1: memref<8x256xf32, #tpu.memory_space<vmem>>, %arg2: memref<256x512xf32, #tpu.memory_space<vmem>>, %arg3: memref<512x256xf32, #tpu.memory_space<vmem>>, %arg4: memref<512x256xf32, #tpu.memory_space<vmem>>, %arg5: memref<512x256xf32, #tpu.memory_space<vmem>>, %arg6: memref<256x2048xf32, #tpu.memory_space<vmem>>, %arg7: memref<256x2048xf32, #tpu.memory_space<vmem>>, %arg8: memref<2048x256xf32, #tpu.memory_space<vmem>>, %arg9: memref<256x256xf32, #tpu.memory_space<vmem>>, %arg10: memref<256x256xf32, #tpu.memory_space<vmem>>, %arg11: memref<256x256xf32, #tpu.memory_space<vmem>>, %arg12: memref<256x512xf32, #tpu.memory_space<vmem>>, %arg13: memref<1x512xf32, #tpu.memory_space<vmem>>, %arg14: memref<512x256xf32, #tpu.memory_space<vmem>>, %arg15: memref<1x256xf32, #tpu.memory_space<vmem>>, %arg16: memref<1x256xf32, #tpu.memory_space<vmem>>, %arg17: memref<1x256xf32, #tpu.memory_space<vmem>>, %arg18: memref<1x256xf32, #tpu.memory_space<vmem>>, %arg19: memref<1x256xf32, #tpu.memory_space<vmem>>, %arg20: memref<8x256xf32, #tpu.memory_space<vmem>>) attributes {dimension_semantics = [#tpu.dimension_semantics<parallel>], iteration_bounds = array<i64: 2>, scalar_prefetch = 0 : i64, scratch_operands = 0 : i64, tpu.core_type = #tpu.core_type<tc>, window_params = [{transform_indices = @transform_0, window_bounds = array<i64: 8, 256>}, {pipeline_mode = #tpu.pipeline_mode<synchronous>, transform_indices = @transform_1, window_bounds = array<i64: 256, 512>}, {pipeline_mode = #tpu.pipeline_mode<synchronous>, transform_indices = @transform_2, window_bounds = array<i64: 512, 256>}, {pipeline_mode = #tpu.pipeline_mode<synchronous>, transform_indices = @transform_3, window_bounds = array<i64: 512, 256>}, {pipeline_mode = #tpu.pipeline_mode<synchronous>, transform_indices = @transform_4, window_bounds = array<i64: 512, 256>}, {pipeline_mode = #tpu.pipeline_mode<synchronous>, transform_indices = @transform_5, window_bounds = array<i64: 256, 2048>}, {pipeline_mode = #tpu.pipeline_mode<synchronous>, transform_indices = @transform_6, window_bounds = array<i64: 256, 2048>}, {pipeline_mode = #tpu.pipeline_mode<synchronous>, transform_indices = @transform_7, window_bounds = array<i64: 2048, 256>}, {pipeline_mode = #tpu.pipeline_mode<synchronous>, transform_indices = @transform_8, window_bounds = array<i64: 256, 256>}, {pipeline_mode = #tpu.pipeline_mode<synchronous>, transform_indices = @transform_9, window_bounds = array<i64: 256, 256>}, {pipeline_mode = #tpu.pipeline_mode<synchronous>, transform_indices = @transform_10, window_bounds = array<i64: 256, 256>}, {pipeline_mode = #tpu.pipeline_mode<synchronous>, transform_indices = @transform_11, window_bounds = array<i64: 256, 512>}, {pipeline_mode = #tpu.pipeline_mode<synchronous>, transform_indices = @transform_12, window_bounds = array<i64: 1, 512>}, {pipeline_mode = #tpu.pipeline_mode<synchronous>, transform_indices = @transform_13, window_bounds = array<i64: 512, 256>}, {pipeline_mode = #tpu.pipeline_mode<synchronous>, transform_indices = @transform_14, window_bounds = array<i64: 1, 256>}, {pipeline_mode = #tpu.pipeline_mode<synchronous>, transform_indices = @transform_15, window_bounds = array<i64: 1, 256>}, {pipeline_mode = #tpu.pipeline_mode<synchronous>, transform_indices = @transform_16, window_bounds = array<i64: 1, 256>}, {pipeline_mode = #tpu.pipeline_mode<synchronous>, transform_indices = @transform_17, window_bounds = array<i64: 1, 256>}, {pipeline_mode = #tpu.pipeline_mode<synchronous>, transform_indices = @transform_18, window_bounds = array<i64: 1, 256>}, {transform_indices = @transform_19, window_bounds = array<i64: 8, 256>}]} {
    %c0 = arith.constant 0 : index
    %c0_0 = arith.constant 0 : index
    %0 = vector.load %arg1[%c0, %c0_0] : memref<8x256xf32, #tpu.memory_space<vmem>>, vector<8x256xf32>
    %c0_1 = arith.constant 0 : index
    %c0_2 = arith.constant 0 : index
    %1 = vector.load %arg2[%c0_1, %c0_2] : memref<256x512xf32, #tpu.memory_space<vmem>>, vector<256x512xf32>
    %cst = arith.constant dense<0.000000e+00> : vector<8x512xf32>
    %2 = tpu.matmul %0, %1, %cst {dimension_numbers = #tpu.dot_dimension_numbers<[1], [0], [0], [1], [0, 0, 1, 1], [], []>} : vector<8x256xf32>, vector<256x512xf32>, vector<8x512xf32> -> vector<8x512xf32>
    %c0_3 = arith.constant 0 : index
    %c0_4 = arith.constant 0 : index
    %3 = vector.load %arg3[%c0_3, %c0_4] : memref<512x256xf32, #tpu.memory_space<vmem>>, vector<512x256xf32>
    %cst_5 = arith.constant dense<0.000000e+00> : vector<8x256xf32>
    %4 = tpu.matmul %2, %3, %cst_5 {dimension_numbers = #tpu.dot_dimension_numbers<[1], [0], [0], [1], [0, 0, 1, 1], [], []>} : vector<8x512xf32>, vector<512x256xf32>, vector<8x256xf32> -> vector<8x256xf32>
    %c0_6 = arith.constant 0 : index
    %c0_7 = arith.constant 0 : index
    %5 = vector.load %arg4[%c0_6, %c0_7] : memref<512x256xf32, #tpu.memory_space<vmem>>, vector<512x256xf32>
    %cst_8 = arith.constant dense<0.000000e+00> : vector<8x256xf32>
    %6 = tpu.matmul %2, %5, %cst_8 {dimension_numbers = #tpu.dot_dimension_numbers<[1], [0], [0], [1], [0, 0, 1, 1], [], []>} : vector<8x512xf32>, vector<512x256xf32>, vector<8x256xf32> -> vector<8x256xf32>
    %c0_9 = arith.constant 0 : index
    %c0_10 = arith.constant 0 : index
    %7 = vector.load %arg5[%c0_9, %c0_10] : memref<512x256xf32, #tpu.memory_space<vmem>>, vector<512x256xf32>
    %cst_11 = arith.constant dense<0.000000e+00> : vector<8x256xf32>
    %8 = tpu.matmul %2, %7, %cst_11 {dimension_numbers = #tpu.dot_dimension_numbers<[1], [0], [0], [1], [0, 0, 1, 1], [], []>} : vector<8x512xf32>, vector<512x256xf32>, vector<8x256xf32> -> vector<8x256xf32>
    %c0_12 = arith.constant 0 : index
    %c0_13 = arith.constant 0 : index
    %9 = vector.load %arg6[%c0_12, %c0_13] : memref<256x2048xf32, #tpu.memory_space<vmem>>, vector<256x2048xf32>
    %cst_14 = arith.constant dense<0.000000e+00> : vector<8x2048xf32>
    %10 = tpu.matmul %4, %9, %cst_14 {dimension_numbers = #tpu.dot_dimension_numbers<[1], [0], [0], [1], [0, 0, 1, 1], [], []>} : vector<8x256xf32>, vector<256x2048xf32>, vector<8x2048xf32> -> vector<8x2048xf32>
    %c0_15 = arith.constant 0 : index
    %c0_16 = arith.constant 0 : index
    %11 = vector.load %arg7[%c0_15, %c0_16] : memref<256x2048xf32, #tpu.memory_space<vmem>>, vector<256x2048xf32>
    %cst_17 = arith.constant dense<0.000000e+00> : vector<8x2048xf32>
    %12 = tpu.matmul %6, %11, %cst_17 {dimension_numbers = #tpu.dot_dimension_numbers<[1], [0], [0], [1], [0, 0, 1, 1], [], []>} : vector<8x256xf32>, vector<256x2048xf32>, vector<8x2048xf32> -> vector<8x2048xf32>
    %13 = arith.mulf %10, %12 : vector<8x2048xf32>
    %c0_18 = arith.constant 0 : index
    %c0_19 = arith.constant 0 : index
    %14 = vector.load %arg8[%c0_18, %c0_19] : memref<2048x256xf32, #tpu.memory_space<vmem>>, vector<2048x256xf32>
    %cst_20 = arith.constant dense<0.000000e+00> : vector<8x256xf32>
    %15 = tpu.matmul %13, %14, %cst_20 {dimension_numbers = #tpu.dot_dimension_numbers<[1], [0], [0], [1], [0, 0, 1, 1], [], []>} : vector<8x2048xf32>, vector<2048x256xf32>, vector<8x256xf32> -> vector<8x256xf32>
    %cst_21 = arith.constant 8.000000e+00 : f32
    %16 = math.sqrt %cst_21 : f32
    %17 = vector.broadcast %16 : f32 to vector<8x256xf32>
    %18 = arith.divf %15, %17 : vector<8x256xf32>
    %cst_22 = arith.constant dense<0xFF800000> : vector<8xf32>
    %19 = vector.multi_reduction <maximumf>, %18, %cst_22 [1] : vector<8x256xf32> to vector<8xf32>
    %20 = vector.shape_cast %19 : vector<8xf32> to vector<8x1xf32>
    %21 = vector.broadcast %20 : vector<8x1xf32> to vector<8x256xf32>
    %22 = arith.subf %18, %21 : vector<8x256xf32>
    %23 = math.exp %22 : vector<8x256xf32>
    %c0_23 = arith.constant 0 : index
    %c0_24 = arith.constant 0 : index
    %24 = vector.load %arg9[%c0_23, %c0_24] : memref<256x256xf32, #tpu.memory_space<vmem>>, vector<256x256xf32>
    %cst_25 = arith.constant dense<0.000000e+00> : vector<8x256xf32>
    %25 = tpu.matmul %23, %24, %cst_25 {dimension_numbers = #tpu.dot_dimension_numbers<[1], [0], [0], [1], [0, 0, 1, 1], [], []>} : vector<8x256xf32>, vector<256x256xf32>, vector<8x256xf32> -> vector<8x256xf32>
    %26 = tpu.reciprocal %25 : vector<8x256xf32> -> vector<8x256xf32>
    %27 = arith.mulf %23, %26 : vector<8x256xf32>
    %c0_26 = arith.constant 0 : index
    %c0_27 = arith.constant 0 : index
    %28 = vector.load %arg6[%c0_26, %c0_27] : memref<256x2048xf32, #tpu.memory_space<vmem>>, vector<256x2048xf32>
    %cst_28 = arith.constant dense<0.000000e+00> : vector<8x2048xf32>
    %29 = tpu.matmul %27, %28, %cst_28 {dimension_numbers = #tpu.dot_dimension_numbers<[1], [0], [0], [1], [0, 0, 1, 1], [], []>} : vector<8x256xf32>, vector<256x2048xf32>, vector<8x2048xf32> -> vector<8x2048xf32>
    %c0_29 = arith.constant 0 : index
    %c0_30 = arith.constant 0 : index
    %30 = vector.load %arg7[%c0_29, %c0_30] : memref<256x2048xf32, #tpu.memory_space<vmem>>, vector<256x2048xf32>
    %cst_31 = arith.constant dense<0.000000e+00> : vector<8x2048xf32>
    %31 = tpu.matmul %8, %30, %cst_31 {dimension_numbers = #tpu.dot_dimension_numbers<[1], [0], [0], [1], [0, 0, 1, 1], [], []>} : vector<8x256xf32>, vector<256x2048xf32>, vector<8x2048xf32> -> vector<8x2048xf32>
    %32 = arith.mulf %29, %31 : vector<8x2048xf32>
    %c0_32 = arith.constant 0 : index
    %c0_33 = arith.constant 0 : index
    %33 = vector.load %arg8[%c0_32, %c0_33] : memref<2048x256xf32, #tpu.memory_space<vmem>>, vector<2048x256xf32>
    %cst_34 = arith.constant dense<0.000000e+00> : vector<8x256xf32>
    %34 = tpu.matmul %32, %33, %cst_34 {dimension_numbers = #tpu.dot_dimension_numbers<[1], [0], [0], [1], [0, 0, 1, 1], [], []>} : vector<8x2048xf32>, vector<2048x256xf32>, vector<8x256xf32> -> vector<8x256xf32>
    %c0_35 = arith.constant 0 : index
    %c0_36 = arith.constant 0 : index
    %35 = vector.load %arg10[%c0_35, %c0_36] : memref<256x256xf32, #tpu.memory_space<vmem>>, vector<256x256xf32>
    %cst_37 = arith.constant dense<0.000000e+00> : vector<8x256xf32>
    %36 = tpu.matmul %34, %35, %cst_37 {dimension_numbers = #tpu.dot_dimension_numbers<[1], [0], [0], [1], [0, 0, 1, 1], [], []>} : vector<8x256xf32>, vector<256x256xf32>, vector<8x256xf32> -> vector<8x256xf32>
    %37 = arith.addf %36, %0 : vector<8x256xf32>
    %c0_38 = arith.constant 0 : index
    %c0_39 = arith.constant 0 : index
    %38 = vector.load %arg11[%c0_38, %c0_39] : memref<256x256xf32, #tpu.memory_space<vmem>>, vector<256x256xf32>
    %cst_40 = arith.constant dense<0.000000e+00> : vector<8x256xf32>
    %39 = tpu.matmul %37, %38, %cst_40 {dimension_numbers = #tpu.dot_dimension_numbers<[1], [0], [0], [1], [0, 0, 1, 1], [], []>} : vector<8x256xf32>, vector<256x256xf32>, vector<8x256xf32> -> vector<8x256xf32>
    %40 = arith.subf %37, %39 : vector<8x256xf32>
    %41 = arith.mulf %40, %40 : vector<8x256xf32>
    %c0_41 = arith.constant 0 : index
    %c0_42 = arith.constant 0 : index
    %42 = vector.load %arg11[%c0_41, %c0_42] : memref<256x256xf32, #tpu.memory_space<vmem>>, vector<256x256xf32>
    %cst_43 = arith.constant dense<0.000000e+00> : vector<8x256xf32>
    %43 = tpu.matmul %41, %42, %cst_43 {dimension_numbers = #tpu.dot_dimension_numbers<[1], [0], [0], [1], [0, 0, 1, 1], [], []>} : vector<8x256xf32>, vector<256x256xf32>, vector<8x256xf32> -> vector<8x256xf32>
    %cst_44 = arith.constant 9.99999974E-6 : f32
    %44 = vector.broadcast %cst_44 : f32 to vector<8x256xf32>
    %45 = arith.addf %43, %44 : vector<8x256xf32>
    %46 = math.rsqrt %45 : vector<8x256xf32>
    %47 = arith.mulf %40, %46 : vector<8x256xf32>
    %c0_45 = arith.constant 0 : index
    %c0_46 = arith.constant 0 : index
    %48 = vector.load %arg16[%c0_45, %c0_46] : memref<1x256xf32, #tpu.memory_space<vmem>>, vector<1x256xf32>
    %49 = vector.broadcast %48 : vector<1x256xf32> to vector<8x256xf32>
    %50 = arith.mulf %47, %49 : vector<8x256xf32>
    %c0_47 = arith.constant 0 : index
    %c0_48 = arith.constant 0 : index
    %51 = vector.load %arg17[%c0_47, %c0_48] : memref<1x256xf32, #tpu.memory_space<vmem>>, vector<1x256xf32>
    %52 = vector.broadcast %51 : vector<1x256xf32> to vector<8x256xf32>
    %53 = arith.addf %50, %52 : vector<8x256xf32>
    %c0_49 = arith.constant 0 : index
    %c0_50 = arith.constant 0 : index
    %54 = vector.load %arg12[%c0_49, %c0_50] : memref<256x512xf32, #tpu.memory_space<vmem>>, vector<256x512xf32>
    %cst_51 = arith.constant dense<0.000000e+00> : vector<8x512xf32>
    %55 = tpu.matmul %53, %54, %cst_51 {dimension_numbers = #tpu.dot_dimension_numbers<[1], [0], [0], [1], [0, 0, 1, 1], [], []>} : vector<8x256xf32>, vector<256x512xf32>, vector<8x512xf32> -> vector<8x512xf32>
    %c0_52 = arith.constant 0 : index
    %c0_53 = arith.constant 0 : index
    %56 = vector.load %arg13[%c0_52, %c0_53] : memref<1x512xf32, #tpu.memory_space<vmem>>, vector<1x512xf32>
    %57 = vector.broadcast %56 : vector<1x512xf32> to vector<8x512xf32>
    %58 = arith.addf %55, %57 : vector<8x512xf32>
    %cst_54 = arith.constant 0.000000e+00 : f32
    %59 = vector.broadcast %cst_54 : f32 to vector<8x512xf32>
    %60 = arith.maximumf %58, %59 : vector<8x512xf32>
    %c0_55 = arith.constant 0 : index
    %c0_56 = arith.constant 0 : index
    %61 = vector.load %arg14[%c0_55, %c0_56] : memref<512x256xf32, #tpu.memory_space<vmem>>, vector<512x256xf32>
    %cst_57 = arith.constant dense<0.000000e+00> : vector<8x256xf32>
    %62 = tpu.matmul %60, %61, %cst_57 {dimension_numbers = #tpu.dot_dimension_numbers<[1], [0], [0], [1], [0, 0, 1, 1], [], []>} : vector<8x512xf32>, vector<512x256xf32>, vector<8x256xf32> -> vector<8x256xf32>
    %c0_58 = arith.constant 0 : index
    %c0_59 = arith.constant 0 : index
    %63 = vector.load %arg15[%c0_58, %c0_59] : memref<1x256xf32, #tpu.memory_space<vmem>>, vector<1x256xf32>
    %64 = vector.broadcast %63 : vector<1x256xf32> to vector<8x256xf32>
    %65 = arith.addf %62, %64 : vector<8x256xf32>
    %66 = arith.addf %65, %53 : vector<8x256xf32>
    %c0_60 = arith.constant 0 : index
    %c0_61 = arith.constant 0 : index
    %67 = vector.load %arg11[%c0_60, %c0_61] : memref<256x256xf32, #tpu.memory_space<vmem>>, vector<256x256xf32>
    %cst_62 = arith.constant dense<0.000000e+00> : vector<8x256xf32>
    %68 = tpu.matmul %66, %67, %cst_62 {dimension_numbers = #tpu.dot_dimension_numbers<[1], [0], [0], [1], [0, 0, 1, 1], [], []>} : vector<8x256xf32>, vector<256x256xf32>, vector<8x256xf32> -> vector<8x256xf32>
    %69 = arith.subf %66, %68 : vector<8x256xf32>
    %70 = arith.mulf %69, %69 : vector<8x256xf32>
    %c0_63 = arith.constant 0 : index
    %c0_64 = arith.constant 0 : index
    %71 = vector.load %arg11[%c0_63, %c0_64] : memref<256x256xf32, #tpu.memory_space<vmem>>, vector<256x256xf32>
    %cst_65 = arith.constant dense<0.000000e+00> : vector<8x256xf32>
    %72 = tpu.matmul %70, %71, %cst_65 {dimension_numbers = #tpu.dot_dimension_numbers<[1], [0], [0], [1], [0, 0, 1, 1], [], []>} : vector<8x256xf32>, vector<256x256xf32>, vector<8x256xf32> -> vector<8x256xf32>
    %cst_66 = arith.constant 9.99999974E-6 : f32
    %73 = vector.broadcast %cst_66 : f32 to vector<8x256xf32>
    %74 = arith.addf %72, %73 : vector<8x256xf32>
    %75 = math.rsqrt %74 : vector<8x256xf32>
    %76 = arith.mulf %69, %75 : vector<8x256xf32>
    %c0_67 = arith.constant 0 : index
    %c0_68 = arith.constant 0 : index
    %77 = vector.load %arg18[%c0_67, %c0_68] : memref<1x256xf32, #tpu.memory_space<vmem>>, vector<1x256xf32>
    %78 = vector.broadcast %77 : vector<1x256xf32> to vector<8x256xf32>
    %79 = arith.mulf %76, %78 : vector<8x256xf32>
    %c0_69 = arith.constant 0 : index
    %c0_70 = arith.constant 0 : index
    %80 = vector.load %arg19[%c0_69, %c0_70] : memref<1x256xf32, #tpu.memory_space<vmem>>, vector<1x256xf32>
    %81 = vector.broadcast %80 : vector<1x256xf32> to vector<8x256xf32>
    %82 = arith.addf %79, %81 : vector<8x256xf32>
    %c0_71 = arith.constant 0 : index
    %c0_72 = arith.constant 0 : index
    %83 = vector.load %arg20[%c0_71, %c0_72] : memref<8x256xf32, #tpu.memory_space<vmem>>, vector<8x256xf32>
    tpu.vector_store %arg20[%c0_71, %c0_72], %82 {strides = array<i32>} : memref<8x256xf32, #tpu.memory_space<vmem>>, vector<8x256xf32>,
    return
  }
  func.func @transform_0(%arg0: i32) -> (i32, i32) {
    %c0_i32 = arith.constant 0 : i32
    %c0_i32_0 = arith.constant 0 : i32
    return %arg0, %c0_i32 : i32, i32
  }
  func.func @transform_1(%arg0: i32) -> (i32, i32) {
    %c0_i32 = arith.constant 0 : i32
    %c0_i32_0 = arith.constant 0 : i32
    %c0_i32_1 = arith.constant 0 : i32
    return %c0_i32, %c0_i32_0 : i32, i32
  }
  func.func @transform_2(%arg0: i32) -> (i32, i32) {
    %c0_i32 = arith.constant 0 : i32
    %c0_i32_0 = arith.constant 0 : i32
    %c0_i32_1 = arith.constant 0 : i32
    return %c0_i32, %c0_i32_0 : i32, i32
  }
  func.func @transform_3(%arg0: i32) -> (i32, i32) {
    %c0_i32 = arith.constant 0 : i32
    %c0_i32_0 = arith.constant 0 : i32
    %c0_i32_1 = arith.constant 0 : i32
    return %c0_i32, %c0_i32_0 : i32, i32
  }
  func.func @transform_4(%arg0: i32) -> (i32, i32) {
    %c0_i32 = arith.constant 0 : i32
    %c0_i32_0 = arith.constant 0 : i32
    %c0_i32_1 = arith.constant 0 : i32
    return %c0_i32, %c0_i32_0 : i32, i32
  }
  func.func @transform_5(%arg0: i32) -> (i32, i32) {
    %c0_i32 = arith.constant 0 : i32
    %c0_i32_0 = arith.constant 0 : i32
    %c0_i32_1 = arith.constant 0 : i32
    return %c0_i32, %c0_i32_0 : i32, i32
  }
  func.func @transform_6(%arg0: i32) -> (i32, i32) {
    %c0_i32 = arith.constant 0 : i32
    %c0_i32_0 = arith.constant 0 : i32
    %c0_i32_1 = arith.constant 0 : i32
    return %c0_i32, %c0_i32_0 : i32, i32
  }
  func.func @transform_7(%arg0: i32) -> (i32, i32) {
    %c0_i32 = arith.constant 0 : i32
    %c0_i32_0 = arith.constant 0 : i32
    %c0_i32_1 = arith.constant 0 : i32
    return %c0_i32, %c0_i32_0 : i32, i32
  }
  func.func @transform_8(%arg0: i32) -> (i32, i32) {
    %c0_i32 = arith.constant 0 : i32
    %c0_i32_0 = arith.constant 0 : i32
    %c0_i32_1 = arith.constant 0 : i32
    return %c0_i32, %c0_i32_0 : i32, i32
  }
  func.func @transform_9(%arg0: i32) -> (i32, i32) {
    %c0_i32 = arith.constant 0 : i32
    %c0_i32_0 = arith.constant 0 : i32
    %c0_i32_1 = arith.constant 0 : i32
    return %c0_i32, %c0_i32_0 : i32, i32
  }
  func.func @transform_10(%arg0: i32) -> (i32, i32) {
    %c0_i32 = arith.constant 0 : i32
    %c0_i32_0 = arith.constant 0 : i32
    %c0_i32_1 = arith.constant 0 : i32
    return %c0_i32, %c0_i32_0 : i32, i32
  }
  func.func @transform_11(%arg0: i32) -> (i32, i32) {
    %c0_i32 = arith.constant 0 : i32
    %c0_i32_0 = arith.constant 0 : i32
    %c0_i32_1 = arith.constant 0 : i32
    return %c0_i32, %c0_i32_0 : i32, i32
  }
  func.func @transform_12(%arg0: i32) -> (i32, i32) {
    %c0_i32 = arith.constant 0 : i32
    %c0_i32_0 = arith.constant 0 : i32
    %c0_i32_1 = arith.constant 0 : i32
    return %c0_i32, %c0_i32_0 : i32, i32
  }
  func.func @transform_13(%arg0: i32) -> (i32, i32) {
    %c0_i32 = arith.constant 0 : i32
    %c0_i32_0 = arith.constant 0 : i32
    %c0_i32_1 = arith.constant 0 : i32
    return %c0_i32, %c0_i32_0 : i32, i32
  }
  func.func @transform_14(%arg0: i32) -> (i32, i32) {
    %c0_i32 = arith.constant 0 : i32
    %c0_i32_0 = arith.constant 0 : i32
    %c0_i32_1 = arith.constant 0 : i32
    return %c0_i32, %c0_i32_0 : i32, i32
  }
  func.func @transform_15(%arg0: i32) -> (i32, i32) {
    %c0_i32 = arith.constant 0 : i32
    %c0_i32_0 = arith.constant 0 : i32
    %c0_i32_1 = arith.constant 0 : i32
    return %c0_i32, %c0_i32_0 : i32, i32
  }
  func.func @transform_16(%arg0: i32) -> (i32, i32) {
    %c0_i32 = arith.constant 0 : i32
    %c0_i32_0 = arith.constant 0 : i32
    %c0_i32_1 = arith.constant 0 : i32
    return %c0_i32, %c0_i32_0 : i32, i32
  }
  func.func @transform_17(%arg0: i32) -> (i32, i32) {
    %c0_i32 = arith.constant 0 : i32
    %c0_i32_0 = arith.constant 0 : i32
    %c0_i32_1 = arith.constant 0 : i32
    return %c0_i32, %c0_i32_0 : i32, i32
  }
  func.func @transform_18(%arg0: i32) -> (i32, i32) {
    %c0_i32 = arith.constant 0 : i32
    %c0_i32_0 = arith.constant 0 : i32
    %c0_i32_1 = arith.constant 0 : i32
    return %c0_i32, %c0_i32_0 : i32, i32
  }
  func.func @transform_19(%arg0: i32) -> (i32, i32) {
    %c0_i32 = arith.constant 0 : i32
    %c0_i32_0 = arith.constant 0 : i32
    return %arg0, %c0_i32 : i32, i32
  }
}

</mosaic_0001>

<llo_original>
// kernel: tpu_custom_call.1
$region0: #{tpu_custom_call.1}
  #allocation0 [shape = 'u32[]', space=smem, size = 0x4, offset = 0x4, fixed_abs, tag = 'smem constant byte address 0x4 - core index']
  #allocation1 [shape = 'u32[144,128]{1,0:T(1,128)}', space=vmem, size = 0x12000, scoped, tag = 'internal scratch']
  %s0 = inlined_call_operand.hbm [shape: f32[16,256], index: 0, kind: input, shape index: {}]
  %s1 = inlined_call_operand.hbm [shape: f32[256,512], index: 1, kind: input, shape index: {}]
  %s2 = inlined_call_operand.hbm [shape: f32[512,256], index: 2, kind: input, shape index: {}]
  %s3 = inlined_call_operand.hbm [shape: f32[512,256], index: 3, kind: input, shape index: {}]
  %s4 = inlined_call_operand.hbm [shape: f32[512,256], index: 4, kind: input, shape index: {}]
  %s5 = inlined_call_operand.hbm [shape: f32[256,2048], index: 5, kind: input, shape index: {}]
  %s6 = inlined_call_operand.hbm [shape: f32[256,2048], index: 6, kind: input, shape index: {}]
  %s7 = inlined_call_operand.hbm [shape: f32[2048,256], index: 7, kind: input, shape index: {}]
  %s8 = inlined_call_operand.hbm [shape: f32[256,256], index: 8, kind: input, shape index: {}]
  %s9 = inlined_call_operand.hbm [shape: f32[256,256], index: 9, kind: input, shape index: {}]
  %s10 = inlined_call_operand.hbm [shape: f32[256,256], index: 10, kind: input, shape index: {}]
  %s11 = inlined_call_operand.hbm [shape: f32[256,512], index: 11, kind: input, shape index: {}]
  %s12 = inlined_call_operand.hbm [shape: f32[1,512], index: 12, kind: input, shape index: {}]
  %s13 = inlined_call_operand.hbm [shape: f32[512,256], index: 13, kind: input, shape index: {}]
  %s14 = inlined_call_operand.hbm [shape: f32[1,256], index: 14, kind: input, shape index: {}]
  %s15 = inlined_call_operand.hbm [shape: f32[1,256], index: 15, kind: input, shape index: {}]
  %s16 = inlined_call_operand.hbm [shape: f32[1,256], index: 16, kind: input, shape index: {}]
  %s17 = inlined_call_operand.hbm [shape: f32[1,256], index: 17, kind: input, shape index: {}]
  %s18 = inlined_call_operand.hbm [shape: f32[1,256], index: 18, kind: input, shape index: {}]
  %s19 = inlined_call_operand.hbm [shape: f32[16,256], index: 19, kind: output, shape index: {}]
  %s20 = sld [smem:[#allocation0]]
  $region185: #{tpu_custom_call.1} parent=0
    _
  %s22 = ssub.s32 1, %s20
  %s23 = scalar_select 0, %s22, %s20
  $region1: #{tpu_custom_call.1} parent=0
    #allocation2 [shape = 'u8[16384]{0}', space=vmem, size = 0x4000, scoped, tag = 'input window, operand 0']
    #allocation3 [shape = 's32[2]{0}', space=sflag, size = 0x8, scoped, tag = 'scoped memory for tpu_custom_call.1']
    #allocation4 [shape = 's32[2]{0}', space=sflag, size = 0x8, scoped, tag = 'scoped memory for tpu_custom_call.1']
    #allocation5 [shape = 'u8[524288]{0}', space=vmem, size = 0x80000, scoped, tag = 'input window, operand 1, single buffered']
    #allocation6 [shape = 's32[1]{0}', space=sflag, size = 0x4, scoped, tag = 'scoped memory for tpu_custom_call.1']
    #allocation7 [shape = 'u8[524288]{0}', space=vmem, size = 0x80000, scoped, tag = 'input window, operand 2, single buffered']
    #allocation8 [shape = 'u8[524288]{0}', space=vmem, size = 0x80000, scoped, tag = 'input window, operand 3, single buffered']
    #allocation9 [shape = 's32[1]{0}', space=sflag, size = 0x4, scoped, tag = 'scoped memory for tpu_custom_call.1']
    #allocation10 [shape = 'u8[524288]{0}', space=vmem, size = 0x80000, scoped, tag = 'input window, operand 4, single buffered']
    #allocation11 [shape = 'u8[2097152]{0}', space=vmem, size = 0x200000, scoped, tag = 'input window, operand 5, single buffered']
    #allocation12 [shape = 's32[1]{0}', space=sflag, size = 0x4, scoped, tag = 'scoped memory for tpu_custom_call.1']
    #allocation13 [shape = 'u8[2097152]{0}', space=vmem, size = 0x200000, scoped, tag = 'input window, operand 6, single buffered']
    #allocation14 [shape = 'u8[2097152]{0}', space=vmem, size = 0x200000, scoped, tag = 'input window, operand 7, single buffered']
    #allocation15 [shape = 's32[1]{0}', space=sflag, size = 0x4, scoped, tag = 'scoped memory for tpu_custom_call.1']
    #allocation16 [shape = 'u8[262144]{0}', space=vmem, size = 0x40000, scoped, tag = 'input window, operand 8, single buffered']
    #allocation17 [shape = 'u8[262144]{0}', space=vmem, size = 0x40000, scoped, tag = 'input window, operand 9, single buffered']
    #allocation18 [shape = 's32[1]{0}', space=sflag, size = 0x4, scoped, tag = 'scoped memory for tpu_custom_call.1']
    #allocation19 [shape = 'u8[262144]{0}', space=vmem, size = 0x40000, scoped, tag = 'input window, operand 10, single buffered']
    #allocation20 [shape = 'u8[524288]{0}', space=vmem, size = 0x80000, scoped, tag = 'input window, operand 11, single buffered']
    #allocation21 [shape = 's32[1]{0}', space=sflag, size = 0x4, scoped, tag = 'scoped memory for tpu_custom_call.1']
    #allocation22 [shape = 'u8[2048]{0}', space=vmem, size = 0x800, scoped, tag = 'input window, operand 12, single buffered']
    #allocation23 [shape = 'u8[524288]{0}', space=vmem, size = 0x80000, scoped, tag = 'input window, operand 13, single buffered']
    #allocation24 [shape = 's32[1]{0}', space=sflag, size = 0x4, scoped, tag = 'scoped memory for tpu_custom_call.1']
    #allocation25 [shape = 'u8[1024]{0}', space=vmem, size = 0x400, scoped, tag = 'input window, operand 14, single buffered']
    #allocation26 [shape = 'u8[1024]{0}', space=vmem, size = 0x400, scoped, tag = 'input window, operand 15, single buffered']
    #allocation27 [shape = 's32[1]{0}', space=sflag, size = 0x4, scoped, tag = 'scoped memory for tpu_custom_call.1']
    #allocation28 [shape = 'u8[1024]{0}', space=vmem, size = 0x400, scoped, tag = 'input window, operand 16, single buffered']
    #allocation29 [shape = 'u8[1024]{0}', space=vmem, size = 0x400, scoped, tag = 'input window, operand 17, single buffered']
    #allocation30 [shape = 's32[1]{0}', space=sflag, size = 0x4, scoped, tag = 'scoped memory for tpu_custom_call.1']
    #allocation31 [shape = 'u8[1024]{0}', space=vmem, size = 0x400, scoped, tag = 'input window, operand 18, single buffered']
    #allocation32 [shape = 'u8[16384]{0}', space=vmem, size = 0x4000, scoped, tag = 'output window, operand 0']
    %24 = vsyncpa [#allocation3], 0
    %s25 = scalar_lea.sflag [#allocation3], 1
    %26 = vsyncpa %s25, 0
    %27 = vsyncpa [#allocation6], 0
    %28 = vsyncpa [#allocation9], 0
    %29 = vsyncpa [#allocation12], 0
    %30 = vsyncpa [#allocation15], 0
    %31 = vsyncpa [#allocation18], 0
    %32 = vsyncpa [#allocation21], 0
    %33 = vsyncpa [#allocation24], 0
    %34 = vsyncpa [#allocation27], 0
    %35 = vsyncpa [#allocation30], 0
    %36 = vsyncpa [#allocation4], 0
    %s37 = scalar_lea.sflag [#allocation4], 1
    %38 = vsyncpa %s37, 0
    loop: start=0, step=1, limit=4
    $region2: #{tpu_custom_call.1} parent=1 // loop_pre_header
      _
    $region3: #{tpu_custom_call.1} parent=1 // loop_header
      %s40 = sphi 0, %s44
      %p41 = scmp.ge.s32.totalorder %s40, 4
      %s50 = sphi 0, %s52
      %s53 = sphi 0, %s50
      %s54 = sphi 0, %s53
      %s70 = sphi 0, %s54
      %s74 = sphi 0, %s74
      %s76 = sphi 0, %s74
      %s77 = sphi 0, %s76
      %s91 = sphi 0, %s77
      %s95 = sphi 0, %s95
      %s97 = sphi 0, %s95
      %s98 = sphi 0, %s97
      %s112 = sphi 0, %s98
      %s116 = sphi 0, %s116
      %s118 = sphi 0, %s116
      %s119 = sphi 0, %s118
      %s133 = sphi 0, %s119
      %s137 = sphi 0, %s137
      %s139 = sphi 0, %s137
      %s140 = sphi 0, %s139
      %s154 = sphi 0, %s140
      %s158 = sphi 0, %s158
      %s160 = sphi 0, %s158
      %s161 = sphi 0, %s160
      %s175 = sphi 0, %s161
      %s179 = sphi 0, %s179
      %s181 = sphi 0, %s179
      %s182 = sphi 0, %s181
      %s196 = sphi 0, %s182
      %s200 = sphi 0, %s200
      %s202 = sphi 0, %s200
      %s203 = sphi 0, %s202
      %s217 = sphi 0, %s203
      %s221 = sphi 0, %s221
      %s223 = sphi 0, %s221
      %s224 = sphi 0, %s223
      %s238 = sphi 0, %s224
      %s242 = sphi 0, %s242
      %s244 = sphi 0, %s242
      %s245 = sphi 0, %s244
      %s259 = sphi 0, %s245
      %s263 = sphi 0, %s263
      %s265 = sphi 0, %s263
      %s266 = sphi 0, %s265
      %s280 = sphi 0, %s266
      %s284 = sphi 0, %s284
      %s286 = sphi 0, %s284
      %s287 = sphi 0, %s286
      %s301 = sphi 0, %s287
      %s305 = sphi 0, %s305
      %s307 = sphi 0, %s305
      %s308 = sphi 0, %s307
      %s322 = sphi 0, %s308
      %s326 = sphi 0, %s326
      %s328 = sphi 0, %s326
      %s329 = sphi 0, %s328
      %s343 = sphi 0, %s329
      %s347 = sphi 0, %s347
      %s349 = sphi 0, %s347
      %s350 = sphi 0, %s349
      %s364 = sphi 0, %s350
      %s368 = sphi 0, %s368
      %s370 = sphi 0, %s368
      %s371 = sphi 0, %s370
      %s385 = sphi 0, %s371
      %s389 = sphi 0, %s389
      %s391 = sphi 0, %s389
      %s392 = sphi 0, %s391
      %s406 = sphi 0, %s392
      %s410 = sphi 0, %s410
      %s412 = sphi 0, %s410
      %s413 = sphi 0, %s412
      %s427 = sphi 0, %s413
      %s431 = sphi 0, %s431
      %s433 = sphi 0, %s431
      %s434 = sphi 0, %s433
      %s448 = sphi 0, %s434
      %s454 = sphi 0, %s456
      %s457 = sphi 0, %s454
      %s458 = sphi 0, %s457
      %s474 = sphi 0, %s458
    $region4: #{tpu_custom_call.1} parent=1 // loop_header_branch
      %43 = sbr.rel (%p41) target = $region8
    $region5: #{tpu_custom_call.1} parent=1 // loop_body
      %s45 = ssub.s32 %s40, 1
      %s46 = ssub.s32 %s40, 2
      %s47 = sadd.s32 %s40, 1
      %s48 = ssub.s32 %s40, %s47
      %p49 = scmp.eq.s32.totalorder %s48, 0
      %s51 = sadd.s32 %s50, 1
      %s52 = scalar_select %p49, %s50, %s51
      %p55 = pneg %p49
      %p56 = scmp.eq.s32.totalorder %s40, 1
      %p57 = por %p55, %p56
      %p58 = scmp.ne.s32.totalorder %s50, %s53
      %p59 = scmp.eq.s32.totalorder %s40, 0
      %p60 = por %p58, %p59
      %p61 = scmp.ne.s32.totalorder %s50, %s53
      %p62 = scmp.eq.s32.totalorder %s45, 1
      %p63 = por %p61, %p62
      %p64 = scmp.ne.s32.totalorder %s53, %s54
      %p65 = scmp.eq.s32.totalorder %s45, 0
      %p66 = por %p64, %p65
      %p67 = scmp.ne.s32.totalorder %s53, %s54
      %p68 = scmp.eq.s32.totalorder %s46, 1
      %p69 = por %p67, %p68
      %p71 = scmp.ne.s32.totalorder %s54, %s70
      %p72 = scmp.eq.s32.totalorder %s46, 0
      %p73 = por %p71, %p72
      %s75 = sadd.s32 %s74, 1
      %p78 = scmp.eq.s32.totalorder %s40, 1
      %p79 = scmp.ne.s32.totalorder %s74, %s76
      %p80 = scmp.eq.s32.totalorder %s40, 0
      %p81 = por %p79, %p80
      %p82 = scmp.ne.s32.totalorder %s74, %s76
      %p83 = scmp.eq.s32.totalorder %s45, 1
      %p84 = por %p82, %p83
      %p85 = scmp.ne.s32.totalorder %s76, %s77
      %p86 = scmp.eq.s32.totalorder %s45, 0
      %p87 = por %p85, %p86
      %p88 = scmp.ne.s32.totalorder %s76, %s77
      %p89 = scmp.eq.s32.totalorder %s46, 1
      %p90 = por %p88, %p89
      %p92 = scmp.ne.s32.totalorder %s77, %s91
      %p93 = scmp.eq.s32.totalorder %s46, 0
      %p94 = por %p92, %p93
      %s96 = sadd.s32 %s95, 1
      %p99 = scmp.eq.s32.totalorder %s40, 1
      %p100 = scmp.ne.s32.totalorder %s95, %s97
      %p101 = scmp.eq.s32.totalorder %s40, 0
      %p102 = por %p100, %p101
      %p103 = scmp.ne.s32.totalorder %s95, %s97
      %p104 = scmp.eq.s32.totalorder %s45, 1
      %p105 = por %p103, %p104
      %p106 = scmp.ne.s32.totalorder %s97, %s98
      %p107 = scmp.eq.s32.totalorder %s45, 0
      %p108 = por %p106, %p107
      %p109 = scmp.ne.s32.totalorder %s97, %s98
      %p110 = scmp.eq.s32.totalorder %s46, 1
      %p111 = por %p109, %p110
      %p113 = scmp.ne.s32.totalorder %s98, %s112
      %p114 = scmp.eq.s32.totalorder %s46, 0
      %p115 = por %p113, %p114
      %s117 = sadd.s32 %s116, 1
      %p120 = scmp.eq.s32.totalorder %s40, 1
      %p121 = scmp.ne.s32.totalorder %s116, %s118
      %p122 = scmp.eq.s32.totalorder %s40, 0
      %p123 = por %p121, %p122
      %p124 = scmp.ne.s32.totalorder %s116, %s118
      %p125 = scmp.eq.s32.totalorder %s45, 1
      %p126 = por %p124, %p125
      %p127 = scmp.ne.s32.totalorder %s118, %s119
      %p128 = scmp.eq.s32.totalorder %s45, 0
      %p129 = por %p127, %p128
      %p130 = scmp.ne.s32.totalorder %s118, %s119
      %p131 = scmp.eq.s32.totalorder %s46, 1
      %p132 = por %p130, %p131
      %p134 = scmp.ne.s32.totalorder %s119, %s133
      %p135 = scmp.eq.s32.totalorder %s46, 0
      %p136 = por %p134, %p135
      %s138 = sadd.s32 %s137, 1
      %p141 = scmp.eq.s32.totalorder %s40, 1
      %p142 = scmp.ne.s32.totalorder %s137, %s139
      %p143 = scmp.eq.s32.totalorder %s40, 0
      %p144 = por %p142, %p143
      %p145 = scmp.ne.s32.totalorder %s137, %s139
      %p146 = scmp.eq.s32.totalorder %s45, 1
      %p147 = por %p145, %p146
      %p148 = scmp.ne.s32.totalorder %s139, %s140
      %p149 = scmp.eq.s32.totalorder %s45, 0
      %p150 = por %p148, %p149
      %p151 = scmp.ne.s32.totalorder %s139, %s140
      %p152 = scmp.eq.s32.totalorder %s46, 1
      %p153 = por %p151, %p152
      %p155 = scmp.ne.s32.totalorder %s140, %s154
      %p156 = scmp.eq.s32.totalorder %s46, 0
      %p157 = por %p155, %p156
      %s159 = sadd.s32 %s158, 1
      %p162 = scmp.eq.s32.totalorder %s40, 1
      %p163 = scmp.ne.s32.totalorder %s158, %s160
      %p164 = scmp.eq.s32.totalorder %s40, 0
      %p165 = por %p163, %p164
      %p166 = scmp.ne.s32.totalorder %s158, %s160
      %p167 = scmp.eq.s32.totalorder %s45, 1
      %p168 = por %p166, %p167
      %p169 = scmp.ne.s32.totalorder %s160, %s161
      %p170 = scmp.eq.s32.totalorder %s45, 0
      %p171 = por %p169, %p170
      %p172 = scmp.ne.s32.totalorder %s160, %s161
      %p173 = scmp.eq.s32.totalorder %s46, 1
      %p174 = por %p172, %p173
      %p176 = scmp.ne.s32.totalorder %s161, %s175
      %p177 = scmp.eq.s32.totalorder %s46, 0
      %p178 = por %p176, %p177
      %s180 = sadd.s32 %s179, 1
      %p183 = scmp.eq.s32.totalorder %s40, 1
      %p184 = scmp.ne.s32.totalorder %s179, %s181
      %p185 = scmp.eq.s32.totalorder %s40, 0
      %p186 = por %p184, %p185
      %p187 = scmp.ne.s32.totalorder %s179, %s181
      %p188 = scmp.eq.s32.totalorder %s45, 1
      %p189 = por %p187, %p188
      %p190 = scmp.ne.s32.totalorder %s181, %s182
      %p191 = scmp.eq.s32.totalorder %s45, 0
      %p192 = por %p190, %p191
      %p193 = scmp.ne.s32.totalorder %s181, %s182
      %p194 = scmp.eq.s32.totalorder %s46, 1
      %p195 = por %p193, %p194
      %p197 = scmp.ne.s32.totalorder %s182, %s196
      %p198 = scmp.eq.s32.totalorder %s46, 0
      %p199 = por %p197, %p198
      %s201 = sadd.s32 %s200, 1
      %p204 = scmp.eq.s32.totalorder %s40, 1
      %p205 = scmp.ne.s32.totalorder %s200, %s202
      %p206 = scmp.eq.s32.totalorder %s40, 0
      %p207 = por %p205, %p206
      %p208 = scmp.ne.s32.totalorder %s200, %s202
      %p209 = scmp.eq.s32.totalorder %s45, 1
      %p210 = por %p208, %p209
      %p211 = scmp.ne.s32.totalorder %s202, %s203
      %p212 = scmp.eq.s32.totalorder %s45, 0
      %p213 = por %p211, %p212
      %p214 = scmp.ne.s32.totalorder %s202, %s203
      %p215 = scmp.eq.s32.totalorder %s46, 1
      %p216 = por %p214, %p215
      %p218 = scmp.ne.s32.totalorder %s203, %s217
      %p219 = scmp.eq.s32.totalorder %s46, 0
      %p220 = por %p218, %p219
      %s222 = sadd.s32 %s221, 1
      %p225 = scmp.eq.s32.totalorder %s40, 1
      %p226 = scmp.ne.s32.totalorder %s221, %s223
      %p227 = scmp.eq.s32.totalorder %s40, 0
      %p228 = por %p226, %p227
      %p229 = scmp.ne.s32.totalorder %s221, %s223
      %p230 = scmp.eq.s32.totalorder %s45, 1
      %p231 = por %p229, %p230
      %p232 = scmp.ne.s32.totalorder %s223, %s224
      %p233 = scmp.eq.s32.totalorder %s45, 0
      %p234 = por %p232, %p233
      %p235 = scmp.ne.s32.totalorder %s223, %s224
      %p236 = scmp.eq.s32.totalorder %s46, 1
      %p237 = por %p235, %p236
      %p239 = scmp.ne.s32.totalorder %s224, %s238
      %p240 = scmp.eq.s32.totalorder %s46, 0
      %p241 = por %p239, %p240
      %s243 = sadd.s32 %s242, 1
      %p246 = scmp.eq.s32.totalorder %s40, 1
      %p247 = scmp.ne.s32.totalorder %s242, %s244
      %p248 = scmp.eq.s32.totalorder %s40, 0
      %p249 = por %p247, %p248
      %p250 = scmp.ne.s32.totalorder %s242, %s244
      %p251 = scmp.eq.s32.totalorder %s45, 1
      %p252 = por %p250, %p251
      %p253 = scmp.ne.s32.totalorder %s244, %s245
      %p254 = scmp.eq.s32.totalorder %s45, 0
      %p255 = por %p253, %p254
      %p256 = scmp.ne.s32.totalorder %s244, %s245
      %p257 = scmp.eq.s32.totalorder %s46, 1
      %p258 = por %p256, %p257
      %p260 = scmp.ne.s32.totalorder %s245, %s259
      %p261 = scmp.eq.s32.totalorder %s46, 0
      %p262 = por %p260, %p261
      %s264 = sadd.s32 %s263, 1
      %p267 = scmp.eq.s32.totalorder %s40, 1
      %p268 = scmp.ne.s32.totalorder %s263, %s265
      %p269 = scmp.eq.s32.totalorder %s40, 0
      %p270 = por %p268, %p269
      %p271 = scmp.ne.s32.totalorder %s263, %s265
      %p272 = scmp.eq.s32.totalorder %s45, 1
      %p273 = por %p271, %p272
      %p274 = scmp.ne.s32.totalorder %s265, %s266
      %p275 = scmp.eq.s32.totalorder %s45, 0
      %p276 = por %p274, %p275
      %p277 = scmp.ne.s32.totalorder %s265, %s266
      %p278 = scmp.eq.s32.totalorder %s46, 1
      %p279 = por %p277, %p278
      %p281 = scmp.ne.s32.totalorder %s266, %s280
      %p282 = scmp.eq.s32.totalorder %s46, 0
      %p283 = por %p281, %p282
      %s285 = sadd.s32 %s284, 1
      %p288 = scmp.eq.s32.totalorder %s40, 1
      %p289 = scmp.ne.s32.totalorder %s284, %s286
      %p290 = scmp.eq.s32.totalorder %s40, 0
      %p291 = por %p289, %p290
      %p292 = scmp.ne.s32.totalorder %s284, %s286
      %p293 = scmp.eq.s32.totalorder %s45, 1
      %p294 = por %p292, %p293
      %p295 = scmp.ne.s32.totalorder %s286, %s287
      %p296 = scmp.eq.s32.totalorder %s45, 0
      %p297 = por %p295, %p296
      %p298 = scmp.ne.s32.totalorder %s286, %s287
      %p299 = scmp.eq.s32.totalorder %s46, 1
      %p300 = por %p298, %p299
      %p302 = scmp.ne.s32.totalorder %s287, %s301
      %p303 = scmp.eq.s32.totalorder %s46, 0
      %p304 = por %p302, %p303
      %s306 = sadd.s32 %s305, 1
      %p309 = scmp.eq.s32.totalorder %s40, 1
      %p310 = scmp.ne.s32.totalorder %s305, %s307
      %p311 = scmp.eq.s32.totalorder %s40, 0
      %p312 = por %p310, %p311
      %p313 = scmp.ne.s32.totalorder %s305, %s307
      %p314 = scmp.eq.s32.totalorder %s45, 1
      %p315 = por %p313, %p314
      %p316 = scmp.ne.s32.totalorder %s307, %s308
      %p317 = scmp.eq.s32.totalorder %s45, 0
      %p318 = por %p316, %p317
      %p319 = scmp.ne.s32.totalorder %s307, %s308
      %p320 = scmp.eq.s32.totalorder %s46, 1
      %p321 = por %p319, %p320
      %p323 = scmp.ne.s32.totalorder %s308, %s322
      %p324 = scmp.eq.s32.totalorder %s46, 0
      %p325 = por %p323, %p324
      %s327 = sadd.s32 %s326, 1
      %p330 = scmp.eq.s32.totalorder %s40, 1
      %p331 = scmp.ne.s32.totalorder %s326, %s328
      %p332 = scmp.eq.s32.totalorder %s40, 0
      %p333 = por %p331, %p332
      %p334 = scmp.ne.s32.totalorder %s326, %s328
      %p335 = scmp.eq.s32.totalorder %s45, 1
      %p336 = por %p334, %p335
      %p337 = scmp.ne.s32.totalorder %s328, %s329
      %p338 = scmp.eq.s32.totalorder %s45, 0
      %p339 = por %p337, %p338
      %p340 = scmp.ne.s32.totalorder %s328, %s329
      %p341 = scmp.eq.s32.totalorder %s46, 1
      %p342 = por %p340, %p341
      %p344 = scmp.ne.s32.totalorder %s329, %s343
      %p345 = scmp.eq.s32.totalorder %s46, 0
      %p346 = por %p344, %p345
      %s348 = sadd.s32 %s347, 1
      %p351 = scmp.eq.s32.totalorder %s40, 1
      %p352 = scmp.ne.s32.totalorder %s347, %s349
      %p353 = scmp.eq.s32.totalorder %s40, 0
      %p354 = por %p352, %p353
      %p355 = scmp.ne.s32.totalorder %s347, %s349
      %p356 = scmp.eq.s32.totalorder %s45, 1
      %p357 = por %p355, %p356
      %p358 = scmp.ne.s32.totalorder %s349, %s350
      %p359 = scmp.eq.s32.totalorder %s45, 0
      %p360 = por %p358, %p359
      %p361 = scmp.ne.s32.totalorder %s349, %s350
      %p362 = scmp.eq.s32.totalorder %s46, 1
      %p363 = por %p361, %p362
      %p365 = scmp.ne.s32.totalorder %s350, %s364
      %p366 = scmp.eq.s32.totalorder %s46, 0
      %p367 = por %p365, %p366
      %s369 = sadd.s32 %s368, 1
      %p372 = scmp.eq.s32.totalorder %s40, 1
      %p373 = scmp.ne.s32.totalorder %s368, %s370
      %p374 = scmp.eq.s32.totalorder %s40, 0
      %p375 = por %p373, %p374
      %p376 = scmp.ne.s32.totalorder %s368, %s370
      %p377 = scmp.eq.s32.totalorder %s45, 1
      %p378 = por %p376, %p377
      %p379 = scmp.ne.s32.totalorder %s370, %s371
      %p380 = scmp.eq.s32.totalorder %s45, 0
      %p381 = por %p379, %p380
      %p382 = scmp.ne.s32.totalorder %s370, %s371
      %p383 = scmp.eq.s32.totalorder %s46, 1
      %p384 = por %p382, %p383
      %p386 = scmp.ne.s32.totalorder %s371, %s385
      %p387 = scmp.eq.s32.totalorder %s46, 0
      %p388 = por %p386, %p387
      %s390 = sadd.s32 %s389, 1
      %p393 = scmp.eq.s32.totalorder %s40, 1
      %p394 = scmp.ne.s32.totalorder %s389, %s391
      %p395 = scmp.eq.s32.totalorder %s40, 0
      %p396 = por %p394, %p395
      %p397 = scmp.ne.s32.totalorder %s389, %s391
      %p398 = scmp.eq.s32.totalorder %s45, 1
      %p399 = por %p397, %p398
      %p400 = scmp.ne.s32.totalorder %s391, %s392
      %p401 = scmp.eq.s32.totalorder %s45, 0
      %p402 = por %p400, %p401
      %p403 = scmp.ne.s32.totalorder %s391, %s392
      %p404 = scmp.eq.s32.totalorder %s46, 1
      %p405 = por %p403, %p404
      %p407 = scmp.ne.s32.totalorder %s392, %s406
      %p408 = scmp.eq.s32.totalorder %s46, 0
      %p409 = por %p407, %p408
      %s411 = sadd.s32 %s410, 1
      %p414 = scmp.eq.s32.totalorder %s40, 1
      %p415 = scmp.ne.s32.totalorder %s410, %s412
      %p416 = scmp.eq.s32.totalorder %s40, 0
      %p417 = por %p415, %p416
      %p418 = scmp.ne.s32.totalorder %s410, %s412
      %p419 = scmp.eq.s32.totalorder %s45, 1
      %p420 = por %p418, %p419
      %p421 = scmp.ne.s32.totalorder %s412, %s413
      %p422 = scmp.eq.s32.totalorder %s45, 0
      %p423 = por %p421, %p422
      %p424 = scmp.ne.s32.totalorder %s412, %s413
      %p425 = scmp.eq.s32.totalorder %s46, 1
      %p426 = por %p424, %p425
      %p428 = scmp.ne.s32.totalorder %s413, %s427
      %p429 = scmp.eq.s32.totalorder %s46, 0
      %p430 = por %p428, %p429
      %s432 = sadd.s32 %s431, 1
      %p435 = scmp.eq.s32.totalorder %s40, 1
      %p436 = scmp.ne.s32.totalorder %s431, %s433
      %p437 = scmp.eq.s32.totalorder %s40, 0
      %p438 = por %p436, %p437
      %p439 = scmp.ne.s32.totalorder %s431, %s433
      %p440 = scmp.eq.s32.totalorder %s45, 1
      %p441 = por %p439, %p440
      %p442 = scmp.ne.s32.totalorder %s433, %s434
      %p443 = scmp.eq.s32.totalorder %s45, 0
      %p444 = por %p442, %p443
      %p445 = scmp.ne.s32.totalorder %s433, %s434
      %p446 = scmp.eq.s32.totalorder %s46, 1
      %p447 = por %p445, %p446
      %p449 = scmp.ne.s32.totalorder %s434, %s448
      %p450 = scmp.eq.s32.totalorder %s46, 0
      %p451 = por %p449, %p450
      %s452 = ssub.s32 %s40, %s47
      %p453 = scmp.eq.s32.totalorder %s452, 0
      %s455 = sadd.s32 %s454, 1
      %s456 = scalar_select %p453, %s454, %s455
      %p459 = pneg %p453
      %p460 = scmp.eq.s32.totalorder %s40, 1
      %p461 = por %p459, %p460
      %p462 = scmp.ne.s32.totalorder %s454, %s457
      %p463 = scmp.eq.s32.totalorder %s40, 0
      %p464 = por %p462, %p463
      %p465 = scmp.ne.s32.totalorder %s454, %s457
      %p466 = scmp.eq.s32.totalorder %s45, 1
      %p467 = por %p465, %p466
      %p468 = scmp.ne.s32.totalorder %s457, %s458
      %p469 = scmp.eq.s32.totalorder %s45, 0
      %p470 = por %p468, %p469
      %p471 = scmp.ne.s32.totalorder %s457, %s458
      %p472 = scmp.eq.s32.totalorder %s46, 1
      %p473 = por %p471, %p472
      %p475 = scmp.ne.s32.totalorder %s458, %s474
      %p476 = scmp.eq.s32.totalorder %s46, 0
      %p477 = por %p475, %p476
      %p478 = scmp.le.s32.totalorder 1, %s40
      %p479 = scmp.lt.s32.totalorder %s40, 3
      %p480 = pnand %p478, %p479
      %p481 = pneg %p480
      // Predicated region
      $region9: #{tpu_custom_call.1} parent=5 // pred_check
        _
      $region10: #{tpu_custom_call.1} parent=5 // pred_check_branch
        %483 = sbr.rel (%p480) target = $region12
      $region11: #{tpu_custom_call.1} parent=5 // pred_region
        %s484 = ssub.s32 %s40, 1
        // Predicated region
        $region13: #{tpu_custom_call.1} parent=11 // pred_check
          %p485 = pneg %p87
        $region14: #{tpu_custom_call.1} parent=11 // pred_check_branch
          %487 = sbr.rel (%p485) target = $region16
        $region15: #{tpu_custom_call.1} parent=11 // pred_region
          %s489 = ssub.s32 16384, 16384
          %490 = vsyncadd [#allocation6], %s489
          %s491 = sshll.u32 [#allocation5], 4
          %s492 = int_to_ptr.vmem [resolvable:$true] %s491
          %497 = dma.hbm_to_vmem [thread:$0]  %s1, 16384, %s492, [#allocation6], 512, 512, 32
        $region16: #{tpu_custom_call.1} parent=11 // pred_fallthru
          _
        // Predicated region
        $region17: #{tpu_custom_call.1} parent=11 // pred_check
          %p498 = pneg %p108
        $region18: #{tpu_custom_call.1} parent=11 // pred_check_branch
          %500 = sbr.rel (%p498) target = $region20
        $region19: #{tpu_custom_call.1} parent=11 // pred_region
          %s502 = ssub.s32 16384, 16384
          %503 = vsyncadd [#allocation6], %s502
          %s504 = sshll.u32 [#allocation7], 4
          %s505 = int_to_ptr.vmem [resolvable:$true] %s504
          %510 = dma.hbm_to_vmem [thread:$0]  %s2, 16384, %s505, [#allocation6], 256, 256, 16
        $region20: #{tpu_custom_call.1} parent=11 // pred_fallthru
          _
        // Predicated region
        $region21: #{tpu_custom_call.1} parent=11 // pred_check
          %p511 = pneg %p129
        $region22: #{tpu_custom_call.1} parent=11 // pred_check_branch
          %513 = sbr.rel (%p511) target = $region24
        $region23: #{tpu_custom_call.1} parent=11 // pred_region
          %s515 = ssub.s32 16384, 16384
          %516 = vsyncadd [#allocation9], %s515
          %s517 = sshll.u32 [#allocation8], 4
          %s518 = int_to_ptr.vmem [resolvable:$true] %s517
          %523 = dma.hbm_to_vmem [thread:$0]  %s3, 16384, %s518, [#allocation9], 256, 256, 16
        $region24: #{tpu_custom_call.1} parent=11 // pred_fallthru
          _
        // Predicated region
        $region25: #{tpu_custom_call.1} parent=11 // pred_check
          %p524 = pneg %p150
        $region26: #{tpu_custom_call.1} parent=11 // pred_check_branch
          %526 = sbr.rel (%p524) target = $region28
        $region27: #{tpu_custom_call.1} parent=11 // pred_region
          %s528 = ssub.s32 16384, 16384
          %529 = vsyncadd [#allocation9], %s528
          %s530 = sshll.u32 [#allocation10], 4
          %s531 = int_to_ptr.vmem [resolvable:$true] %s530
          %536 = dma.hbm_to_vmem [thread:$0]  %s4, 16384, %s531, [#allocation9], 256, 256, 16
        $region28: #{tpu_custom_call.1} parent=11 // pred_fallthru
          _
        // Predicated region
        $region29: #{tpu_custom_call.1} parent=11 // pred_check
          %p537 = pneg %p171
        $region30: #{tpu_custom_call.1} parent=11 // pred_check_branch
          %539 = sbr.rel (%p537) target = $region32
        $region31: #{tpu_custom_call.1} parent=11 // pred_region
          %s541 = ssub.s32 65536, 65536
          %542 = vsyncadd [#allocation12], %s541
          %s543 = sshll.u32 [#allocation11], 4
          %s544 = int_to_ptr.vmem [resolvable:$true] %s543
          %549 = dma.hbm_to_vmem [thread:$0]  %s5, 65536, %s544, [#allocation12], 2048, 2048, 128
        $region32: #{tpu_custom_call.1} parent=11 // pred_fallthru
          _
        // Predicated region
        $region33: #{tpu_custom_call.1} parent=11 // pred_check
          %p550 = pneg %p192
        $region34: #{tpu_custom_call.1} parent=11 // pred_check_branch
          %552 = sbr.rel (%p550) target = $region36
        $region35: #{tpu_custom_call.1} parent=11 // pred_region
          %s554 = ssub.s32 65536, 65536
          %555 = vsyncadd [#allocation12], %s554
          %s556 = sshll.u32 [#allocation13], 4
          %s557 = int_to_ptr.vmem [resolvable:$true] %s556
          %562 = dma.hbm_to_vmem [thread:$0]  %s6, 65536, %s557, [#allocation12], 2048, 2048, 128
        $region36: #{tpu_custom_call.1} parent=11 // pred_fallthru
          _
        // Predicated region
        $region37: #{tpu_custom_call.1} parent=11 // pred_check
          %p563 = pneg %p213
        $region38: #{tpu_custom_call.1} parent=11 // pred_check_branch
          %565 = sbr.rel (%p563) target = $region40
        $region39: #{tpu_custom_call.1} parent=11 // pred_region
          %s567 = ssub.s32 65536, 65536
          %568 = vsyncadd [#allocation15], %s567
          %s569 = sshll.u32 [#allocation14], 4
          %s570 = int_to_ptr.vmem [resolvable:$true] %s569
          %575 = dma.hbm_to_vmem [thread:$0]  %s7, 65536, %s570, [#allocation15], 256, 256, 16
        $region40: #{tpu_custom_call.1} parent=11 // pred_fallthru
          _
        // Predicated region
        $region41: #{tpu_custom_call.1} parent=11 // pred_check
          %p576 = pneg %p234
        $region42: #{tpu_custom_call.1} parent=11 // pred_check_branch
          %578 = sbr.rel (%p576) target = $region44
        $region43: #{tpu_custom_call.1} parent=11 // pred_region
          %s580 = ssub.s32 8192, 8192
          %581 = vsyncadd [#allocation15], %s580
          %s582 = sshll.u32 [#allocation16], 4
          %s583 = int_to_ptr.vmem [resolvable:$true] %s582
          %588 = dma.hbm_to_vmem [thread:$0]  %s8, 8192, %s583, [#allocation15], 256, 256, 16
        $region44: #{tpu_custom_call.1} parent=11 // pred_fallthru
          _
        // Predicated region
        $region45: #{tpu_custom_call.1} parent=11 // pred_check
          %p589 = pneg %p255
        $region46: #{tpu_custom_call.1} parent=11 // pred_check_branch
          %591 = sbr.rel (%p589) target = $region48
        $region47: #{tpu_custom_call.1} parent=11 // pred_region
          %s593 = ssub.s32 8192, 8192
          %594 = vsyncadd [#allocation18], %s593
          %s595 = sshll.u32 [#allocation17], 4
          %s596 = int_to_ptr.vmem [resolvable:$true] %s595
          %601 = dma.hbm_to_vmem [thread:$0]  %s9, 8192, %s596, [#allocation18], 256, 256, 16
        $region48: #{tpu_custom_call.1} parent=11 // pred_fallthru
          _
        // Predicated region
        $region49: #{tpu_custom_call.1} parent=11 // pred_check
          %p602 = pneg %p276
        $region50: #{tpu_custom_call.1} parent=11 // pred_check_branch
          %604 = sbr.rel (%p602) target = $region52
        $region51: #{tpu_custom_call.1} parent=11 // pred_region
          %s606 = ssub.s32 8192, 8192
          %607 = vsyncadd [#allocation18], %s606
          %s608 = sshll.u32 [#allocation19], 4
          %s609 = int_to_ptr.vmem [resolvable:$true] %s608
          %614 = dma.hbm_to_vmem [thread:$0]  %s10, 8192, %s609, [#allocation18], 256, 256, 16
        $region52: #{tpu_custom_call.1} parent=11 // pred_fallthru
          _
        // Predicated region
        $region53: #{tpu_custom_call.1} parent=11 // pred_check
          %p615 = pneg %p297
        $region54: #{tpu_custom_call.1} parent=11 // pred_check_branch
          %617 = sbr.rel (%p615) target = $region56
        $region55: #{tpu_custom_call.1} parent=11 // pred_region
          %s619 = ssub.s32 16384, 16384
          %620 = vsyncadd [#allocation21], %s619
          %s621 = sshll.u32 [#allocation20], 4
          %s622 = int_to_ptr.vmem [resolvable:$true] %s621
          %627 = dma.hbm_to_vmem [thread:$0]  %s11, 16384, %s622, [#allocation21], 512, 512, 32
        $region56: #{tpu_custom_call.1} parent=11 // pred_fallthru
          _
        // Predicated region
        $region57: #{tpu_custom_call.1} parent=11 // pred_check
          %p628 = pneg %p318
        $region58: #{tpu_custom_call.1} parent=11 // pred_check_branch
          %630 = sbr.rel (%p628) target = $region60
        $region59: #{tpu_custom_call.1} parent=11 // pred_region
          %s632 = ssub.s32 64, 64
          %633 = vsyncadd [#allocation21], %s632
          %s635 = sshll.u32 [#allocation22], 4
          %s636 = int_to_ptr.vmem [resolvable:$true] %s635
          %638 = dma.hbm_to_vmem [thread:$0]  %s12, 64, %s636, [#allocation21]
        $region60: #{tpu_custom_call.1} parent=11 // pred_fallthru
          _
        // Predicated region
        $region61: #{tpu_custom_call.1} parent=11 // pred_check
          %p639 = pneg %p339
        $region62: #{tpu_custom_call.1} parent=11 // pred_check_branch
          %641 = sbr.rel (%p639) target = $region64
        $region63: #{tpu_custom_call.1} parent=11 // pred_region
          %s643 = ssub.s32 16384, 16384
          %644 = vsyncadd [#allocation24], %s643
          %s645 = sshll.u32 [#allocation23], 4
          %s646 = int_to_ptr.vmem [resolvable:$true] %s645
          %651 = dma.hbm_to_vmem [thread:$0]  %s13, 16384, %s646, [#allocation24], 256, 256, 16
        $region64: #{tpu_custom_call.1} parent=11 // pred_fallthru
          _
        // Predicated region
        $region65: #{tpu_custom_call.1} parent=11 // pred_check
          %p652 = pneg %p360
        $region66: #{tpu_custom_call.1} parent=11 // pred_check_branch
          %654 = sbr.rel (%p652) target = $region68
        $region67: #{tpu_custom_call.1} parent=11 // pred_region
          %s656 = ssub.s32 32, 32
          %657 = vsyncadd [#allocation24], %s656
          %s659 = sshll.u32 [#allocation25], 4
          %s660 = int_to_ptr.vmem [resolvable:$true] %s659
          %662 = dma.hbm_to_vmem [thread:$0]  %s14, 32, %s660, [#allocation24]
        $region68: #{tpu_custom_call.1} parent=11 // pred_fallthru
          _
        // Predicated region
        $region69: #{tpu_custom_call.1} parent=11 // pred_check
          %p663 = pneg %p381
        $region70: #{tpu_custom_call.1} parent=11 // pred_check_branch
          %665 = sbr.rel (%p663) target = $region72
        $region71: #{tpu_custom_call.1} parent=11 // pred_region
          %s667 = ssub.s32 32, 32
          %668 = vsyncadd [#allocation27], %s667
          %s670 = sshll.u32 [#allocation26], 4
          %s671 = int_to_ptr.vmem [resolvable:$true] %s670
          %673 = dma.hbm_to_vmem [thread:$0]  %s15, 32, %s671, [#allocation27]
        $region72: #{tpu_custom_call.1} parent=11 // pred_fallthru
          _
        // Predicated region
        $region73: #{tpu_custom_call.1} parent=11 // pred_check
          %p674 = pneg %p402
        $region74: #{tpu_custom_call.1} parent=11 // pred_check_branch
          %676 = sbr.rel (%p674) target = $region76
        $region75: #{tpu_custom_call.1} parent=11 // pred_region
          %s678 = ssub.s32 32, 32
          %679 = vsyncadd [#allocation27], %s678
          %s681 = sshll.u32 [#allocation28], 4
          %s682 = int_to_ptr.vmem [resolvable:$true] %s681
          %684 = dma.hbm_to_vmem [thread:$0]  %s16, 32, %s682, [#allocation27]
        $region76: #{tpu_custom_call.1} parent=11 // pred_fallthru
          _
        // Predicated region
        $region77: #{tpu_custom_call.1} parent=11 // pred_check
          %p685 = pneg %p423
        $region78: #{tpu_custom_call.1} parent=11 // pred_check_branch
          %687 = sbr.rel (%p685) target = $region80
        $region79: #{tpu_custom_call.1} parent=11 // pred_region
          %s689 = ssub.s32 32, 32
          %690 = vsyncadd [#allocation30], %s689
          %s692 = sshll.u32 [#allocation29], 4
          %s693 = int_to_ptr.vmem [resolvable:$true] %s692
          %695 = dma.hbm_to_vmem [thread:$0]  %s17, 32, %s693, [#allocation30]
        $region80: #{tpu_custom_call.1} parent=11 // pred_fallthru
          _
        // Predicated region
        $region81: #{tpu_custom_call.1} parent=11 // pred_check
          %p696 = pneg %p444
        $region82: #{tpu_custom_call.1} parent=11 // pred_check_branch
          %698 = sbr.rel (%p696) target = $region84
        $region83: #{tpu_custom_call.1} parent=11 // pred_region
          %s700 = ssub.s32 32, 32
          %701 = vsyncadd [#allocation30], %s700
          %s703 = sshll.u32 [#allocation31], 4
          %s704 = int_to_ptr.vmem [resolvable:$true] %s703
          %706 = dma.hbm_to_vmem [thread:$0]  %s18, 32, %s704, [#allocation30]
        $region84: #{tpu_custom_call.1} parent=11 // pred_fallthru
          _
      $region12: #{tpu_custom_call.1} parent=5 // pred_fallthru
        _
      %p707 = scmp.lt.s32.totalorder %s40, 2
      // Predicated region
      $region85: #{tpu_custom_call.1} parent=5 // pred_check
        %p708 = pneg %p707
      $region86: #{tpu_custom_call.1} parent=5 // pred_check_branch
        %710 = sbr.rel (%p708) target = $region88
      $region87: #{tpu_custom_call.1} parent=5 // pred_region
        // Predicated region
        $region89: #{tpu_custom_call.1} parent=87 // pred_check
          %p711 = pneg %p60
        $region90: #{tpu_custom_call.1} parent=87 // pred_check_branch
          %713 = sbr.rel (%p711) target = $region92
        $region91: #{tpu_custom_call.1} parent=87 // pred_region
          %s714 = sand.u32 %s50, 1
          %s715 = scalar_lea.sflag [#allocation3], %s714
          %s716 = sand.u32 %s50, 1
          %s717 = smul.addr %s716, 16
          %s718 = scalar_lea.vmem [#allocation2], %s717
          %s720 = ssub.s32 256, 256
          %721 = vsyncadd %s715, %s720
          %s722 = smul.addr %s40, 2
          %s723 = smul.addr %s722, 128
          %s724 = scalar_lea.hbm %s0, %s723
          %s726 = sshll.u32 %s718, 4
          %s727 = int_to_ptr.vmem [resolvable:$true] %s726
          %729 = dma.hbm_to_vmem [thread:$0]  %s724, 256, %s727, %s715
        $region92: #{tpu_custom_call.1} parent=87 // pred_fallthru
          _
      $region88: #{tpu_custom_call.1} parent=5 // pred_fallthru
        _
      %p730 = scmp.le.s32.totalorder 1, %s40
      %p731 = scmp.lt.s32.totalorder %s40, 3
      %p732 = pnand %p730, %p731
      %p733 = pneg %p732
      // Predicated region
      $region93: #{tpu_custom_call.1} parent=5 // pred_check
        _
      $region94: #{tpu_custom_call.1} parent=5 // pred_check_branch
        %735 = sbr.rel (%p732) target = $region96
      $region95: #{tpu_custom_call.1} parent=5 // pred_region
        %s736 = ssub.s32 %s40, 1
        %s737 = sand.u32 %s53, 1
        %s738 = scalar_lea.sflag [#allocation3], %s737
        %s739 = sand.u32 %s53, 1
        %s740 = smul.addr %s739, 16
        %s741 = scalar_lea.vmem [#allocation2], %s740
        // Predicated region
        $region97: #{tpu_custom_call.1} parent=95 // pred_check
          %p742 = pneg %p66
        $region98: #{tpu_custom_call.1} parent=95 // pred_check_branch
          %744 = sbr.rel (%p742) target = $region100
        $region99: #{tpu_custom_call.1} parent=95 // pred_region
          %745 = dma.done %s738, 256
        $region100: #{tpu_custom_call.1} parent=95 // pred_fallthru
          _
        // Predicated region
        $region101: #{tpu_custom_call.1} parent=95 // pred_check
          %p746 = pneg %p87
        $region102: #{tpu_custom_call.1} parent=95 // pred_check_branch
          %748 = sbr.rel (%p746) target = $region104
        $region103: #{tpu_custom_call.1} parent=95 // pred_region
          %749 = dma.done [#allocation6], 16384
        $region104: #{tpu_custom_call.1} parent=95 // pred_fallthru
          _
        // Predicated region
        $region105: #{tpu_custom_call.1} parent=95 // pred_check
          %p750 = pneg %p108
        $region106: #{tpu_custom_call.1} parent=95 // pred_check_branch
          %752 = sbr.rel (%p750) target = $region108
        $region107: #{tpu_custom_call.1} parent=95 // pred_region
          %753 = dma.done [#allocation6], 16384
        $region108: #{tpu_custom_call.1} parent=95 // pred_fallthru
          _
        // Predicated region
        $region109: #{tpu_custom_call.1} parent=95 // pred_check
          %p754 = pneg %p129
        $region110: #{tpu_custom_call.1} parent=95 // pred_check_branch
          %756 = sbr.rel (%p754) target = $region112
        $region111: #{tpu_custom_call.1} parent=95 // pred_region
          %757 = dma.done [#allocation9], 16384
        $region112: #{tpu_custom_call.1} parent=95 // pred_fallthru
          _
        // Predicated region
        $region113: #{tpu_custom_call.1} parent=95 // pred_check
          %p758 = pneg %p150
        $region114: #{tpu_custom_call.1} parent=95 // pred_check_branch
          %760 = sbr.rel (%p758) target = $region116
        $region115: #{tpu_custom_call.1} parent=95 // pred_region
          %761 = dma.done [#allocation9], 16384
        $region116: #{tpu_custom_call.1} parent=95 // pred_fallthru
          _
        // Predicated region
        $region117: #{tpu_custom_call.1} parent=95 // pred_check
          %p762 = pneg %p171
        $region118: #{tpu_custom_call.1} parent=95 // pred_check_branch
          %764 = sbr.rel (%p762) target = $region120
        $region119: #{tpu_custom_call.1} parent=95 // pred_region
          %765 = dma.done [#allocation12], 65536
        $region120: #{tpu_custom_call.1} parent=95 // pred_fallthru
          _
        // Predicated region
        $region121: #{tpu_custom_call.1} parent=95 // pred_check
          %p766 = pneg %p192
        $region122: #{tpu_custom_call.1} parent=95 // pred_check_branch
          %768 = sbr.rel (%p766) target = $region124
        $region123: #{tpu_custom_call.1} parent=95 // pred_region
          %769 = dma.done [#allocation12], 65536
        $region124: #{tpu_custom_call.1} parent=95 // pred_fallthru
          _
        // Predicated region
        $region125: #{tpu_custom_call.1} parent=95 // pred_check
          %p770 = pneg %p213
        $region126: #{tpu_custom_call.1} parent=95 // pred_check_branch
          %772 = sbr.rel (%p770) target = $region128
        $region127: #{tpu_custom_call.1} parent=95 // pred_region
          %773 = dma.done [#allocation15], 65536
        $region128: #{tpu_custom_call.1} parent=95 // pred_fallthru
          _
        // Predicated region
        $region129: #{tpu_custom_call.1} parent=95 // pred_check
          %p774 = pneg %p234
        $region130: #{tpu_custom_call.1} parent=95 // pred_check_branch
          %776 = sbr.rel (%p774) target = $region132
        $region131: #{tpu_custom_call.1} parent=95 // pred_region
          %777 = dma.done [#allocation15], 8192
        $region132: #{tpu_custom_call.1} parent=95 // pred_fallthru
          _
        // Predicated region
        $region133: #{tpu_custom_call.1} parent=95 // pred_check
          %p778 = pneg %p255
        $region134: #{tpu_custom_call.1} parent=95 // pred_check_branch
          %780 = sbr.rel (%p778) target = $region136
        $region135: #{tpu_custom_call.1} parent=95 // pred_region
          %781 = dma.done [#allocation18], 8192
        $region136: #{tpu_custom_call.1} parent=95 // pred_fallthru
          _
        // Predicated region
        $region137: #{tpu_custom_call.1} parent=95 // pred_check
          %p782 = pneg %p276
        $region138: #{tpu_custom_call.1} parent=95 // pred_check_branch
          %784 = sbr.rel (%p782) target = $region140
        $region139: #{tpu_custom_call.1} parent=95 // pred_region
          %785 = dma.done [#allocation18], 8192
        $region140: #{tpu_custom_call.1} parent=95 // pred_fallthru
          _
        // Predicated region
        $region141: #{tpu_custom_call.1} parent=95 // pred_check
          %p786 = pneg %p297
        $region142: #{tpu_custom_call.1} parent=95 // pred_check_branch
          %788 = sbr.rel (%p786) target = $region144
        $region143: #{tpu_custom_call.1} parent=95 // pred_region
          %789 = dma.done [#allocation21], 16384
        $region144: #{tpu_custom_call.1} parent=95 // pred_fallthru
          _
        // Predicated region
        $region145: #{tpu_custom_call.1} parent=95 // pred_check
          %p790 = pneg %p318
        $region146: #{tpu_custom_call.1} parent=95 // pred_check_branch
          %792 = sbr.rel (%p790) target = $region148
        $region147: #{tpu_custom_call.1} parent=95 // pred_region
          %793 = dma.done [#allocation21], 64
        $region148: #{tpu_custom_call.1} parent=95 // pred_fallthru
          _
        // Predicated region
        $region149: #{tpu_custom_call.1} parent=95 // pred_check
          %p794 = pneg %p339
        $region150: #{tpu_custom_call.1} parent=95 // pred_check_branch
          %796 = sbr.rel (%p794) target = $region152
        $region151: #{tpu_custom_call.1} parent=95 // pred_region
          %797 = dma.done [#allocation24], 16384
        $region152: #{tpu_custom_call.1} parent=95 // pred_fallthru
          _
        // Predicated region
        $region153: #{tpu_custom_call.1} parent=95 // pred_check
          %p798 = pneg %p360
        $region154: #{tpu_custom_call.1} parent=95 // pred_check_branch
          %800 = sbr.rel (%p798) target = $region156
        $region155: #{tpu_custom_call.1} parent=95 // pred_region
          %801 = dma.done [#allocation24], 32
        $region156: #{tpu_custom_call.1} parent=95 // pred_fallthru
          _
        // Predicated region
        $region157: #{tpu_custom_call.1} parent=95 // pred_check
          %p802 = pneg %p381
        $region158: #{tpu_custom_call.1} parent=95 // pred_check_branch
          %804 = sbr.rel (%p802) target = $region160
        $region159: #{tpu_custom_call.1} parent=95 // pred_region
          %805 = dma.done [#allocation27], 32
        $region160: #{tpu_custom_call.1} parent=95 // pred_fallthru
          _
        // Predicated region
        $region161: #{tpu_custom_call.1} parent=95 // pred_check
          %p806 = pneg %p402
        $region162: #{tpu_custom_call.1} parent=95 // pred_check_branch
          %808 = sbr.rel (%p806) target = $region164
        $region163: #{tpu_custom_call.1} parent=95 // pred_region
          %809 = dma.done [#allocation27], 32
        $region164: #{tpu_custom_call.1} parent=95 // pred_fallthru
          _
        // Predicated region
        $region165: #{tpu_custom_call.1} parent=95 // pred_check
          %p810 = pneg %p423
        $region166: #{tpu_custom_call.1} parent=95 // pred_check_branch
          %812 = sbr.rel (%p810) target = $region168
        $region167: #{tpu_custom_call.1} parent=95 // pred_region
          %813 = dma.done [#allocation30], 32
        $region168: #{tpu_custom_call.1} parent=95 // pred_fallthru
          _
        // Predicated region
        $region169: #{tpu_custom_call.1} parent=95 // pred_check
          %p814 = pneg %p444
        $region170: #{tpu_custom_call.1} parent=95 // pred_check_branch
          %816 = sbr.rel (%p814) target = $region172
        $region171: #{tpu_custom_call.1} parent=95 // pred_region
          %817 = dma.done [#allocation30], 32
        $region172: #{tpu_custom_call.1} parent=95 // pred_fallthru
          _
        %s818 = sand.u32 %s53, 1
        %s819 = scalar_lea.sflag [#allocation3], %s818
        %s820 = sand.u32 %s53, 1
        %s821 = smul.addr %s820, 16
        %s822 = scalar_lea.vmem [#allocation2], %s821
        %p823 = pneg %p66
        %p824 = pneg %p63
        %p825 = pneg %p87
        %p826 = pneg %p84
        %p827 = pneg %p108
        %p828 = pneg %p105
        %p829 = pneg %p129
        %p830 = pneg %p126
        %p831 = pneg %p150
        %p832 = pneg %p147
        %p833 = pneg %p171
        %p834 = pneg %p168
        %p835 = pneg %p192
        %p836 = pneg %p189
        %p837 = pneg %p213
        %p838 = pneg %p210
        %p839 = pneg %p234
        %p840 = pneg %p231
        %p841 = pneg %p255
        %p842 = pneg %p252
        %p843 = pneg %p276
        %p844 = pneg %p273
        %p845 = pneg %p297
        %p846 = pneg %p294
        %p847 = pneg %p318
        %p848 = pneg %p315
        %p849 = pneg %p339
        %p850 = pneg %p336
        %p851 = pneg %p360
        %p852 = pneg %p357
        %p853 = pneg %p381
        %p854 = pneg %p378
        %p855 = pneg %p402
        %p856 = pneg %p399
        %p857 = pneg %p423
        %p858 = pneg %p420
        %p859 = pneg %p444
        %p860 = pneg %p441
        %p861 = pneg %p470
        %p862 = pneg %p467
        %s863 = sand.u32 %s457, 1
        %s864 = scalar_lea.sflag [#allocation4], %s863
        %s865 = sand.u32 %s457, 1
        %s866 = smul.addr %s865, 16
        %s867 = scalar_lea.vmem [#allocation32], %s866
        %v868 = vld [vmem:[%s741] sm:$0xff]
        %v869 = vld [vmem:[%s741 + $0x8] sm:$0xff]
        %v870 = vld [vmem:[#allocation5] sm:$0xff]
        %v871 = vld [vmem:[#allocation5 + $0x8] sm:$0xff]
        %v872 = vld [vmem:[#allocation5 + $0x10] sm:$0xff]
        %v873 = vld [vmem:[#allocation5 + $0x18] sm:$0xff]
        %v874 = vld [vmem:[#allocation5 + $0x20] sm:$0xff]
        %v875 = vld [vmem:[#allocation5 + $0x28] sm:$0xff]
        %v876 = vld [vmem:[#allocation5 + $0x30] sm:$0xff]
        %v877 = vld [vmem:[#allocation5 + $0x38] sm:$0xff]
        %v878 = vld [vmem:[#allocation5 + $0x40] sm:$0xff]
        %v879 = vld [vmem:[#allocation5 + $0x48] sm:$0xff]
        %v880 = vld [vmem:[#allocation5 + $0x50] sm:$0xff]
        %v881 = vld [vmem:[#allocation5 + $0x58] sm:$0xff]
        %v882 = vld [vmem:[#allocation5 + $0x60] sm:$0xff]
        %v883 = vld [vmem:[#allocation5 + $0x68] sm:$0xff]
        %v884 = vld [vmem:[#allocation5 + $0x70] sm:$0xff]
        %v885 = vld [vmem:[#allocation5 + $0x78] sm:$0xff]
        %v886 = vld [vmem:[#allocation5 + $0x80] sm:$0xff]
        %v887 = vld [vmem:[#allocation5 + $0x88] sm:$0xff]
        %v888 = vld [vmem:[#allocation5 + $0x90] sm:$0xff]
        %v889 = vld [vmem:[#allocation5 + $0x98] sm:$0xff]
        %v890 = vld [vmem:[#allocation5 + $0xa0] sm:$0xff]
        %v891 = vld [vmem:[#allocation5 + $0xa8] sm:$0xff]
        %v892 = vld [vmem:[#allocation5 + $0xb0] sm:$0xff]
        %v893 = vld [vmem:[#allocation5 + $0xb8] sm:$0xff]
        %v894 = vld [vmem:[#allocation5 + $0xc0] sm:$0xff]
        %v895 = vld [vmem:[#allocation5 + $0xc8] sm:$0xff]
        %v896 = vld [vmem:[#allocation5 + $0xd0] sm:$0xff]
        %v897 = vld [vmem:[#allocation5 + $0xd8] sm:$0xff]
        %v898 = vld [vmem:[#allocation5 + $0xe0] sm:$0xff]
        %v899 = vld [vmem:[#allocation5 + $0xe8] sm:$0xff]
        %v900 = vld [vmem:[#allocation5 + $0xf0] sm:$0xff]
        %v901 = vld [vmem:[#allocation5 + $0xf8] sm:$0xff]
        %v902 = vld [vmem:[#allocation5 + $0x100] sm:$0xff]
        %v903 = vld [vmem:[#allocation5 + $0x108] sm:$0xff]
        %v904 = vld [vmem:[#allocation5 + $0x110] sm:$0xff]
        %v905 = vld [vmem:[#allocation5 + $0x118] sm:$0xff]
        %v906 = vld [vmem:[#allocation5 + $0x120] sm:$0xff]
        %v907 = vld [vmem:[#allocation5 + $0x128] sm:$0xff]
        %v908 = vld [vmem:[#allocation5 + $0x130] sm:$0xff]
        %v909 = vld [vmem:[#allocation5 + $0x138] sm:$0xff]
        %v910 = vld [vmem:[#allocation5 + $0x140] sm:$0xff]
        %v911 = vld [vmem:[#allocation5 + $0x148] sm:$0xff]
        %v912 = vld [vmem:[#allocation5 + $0x150] sm:$0xff]
        %v913 = vld [vmem:[#allocation5 + $0x158] sm:$0xff]
        %v914 = vld [vmem:[#allocation5 + $0x160] sm:$0xff]
        %v915 = vld [vmem:[#allocation5 + $0x168] sm:$0xff]
        %v916 = vld [vmem:[#allocation5 + $0x170] sm:$0xff]
        %v917 = vld [vmem:[#allocation5 + $0x178] sm:$0xff]
        %v918 = vld [vmem:[#allocation5 + $0x180] sm:$0xff]
        %v919 = vld [vmem:[#allocation5 + $0x188] sm:$0xff]
        %v920 = vld [vmem:[#allocation5 + $0x190] sm:$0xff]
        %v921 = vld [vmem:[#allocation5 + $0x198] sm:$0xff]
        %v922 = vld [vmem:[#allocation5 + $0x1a0] sm:$0xff]
        %v923 = vld [vmem:[#allocation5 + $0x1a8] sm:$0xff]
        %v924 = vld [vmem:[#allocation5 + $0x1b0] sm:$0xff]
        %v925 = vld [vmem:[#allocation5 + $0x1b8] sm:$0xff]
        %v926 = vld [vmem:[#allocation5 + $0x1c0] sm:$0xff]
        %v927 = vld [vmem:[#allocation5 + $0x1c8] sm:$0xff]
        %v928 = vld [vmem:[#allocation5 + $0x1d0] sm:$0xff]
        %v929 = vld [vmem:[#allocation5 + $0x1d8] sm:$0xff]
        %v930 = vld [vmem:[#allocation5 + $0x1e0] sm:$0xff]
        %v931 = vld [vmem:[#allocation5 + $0x1e8] sm:$0xff]
        %v932 = vld [vmem:[#allocation5 + $0x1f0] sm:$0xff]
        %v933 = vld [vmem:[#allocation5 + $0x1f8] sm:$0xff]
        %v934 = vld [vmem:[#allocation5 + $0x200] sm:$0xff]
        %v935 = vld [vmem:[#allocation5 + $0x208] sm:$0xff]
        %v936 = vld [vmem:[#allocation5 + $0x210] sm:$0xff]
        %v937 = vld [vmem:[#allocation5 + $0x218] sm:$0xff]
        %v938 = vld [vmem:[#allocation5 + $0x220] sm:$0xff]
        %v939 = vld [vmem:[#allocation5 + $0x228] sm:$0xff]
        %v940 = vld [vmem:[#allocation5 + $0x230] sm:$0xff]
        %v941 = vld [vmem:[#allocation5 + $0x238] sm:$0xff]
        %v942 = vld [vmem:[#allocation5 + $0x240] sm:$0xff]
        %v943 = vld [vmem:[#allocation5 + $0x248] sm:$0xff]
        %v944 = vld [vmem:[#allocation5 + $0x250] sm:$0xff]
        %v945 = vld [vmem:[#allocation5 + $0x258] sm:$0xff]
        %v946 = vld [vmem:[#allocation5 + $0x260] sm:$0xff]
        %v947 = vld [vmem:[#allocation5 + $0x268] sm:$0xff]
        %v948 = vld [vmem:[#allocation5 + $0x270] sm:$0xff]
        %v949 = vld [vmem:[#allocation5 + $0x278] sm:$0xff]
        %v950 = vld [vmem:[#allocation5 + $0x280] sm:$0xff]
        %v951 = vld [vmem:[#allocation5 + $0x288] sm:$0xff]
        %v952 = vld [vmem:[#allocation5 + $0x290] sm:$0xff]
        %v953 = vld [vmem:[#allocation5 + $0x298] sm:$0xff]
        %v954 = vld [vmem:[#allocation5 + $0x2a0] sm:$0xff]
        %v955 = vld [vmem:[#allocation5 + $0x2a8] sm:$0xff]
        %v956 = vld [vmem:[#allocation5 + $0x2b0] sm:$0xff]
        %v957 = vld [vmem:[#allocation5 + $0x2b8] sm:$0xff]
        %v958 = vld [vmem:[#allocation5 + $0x2c0] sm:$0xff]
        %v959 = vld [vmem:[#allocation5 + $0x2c8] sm:$0xff]
        %v960 = vld [vmem:[#allocation5 + $0x2d0] sm:$0xff]
        %v961 = vld [vmem:[#allocation5 + $0x2d8] sm:$0xff]
        %v962 = vld [vmem:[#allocation5 + $0x2e0] sm:$0xff]
        %v963 = vld [vmem:[#allocation5 + $0x2e8] sm:$0xff]
        %v964 = vld [vmem:[#allocation5 + $0x2f0] sm:$0xff]
        %v965 = vld [vmem:[#allocation5 + $0x2f8] sm:$0xff]
        %v966 = vld [vmem:[#allocation5 + $0x300] sm:$0xff]
        %v967 = vld [vmem:[#allocation5 + $0x308] sm:$0xff]
        %v968 = vld [vmem:[#allocation5 + $0x310] sm:$0xff]
        %v969 = vld [vmem:[#allocation5 + $0x318] sm:$0xff]
        %v970 = vld [vmem:[#allocation5 + $0x320] sm:$0xff]
        %v971 = vld [vmem:[#allocation5 + $0x328] sm:$0xff]
        %v972 = vld [vmem:[#allocation5 + $0x330] sm:$0xff]
        %v973 = vld [vmem:[#allocation5 + $0x338] sm:$0xff]
        %v974 = vld [vmem:[#allocation5 + $0x340] sm:$0xff]
        %v975 = vld [vmem:[#allocation5 + $0x348] sm:$0xff]
        %v976 = vld [vmem:[#allocation5 + $0x350] sm:$0xff]
        %v977 = vld [vmem:[#allocation5 + $0x358] sm:$0xff]
        %v978 = vld [vmem:[#allocation5 + $0x360] sm:$0xff]
        %v979 = vld [vmem:[#allocation5 + $0x368] sm:$0xff]
        %v980 = vld [vmem:[#allocation5 + $0x370] sm:$0xff]
        %v981 = vld [vmem:[#allocation5 + $0x378] sm:$0xff]
        %v982 = vld [vmem:[#allocation5 + $0x380] sm:$0xff]
        %v983 = vld [vmem:[#allocation5 + $0x388] sm:$0xff]
        %v984 = vld [vmem:[#allocation5 + $0x390] sm:$0xff]
        %v985 = vld [vmem:[#allocation5 + $0x398] sm:$0xff]
        %v986 = vld [vmem:[#allocation5 + $0x3a0] sm:$0xff]
        %v987 = vld [vmem:[#allocation5 + $0x3a8] sm:$0xff]
        %v988 = vld [vmem:[#allocation5 + $0x3b0] sm:$0xff]
        %v989 = vld [vmem:[#allocation5 + $0x3b8] sm:$0xff]
        %v990 = vld [vmem:[#allocation5 + $0x3c0] sm:$0xff]
        %v991 = vld [vmem:[#allocation5 + $0x3c8] sm:$0xff]
        %v992 = vld [vmem:[#allocation5 + $0x3d0] sm:$0xff]
        %v993 = vld [vmem:[#allocation5 + $0x3d8] sm:$0xff]
        %v994 = vld [vmem:[#allocation5 + $0x3e0] sm:$0xff]
        %v995 = vld [vmem:[#allocation5 + $0x3e8] sm:$0xff]
        %v996 = vld [vmem:[#allocation5 + $0x3f0] sm:$0xff]
        %v997 = vld [vmem:[#allocation5 + $0x3f8] sm:$0xff]
        %998 = vmatprep.subr.mxu0 %v931
        %999 = vmatpush1.msra.mxu0 %v930
        %1000 = vmatprep.subr.mxu0 %v927
        %1001 = vmatpush1.msra.mxu0 %v926
        %1002 = vmatprep.subr.mxu0 %v923
        %1003 = vmatpush1.msra.mxu0 %v922
        %1004 = vmatprep.subr.mxu0 %v919
        %1005 = vmatpush1.msra.mxu0 %v918
        %1006 = vmatprep.subr.mxu0 %v915
        %1007 = vmatpush1.msra.mxu0 %v914
        %1008 = vmatprep.subr.mxu0 %v911
        %1009 = vmatpush1.msra.mxu0 %v910
        %1010 = vmatprep.subr.mxu0 %v907
        %1011 = vmatpush1.msra.mxu0 %v906
        %1012 = vmatprep.subr.mxu0 %v903
        %1013 = vmatpush1.msra.mxu0 %v902
        %1014 = vmatprep.subr.mxu0 %v899
        %1015 = vmatpush1.msra.mxu0 %v898
        %1016 = vmatprep.subr.mxu0 %v895
        %1017 = vmatpush1.msra.mxu0 %v894
        %1018 = vmatprep.subr.mxu0 %v891
        %1019 = vmatpush1.msra.mxu0 %v890
        %1020 = vmatprep.subr.mxu0 %v887
        %1021 = vmatpush1.msra.mxu0 %v886
        %1022 = vmatprep.subr.mxu0 %v883
        %1023 = vmatpush1.msra.mxu0 %v882
        %1024 = vmatprep.subr.mxu0 %v879
        %1025 = vmatpush1.msra.mxu0 %v878
        %1026 = vmatprep.subr.mxu0 %v875
        %1027 = vmatpush1.msra.mxu0 %v874
        %1028 = vmatprep.subr.mxu0 %v871
        %1029 = vmatpush1.msra.mxu0 %v870
        %1030 = vmatprep.subr.mxu0 %v995
        %1031 = vmatpush2.msra.mxu0 %v994
        %1032 = vmatprep.subr.mxu0 %v991
        %1033 = vmatpush2.msra.mxu0 %v990
        %1034 = vmatprep.subr.mxu0 %v987
        %1035 = vmatpush2.msra.mxu0 %v986
        %1036 = vmatprep.subr.mxu0 %v983
        %1037 = vmatpush2.msra.mxu0 %v982
        %1038 = vmatprep.subr.mxu0 %v979
        %1039 = vmatpush2.msra.mxu0 %v978
        %1040 = vmatprep.subr.mxu0 %v975
        %1041 = vmatpush2.msra.mxu0 %v974
        %1042 = vmatprep.subr.mxu0 %v971
        %1043 = vmatpush2.msra.mxu0 %v970
        %1044 = vmatprep.subr.mxu0 %v967
        %1045 = vmatpush2.msra.mxu0 %v966
        %1046 = vmatprep.subr.mxu0 %v963
        %1047 = vmatpush2.msra.mxu0 %v962
        %1048 = vmatprep.subr.mxu0 %v959
        %1049 = vmatpush2.msra.mxu0 %v958
        %1050 = vmatprep.subr.mxu0 %v955
        %1051 = vmatpush2.msra.mxu0 %v954
        %1052 = vmatprep.subr.mxu0 %v951
        %1053 = vmatpush2.msra.mxu0 %v950
        %1054 = vmatprep.subr.mxu0 %v947
        %1055 = vmatpush2.msra.mxu0 %v946
        %1056 = vmatprep.subr.mxu0 %v943
        %1057 = vmatpush2.msra.mxu0 %v942
        %1058 = vmatprep.subr.mxu0 %v939
        %1059 = vmatpush2.msra.mxu0 %v938
        %1060 = vmatprep.subr.mxu0 %v935
        %1061 = vmatpush2.msra.mxu0 %v934
        %1062 = vmatprep.mubr.f32.mxu0 %v869
        %1063 = vmatmul.mubr.f32.gmra.mxu0 %v868
        %v1064 = vpop.f32.mrf.mxu0
        %v1065 = vadd.f32 0.0, %v1064
        %v1066 = vpop.f32.mrf.mxu0
        %v1067 = vadd.f32 0.0, %v1066
        %1068 = vdwg.mxu0
        %1069 = vmatprep.subr.mxu0 %v933
        %1070 = vmatpush1.msra.mxu0 %v932
        %1071 = vmatprep.subr.mxu0 %v929
        %1072 = vmatpush1.msra.mxu0 %v928
        %1073 = vmatprep.subr.mxu0 %v925
        %1074 = vmatpush1.msra.mxu0 %v924
        %1075 = vmatprep.subr.mxu0 %v921
        %1076 = vmatpush1.msra.mxu0 %v920
        %1077 = vmatprep.subr.mxu0 %v917
        %1078 = vmatpush1.msra.mxu0 %v916
        %1079 = vmatprep.subr.mxu0 %v913
        %1080 = vmatpush1.msra.mxu0 %v912
        %1081 = vmatprep.subr.mxu0 %v909
        %1082 = vmatpush1.msra.mxu0 %v908
        %1083 = vmatprep.subr.mxu0 %v905
        %1084 = vmatpush1.msra.mxu0 %v904
        %1085 = vmatprep.subr.mxu0 %v901
        %1086 = vmatpush1.msra.mxu0 %v900
        %1087 = vmatprep.subr.mxu0 %v897
        %1088 = vmatpush1.msra.mxu0 %v896
        %1089 = vmatprep.subr.mxu0 %v893
        %1090 = vmatpush1.msra.mxu0 %v892
        %1091 = vmatprep.subr.mxu0 %v889
        %1092 = vmatpush1.msra.mxu0 %v888
        %1093 = vmatprep.subr.mxu0 %v885
        %1094 = vmatpush1.msra.mxu0 %v884
        %1095 = vmatprep.subr.mxu0 %v881
        %1096 = vmatpush1.msra.mxu0 %v880
        %1097 = vmatprep.subr.mxu0 %v877
        %1098 = vmatpush1.msra.mxu0 %v876
        %1099 = vmatprep.subr.mxu0 %v873
        %1100 = vmatpush1.msra.mxu0 %v872
        %1101 = vmatprep.subr.mxu0 %v997
        %1102 = vmatpush2.msra.mxu0 %v996
        %1103 = vmatprep.subr.mxu0 %v993
        %1104 = vmatpush2.msra.mxu0 %v992
        %1105 = vmatprep.subr.mxu0 %v989
        %1106 = vmatpush2.msra.mxu0 %v988
        %1107 = vmatprep.subr.mxu0 %v985
        %1108 = vmatpush2.msra.mxu0 %v984
        %1109 = vmatprep.subr.mxu0 %v981
        %1110 = vmatpush2.msra.mxu0 %v980
        %1111 = vmatprep.subr.mxu0 %v977
        %1112 = vmatpush2.msra.mxu0 %v976
        %1113 = vmatprep.subr.mxu0 %v973
        %1114 = vmatpush2.msra.mxu0 %v972
        %1115 = vmatprep.subr.mxu0 %v969
        %1116 = vmatpush2.msra.mxu0 %v968
        %1117 = vmatprep.subr.mxu0 %v965
        %1118 = vmatpush2.msra.mxu0 %v964
        %1119 = vmatprep.subr.mxu0 %v961
        %1120 = vmatpush2.msra.mxu0 %v960
        %1121 = vmatprep.subr.mxu0 %v957
        %1122 = vmatpush2.msra.mxu0 %v956
        %1123 = vmatprep.subr.mxu0 %v953
        %1124 = vmatpush2.msra.mxu0 %v952
        %1125 = vmatprep.subr.mxu0 %v949
        %1126 = vmatpush2.msra.mxu0 %v948
        %1127 = vmatprep.subr.mxu0 %v945
        %1128 = vmatpush2.msra.mxu0 %v944
        %1129 = vmatprep.subr.mxu0 %v941
        %1130 = vmatpush2.msra.mxu0 %v940
        %1131 = vmatprep.subr.mxu0 %v937
        %1132 = vmatpush2.msra.mxu0 %v936
        %1133 = vmatprep.mubr.f32.mxu0 %v869
        %1134 = vmatmul.mubr.f32.gmra.mxu0 %v868
        %v1135 = vpop.f32.mrf.mxu0
        %v1136 = vadd.f32 0.0, %v1135
        %v1137 = vpop.f32.mrf.mxu0
        %v1138 = vadd.f32 0.0, %v1137
        %1139 = vdwg.mxu0
        %v1140 = vld [vmem:[#allocation7] sm:$0xff]
        %v1141 = vld [vmem:[#allocation7 + $0x8] sm:$0xff]
        %v1142 = vld [vmem:[#allocation7 + $0x10] sm:$0xff]
        %v1143 = vld [vmem:[#allocation7 + $0x18] sm:$0xff]
        %v1144 = vld [vmem:[#allocation7 + $0x20] sm:$0xff]
        %v1145 = vld [vmem:[#allocation7 + $0x28] sm:$0xff]
        %v1146 = vld [vmem:[#allocation7 + $0x30] sm:$0xff]
        %v1147 = vld [vmem:[#allocation7 + $0x38] sm:$0xff]
        %v1148 = vld [vmem:[#allocation7 + $0x40] sm:$0xff]
        %v1149 = vld [vmem:[#allocation7 + $0x48] sm:$0xff]
        %v1150 = vld [vmem:[#allocation7 + $0x50] sm:$0xff]
        %v1151 = vld [vmem:[#allocation7 + $0x58] sm:$0xff]
        %v1152 = vld [vmem:[#allocation7 + $0x60] sm:$0xff]
        %v1153 = vld [vmem:[#allocation7 + $0x68] sm:$0xff]
        %v1154 = vld [vmem:[#allocation7 + $0x70] sm:$0xff]
        %v1155 = vld [vmem:[#allocation7 + $0x78] sm:$0xff]
        %v1156 = vld [vmem:[#allocation7 + $0x80] sm:$0xff]
        %v1157 = vld [vmem:[#allocation7 + $0x88] sm:$0xff]
        %v1158 = vld [vmem:[#allocation7 + $0x90] sm:$0xff]
        %v1159 = vld [vmem:[#allocation7 + $0x98] sm:$0xff]
        %v1160 = vld [vmem:[#allocation7 + $0xa0] sm:$0xff]
        %v1161 = vld [vmem:[#allocation7 + $0xa8] sm:$0xff]
        %v1162 = vld [vmem:[#allocation7 + $0xb0] sm:$0xff]
        %v1163 = vld [vmem:[#allocation7 + $0xb8] sm:$0xff]
        %v1164 = vld [vmem:[#allocation7 + $0xc0] sm:$0xff]
        %v1165 = vld [vmem:[#allocation7 + $0xc8] sm:$0xff]
        %v1166 = vld [vmem:[#allocation7 + $0xd0] sm:$0xff]
        %v1167 = vld [vmem:[#allocation7 + $0xd8] sm:$0xff]
        %v1168 = vld [vmem:[#allocation7 + $0xe0] sm:$0xff]
        %v1169 = vld [vmem:[#allocation7 + $0xe8] sm:$0xff]
        %v1170 = vld [vmem:[#allocation7 + $0xf0] sm:$0xff]
        %v1171 = vld [vmem:[#allocation7 + $0xf8] sm:$0xff]
        %v1172 = vld [vmem:[#allocation7 + $0x100] sm:$0xff]
        %v1173 = vld [vmem:[#allocation7 + $0x108] sm:$0xff]
        %v1174 = vld [vmem:[#allocation7 + $0x110] sm:$0xff]
        %v1175 = vld [vmem:[#allocation7 + $0x118] sm:$0xff]
        %v1176 = vld [vmem:[#allocation7 + $0x120] sm:$0xff]
        %v1177 = vld [vmem:[#allocation7 + $0x128] sm:$0xff]
        %v1178 = vld [vmem:[#allocation7 + $0x130] sm:$0xff]
        %v1179 = vld [vmem:[#allocation7 + $0x138] sm:$0xff]
        %v1180 = vld [vmem:[#allocation7 + $0x140] sm:$0xff]
        %v1181 = vld [vmem:[#allocation7 + $0x148] sm:$0xff]
        %v1182 = vld [vmem:[#allocation7 + $0x150] sm:$0xff]
        %v1183 = vld [vmem:[#allocation7 + $0x158] sm:$0xff]
        %v1184 = vld [vmem:[#allocation7 + $0x160] sm:$0xff]
        %v1185 = vld [vmem:[#allocation7 + $0x168] sm:$0xff]
        %v1186 = vld [vmem:[#allocation7 + $0x170] sm:$0xff]
        %v1187 = vld [vmem:[#allocation7 + $0x178] sm:$0xff]
        %v1188 = vld [vmem:[#allocation7 + $0x180] sm:$0xff]
        %v1189 = vld [vmem:[#allocation7 + $0x188] sm:$0xff]
        %v1190 = vld [vmem:[#allocation7 + $0x190] sm:$0xff]
        %v1191 = vld [vmem:[#allocation7 + $0x198] sm:$0xff]
        %v1192 = vld [vmem:[#allocation7 + $0x1a0] sm:$0xff]
        %v1193 = vld [vmem:[#allocation7 + $0x1a8] sm:$0xff]
        %v1194 = vld [vmem:[#allocation7 + $0x1b0] sm:$0xff]
        %v1195 = vld [vmem:[#allocation7 + $0x1b8] sm:$0xff]
        %v1196 = vld [vmem:[#allocation7 + $0x1c0] sm:$0xff]
        %v1197 = vld [vmem:[#allocation7 + $0x1c8] sm:$0xff]
        %v1198 = vld [vmem:[#allocation7 + $0x1d0] sm:$0xff]
        %v1199 = vld [vmem:[#allocation7 + $0x1d8] sm:$0xff]
        %v1200 = vld [vmem:[#allocation7 + $0x1e0] sm:$0xff]
        %v1201 = vld [vmem:[#allocation7 + $0x1e8] sm:$0xff]
        %v1202 = vld [vmem:[#allocation7 + $0x1f0] sm:$0xff]
        %v1203 = vld [vmem:[#allocation7 + $0x1f8] sm:$0xff]
        %v1204 = vld [vmem:[#allocation7 + $0x200] sm:$0xff]
        %v1205 = vld [vmem:[#allocation7 + $0x208] sm:$0xff]
        %v1206 = vld [vmem:[#allocation7 + $0x210] sm:$0xff]
        %v1207 = vld [vmem:[#allocation7 + $0x218] sm:$0xff]
        %v1208 = vld [vmem:[#allocation7 + $0x220] sm:$0xff]
        %v1209 = vld [vmem:[#allocation7 + $0x228] sm:$0xff]
        %v1210 = vld [vmem:[#allocation7 + $0x230] sm:$0xff]
        %v1211 = vld [vmem:[#allocation7 + $0x238] sm:$0xff]
        %v1212 = vld [vmem:[#allocation7 + $0x240] sm:$0xff]
        %v1213 = vld [vmem:[#allocation7 + $0x248] sm:$0xff]
        %v1214 = vld [vmem:[#allocation7 + $0x250] sm:$0xff]
        %v1215 = vld [vmem:[#allocation7 + $0x258] sm:$0xff]
        %v1216 = vld [vmem:[#allocation7 + $0x260] sm:$0xff]
        %v1217 = vld [vmem:[#allocation7 + $0x268] sm:$0xff]
        %v1218 = vld [vmem:[#allocation7 + $0x270] sm:$0xff]
        %v1219 = vld [vmem:[#allocation7 + $0x278] sm:$0xff]
        %v1220 = vld [vmem:[#allocation7 + $0x280] sm:$0xff]
        %v1221 = vld [vmem:[#allocation7 + $0x288] sm:$0xff]
        %v1222 = vld [vmem:[#allocation7 + $0x290] sm:$0xff]
        %v1223 = vld [vmem:[#allocation7 + $0x298] sm:$0xff]
        %v1224 = vld [vmem:[#allocation7 + $0x2a0] sm:$0xff]
        %v1225 = vld [vmem:[#allocation7 + $0x2a8] sm:$0xff]
        %v1226 = vld [vmem:[#allocation7 + $0x2b0] sm:$0xff]
        %v1227 = vld [vmem:[#allocation7 + $0x2b8] sm:$0xff]
        %v1228 = vld [vmem:[#allocation7 + $0x2c0] sm:$0xff]
        %v1229 = vld [vmem:[#allocation7 + $0x2c8] sm:$0xff]
        %v1230 = vld [vmem:[#allocation7 + $0x2d0] sm:$0xff]
        %v1231 = vld [vmem:[#allocation7 + $0x2d8] sm:$0xff]
        %v1232 = vld [vmem:[#allocation7 + $0x2e0] sm:$0xff]
        %v1233 = vld [vmem:[#allocation7 + $0x2e8] sm:$0xff]
        %v1234 = vld [vmem:[#allocation7 + $0x2f0] sm:$0xff]
        %v1235 = vld [vmem:[#allocation7 + $0x2f8] sm:$0xff]
        %v1236 = vld [vmem:[#allocation7 + $0x300] sm:$0xff]
        %v1237 = vld [vmem:[#allocation7 + $0x308] sm:$0xff]
        %v1238 = vld [vmem:[#allocation7 + $0x310] sm:$0xff]
        %v1239 = vld [vmem:[#allocation7 + $0x318] sm:$0xff]
        %v1240 = vld [vmem:[#allocation7 + $0x320] sm:$0xff]
        %v1241 = vld [vmem:[#allocation7 + $0x328] sm:$0xff]
        %v1242 = vld [vmem:[#allocation7 + $0x330] sm:$0xff]
        %v1243 = vld [vmem:[#allocation7 + $0x338] sm:$0xff]
        %v1244 = vld [vmem:[#allocation7 + $0x340] sm:$0xff]
        %v1245 = vld [vmem:[#allocation7 + $0x348] sm:$0xff]
        %v1246 = vld [vmem:[#allocation7 + $0x350] sm:$0xff]
        %v1247 = vld [vmem:[#allocation7 + $0x358] sm:$0xff]
        %v1248 = vld [vmem:[#allocation7 + $0x360] sm:$0xff]
        %v1249 = vld [vmem:[#allocation7 + $0x368] sm:$0xff]
        %v1250 = vld [vmem:[#allocation7 + $0x370] sm:$0xff]
        %v1251 = vld [vmem:[#allocation7 + $0x378] sm:$0xff]
        %v1252 = vld [vmem:[#allocation7 + $0x380] sm:$0xff]
        %v1253 = vld [vmem:[#allocation7 + $0x388] sm:$0xff]
        %v1254 = vld [vmem:[#allocation7 + $0x390] sm:$0xff]
        %v1255 = vld [vmem:[#allocation7 + $0x398] sm:$0xff]
        %v1256 = vld [vmem:[#allocation7 + $0x3a0] sm:$0xff]
        %v1257 = vld [vmem:[#allocation7 + $0x3a8] sm:$0xff]
        %v1258 = vld [vmem:[#allocation7 + $0x3b0] sm:$0xff]
        %v1259 = vld [vmem:[#allocation7 + $0x3b8] sm:$0xff]
        %v1260 = vld [vmem:[#allocation7 + $0x3c0] sm:$0xff]
        %v1261 = vld [vmem:[#allocation7 + $0x3c8] sm:$0xff]
        %v1262 = vld [vmem:[#allocation7 + $0x3d0] sm:$0xff]
        %v1263 = vld [vmem:[#allocation7 + $0x3d8] sm:$0xff]
        %v1264 = vld [vmem:[#allocation7 + $0x3e0] sm:$0xff]
        %v1265 = vld [vmem:[#allocation7 + $0x3e8] sm:$0xff]
        %v1266 = vld [vmem:[#allocation7 + $0x3f0] sm:$0xff]
        %v1267 = vld [vmem:[#allocation7 + $0x3f8] sm:$0xff]
        %1268 = vmatprep.subr.mxu0 %v1171
        %1269 = vmatpush1.msra.mxu0 %v1170
        %1270 = vmatprep.subr.mxu0 %v1169
        %1271 = vmatpush1.msra.mxu0 %v1168
        %1272 = vmatprep.subr.mxu0 %v1167
        %1273 = vmatpush1.msra.mxu0 %v1166
        %1274 = vmatprep.subr.mxu0 %v1165
        %1275 = vmatpush1.msra.mxu0 %v1164
        %1276 = vmatprep.subr.mxu0 %v1163
        %1277 = vmatpush1.msra.mxu0 %v1162
        %1278 = vmatprep.subr.mxu0 %v1161
        %1279 = vmatpush1.msra.mxu0 %v1160
        %1280 = vmatprep.subr.mxu0 %v1159
        %1281 = vmatpush1.msra.mxu0 %v1158
        %1282 = vmatprep.subr.mxu0 %v1157
        %1283 = vmatpush1.msra.mxu0 %v1156
        %1284 = vmatprep.subr.mxu0 %v1155
        %1285 = vmatpush1.msra.mxu0 %v1154
        %1286 = vmatprep.subr.mxu0 %v1153
        %1287 = vmatpush1.msra.mxu0 %v1152
        %1288 = vmatprep.subr.mxu0 %v1151
        %1289 = vmatpush1.msra.mxu0 %v1150
        %1290 = vmatprep.subr.mxu0 %v1149
        %1291 = vmatpush1.msra.mxu0 %v1148
        %1292 = vmatprep.subr.mxu0 %v1147
        %1293 = vmatpush1.msra.mxu0 %v1146
        %1294 = vmatprep.subr.mxu0 %v1145
        %1295 = vmatpush1.msra.mxu0 %v1144
        %1296 = vmatprep.subr.mxu0 %v1143
        %1297 = vmatpush1.msra.mxu0 %v1142
        %1298 = vmatprep.subr.mxu0 %v1141
        %1299 = vmatpush1.msra.mxu0 %v1140
        %1300 = vmatprep.subr.mxu0 %v1203
        %1301 = vmatpush2.msra.mxu0 %v1202
        %1302 = vmatprep.subr.mxu0 %v1201
        %1303 = vmatpush2.msra.mxu0 %v1200
        %1304 = vmatprep.subr.mxu0 %v1199
        %1305 = vmatpush2.msra.mxu0 %v1198
        %1306 = vmatprep.subr.mxu0 %v1197
        %1307 = vmatpush2.msra.mxu0 %v1196
        %1308 = vmatprep.subr.mxu0 %v1195
        %1309 = vmatpush2.msra.mxu0 %v1194
        %1310 = vmatprep.subr.mxu0 %v1193
        %1311 = vmatpush2.msra.mxu0 %v1192
        %1312 = vmatprep.subr.mxu0 %v1191
        %1313 = vmatpush2.msra.mxu0 %v1190
        %1314 = vmatprep.subr.mxu0 %v1189
        %1315 = vmatpush2.msra.mxu0 %v1188
        %1316 = vmatprep.subr.mxu0 %v1187
        %1317 = vmatpush2.msra.mxu0 %v1186
        %1318 = vmatprep.subr.mxu0 %v1185
        %1319 = vmatpush2.msra.mxu0 %v1184
        %1320 = vmatprep.subr.mxu0 %v1183
        %1321 = vmatpush2.msra.mxu0 %v1182
        %1322 = vmatprep.subr.mxu0 %v1181
        %1323 = vmatpush2.msra.mxu0 %v1180
        %1324 = vmatprep.subr.mxu0 %v1179
        %1325 = vmatpush2.msra.mxu0 %v1178
        %1326 = vmatprep.subr.mxu0 %v1177
        %1327 = vmatpush2.msra.mxu0 %v1176
        %1328 = vmatprep.subr.mxu0 %v1175
        %1329 = vmatpush2.msra.mxu0 %v1174
        %1330 = vmatprep.subr.mxu0 %v1173
        %1331 = vmatpush2.msra.mxu0 %v1172
        %1332 = vmatprep.mubr.f32.mxu0 %v1067
        %1333 = vmatmul.mubr.f32.gmra.mxu0 %v1065
        %v1334 = vpop.f32.mrf.mxu0
        %v1335 = vadd.f32 0.0, %v1334
        %v1336 = vpop.f32.mrf.mxu0
        %v1337 = vadd.f32 0.0, %v1336
        %1338 = vdwg.mxu0
        %1339 = vmatprep.subr.mxu0 %v1235
        %1340 = vmatpush1.msra.mxu0 %v1234
        %1341 = vmatprep.subr.mxu0 %v1233
        %1342 = vmatpush1.msra.mxu0 %v1232
        %1343 = vmatprep.subr.mxu0 %v1231
        %1344 = vmatpush1.msra.mxu0 %v1230
        %1345 = vmatprep.subr.mxu0 %v1229
        %1346 = vmatpush1.msra.mxu0 %v1228
        %1347 = vmatprep.subr.mxu0 %v1227
        %1348 = vmatpush1.msra.mxu0 %v1226
        %1349 = vmatprep.subr.mxu0 %v1225
        %1350 = vmatpush1.msra.mxu0 %v1224
        %1351 = vmatprep.subr.mxu0 %v1223
        %1352 = vmatpush1.msra.mxu0 %v1222
        %1353 = vmatprep.subr.mxu0 %v1221
        %1354 = vmatpush1.msra.mxu0 %v1220
        %1355 = vmatprep.subr.mxu0 %v1219
        %1356 = vmatpush1.msra.mxu0 %v1218
        %1357 = vmatprep.subr.mxu0 %v1217
        %1358 = vmatpush1.msra.mxu0 %v1216
        %1359 = vmatprep.subr.mxu0 %v1215
        %1360 = vmatpush1.msra.mxu0 %v1214
        %1361 = vmatprep.subr.mxu0 %v1213
        %1362 = vmatpush1.msra.mxu0 %v1212
        %1363 = vmatprep.subr.mxu0 %v1211
        %1364 = vmatpush1.msra.mxu0 %v1210
        %1365 = vmatprep.subr.mxu0 %v1209
        %1366 = vmatpush1.msra.mxu0 %v1208
        %1367 = vmatprep.subr.mxu0 %v1207
        %1368 = vmatpush1.msra.mxu0 %v1206
        %1369 = vmatprep.subr.mxu0 %v1205
        %1370 = vmatpush1.msra.mxu0 %v1204
        %1371 = vmatprep.subr.mxu0 %v1267
        %1372 = vmatpush2.msra.mxu0 %v1266
        %1373 = vmatprep.subr.mxu0 %v1265
        %1374 = vmatpush2.msra.mxu0 %v1264
        %1375 = vmatprep.subr.mxu0 %v1263
        %1376 = vmatpush2.msra.mxu0 %v1262
        %1377 = vmatprep.subr.mxu0 %v1261
        %1378 = vmatpush2.msra.mxu0 %v1260
        %1379 = vmatprep.subr.mxu0 %v1259
        %1380 = vmatpush2.msra.mxu0 %v1258
        %1381 = vmatprep.subr.mxu0 %v1257
        %1382 = vmatpush2.msra.mxu0 %v1256
        %1383 = vmatprep.subr.mxu0 %v1255
        %1384 = vmatpush2.msra.mxu0 %v1254
        %1385 = vmatprep.subr.mxu0 %v1253
        %1386 = vmatpush2.msra.mxu0 %v1252
        %1387 = vmatprep.subr.mxu0 %v1251
        %1388 = vmatpush2.msra.mxu0 %v1250
        %1389 = vmatprep.subr.mxu0 %v1249
        %1390 = vmatpush2.msra.mxu0 %v1248
        %1391 = vmatprep.subr.mxu0 %v1247
        %1392 = vmatpush2.msra.mxu0 %v1246
        %1393 = vmatprep.subr.mxu0 %v1245
        %1394 = vmatpush2.msra.mxu0 %v1244
        %1395 = vmatprep.subr.mxu0 %v1243
        %1396 = vmatpush2.msra.mxu0 %v1242
        %1397 = vmatprep.subr.mxu0 %v1241
        %1398 = vmatpush2.msra.mxu0 %v1240
        %1399 = vmatprep.subr.mxu0 %v1239
        %1400 = vmatpush2.msra.mxu0 %v1238
        %1401 = vmatprep.subr.mxu0 %v1237
        %1402 = vmatpush2.msra.mxu0 %v1236
        %1403 = vmatprep.mubr.f32.mxu0 %v1138
        %1404 = vmatmul.mubr.f32.gmra.mxu0 %v1136
        %v1405 = vpop.f32.mrf.mxu0
        %v1406 = vadd.f32 %v1335, %v1405
        %v1407 = vpop.f32.mrf.mxu0
        %v1408 = vadd.f32 %v1337, %v1407
        %1409 = vdwg.mxu0
        %v1410 = vld [vmem:[#allocation8] sm:$0xff]
        %v1411 = vld [vmem:[#allocation8 + $0x8] sm:$0xff]
        %v1412 = vld [vmem:[#allocation8 + $0x10] sm:$0xff]
        %v1413 = vld [vmem:[#allocation8 + $0x18] sm:$0xff]
        %v1414 = vld [vmem:[#allocation8 + $0x20] sm:$0xff]
        %v1415 = vld [vmem:[#allocation8 + $0x28] sm:$0xff]
        %v1416 = vld [vmem:[#allocation8 + $0x30] sm:$0xff]
        %v1417 = vld [vmem:[#allocation8 + $0x38] sm:$0xff]
        %v1418 = vld [vmem:[#allocation8 + $0x40] sm:$0xff]
        %v1419 = vld [vmem:[#allocation8 + $0x48] sm:$0xff]
        %v1420 = vld [vmem:[#allocation8 + $0x50] sm:$0xff]
        %v1421 = vld [vmem:[#allocation8 + $0x58] sm:$0xff]
        %v1422 = vld [vmem:[#allocation8 + $0x60] sm:$0xff]
        %v1423 = vld [vmem:[#allocation8 + $0x68] sm:$0xff]
        %v1424 = vld [vmem:[#allocation8 + $0x70] sm:$0xff]
        %v1425 = vld [vmem:[#allocation8 + $0x78] sm:$0xff]
        %v1426 = vld [vmem:[#allocation8 + $0x80] sm:$0xff]
        %v1427 = vld [vmem:[#allocation8 + $0x88] sm:$0xff]
        %v1428 = vld [vmem:[#allocation8 + $0x90] sm:$0xff]
        %v1429 = vld [vmem:[#allocation8 + $0x98] sm:$0xff]
        %v1430 = vld [vmem:[#allocation8 + $0xa0] sm:$0xff]
        %v1431 = vld [vmem:[#allocation8 + $0xa8] sm:$0xff]
        %v1432 = vld [vmem:[#allocation8 + $0xb0] sm:$0xff]
        %v1433 = vld [vmem:[#allocation8 + $0xb8] sm:$0xff]
        %v1434 = vld [vmem:[#allocation8 + $0xc0] sm:$0xff]
        %v1435 = vld [vmem:[#allocation8 + $0xc8] sm:$0xff]
        %v1436 = vld [vmem:[#allocation8 + $0xd0] sm:$0xff]
        %v1437 = vld [vmem:[#allocation8 + $0xd8] sm:$0xff]
        %v1438 = vld [vmem:[#allocation8 + $0xe0] sm:$0xff]
        %v1439 = vld [vmem:[#allocation8 + $0xe8] sm:$0xff]
        %v1440 = vld [vmem:[#allocation8 + $0xf0] sm:$0xff]
        %v1441 = vld [vmem:[#allocation8 + $0xf8] sm:$0xff]
        %v1442 = vld [vmem:[#allocation8 + $0x100] sm:$0xff]
        %v1443 = vld [vmem:[#allocation8 + $0x108] sm:$0xff]
        %v1444 = vld [vmem:[#allocation8 + $0x110] sm:$0xff]
        %v1445 = vld [vmem:[#allocation8 + $0x118] sm:$0xff]
        %v1446 = vld [vmem:[#allocation8 + $0x120] sm:$0xff]
        %v1447 = vld [vmem:[#allocation8 + $0x128] sm:$0xff]
        %v1448 = vld [vmem:[#allocation8 + $0x130] sm:$0xff]
        %v1449 = vld [vmem:[#allocation8 + $0x138] sm:$0xff]
        %v1450 = vld [vmem:[#allocation8 + $0x140] sm:$0xff]
        %v1451 = vld [vmem:[#allocation8 + $0x148] sm:$0xff]
        %v1452 = vld [vmem:[#allocation8 + $0x150] sm:$0xff]
        %v1453 = vld [vmem:[#allocation8 + $0x158] sm:$0xff]
        %v1454 = vld [vmem:[#allocation8 + $0x160] sm:$0xff]
        %v1455 = vld [vmem:[#allocation8 + $0x168] sm:$0xff]
        %v1456 = vld [vmem:[#allocation8 + $0x170] sm:$0xff]
        %v1457 = vld [vmem:[#allocation8 + $0x178] sm:$0xff]
        %v1458 = vld [vmem:[#allocation8 + $0x180] sm:$0xff]
        %v1459 = vld [vmem:[#allocation8 + $0x188] sm:$0xff]
        %v1460 = vld [vmem:[#allocation8 + $0x190] sm:$0xff]
        %v1461 = vld [vmem:[#allocation8 + $0x198] sm:$0xff]
        %v1462 = vld [vmem:[#allocation8 + $0x1a0] sm:$0xff]
        %v1463 = vld [vmem:[#allocation8 + $0x1a8] sm:$0xff]
        %v1464 = vld [vmem:[#allocation8 + $0x1b0] sm:$0xff]
        %v1465 = vld [vmem:[#allocation8 + $0x1b8] sm:$0xff]
        %v1466 = vld [vmem:[#allocation8 + $0x1c0] sm:$0xff]
        %v1467 = vld [vmem:[#allocation8 + $0x1c8] sm:$0xff]
        %v1468 = vld [vmem:[#allocation8 + $0x1d0] sm:$0xff]
        %v1469 = vld [vmem:[#allocation8 + $0x1d8] sm:$0xff]
        %v1470 = vld [vmem:[#allocation8 + $0x1e0] sm:$0xff]
        %v1471 = vld [vmem:[#allocation8 + $0x1e8] sm:$0xff]
        %v1472 = vld [vmem:[#allocation8 + $0x1f0] sm:$0xff]
        %v1473 = vld [vmem:[#allocation8 + $0x1f8] sm:$0xff]
        %v1474 = vld [vmem:[#allocation8 + $0x200] sm:$0xff]
        %v1475 = vld [vmem:[#allocation8 + $0x208] sm:$0xff]
        %v1476 = vld [vmem:[#allocation8 + $0x210] sm:$0xff]
        %v1477 = vld [vmem:[#allocation8 + $0x218] sm:$0xff]
        %v1478 = vld [vmem:[#allocation8 + $0x220] sm:$0xff]
        %v1479 = vld [vmem:[#allocation8 + $0x228] sm:$0xff]
        %v1480 = vld [vmem:[#allocation8 + $0x230] sm:$0xff]
        %v1481 = vld [vmem:[#allocation8 + $0x238] sm:$0xff]
        %v1482 = vld [vmem:[#allocation8 + $0x240] sm:$0xff]
        %v1483 = vld [vmem:[#allocation8 + $0x248] sm:$0xff]
        %v1484 = vld [vmem:[#allocation8 + $0x250] sm:$0xff]
        %v1485 = vld [vmem:[#allocation8 + $0x258] sm:$0xff]
        %v1486 = vld [vmem:[#allocation8 + $0x260] sm:$0xff]
        %v1487 = vld [vmem:[#allocation8 + $0x268] sm:$0xff]
        %v1488 = vld [vmem:[#allocation8 + $0x270] sm:$0xff]
        %v1489 = vld [vmem:[#allocation8 + $0x278] sm:$0xff]
        %v1490 = vld [vmem:[#allocation8 + $0x280] sm:$0xff]
        %v1491 = vld [vmem:[#allocation8 + $0x288] sm:$0xff]
        %v1492 = vld [vmem:[#allocation8 + $0x290] sm:$0xff]
        %v1493 = vld [vmem:[#allocation8 + $0x298] sm:$0xff]
        %v1494 = vld [vmem:[#allocation8 + $0x2a0] sm:$0xff]
        %v1495 = vld [vmem:[#allocation8 + $0x2a8] sm:$0xff]
        %v1496 = vld [vmem:[#allocation8 + $0x2b0] sm:$0xff]
        %v1497 = vld [vmem:[#allocation8 + $0x2b8] sm:$0xff]
        %v1498 = vld [vmem:[#allocation8 + $0x2c0] sm:$0xff]
        %v1499 = vld [vmem:[#allocation8 + $0x2c8] sm:$0xff]
        %v1500 = vld [vmem:[#allocation8 + $0x2d0] sm:$0xff]
        %v1501 = vld [vmem:[#allocation8 + $0x2d8] sm:$0xff]
        %v1502 = vld [vmem:[#allocation8 + $0x2e0] sm:$0xff]
        %v1503 = vld [vmem:[#allocation8 + $0x2e8] sm:$0xff]
        %v1504 = vld [vmem:[#allocation8 + $0x2f0] sm:$0xff]
        %v1505 = vld [vmem:[#allocation8 + $0x2f8] sm:$0xff]
        %v1506 = vld [vmem:[#allocation8 + $0x300] sm:$0xff]
        %v1507 = vld [vmem:[#allocation8 + $0x308] sm:$0xff]
        %v1508 = vld [vmem:[#allocation8 + $0x310] sm:$0xff]
        %v1509 = vld [vmem:[#allocation8 + $0x318] sm:$0xff]
        %v1510 = vld [vmem:[#allocation8 + $0x320] sm:$0xff]
        %v1511 = vld [vmem:[#allocation8 + $0x328] sm:$0xff]
        %v1512 = vld [vmem:[#allocation8 + $0x330] sm:$0xff]
        %v1513 = vld [vmem:[#allocation8 + $0x338] sm:$0xff]
        %v1514 = vld [vmem:[#allocation8 + $0x340] sm:$0xff]
        %v1515 = vld [vmem:[#allocation8 + $0x348] sm:$0xff]
        %v1516 = vld [vmem:[#allocation8 + $0x350] sm:$0xff]
        %v1517 = vld [vmem:[#allocation8 + $0x358] sm:$0xff]
        %v1518 = vld [vmem:[#allocation8 + $0x360] sm:$0xff]
        %v1519 = vld [vmem:[#allocation8 + $0x368] sm:$0xff]
        %v1520 = vld [vmem:[#allocation8 + $0x370] sm:$0xff]
        %v1521 = vld [vmem:[#allocation8 + $0x378] sm:$0xff]
        %v1522 = vld [vmem:[#allocation8 + $0x380] sm:$0xff]
        %v1523 = vld [vmem:[#allocation8 + $0x388] sm:$0xff]
        %v1524 = vld [vmem:[#allocation8 + $0x390] sm:$0xff]
        %v1525 = vld [vmem:[#allocation8 + $0x398] sm:$0xff]
        %v1526 = vld [vmem:[#allocation8 + $0x3a0] sm:$0xff]
        %v1527 = vld [vmem:[#allocation8 + $0x3a8] sm:$0xff]
        %v1528 = vld [vmem:[#allocation8 + $0x3b0] sm:$0xff]
        %v1529 = vld [vmem:[#allocation8 + $0x3b8] sm:$0xff]
        %v1530 = vld [vmem:[#allocation8 + $0x3c0] sm:$0xff]
        %v1531 = vld [vmem:[#allocation8 + $0x3c8] sm:$0xff]
        %v1532 = vld [vmem:[#allocation8 + $0x3d0] sm:$0xff]
        %v1533 = vld [vmem:[#allocation8 + $0x3d8] sm:$0xff]
        %v1534 = vld [vmem:[#allocation8 + $0x3e0] sm:$0xff]
        %v1535 = vld [vmem:[#allocation8 + $0x3e8] sm:$0xff]
        %v1536 = vld [vmem:[#allocation8 + $0x3f0] sm:$0xff]
        %v1537 = vld [vmem:[#allocation8 + $0x3f8] sm:$0xff]
        %1538 = vmatprep.subr.mxu0 %v1441
        %1539 = vmatpush1.msra.mxu0 %v1440
        %1540 = vmatprep.subr.mxu0 %v1439
        %1541 = vmatpush1.msra.mxu0 %v1438
        %1542 = vmatprep.subr.mxu0 %v1437
        %1543 = vmatpush1.msra.mxu0 %v1436
        %1544 = vmatprep.subr.mxu0 %v1435
        %1545 = vmatpush1.msra.mxu0 %v1434
        %1546 = vmatprep.subr.mxu0 %v1433
        %1547 = vmatpush1.msra.mxu0 %v1432
        %1548 = vmatprep.subr.mxu0 %v1431
        %1549 = vmatpush1.msra.mxu0 %v1430
        %1550 = vmatprep.subr.mxu0 %v1429
        %1551 = vmatpush1.msra.mxu0 %v1428
        %1552 = vmatprep.subr.mxu0 %v1427
        %1553 = vmatpush1.msra.mxu0 %v1426
        %1554 = vmatprep.subr.mxu0 %v1425
        %1555 = vmatpush1.msra.mxu0 %v1424
        %1556 = vmatprep.subr.mxu0 %v1423
        %1557 = vmatpush1.msra.mxu0 %v1422
        %1558 = vmatprep.subr.mxu0 %v1421
        %1559 = vmatpush1.msra.mxu0 %v1420
        %1560 = vmatprep.subr.mxu0 %v1419
        %1561 = vmatpush1.msra.mxu0 %v1418
        %1562 = vmatprep.subr.mxu0 %v1417
        %1563 = vmatpush1.msra.mxu0 %v1416
        %1564 = vmatprep.subr.mxu0 %v1415
        %1565 = vmatpush1.msra.mxu0 %v1414
        %1566 = vmatprep.subr.mxu0 %v1413
        %1567 = vmatpush1.msra.mxu0 %v1412
        %1568 = vmatprep.subr.mxu0 %v1411
        %1569 = vmatpush1.msra.mxu0 %v1410
        %1570 = vmatprep.subr.mxu0 %v1473
        %1571 = vmatpush2.msra.mxu0 %v1472
        %1572 = vmatprep.subr.mxu0 %v1471
        %1573 = vmatpush2.msra.mxu0 %v1470
        %1574 = vmatprep.subr.mxu0 %v1469
        %1575 = vmatpush2.msra.mxu0 %v1468
        %1576 = vmatprep.subr.mxu0 %v1467
        %1577 = vmatpush2.msra.mxu0 %v1466
        %1578 = vmatprep.subr.mxu0 %v1465
        %1579 = vmatpush2.msra.mxu0 %v1464
        %1580 = vmatprep.subr.mxu0 %v1463
        %1581 = vmatpush2.msra.mxu0 %v1462
        %1582 = vmatprep.subr.mxu0 %v1461
        %1583 = vmatpush2.msra.mxu0 %v1460
        %1584 = vmatprep.subr.mxu0 %v1459
        %1585 = vmatpush2.msra.mxu0 %v1458
        %1586 = vmatprep.subr.mxu0 %v1457
        %1587 = vmatpush2.msra.mxu0 %v1456
        %1588 = vmatprep.subr.mxu0 %v1455
        %1589 = vmatpush2.msra.mxu0 %v1454
        %1590 = vmatprep.subr.mxu0 %v1453
        %1591 = vmatpush2.msra.mxu0 %v1452
        %1592 = vmatprep.subr.mxu0 %v1451
        %1593 = vmatpush2.msra.mxu0 %v1450
        %1594 = vmatprep.subr.mxu0 %v1449
        %1595 = vmatpush2.msra.mxu0 %v1448
        %1596 = vmatprep.subr.mxu0 %v1447
        %1597 = vmatpush2.msra.mxu0 %v1446
        %1598 = vmatprep.subr.mxu0 %v1445
        %1599 = vmatpush2.msra.mxu0 %v1444
        %1600 = vmatprep.subr.mxu0 %v1443
        %1601 = vmatpush2.msra.mxu0 %v1442
        %1602 = vmatprep.mubr.f32.mxu0 %v1067
        %1603 = vmatmul.mubr.f32.gmra.mxu0 %v1065
        %v1604 = vpop.f32.mrf.mxu0
        %v1605 = vadd.f32 0.0, %v1604
        %v1606 = vpop.f32.mrf.mxu0
        %v1607 = vadd.f32 0.0, %v1606
        %1608 = vdwg.mxu0
        %1609 = vmatprep.subr.mxu0 %v1505
        %1610 = vmatpush1.msra.mxu0 %v1504
        %1611 = vmatprep.subr.mxu0 %v1503
        %1612 = vmatpush1.msra.mxu0 %v1502
        %1613 = vmatprep.subr.mxu0 %v1501
        %1614 = vmatpush1.msra.mxu0 %v1500
        %1615 = vmatprep.subr.mxu0 %v1499
        %1616 = vmatpush1.msra.mxu0 %v1498
        %1617 = vmatprep.subr.mxu0 %v1497
        %1618 = vmatpush1.msra.mxu0 %v1496
        %1619 = vmatprep.subr.mxu0 %v1495
        %1620 = vmatpush1.msra.mxu0 %v1494
        %1621 = vmatprep.subr.mxu0 %v1493
        %1622 = vmatpush1.msra.mxu0 %v1492
        %1623 = vmatprep.subr.mxu0 %v1491
        %1624 = vmatpush1.msra.mxu0 %v1490
        %1625 = vmatprep.subr.mxu0 %v1489
        %1626 = vmatpush1.msra.mxu0 %v1488
        %1627 = vmatprep.subr.mxu0 %v1487
        %1628 = vmatpush1.msra.mxu0 %v1486
        %1629 = vmatprep.subr.mxu0 %v1485
        %1630 = vmatpush1.msra.mxu0 %v1484
        %1631 = vmatprep.subr.mxu0 %v1483
        %1632 = vmatpush1.msra.mxu0 %v1482
        %1633 = vmatprep.subr.mxu0 %v1481
        %1634 = vmatpush1.msra.mxu0 %v1480
        %1635 = vmatprep.subr.mxu0 %v1479
        %1636 = vmatpush1.msra.mxu0 %v1478
        %1637 = vmatprep.subr.mxu0 %v1477
        %1638 = vmatpush1.msra.mxu0 %v1476
        %1639 = vmatprep.subr.mxu0 %v1475
        %1640 = vmatpush1.msra.mxu0 %v1474
        %1641 = vmatprep.subr.mxu0 %v1537
        %1642 = vmatpush2.msra.mxu0 %v1536
        %1643 = vmatprep.subr.mxu0 %v1535
        %1644 = vmatpush2.msra.mxu0 %v1534
        %1645 = vmatprep.subr.mxu0 %v1533
        %1646 = vmatpush2.msra.mxu0 %v1532
        %1647 = vmatprep.subr.mxu0 %v1531
        %1648 = vmatpush2.msra.mxu0 %v1530
        %1649 = vmatprep.subr.mxu0 %v1529
        %1650 = vmatpush2.msra.mxu0 %v1528
        %1651 = vmatprep.subr.mxu0 %v1527
        %1652 = vmatpush2.msra.mxu0 %v1526
        %1653 = vmatprep.subr.mxu0 %v1525
        %1654 = vmatpush2.msra.mxu0 %v1524
        %1655 = vmatprep.subr.mxu0 %v1523
        %1656 = vmatpush2.msra.mxu0 %v1522
        %1657 = vmatprep.subr.mxu0 %v1521
        %1658 = vmatpush2.msra.mxu0 %v1520
        %1659 = vmatprep.subr.mxu0 %v1519
        %1660 = vmatpush2.msra.mxu0 %v1518
        %1661 = vmatprep.subr.mxu0 %v1517
        %1662 = vmatpush2.msra.mxu0 %v1516
        %1663 = vmatprep.subr.mxu0 %v1515
        %1664 = vmatpush2.msra.mxu0 %v1514
        %1665 = vmatprep.subr.mxu0 %v1513
        %1666 = vmatpush2.msra.mxu0 %v1512
        %1667 = vmatprep.subr.mxu0 %v1511
        %1668 = vmatpush2.msra.mxu0 %v1510
        %1669 = vmatprep.subr.mxu0 %v1509
        %1670 = vmatpush2.msra.mxu0 %v1508
        %1671 = vmatprep.subr.mxu0 %v1507
        %1672 = vmatpush2.msra.mxu0 %v1506
        %1673 = vmatprep.mubr.f32.mxu0 %v1138
        %1674 = vmatmul.mubr.f32.gmra.mxu0 %v1136
        %v1675 = vpop.f32.mrf.mxu0
        %v1676 = vadd.f32 %v1605, %v1675
        %v1677 = vpop.f32.mrf.mxu0
        %v1678 = vadd.f32 %v1607, %v1677
        %1679 = vdwg.mxu0
        %v1680 = vld [vmem:[#allocation10] sm:$0xff]
        %v1681 = vld [vmem:[#allocation10 + $0x8] sm:$0xff]
        %v1682 = vld [vmem:[#allocation10 + $0x10] sm:$0xff]
        %v1683 = vld [vmem:[#allocation10 + $0x18] sm:$0xff]
        %v1684 = vld [vmem:[#allocation10 + $0x20] sm:$0xff]
        %v1685 = vld [vmem:[#allocation10 + $0x28] sm:$0xff]
        %v1686 = vld [vmem:[#allocation10 + $0x30] sm:$0xff]
        %v1687 = vld [vmem:[#allocation10 + $0x38] sm:$0xff]
        %v1688 = vld [vmem:[#allocation10 + $0x40] sm:$0xff]
        %v1689 = vld [vmem:[#allocation10 + $0x48] sm:$0xff]
        %v1690 = vld [vmem:[#allocation10 + $0x50] sm:$0xff]
        %v1691 = vld [vmem:[#allocation10 + $0x58] sm:$0xff]
        %v1692 = vld [vmem:[#allocation10 + $0x60] sm:$0xff]
        %v1693 = vld [vmem:[#allocation10 + $0x68] sm:$0xff]
        %v1694 = vld [vmem:[#allocation10 + $0x70] sm:$0xff]
        %v1695 = vld [vmem:[#allocation10 + $0x78] sm:$0xff]
        %v1696 = vld [vmem:[#allocation10 + $0x80] sm:$0xff]
        %v1697 = vld [vmem:[#allocation10 + $0x88] sm:$0xff]
        %v1698 = vld [vmem:[#allocation10 + $0x90] sm:$0xff]
        %v1699 = vld [vmem:[#allocation10 + $0x98] sm:$0xff]
        %v1700 = vld [vmem:[#allocation10 + $0xa0] sm:$0xff]
        %v1701 = vld [vmem:[#allocation10 + $0xa8] sm:$0xff]
        %v1702 = vld [vmem:[#allocation10 + $0xb0] sm:$0xff]
        %v1703 = vld [vmem:[#allocation10 + $0xb8] sm:$0xff]
        %v1704 = vld [vmem:[#allocation10 + $0xc0] sm:$0xff]
        %v1705 = vld [vmem:[#allocation10 + $0xc8] sm:$0xff]
        %v1706 = vld [vmem:[#allocation10 + $0xd0] sm:$0xff]
        %v1707 = vld [vmem:[#allocation10 + $0xd8] sm:$0xff]
        %v1708 = vld [vmem:[#allocation10 + $0xe0] sm:$0xff]
        %v1709 = vld [vmem:[#allocation10 + $0xe8] sm:$0xff]
        %v1710 = vld [vmem:[#allocation10 + $0xf0] sm:$0xff]
        %v1711 = vld [vmem:[#allocation10 + $0xf8] sm:$0xff]
        %v1712 = vld [vmem:[#allocation10 + $0x100] sm:$0xff]
        %v1713 = vld [vmem:[#allocation10 + $0x108] sm:$0xff]
        %v1714 = vld [vmem:[#allocation10 + $0x110] sm:$0xff]
        %v1715 = vld [vmem:[#allocation10 + $0x118] sm:$0xff]
        %v1716 = vld [vmem:[#allocation10 + $0x120] sm:$0xff]
        %v1717 = vld [vmem:[#allocation10 + $0x128] sm:$0xff]
        %v1718 = vld [vmem:[#allocation10 + $0x130] sm:$0xff]
        %v1719 = vld [vmem:[#allocation10 + $0x138] sm:$0xff]
        %v1720 = vld [vmem:[#allocation10 + $0x140] sm:$0xff]
        %v1721 = vld [vmem:[#allocation10 + $0x148] sm:$0xff]
        %v1722 = vld [vmem:[#allocation10 + $0x150] sm:$0xff]
        %v1723 = vld [vmem:[#allocation10 + $0x158] sm:$0xff]
        %v1724 = vld [vmem:[#allocation10 + $0x160] sm:$0xff]
        %v1725 = vld [vmem:[#allocation10 + $0x168] sm:$0xff]
        %v1726 = vld [vmem:[#allocation10 + $0x170] sm:$0xff]
        %v1727 = vld [vmem:[#allocation10 + $0x178] sm:$0xff]
        %v1728 = vld [vmem:[#allocation10 + $0x180] sm:$0xff]
        %v1729 = vld [vmem:[#allocation10 + $0x188] sm:$0xff]
        %v1730 = vld [vmem:[#allocation10 + $0x190] sm:$0xff]
        %v1731 = vld [vmem:[#allocation10 + $0x198] sm:$0xff]
        %v1732 = vld [vmem:[#allocation10 + $0x1a0] sm:$0xff]
        %v1733 = vld [vmem:[#allocation10 + $0x1a8] sm:$0xff]
        %v1734 = vld [vmem:[#allocation10 + $0x1b0] sm:$0xff]
        %v1735 = vld [vmem:[#allocation10 + $0x1b8] sm:$0xff]
        %v1736 = vld [vmem:[#allocation10 + $0x1c0] sm:$0xff]
        %v1737 = vld [vmem:[#allocation10 + $0x1c8] sm:$0xff]
        %v1738 = vld [vmem:[#allocation10 + $0x1d0] sm:$0xff]
        %v1739 = vld [vmem:[#allocation10 + $0x1d8] sm:$0xff]
        %v1740 = vld [vmem:[#allocation10 + $0x1e0] sm:$0xff]
        %v1741 = vld [vmem:[#allocation10 + $0x1e8] sm:$0xff]
        %v1742 = vld [vmem:[#allocation10 + $0x1f0] sm:$0xff]
        %v1743 = vld [vmem:[#allocation10 + $0x1f8] sm:$0xff]
        %v1744 = vld [vmem:[#allocation10 + $0x200] sm:$0xff]
        %v1745 = vld [vmem:[#allocation10 + $0x208] sm:$0xff]
        %v1746 = vld [vmem:[#allocation10 + $0x210] sm:$0xff]
        %v1747 = vld [vmem:[#allocation10 + $0x218] sm:$0xff]
        %v1748 = vld [vmem:[#allocation10 + $0x220] sm:$0xff]
        %v1749 = vld [vmem:[#allocation10 + $0x228] sm:$0xff]
        %v1750 = vld [vmem:[#allocation10 + $0x230] sm:$0xff]
        %v1751 = vld [vmem:[#allocation10 + $0x238] sm:$0xff]
        %v1752 = vld [vmem:[#allocation10 + $0x240] sm:$0xff]
        %v1753 = vld [vmem:[#allocation10 + $0x248] sm:$0xff]
        %v1754 = vld [vmem:[#allocation10 + $0x250] sm:$0xff]
        %v1755 = vld [vmem:[#allocation10 + $0x258] sm:$0xff]
        %v1756 = vld [vmem:[#allocation10 + $0x260] sm:$0xff]
        %v1757 = vld [vmem:[#allocation10 + $0x268] sm:$0xff]
        %v1758 = vld [vmem:[#allocation10 + $0x270] sm:$0xff]
        %v1759 = vld [vmem:[#allocation10 + $0x278] sm:$0xff]
        %v1760 = vld [vmem:[#allocation10 + $0x280] sm:$0xff]
        %v1761 = vld [vmem:[#allocation10 + $0x288] sm:$0xff]
        %v1762 = vld [vmem:[#allocation10 + $0x290] sm:$0xff]
        %v1763 = vld [vmem:[#allocation10 + $0x298] sm:$0xff]
        %v1764 = vld [vmem:[#allocation10 + $0x2a0] sm:$0xff]
        %v1765 = vld [vmem:[#allocation10 + $0x2a8] sm:$0xff]
        %v1766 = vld [vmem:[#allocation10 + $0x2b0] sm:$0xff]
        %v1767 = vld [vmem:[#allocation10 + $0x2b8] sm:$0xff]
        %v1768 = vld [vmem:[#allocation10 + $0x2c0] sm:$0xff]
        %v1769 = vld [vmem:[#allocation10 + $0x2c8] sm:$0xff]
        %v1770 = vld [vmem:[#allocation10 + $0x2d0] sm:$0xff]
        %v1771 = vld [vmem:[#allocation10 + $0x2d8] sm:$0xff]
        %v1772 = vld [vmem:[#allocation10 + $0x2e0] sm:$0xff]
        %v1773 = vld [vmem:[#allocation10 + $0x2e8] sm:$0xff]
        %v1774 = vld [vmem:[#allocation10 + $0x2f0] sm:$0xff]
        %v1775 = vld [vmem:[#allocation10 + $0x2f8] sm:$0xff]
        %v1776 = vld [vmem:[#allocation10 + $0x300] sm:$0xff]
        %v1777 = vld [vmem:[#allocation10 + $0x308] sm:$0xff]
        %v1778 = vld [vmem:[#allocation10 + $0x310] sm:$0xff]
        %v1779 = vld [vmem:[#allocation10 + $0x318] sm:$0xff]
        %v1780 = vld [vmem:[#allocation10 + $0x320] sm:$0xff]
        %v1781 = vld [vmem:[#allocation10 + $0x328] sm:$0xff]
        %v1782 = vld [vmem:[#allocation10 + $0x330] sm:$0xff]
        %v1783 = vld [vmem:[#allocation10 + $0x338] sm:$0xff]
        %v1784 = vld [vmem:[#allocation10 + $0x340] sm:$0xff]
        %v1785 = vld [vmem:[#allocation10 + $0x348] sm:$0xff]
        %v1786 = vld [vmem:[#allocation10 + $0x350] sm:$0xff]
        %v1787 = vld [vmem:[#allocation10 + $0x358] sm:$0xff]
        %v1788 = vld [vmem:[#allocation10 + $0x360] sm:$0xff]
        %v1789 = vld [vmem:[#allocation10 + $0x368] sm:$0xff]
        %v1790 = vld [vmem:[#allocation10 + $0x370] sm:$0xff]
        %v1791 = vld [vmem:[#allocation10 + $0x378] sm:$0xff]
        %v1792 = vld [vmem:[#allocation10 + $0x380] sm:$0xff]
        %v1793 = vld [vmem:[#allocation10 + $0x388] sm:$0xff]
        %v1794 = vld [vmem:[#allocation10 + $0x390] sm:$0xff]
        %v1795 = vld [vmem:[#allocation10 + $0x398] sm:$0xff]
        %v1796 = vld [vmem:[#allocation10 + $0x3a0] sm:$0xff]
        %v1797 = vld [vmem:[#allocation10 + $0x3a8] sm:$0xff]
        %v1798 = vld [vmem:[#allocation10 + $0x3b0] sm:$0xff]
        %v1799 = vld [vmem:[#allocation10 + $0x3b8] sm:$0xff]
        %v1800 = vld [vmem:[#allocation10 + $0x3c0] sm:$0xff]
        %v1801 = vld [vmem:[#allocation10 + $0x3c8] sm:$0xff]
        %v1802 = vld [vmem:[#allocation10 + $0x3d0] sm:$0xff]
        %v1803 = vld [vmem:[#allocation10 + $0x3d8] sm:$0xff]
        %v1804 = vld [vmem:[#allocation10 + $0x3e0] sm:$0xff]
        %v1805 = vld [vmem:[#allocation10 + $0x3e8] sm:$0xff]
        %v1806 = vld [vmem:[#allocation10 + $0x3f0] sm:$0xff]
        %v1807 = vld [vmem:[#allocation10 + $0x3f8] sm:$0xff]
        %1808 = vmatprep.subr.mxu0 %v1711
        %1809 = vmatpush1.msra.mxu0 %v1710
        %1810 = vmatprep.subr.mxu0 %v1709
        %1811 = vmatpush1.msra.mxu0 %v1708
        %1812 = vmatprep.subr.mxu0 %v1707
        %1813 = vmatpush1.msra.mxu0 %v1706
        %1814 = vmatprep.subr.mxu0 %v1705
        %1815 = vmatpush1.msra.mxu0 %v1704
        %1816 = vmatprep.subr.mxu0 %v1703
        %1817 = vmatpush1.msra.mxu0 %v1702
        %1818 = vmatprep.subr.mxu0 %v1701
        %1819 = vmatpush1.msra.mxu0 %v1700
        %1820 = vmatprep.subr.mxu0 %v1699
        %1821 = vmatpush1.msra.mxu0 %v1698
        %1822 = vmatprep.subr.mxu0 %v1697
        %1823 = vmatpush1.msra.mxu0 %v1696
        %1824 = vmatprep.subr.mxu0 %v1695
        %1825 = vmatpush1.msra.mxu0 %v1694
        %1826 = vmatprep.subr.mxu0 %v1693
        %1827 = vmatpush1.msra.mxu0 %v1692
        %1828 = vmatprep.subr.mxu0 %v1691
        %1829 = vmatpush1.msra.mxu0 %v1690
        %1830 = vmatprep.subr.mxu0 %v1689
        %1831 = vmatpush1.msra.mxu0 %v1688
        %1832 = vmatprep.subr.mxu0 %v1687
        %1833 = vmatpush1.msra.mxu0 %v1686
        %1834 = vmatprep.subr.mxu0 %v1685
        %1835 = vmatpush1.msra.mxu0 %v1684
        %1836 = vmatprep.subr.mxu0 %v1683
        %1837 = vmatpush1.msra.mxu0 %v1682
        %1838 = vmatprep.subr.mxu0 %v1681
        %1839 = vmatpush1.msra.mxu0 %v1680
        %1840 = vmatprep.subr.mxu0 %v1743
        %1841 = vmatpush2.msra.mxu0 %v1742
        %1842 = vmatprep.subr.mxu0 %v1741
        %1843 = vmatpush2.msra.mxu0 %v1740
        %1844 = vmatprep.subr.mxu0 %v1739
        %1845 = vmatpush2.msra.mxu0 %v1738
        %1846 = vmatprep.subr.mxu0 %v1737
        %1847 = vmatpush2.msra.mxu0 %v1736
        %1848 = vmatprep.subr.mxu0 %v1735
        %1849 = vmatpush2.msra.mxu0 %v1734
        %1850 = vmatprep.subr.mxu0 %v1733
        %1851 = vmatpush2.msra.mxu0 %v1732
        %1852 = vmatprep.subr.mxu0 %v1731
        %1853 = vmatpush2.msra.mxu0 %v1730
        %1854 = vmatprep.subr.mxu0 %v1729
        %1855 = vmatpush2.msra.mxu0 %v1728
        %1856 = vmatprep.subr.mxu0 %v1727
        %1857 = vmatpush2.msra.mxu0 %v1726
        %1858 = vmatprep.subr.mxu0 %v1725
        %1859 = vmatpush2.msra.mxu0 %v1724
        %1860 = vmatprep.subr.mxu0 %v1723
        %1861 = vmatpush2.msra.mxu0 %v1722
        %1862 = vmatprep.subr.mxu0 %v1721
        %1863 = vmatpush2.msra.mxu0 %v1720
        %1864 = vmatprep.subr.mxu0 %v1719
        %1865 = vmatpush2.msra.mxu0 %v1718
        %1866 = vmatprep.subr.mxu0 %v1717
        %1867 = vmatpush2.msra.mxu0 %v1716
        %1868 = vmatprep.subr.mxu0 %v1715
        %1869 = vmatpush2.msra.mxu0 %v1714
        %1870 = vmatprep.subr.mxu0 %v1713
        %1871 = vmatpush2.msra.mxu0 %v1712
        %1872 = vmatprep.mubr.f32.mxu0 %v1067
        %1873 = vmatmul.mubr.f32.gmra.mxu0 %v1065
        %v1874 = vpop.f32.mrf.mxu0
        %v1875 = vadd.f32 0.0, %v1874
        %v1876 = vpop.f32.mrf.mxu0
        %v1877 = vadd.f32 0.0, %v1876
        %1878 = vdwg.mxu0
        %1879 = vmatprep.subr.mxu0 %v1775
        %1880 = vmatpush1.msra.mxu0 %v1774
        %1881 = vmatprep.subr.mxu0 %v1773
        %1882 = vmatpush1.msra.mxu0 %v1772
        %1883 = vmatprep.subr.mxu0 %v1771
        %1884 = vmatpush1.msra.mxu0 %v1770
        %1885 = vmatprep.subr.mxu0 %v1769
        %1886 = vmatpush1.msra.mxu0 %v1768
        %1887 = vmatprep.subr.mxu0 %v1767
        %1888 = vmatpush1.msra.mxu0 %v1766
        %1889 = vmatprep.subr.mxu0 %v1765
        %1890 = vmatpush1.msra.mxu0 %v1764
        %1891 = vmatprep.subr.mxu0 %v1763
        %1892 = vmatpush1.msra.mxu0 %v1762
        %1893 = vmatprep.subr.mxu0 %v1761
        %1894 = vmatpush1.msra.mxu0 %v1760
        %1895 = vmatprep.subr.mxu0 %v1759
        %1896 = vmatpush1.msra.mxu0 %v1758
        %1897 = vmatprep.subr.mxu0 %v1757
        %1898 = vmatpush1.msra.mxu0 %v1756
        %1899 = vmatprep.subr.mxu0 %v1755
        %1900 = vmatpush1.msra.mxu0 %v1754
        %1901 = vmatprep.subr.mxu0 %v1753
        %1902 = vmatpush1.msra.mxu0 %v1752
        %1903 = vmatprep.subr.mxu0 %v1751
        %1904 = vmatpush1.msra.mxu0 %v1750
        %1905 = vmatprep.subr.mxu0 %v1749
        %1906 = vmatpush1.msra.mxu0 %v1748
        %1907 = vmatprep.subr.mxu0 %v1747
        %1908 = vmatpush1.msra.mxu0 %v1746
        %1909 = vmatprep.subr.mxu0 %v1745
        %1910 = vmatpush1.msra.mxu0 %v1744
        %1911 = vmatprep.subr.mxu0 %v1807
        %1912 = vmatpush2.msra.mxu0 %v1806
        %1913 = vmatprep.subr.mxu0 %v1805
        %1914 = vmatpush2.msra.mxu0 %v1804
        %1915 = vmatprep.subr.mxu0 %v1803
        %1916 = vmatpush2.msra.mxu0 %v1802
        %1917 = vmatprep.subr.mxu0 %v1801
        %1918 = vmatpush2.msra.mxu0 %v1800
        %1919 = vmatprep.subr.mxu0 %v1799
        %1920 = vmatpush2.msra.mxu0 %v1798
        %1921 = vmatprep.subr.mxu0 %v1797
        %1922 = vmatpush2.msra.mxu0 %v1796
        %1923 = vmatprep.subr.mxu0 %v1795
        %1924 = vmatpush2.msra.mxu0 %v1794
        %1925 = vmatprep.subr.mxu0 %v1793
        %1926 = vmatpush2.msra.mxu0 %v1792
        %1927 = vmatprep.subr.mxu0 %v1791
        %1928 = vmatpush2.msra.mxu0 %v1790
        %1929 = vmatprep.subr.mxu0 %v1789
        %1930 = vmatpush2.msra.mxu0 %v1788
        %1931 = vmatprep.subr.mxu0 %v1787
        %1932 = vmatpush2.msra.mxu0 %v1786
        %1933 = vmatprep.subr.mxu0 %v1785
        %1934 = vmatpush2.msra.mxu0 %v1784
        %1935 = vmatprep.subr.mxu0 %v1783
        %1936 = vmatpush2.msra.mxu0 %v1782
        %1937 = vmatprep.subr.mxu0 %v1781
        %1938 = vmatpush2.msra.mxu0 %v1780
        %1939 = vmatprep.subr.mxu0 %v1779
        %1940 = vmatpush2.msra.mxu0 %v1778
        %1941 = vmatprep.subr.mxu0 %v1777
        %1942 = vmatpush2.msra.mxu0 %v1776
        %1943 = vmatprep.mubr.f32.mxu0 %v1138
        %1944 = vmatmul.mubr.f32.gmra.mxu0 %v1136
        %v1945 = vpop.f32.mrf.mxu0
        %v1946 = vadd.f32 %v1875, %v1945
        %v1947 = vpop.f32.mrf.mxu0
        %v1948 = vadd.f32 %v1877, %v1947
        %1949 = vdwg.mxu0
        %v1950 = vld [vmem:[#allocation11] sm:$0xff]
        %v1951 = vld [vmem:[#allocation11 + $0x8] sm:$0xff]
        %v1952 = vld [vmem:[#allocation11 + $0x10] sm:$0xff]
        %v1953 = vld [vmem:[#allocation11 + $0x18] sm:$0xff]
        %v1954 = vld [vmem:[#allocation11 + $0x20] sm:$0xff]
        %v1955 = vld [vmem:[#allocation11 + $0x28] sm:$0xff]
        %v1956 = vld [vmem:[#allocation11 + $0x30] sm:$0xff]
        %v1957 = vld [vmem:[#allocation11 + $0x38] sm:$0xff]
        %v1958 = vld [vmem:[#allocation11 + $0x40] sm:$0xff]
        %v1959 = vld [vmem:[#allocation11 + $0x48] sm:$0xff]
        %v1960 = vld [vmem:[#allocation11 + $0x50] sm:$0xff]
        %v1961 = vld [vmem:[#allocation11 + $0x58] sm:$0xff]
        %v1962 = vld [vmem:[#allocation11 + $0x60] sm:$0xff]
        %v1963 = vld [vmem:[#allocation11 + $0x68] sm:$0xff]
        %v1964 = vld [vmem:[#allocation11 + $0x70] sm:$0xff]
        %v1965 = vld [vmem:[#allocation11 + $0x78] sm:$0xff]
        %v1966 = vld [vmem:[#allocation11 + $0x80] sm:$0xff]
        %v1967 = vld [vmem:[#allocation11 + $0x88] sm:$0xff]
        %v1968 = vld [vmem:[#allocation11 + $0x90] sm:$0xff]
        %v1969 = vld [vmem:[#allocation11 + $0x98] sm:$0xff]
        %v1970 = vld [vmem:[#allocation11 + $0xa0] sm:$0xff]
        %v1971 = vld [vmem:[#allocation11 + $0xa8] sm:$0xff]
        %v1972 = vld [vmem:[#allocation11 + $0xb0] sm:$0xff]
        %v1973 = vld [vmem:[#allocation11 + $0xb8] sm:$0xff]
        %v1974 = vld [vmem:[#allocation11 + $0xc0] sm:$0xff]
        %v1975 = vld [vmem:[#allocation11 + $0xc8] sm:$0xff]
        %v1976 = vld [vmem:[#allocation11 + $0xd0] sm:$0xff]
        %v1977 = vld [vmem:[#allocation11 + $0xd8] sm:$0xff]
        %v1978 = vld [vmem:[#allocation11 + $0xe0] sm:$0xff]
        %v1979 = vld [vmem:[#allocation11 + $0xe8] sm:$0xff]
        %v1980 = vld [vmem:[#allocation11 + $0xf0] sm:$0xff]
        %v1981 = vld [vmem:[#allocation11 + $0xf8] sm:$0xff]
        %v1982 = vld [vmem:[#allocation11 + $0x100] sm:$0xff]
        %v1983 = vld [vmem:[#allocation11 + $0x108] sm:$0xff]
        %v1984 = vld [vmem:[#allocation11 + $0x110] sm:$0xff]
        %v1985 = vld [vmem:[#allocation11 + $0x118] sm:$0xff]
        %v1986 = vld [vmem:[#allocation11 + $0x120] sm:$0xff]
        %v1987 = vld [vmem:[#allocation11 + $0x128] sm:$0xff]
        %v1988 = vld [vmem:[#allocation11 + $0x130] sm:$0xff]
        %v1989 = vld [vmem:[#allocation11 + $0x138] sm:$0xff]
        %v1990 = vld [vmem:[#allocation11 + $0x140] sm:$0xff]
        %v1991 = vld [vmem:[#allocation11 + $0x148] sm:$0xff]
        %v1992 = vld [vmem:[#allocation11 + $0x150] sm:$0xff]
        %v1993 = vld [vmem:[#allocation11 + $0x158] sm:$0xff]
        %v1994 = vld [vmem:[#allocation11 + $0x160] sm:$0xff]
        %v1995 = vld [vmem:[#allocation11 + $0x168] sm:$0xff]
        %v1996 = vld [vmem:[#allocation11 + $0x170] sm:$0xff]
        %v1997 = vld [vmem:[#allocation11 + $0x178] sm:$0xff]
        %v1998 = vld [vmem:[#allocation11 + $0x180] sm:$0xff]
        %v1999 = vld [vmem:[#allocation11 + $0x188] sm:$0xff]
        %v2000 = vld [vmem:[#allocation11 + $0x190] sm:$0xff]
        %v2001 = vld [vmem:[#allocation11 + $0x198] sm:$0xff]
        %v2002 = vld [vmem:[#allocation11 + $0x1a0] sm:$0xff]
        %v2003 = vld [vmem:[#allocation11 + $0x1a8] sm:$0xff]
        %v2004 = vld [vmem:[#allocation11 + $0x1b0] sm:$0xff]
        %v2005 = vld [vmem:[#allocation11 + $0x1b8] sm:$0xff]
        %v2006 = vld [vmem:[#allocation11 + $0x1c0] sm:$0xff]
        %v2007 = vld [vmem:[#allocation11 + $0x1c8] sm:$0xff]
        %v2008 = vld [vmem:[#allocation11 + $0x1d0] sm:$0xff]
        %v2009 = vld [vmem:[#allocation11 + $0x1d8] sm:$0xff]
        %v2010 = vld [vmem:[#allocation11 + $0x1e0] sm:$0xff]
        %v2011 = vld [vmem:[#allocation11 + $0x1e8] sm:$0xff]
        %v2012 = vld [vmem:[#allocation11 + $0x1f0] sm:$0xff]
        %v2013 = vld [vmem:[#allocation11 + $0x1f8] sm:$0xff]
        %v2014 = vld [vmem:[#allocation11 + $0x200] sm:$0xff]
        %v2015 = vld [vmem:[#allocation11 + $0x208] sm:$0xff]
        %v2016 = vld [vmem:[#allocation11 + $0x210] sm:$0xff]
        %v2017 = vld [vmem:[#allocation11 + $0x218] sm:$0xff]
        %v2018 = vld [vmem:[#allocation11 + $0x220] sm:$0xff]
        %v2019 = vld [vmem:[#allocation11 + $0x228] sm:$0xff]
        %v2020 = vld [vmem:[#allocation11 + $0x230] sm:$0xff]
        %v2021 = vld [vmem:[#allocation11 + $0x238] sm:$0xff]
        %v2022 = vld [vmem:[#allocation11 + $0x240] sm:$0xff]
        %v2023 = vld [vmem:[#allocation11 + $0x248] sm:$0xff]
        %v2024 = vld [vmem:[#allocation11 + $0x250] sm:$0xff]
        %v2025 = vld [vmem:[#allocation11 + $0x258] sm:$0xff]
        %v2026 = vld [vmem:[#allocation11 + $0x260] sm:$0xff]
        %v2027 = vld [vmem:[#allocation11 + $0x268] sm:$0xff]
        %v2028 = vld [vmem:[#allocation11 + $0x270] sm:$0xff]
        %v2029 = vld [vmem:[#allocation11 + $0x278] sm:$0xff]
        %v2030 = vld [vmem:[#allocation11 + $0x280] sm:$0xff]
        %v2031 = vld [vmem:[#allocation11 + $0x288] sm:$0xff]
        %v2032 = vld [vmem:[#allocation11 + $0x290] sm:$0xff]
        %v2033 = vld [vmem:[#allocation11 + $0x298] sm:$0xff]
        %v2034 = vld [vmem:[#allocation11 + $0x2a0] sm:$0xff]
        %v2035 = vld [vmem:[#allocation11 + $0x2a8] sm:$0xff]
        %v2036 = vld [vmem:[#allocation11 + $0x2b0] sm:$0xff]
        %v2037 = vld [vmem:[#allocation11 + $0x2b8] sm:$0xff]
        %v2038 = vld [vmem:[#allocation11 + $0x2c0] sm:$0xff]
        %v2039 = vld [vmem:[#allocation11 + $0x2c8] sm:$0xff]
        %v2040 = vld [vmem:[#allocation11 + $0x2d0] sm:$0xff]
        %v2041 = vld [vmem:[#allocation11 + $0x2d8] sm:$0xff]
        %v2042 = vld [vmem:[#allocation11 + $0x2e0] sm:$0xff]
        %v2043 = vld [vmem:[#allocation11 + $0x2e8] sm:$0xff]
        %v2044 = vld [vmem:[#allocation11 + $0x2f0] sm:$0xff]
        %v2045 = vld [vmem:[#allocation11 + $0x2f8] sm:$0xff]
        %v2046 = vld [vmem:[#allocation11 + $0x300] sm:$0xff]
        %v2047 = vld [vmem:[#allocation11 + $0x308] sm:$0xff]
        %v2048 = vld [vmem:[#allocation11 + $0x310] sm:$0xff]
        %v2049 = vld [vmem:[#allocation11 + $0x318] sm:$0xff]
        %v2050 = vld [vmem:[#allocation11 + $0x320] sm:$0xff]
        %v2051 = vld [vmem:[#allocation11 + $0x328] sm:$0xff]
        %v2052 = vld [vmem:[#allocation11 + $0x330] sm:$0xff]
        %v2053 = vld [vmem:[#allocation11 + $0x338] sm:$0xff]
        %v2054 = vld [vmem:[#allocation11 + $0x340] sm:$0xff]
        %v2055 = vld [vmem:[#allocation11 + $0x348] sm:$0xff]
        %v2056 = vld [vmem:[#allocation11 + $0x350] sm:$0xff]
        %v2057 = vld [vmem:[#allocation11 + $0x358] sm:$0xff]
        %v2058 = vld [vmem:[#allocation11 + $0x360] sm:$0xff]
        %v2059 = vld [vmem:[#allocation11 + $0x368] sm:$0xff]
        %v2060 = vld [vmem:[#allocation11 + $0x370] sm:$0xff]
        %v2061 = vld [vmem:[#allocation11 + $0x378] sm:$0xff]
        %v2062 = vld [vmem:[#allocation11 + $0x380] sm:$0xff]
        %v2063 = vld [vmem:[#allocation11 + $0x388] sm:$0xff]
        %v2064 = vld [vmem:[#allocation11 + $0x390] sm:$0xff]
        %v2065 = vld [vmem:[#allocation11 + $0x398] sm:$0xff]
        %v2066 = vld [vmem:[#allocation11 + $0x3a0] sm:$0xff]
        %v2067 = vld [vmem:[#allocation11 + $0x3a8] sm:$0xff]
        %v2068 = vld [vmem:[#allocation11 + $0x3b0] sm:$0xff]
        %v2069 = vld [vmem:[#allocation11 + $0x3b8] sm:$0xff]
        %v2070 = vld [vmem:[#allocation11 + $0x3c0] sm:$0xff]
        %v2071 = vld [vmem:[#allocation11 + $0x3c8] sm:$0xff]
        %v2072 = vld [vmem:[#allocation11 + $0x3d0] sm:$0xff]
        %v2073 = vld [vmem:[#allocation11 + $0x3d8] sm:$0xff]
        %v2074 = vld [vmem:[#allocation11 + $0x3e0] sm:$0xff]
        %v2075 = vld [vmem:[#allocation11 + $0x3e8] sm:$0xff]
        %v2076 = vld [vmem:[#allocation11 + $0x3f0] sm:$0xff]
        %v2077 = vld [vmem:[#allocation11 + $0x3f8] sm:$0xff]
        %v2078 = vld [vmem:[#allocation11 + $0x400] sm:$0xff]
        %v2079 = vld [vmem:[#allocation11 + $0x408] sm:$0xff]
        %v2080 = vld [vmem:[#allocation11 + $0x410] sm:$0xff]
        %v2081 = vld [vmem:[#allocation11 + $0x418] sm:$0xff]
        %v2082 = vld [vmem:[#allocation11 + $0x420] sm:$0xff]
        %v2083 = vld [vmem:[#allocation11 + $0x428] sm:$0xff]
        %v2084 = vld [vmem:[#allocation11 + $0x430] sm:$0xff]
        %v2085 = vld [vmem:[#allocation11 + $0x438] sm:$0xff]
        %v2086 = vld [vmem:[#allocation11 + $0x440] sm:$0xff]
        %v2087 = vld [vmem:[#allocation11 + $0x448] sm:$0xff]
        %v2088 = vld [vmem:[#allocation11 + $0x450] sm:$0xff]
        %v2089 = vld [vmem:[#allocation11 + $0x458] sm:$0xff]
        %v2090 = vld [vmem:[#allocation11 + $0x460] sm:$0xff]
        %v2091 = vld [vmem:[#allocation11 + $0x468] sm:$0xff]
        %v2092 = vld [vmem:[#allocation11 + $0x470] sm:$0xff]
        %v2093 = vld [vmem:[#allocation11 + $0x478] sm:$0xff]
        %v2094 = vld [vmem:[#allocation11 + $0x480] sm:$0xff]
        %v2095 = vld [vmem:[#allocation11 + $0x488] sm:$0xff]
        %v2096 = vld [vmem:[#allocation11 + $0x490] sm:$0xff]
        %v2097 = vld [vmem:[#allocation11 + $0x498] sm:$0xff]
        %v2098 = vld [vmem:[#allocation11 + $0x4a0] sm:$0xff]
        %v2099 = vld [vmem:[#allocation11 + $0x4a8] sm:$0xff]
        %v2100 = vld [vmem:[#allocation11 + $0x4b0] sm:$0xff]
        %v2101 = vld [vmem:[#allocation11 + $0x4b8] sm:$0xff]
        %v2102 = vld [vmem:[#allocation11 + $0x4c0] sm:$0xff]
        %v2103 = vld [vmem:[#allocation11 + $0x4c8] sm:$0xff]
        %v2104 = vld [vmem:[#allocation11 + $0x4d0] sm:$0xff]
        %v2105 = vld [vmem:[#allocation11 + $0x4d8] sm:$0xff]
        %v2106 = vld [vmem:[#allocation11 + $0x4e0] sm:$0xff]
        %v2107 = vld [vmem:[#allocation11 + $0x4e8] sm:$0xff]
        %v2108 = vld [vmem:[#allocation11 + $0x4f0] sm:$0xff]
        %v2109 = vld [vmem:[#allocation11 + $0x4f8] sm:$0xff]
        %v2110 = vld [vmem:[#allocation11 + $0x500] sm:$0xff]
        %v2111 = vld [vmem:[#allocation11 + $0x508] sm:$0xff]
        %v2112 = vld [vmem:[#allocation11 + $0x510] sm:$0xff]
        %v2113 = vld [vmem:[#allocation11 + $0x518] sm:$0xff]
        %v2114 = vld [vmem:[#allocation11 + $0x520] sm:$0xff]
        %v2115 = vld [vmem:[#allocation11 + $0x528] sm:$0xff]
        %v2116 = vld [vmem:[#allocation11 + $0x530] sm:$0xff]
        %v2117 = vld [vmem:[#allocation11 + $0x538] sm:$0xff]
        %v2118 = vld [vmem:[#allocation11 + $0x540] sm:$0xff]
        %v2119 = vld [vmem:[#allocation11 + $0x548] sm:$0xff]
        %v2120 = vld [vmem:[#allocation11 + $0x550] sm:$0xff]
        %v2121 = vld [vmem:[#allocation11 + $0x558] sm:$0xff]
        %v2122 = vld [vmem:[#allocation11 + $0x560] sm:$0xff]
        %v2123 = vld [vmem:[#allocation11 + $0x568] sm:$0xff]
        %v2124 = vld [vmem:[#allocation11 + $0x570] sm:$0xff]
        %v2125 = vld [vmem:[#allocation11 + $0x578] sm:$0xff]
        %v2126 = vld [vmem:[#allocation11 + $0x580] sm:$0xff]
        %v2127 = vld [vmem:[#allocation11 + $0x588] sm:$0xff]
        %v2128 = vld [vmem:[#allocation11 + $0x590] sm:$0xff]
        %v2129 = vld [vmem:[#allocation11 + $0x598] sm:$0xff]
        %v2130 = vld [vmem:[#allocation11 + $0x5a0] sm:$0xff]
        %v2131 = vld [vmem:[#allocation11 + $0x5a8] sm:$0xff]
        %v2132 = vld [vmem:[#allocation11 + $0x5b0] sm:$0xff]
        %v2133 = vld [vmem:[#allocation11 + $0x5b8] sm:$0xff]
        %v2134 = vld [vmem:[#allocation11 + $0x5c0] sm:$0xff]
        %v2135 = vld [vmem:[#allocation11 + $0x5c8] sm:$0xff]
        %v2136 = vld [vmem:[#allocation11 + $0x5d0] sm:$0xff]
        %v2137 = vld [vmem:[#allocation11 + $0x5d8] sm:$0xff]
        %v2138 = vld [vmem:[#allocation11 + $0x5e0] sm:$0xff]
        %v2139 = vld [vmem:[#allocation11 + $0x5e8] sm:$0xff]
        %v2140 = vld [vmem:[#allocation11 + $0x5f0] sm:$0xff]
        %v2141 = vld [vmem:[#allocation11 + $0x5f8] sm:$0xff]
        %v2142 = vld [vmem:[#allocation11 + $0x600] sm:$0xff]
        %v2143 = vld [vmem:[#allocation11 + $0x608] sm:$0xff]
        %v2144 = vld [vmem:[#allocation11 + $0x610] sm:$0xff]
        %v2145 = vld [vmem:[#allocation11 + $0x618] sm:$0xff]
        %v2146 = vld [vmem:[#allocation11 + $0x620] sm:$0xff]
        %v2147 = vld [vmem:[#allocation11 + $0x628] sm:$0xff]
        %v2148 = vld [vmem:[#allocation11 + $0x630] sm:$0xff]
        %v2149 = vld [vmem:[#allocation11 + $0x638] sm:$0xff]
        %v2150 = vld [vmem:[#allocation11 + $0x640] sm:$0xff]
        %v2151 = vld [vmem:[#allocation11 + $0x648] sm:$0xff]
        %v2152 = vld [vmem:[#allocation11 + $0x650] sm:$0xff]
        %v2153 = vld [vmem:[#allocation11 + $0x658] sm:$0xff]
        %v2154 = vld [vmem:[#allocation11 + $0x660] sm:$0xff]
        %v2155 = vld [vmem:[#allocation11 + $0x668] sm:$0xff]
        %v2156 = vld [vmem:[#allocation11 + $0x670] sm:$0xff]
        %v2157 = vld [vmem:[#allocation11 + $0x678] sm:$0xff]
        %v2158 = vld [vmem:[#allocation11 + $0x680] sm:$0xff]
        %v2159 = vld [vmem:[#allocation11 + $0x688] sm:$0xff]
        %v2160 = vld [vmem:[#allocation11 + $0x690] sm:$0xff]
        %v2161 = vld [vmem:[#allocation11 + $0x698] sm:$0xff]
        %v2162 = vld [vmem:[#allocation11 + $0x6a0] sm:$0xff]
        %v2163 = vld [vmem:[#allocation11 + $0x6a8] sm:$0xff]
        %v2164 = vld [vmem:[#allocation11 + $0x6b0] sm:$0xff]
        %v2165 = vld [vmem:[#allocation11 + $0x6b8] sm:$0xff]
        %v2166 = vld [vmem:[#allocation11 + $0x6c0] sm:$0xff]
        %v2167 = vld [vmem:[#allocation11 + $0x6c8] sm:$0xff]
        %v2168 = vld [vmem:[#allocation11 + $0x6d0] sm:$0xff]
        %v2169 = vld [vmem:[#allocation11 + $0x6d8] sm:$0xff]
        %v2170 = vld [vmem:[#allocation11 + $0x6e0] sm:$0xff]
        %v2171 = vld [vmem:[#allocation11 + $0x6e8] sm:$0xff]
        %v2172 = vld [vmem:[#allocation11 + $0x6f0] sm:$0xff]
        %v2173 = vld [vmem:[#allocation11 + $0x6f8] sm:$0xff]
        %v2174 = vld [vmem:[#allocation11 + $0x700] sm:$0xff]
        %v2175 = vld [vmem:[#allocation11 + $0x708] sm:$0xff]
        %v2176 = vld [vmem:[#allocation11 + $0x710] sm:$0xff]
        %v2177 = vld [vmem:[#allocation11 + $0x718] sm:$0xff]
        %v2178 = vld [vmem:[#allocation11 + $0x720] sm:$0xff]
        %v2179 = vld [vmem:[#allocation11 + $0x728] sm:$0xff]
        %v2180 = vld [vmem:[#allocation11 + $0x730] sm:$0xff]
        %v2181 = vld [vmem:[#allocation11 + $0x738] sm:$0xff]
        %v2182 = vld [vmem:[#allocation11 + $0x740] sm:$0xff]
        %v2183 = vld [vmem:[#allocation11 + $0x748] sm:$0xff]
        %v2184 = vld [vmem:[#allocation11 + $0x750] sm:$0xff]
        %v2185 = vld [vmem:[#allocation11 + $0x758] sm:$0xff]
        %v2186 = vld [vmem:[#allocation11 + $0x760] sm:$0xff]
        %v2187 = vld [vmem:[#allocation11 + $0x768] sm:$0xff]
        %v2188 = vld [vmem:[#allocation11 + $0x770] sm:$0xff]
        %v2189 = vld [vmem:[#allocation11 + $0x778] sm:$0xff]
        %v2190 = vld [vmem:[#allocation11 + $0x780] sm:$0xff]
        %v2191 = vld [vmem:[#allocation11 + $0x788] sm:$0xff]
        %v2192 = vld [vmem:[#allocation11 + $0x790] sm:$0xff]
        %v2193 = vld [vmem:[#allocation11 + $0x798] sm:$0xff]
        %v2194 = vld [vmem:[#allocation11 + $0x7a0] sm:$0xff]
        %v2195 = vld [vmem:[#allocation11 + $0x7a8] sm:$0xff]
        %v2196 = vld [vmem:[#allocation11 + $0x7b0] sm:$0xff]
        %v2197 = vld [vmem:[#allocation11 + $0x7b8] sm:$0xff]
        %v2198 = vld [vmem:[#allocation11 + $0x7c0] sm:$0xff]
        %v2199 = vld [vmem:[#allocation11 + $0x7c8] sm:$0xff]
        %v2200 = vld [vmem:[#allocation11 + $0x7d0] sm:$0xff]
        %v2201 = vld [vmem:[#allocation11 + $0x7d8] sm:$0xff]
        %v2202 = vld [vmem:[#allocation11 + $0x7e0] sm:$0xff]
        %v2203 = vld [vmem:[#allocation11 + $0x7e8] sm:$0xff]
        %v2204 = vld [vmem:[#allocation11 + $0x7f0] sm:$0xff]
        %v2205 = vld [vmem:[#allocation11 + $0x7f8] sm:$0xff]
        %v2206 = vld [vmem:[#allocation11 + $0x800] sm:$0xff]
        %v2207 = vld [vmem:[#allocation11 + $0x808] sm:$0xff]
        %v2208 = vld [vmem:[#allocation11 + $0x810] sm:$0xff]
        %v2209 = vld [vmem:[#allocation11 + $0x818] sm:$0xff]
        %v2210 = vld [vmem:[#allocation11 + $0x820] sm:$0xff]
        %v2211 = vld [vmem:[#allocation11 + $0x828] sm:$0xff]
        %v2212 = vld [vmem:[#allocation11 + $0x830] sm:$0xff]
        %v2213 = vld [vmem:[#allocation11 + $0x838] sm:$0xff]
        %v2214 = vld [vmem:[#allocation11 + $0x840] sm:$0xff]
        %v2215 = vld [vmem:[#allocation11 + $0x848] sm:$0xff]
        %v2216 = vld [vmem:[#allocation11 + $0x850] sm:$0xff]
        %v2217 = vld [vmem:[#allocation11 + $0x858] sm:$0xff]
        %v2218 = vld [vmem:[#allocation11 + $0x860] sm:$0xff]
        %v2219 = vld [vmem:[#allocation11 + $0x868] sm:$0xff]
        %v2220 = vld [vmem:[#allocation11 + $0x870] sm:$0xff]
        %v2221 = vld [vmem:[#allocation11 + $0x878] sm:$0xff]
        %v2222 = vld [vmem:[#allocation11 + $0x880] sm:$0xff]
        %v2223 = vld [vmem:[#allocation11 + $0x888] sm:$0xff]
        %v2224 = vld [vmem:[#allocation11 + $0x890] sm:$0xff]
        %v2225 = vld [vmem:[#allocation11 + $0x898] sm:$0xff]
        %v2226 = vld [vmem:[#allocation11 + $0x8a0] sm:$0xff]
        %v2227 = vld [vmem:[#allocation11 + $0x8a8] sm:$0xff]
        %v2228 = vld [vmem:[#allocation11 + $0x8b0] sm:$0xff]
        %v2229 = vld [vmem:[#allocation11 + $0x8b8] sm:$0xff]
        %v2230 = vld [vmem:[#allocation11 + $0x8c0] sm:$0xff]
        %v2231 = vld [vmem:[#allocation11 + $0x8c8] sm:$0xff]
        %v2232 = vld [vmem:[#allocation11 + $0x8d0] sm:$0xff]
        %v2233 = vld [vmem:[#allocation11 + $0x8d8] sm:$0xff]
        %v2234 = vld [vmem:[#allocation11 + $0x8e0] sm:$0xff]
        %v2235 = vld [vmem:[#allocation11 + $0x8e8] sm:$0xff]
        %v2236 = vld [vmem:[#allocation11 + $0x8f0] sm:$0xff]
        %v2237 = vld [vmem:[#allocation11 + $0x8f8] sm:$0xff]
        %v2238 = vld [vmem:[#allocation11 + $0x900] sm:$0xff]
        %v2239 = vld [vmem:[#allocation11 + $0x908] sm:$0xff]
        %v2240 = vld [vmem:[#allocation11 + $0x910] sm:$0xff]
        %v2241 = vld [vmem:[#allocation11 + $0x918] sm:$0xff]
        %v2242 = vld [vmem:[#allocation11 + $0x920] sm:$0xff]
        %v2243 = vld [vmem:[#allocation11 + $0x928] sm:$0xff]
        %v2244 = vld [vmem:[#allocation11 + $0x930] sm:$0xff]
        %v2245 = vld [vmem:[#allocation11 + $0x938] sm:$0xff]
        %v2246 = vld [vmem:[#allocation11 + $0x940] sm:$0xff]
        %v2247 = vld [vmem:[#allocation11 + $0x948] sm:$0xff]
        %v2248 = vld [vmem:[#allocation11 + $0x950] sm:$0xff]
        %v2249 = vld [vmem:[#allocation11 + $0x958] sm:$0xff]
        %v2250 = vld [vmem:[#allocation11 + $0x960] sm:$0xff]
        %v2251 = vld [vmem:[#allocation11 + $0x968] sm:$0xff]
        %v2252 = vld [vmem:[#allocation11 + $0x970] sm:$0xff]
        %v2253 = vld [vmem:[#allocation11 + $0x978] sm:$0xff]
        %v2254 = vld [vmem:[#allocation11 + $0x980] sm:$0xff]
        %v2255 = vld [vmem:[#allocation11 + $0x988] sm:$0xff]
        %v2256 = vld [vmem:[#allocation11 + $0x990] sm:$0xff]
        %v2257 = vld [vmem:[#allocation11 + $0x998] sm:$0xff]
        %v2258 = vld [vmem:[#allocation11 + $0x9a0] sm:$0xff]
        %v2259 = vld [vmem:[#allocation11 + $0x9a8] sm:$0xff]
        %v2260 = vld [vmem:[#allocation11 + $0x9b0] sm:$0xff]
        %v2261 = vld [vmem:[#allocation11 + $0x9b8] sm:$0xff]
        %v2262 = vld [vmem:[#allocation11 + $0x9c0] sm:$0xff]
        %v2263 = vld [vmem:[#allocation11 + $0x9c8] sm:$0xff]
        %v2264 = vld [vmem:[#allocation11 + $0x9d0] sm:$0xff]
        %v2265 = vld [vmem:[#allocation11 + $0x9d8] sm:$0xff]
        %v2266 = vld [vmem:[#allocation11 + $0x9e0] sm:$0xff]
        %v2267 = vld [vmem:[#allocation11 + $0x9e8] sm:$0xff]
        %v2268 = vld [vmem:[#allocation11 + $0x9f0] sm:$0xff]
        %v2269 = vld [vmem:[#allocation11 + $0x9f8] sm:$0xff]
        %v2270 = vld [vmem:[#allocation11 + $0xa00] sm:$0xff]
        %v2271 = vld [vmem:[#allocation11 + $0xa08] sm:$0xff]
        %v2272 = vld [vmem:[#allocation11 + $0xa10] sm:$0xff]
        %v2273 = vld [vmem:[#allocation11 + $0xa18] sm:$0xff]
        %v2274 = vld [vmem:[#allocation11 + $0xa20] sm:$0xff]
        %v2275 = vld [vmem:[#allocation11 + $0xa28] sm:$0xff]
        %v2276 = vld [vmem:[#allocation11 + $0xa30] sm:$0xff]
        %v2277 = vld [vmem:[#allocation11 + $0xa38] sm:$0xff]
        %v2278 = vld [vmem:[#allocation11 + $0xa40] sm:$0xff]
        %v2279 = vld [vmem:[#allocation11 + $0xa48] sm:$0xff]
        %v2280 = vld [vmem:[#allocation11 + $0xa50] sm:$0xff]
        %v2281 = vld [vmem:[#allocation11 + $0xa58] sm:$0xff]
        %v2282 = vld [vmem:[#allocation11 + $0xa60] sm:$0xff]
        %v2283 = vld [vmem:[#allocation11 + $0xa68] sm:$0xff]
        %v2284 = vld [vmem:[#allocation11 + $0xa70] sm:$0xff]
        %v2285 = vld [vmem:[#allocation11 + $0xa78] sm:$0xff]
        %v2286 = vld [vmem:[#allocation11 + $0xa80] sm:$0xff]
        %v2287 = vld [vmem:[#allocation11 + $0xa88] sm:$0xff]
        %v2288 = vld [vmem:[#allocation11 + $0xa90] sm:$0xff]
        %v2289 = vld [vmem:[#allocation11 + $0xa98] sm:$0xff]
        %v2290 = vld [vmem:[#allocation11 + $0xaa0] sm:$0xff]
        %v2291 = vld [vmem:[#allocation11 + $0xaa8] sm:$0xff]
        %v2292 = vld [vmem:[#allocation11 + $0xab0] sm:$0xff]
        %v2293 = vld [vmem:[#allocation11 + $0xab8] sm:$0xff]
        %v2294 = vld [vmem:[#allocation11 + $0xac0] sm:$0xff]
        %v2295 = vld [vmem:[#allocation11 + $0xac8] sm:$0xff]
        %v2296 = vld [vmem:[#allocation11 + $0xad0] sm:$0xff]
        %v2297 = vld [vmem:[#allocation11 + $0xad8] sm:$0xff]
        %v2298 = vld [vmem:[#allocation11 + $0xae0] sm:$0xff]
        %v2299 = vld [vmem:[#allocation11 + $0xae8] sm:$0xff]
        %v2300 = vld [vmem:[#allocation11 + $0xaf0] sm:$0xff]
        %v2301 = vld [vmem:[#allocation11 + $0xaf8] sm:$0xff]
        %v2302 = vld [vmem:[#allocation11 + $0xb00] sm:$0xff]
        %v2303 = vld [vmem:[#allocation11 + $0xb08] sm:$0xff]
        %v2304 = vld [vmem:[#allocation11 + $0xb10] sm:$0xff]
        %v2305 = vld [vmem:[#allocation11 + $0xb18] sm:$0xff]
        %v2306 = vld [vmem:[#allocation11 + $0xb20] sm:$0xff]
        %v2307 = vld [vmem:[#allocation11 + $0xb28] sm:$0xff]
        %v2308 = vld [vmem:[#allocation11 + $0xb30] sm:$0xff]
        %v2309 = vld [vmem:[#allocation11 + $0xb38] sm:$0xff]
        %v2310 = vld [vmem:[#allocation11 + $0xb40] sm:$0xff]
        %v2311 = vld [vmem:[#allocation11 + $0xb48] sm:$0xff]
        %v2312 = vld [vmem:[#allocation11 + $0xb50] sm:$0xff]
        %v2313 = vld [vmem:[#allocation11 + $0xb58] sm:$0xff]
        %v2314 = vld [vmem:[#allocation11 + $0xb60] sm:$0xff]
        %v2315 = vld [vmem:[#allocation11 + $0xb68] sm:$0xff]
        %v2316 = vld [vmem:[#allocation11 + $0xb70] sm:$0xff]
        %v2317 = vld [vmem:[#allocation11 + $0xb78] sm:$0xff]
        %v2318 = vld [vmem:[#allocation11 + $0xb80] sm:$0xff]
        %v2319 = vld [vmem:[#allocation11 + $0xb88] sm:$0xff]
        %v2320 = vld [vmem:[#allocation11 + $0xb90] sm:$0xff]
        %v2321 = vld [vmem:[#allocation11 + $0xb98] sm:$0xff]
        %v2322 = vld [vmem:[#allocation11 + $0xba0] sm:$0xff]
        %v2323 = vld [vmem:[#allocation11 + $0xba8] sm:$0xff]
        %v2324 = vld [vmem:[#allocation11 + $0xbb0] sm:$0xff]
        %v2325 = vld [vmem:[#allocation11 + $0xbb8] sm:$0xff]
        %v2326 = vld [vmem:[#allocation11 + $0xbc0] sm:$0xff]
        %v2327 = vld [vmem:[#allocation11 + $0xbc8] sm:$0xff]
        %v2328 = vld [vmem:[#allocation11 + $0xbd0] sm:$0xff]
        %v2329 = vld [vmem:[#allocation11 + $0xbd8] sm:$0xff]
        %v2330 = vld [vmem:[#allocation11 + $0xbe0] sm:$0xff]
        %v2331 = vld [vmem:[#allocation11 + $0xbe8] sm:$0xff]
        %v2332 = vld [vmem:[#allocation11 + $0xbf0] sm:$0xff]
        %v2333 = vld [vmem:[#allocation11 + $0xbf8] sm:$0xff]
        %v2334 = vld [vmem:[#allocation11 + $0xc00] sm:$0xff]
        %v2335 = vld [vmem:[#allocation11 + $0xc08] sm:$0xff]
        %v2336 = vld [vmem:[#allocation11 + $0xc10] sm:$0xff]
        %v2337 = vld [vmem:[#allocation11 + $0xc18] sm:$0xff]
        %v2338 = vld [vmem:[#allocation11 + $0xc20] sm:$0xff]
        %v2339 = vld [vmem:[#allocation11 + $0xc28] sm:$0xff]
        %v2340 = vld [vmem:[#allocation11 + $0xc30] sm:$0xff]
        %v2341 = vld [vmem:[#allocation11 + $0xc38] sm:$0xff]
        %v2342 = vld [vmem:[#allocation11 + $0xc40] sm:$0xff]
        %v2343 = vld [vmem:[#allocation11 + $0xc48] sm:$0xff]
        %v2344 = vld [vmem:[#allocation11 + $0xc50] sm:$0xff]
        %v2345 = vld [vmem:[#allocation11 + $0xc58] sm:$0xff]
        %v2346 = vld [vmem:[#allocation11 + $0xc60] sm:$0xff]
        %v2347 = vld [vmem:[#allocation11 + $0xc68] sm:$0xff]
        %v2348 = vld [vmem:[#allocation11 + $0xc70] sm:$0xff]
        %v2349 = vld [vmem:[#allocation11 + $0xc78] sm:$0xff]
        %v2350 = vld [vmem:[#allocation11 + $0xc80] sm:$0xff]
        %v2351 = vld [vmem:[#allocation11 + $0xc88] sm:$0xff]
        %v2352 = vld [vmem:[#allocation11 + $0xc90] sm:$0xff]
        %v2353 = vld [vmem:[#allocation11 + $0xc98] sm:$0xff]
        %v2354 = vld [vmem:[#allocation11 + $0xca0] sm:$0xff]
        %v2355 = vld [vmem:[#allocation11 + $0xca8] sm:$0xff]
        %v2356 = vld [vmem:[#allocation11 + $0xcb0] sm:$0xff]
        %v2357 = vld [vmem:[#allocation11 + $0xcb8] sm:$0xff]
        %v2358 = vld [vmem:[#allocation11 + $0xcc0] sm:$0xff]
        %v2359 = vld [vmem:[#allocation11 + $0xcc8] sm:$0xff]
        %v2360 = vld [vmem:[#allocation11 + $0xcd0] sm:$0xff]
        %v2361 = vld [vmem:[#allocation11 + $0xcd8] sm:$0xff]
        %v2362 = vld [vmem:[#allocation11 + $0xce0] sm:$0xff]
        %v2363 = vld [vmem:[#allocation11 + $0xce8] sm:$0xff]
        %v2364 = vld [vmem:[#allocation11 + $0xcf0] sm:$0xff]
        %v2365 = vld [vmem:[#allocation11 + $0xcf8] sm:$0xff]
        %v2366 = vld [vmem:[#allocation11 + $0xd00] sm:$0xff]
        %v2367 = vld [vmem:[#allocation11 + $0xd08] sm:$0xff]
        %v2368 = vld [vmem:[#allocation11 + $0xd10] sm:$0xff]
        %v2369 = vld [vmem:[#allocation11 + $0xd18] sm:$0xff]
        %v2370 = vld [vmem:[#allocation11 + $0xd20] sm:$0xff]
        %v2371 = vld [vmem:[#allocation11 + $0xd28] sm:$0xff]
        %v2372 = vld [vmem:[#allocation11 + $0xd30] sm:$0xff]
        %v2373 = vld [vmem:[#allocation11 + $0xd38] sm:$0xff]
        %v2374 = vld [vmem:[#allocation11 + $0xd40] sm:$0xff]
        %v2375 = vld [vmem:[#allocation11 + $0xd48] sm:$0xff]
        %v2376 = vld [vmem:[#allocation11 + $0xd50] sm:$0xff]
        %v2377 = vld [vmem:[#allocation11 + $0xd58] sm:$0xff]
        %v2378 = vld [vmem:[#allocation11 + $0xd60] sm:$0xff]
        %v2379 = vld [vmem:[#allocation11 + $0xd68] sm:$0xff]
        %v2380 = vld [vmem:[#allocation11 + $0xd70] sm:$0xff]
        %v2381 = vld [vmem:[#allocation11 + $0xd78] sm:$0xff]
        %v2382 = vld [vmem:[#allocation11 + $0xd80] sm:$0xff]
        %v2383 = vld [vmem:[#allocation11 + $0xd88] sm:$0xff]
        %v2384 = vld [vmem:[#allocation11 + $0xd90] sm:$0xff]
        %v2385 = vld [vmem:[#allocation11 + $0xd98] sm:$0xff]
        %v2386 = vld [vmem:[#allocation11 + $0xda0] sm:$0xff]
        %v2387 = vld [vmem:[#allocation11 + $0xda8] sm:$0xff]
        %v2388 = vld [vmem:[#allocation11 + $0xdb0] sm:$0xff]
        %v2389 = vld [vmem:[#allocation11 + $0xdb8] sm:$0xff]
        %v2390 = vld [vmem:[#allocation11 + $0xdc0] sm:$0xff]
        %v2391 = vld [vmem:[#allocation11 + $0xdc8] sm:$0xff]
        %v2392 = vld [vmem:[#allocation11 + $0xdd0] sm:$0xff]
        %v2393 = vld [vmem:[#allocation11 + $0xdd8] sm:$0xff]
        %v2394 = vld [vmem:[#allocation11 + $0xde0] sm:$0xff]
        %v2395 = vld [vmem:[#allocation11 + $0xde8] sm:$0xff]
        %v2396 = vld [vmem:[#allocation11 + $0xdf0] sm:$0xff]
        %v2397 = vld [vmem:[#allocation11 + $0xdf8] sm:$0xff]
        %v2398 = vld [vmem:[#allocation11 + $0xe00] sm:$0xff]
        %v2399 = vld [vmem:[#allocation11 + $0xe08] sm:$0xff]
        %v2400 = vld [vmem:[#allocation11 + $0xe10] sm:$0xff]
        %v2401 = vld [vmem:[#allocation11 + $0xe18] sm:$0xff]
        %v2402 = vld [vmem:[#allocation11 + $0xe20] sm:$0xff]
        %v2403 = vld [vmem:[#allocation11 + $0xe28] sm:$0xff]
        %v2404 = vld [vmem:[#allocation11 + $0xe30] sm:$0xff]
        %v2405 = vld [vmem:[#allocation11 + $0xe38] sm:$0xff]
        %v2406 = vld [vmem:[#allocation11 + $0xe40] sm:$0xff]
        %v2407 = vld [vmem:[#allocation11 + $0xe48] sm:$0xff]
        %v2408 = vld [vmem:[#allocation11 + $0xe50] sm:$0xff]
        %v2409 = vld [vmem:[#allocation11 + $0xe58] sm:$0xff]
        %v2410 = vld [vmem:[#allocation11 + $0xe60] sm:$0xff]
        %v2411 = vld [vmem:[#allocation11 + $0xe68] sm:$0xff]
        %v2412 = vld [vmem:[#allocation11 + $0xe70] sm:$0xff]
        %v2413 = vld [vmem:[#allocation11 + $0xe78] sm:$0xff]
        %v2414 = vld [vmem:[#allocation11 + $0xe80] sm:$0xff]
        %v2415 = vld [vmem:[#allocation11 + $0xe88] sm:$0xff]
        %v2416 = vld [vmem:[#allocation11 + $0xe90] sm:$0xff]
        %v2417 = vld [vmem:[#allocation11 + $0xe98] sm:$0xff]
        %v2418 = vld [vmem:[#allocation11 + $0xea0] sm:$0xff]
        %v2419 = vld [vmem:[#allocation11 + $0xea8] sm:$0xff]
        %v2420 = vld [vmem:[#allocation11 + $0xeb0] sm:$0xff]
        %v2421 = vld [vmem:[#allocation11 + $0xeb8] sm:$0xff]
        %v2422 = vld [vmem:[#allocation11 + $0xec0] sm:$0xff]
        %v2423 = vld [vmem:[#allocation11 + $0xec8] sm:$0xff]
        %v2424 = vld [vmem:[#allocation11 + $0xed0] sm:$0xff]
        %v2425 = vld [vmem:[#allocation11 + $0xed8] sm:$0xff]
        %v2426 = vld [vmem:[#allocation11 + $0xee0] sm:$0xff]
        %v2427 = vld [vmem:[#allocation11 + $0xee8] sm:$0xff]
        %v2428 = vld [vmem:[#allocation11 + $0xef0] sm:$0xff]
        %v2429 = vld [vmem:[#allocation11 + $0xef8] sm:$0xff]
        %v2430 = vld [vmem:[#allocation11 + $0xf00] sm:$0xff]
        %v2431 = vld [vmem:[#allocation11 + $0xf08] sm:$0xff]
        %v2432 = vld [vmem:[#allocation11 + $0xf10] sm:$0xff]
        %v2433 = vld [vmem:[#allocation11 + $0xf18] sm:$0xff]
        %v2434 = vld [vmem:[#allocation11 + $0xf20] sm:$0xff]
        %v2435 = vld [vmem:[#allocation11 + $0xf28] sm:$0xff]
        %v2436 = vld [vmem:[#allocation11 + $0xf30] sm:$0xff]
        %v2437 = vld [vmem:[#allocation11 + $0xf38] sm:$0xff]
        %v2438 = vld [vmem:[#allocation11 + $0xf40] sm:$0xff]
        %v2439 = vld [vmem:[#allocation11 + $0xf48] sm:$0xff]
        %v2440 = vld [vmem:[#allocation11 + $0xf50] sm:$0xff]
        %v2441 = vld [vmem:[#allocation11 + $0xf58] sm:$0xff]
        %v2442 = vld [vmem:[#allocation11 + $0xf60] sm:$0xff]
        %v2443 = vld [vmem:[#allocation11 + $0xf68] sm:$0xff]
        %v2444 = vld [vmem:[#allocation11 + $0xf70] sm:$0xff]
        %v2445 = vld [vmem:[#allocation11 + $0xf78] sm:$0xff]
        %v2446 = vld [vmem:[#allocation11 + $0xf80] sm:$0xff]
        %v2447 = vld [vmem:[#allocation11 + $0xf88] sm:$0xff]
        %v2448 = vld [vmem:[#allocation11 + $0xf90] sm:$0xff]
        %v2449 = vld [vmem:[#allocation11 + $0xf98] sm:$0xff]
        %v2450 = vld [vmem:[#allocation11 + $0xfa0] sm:$0xff]
        %v2451 = vld [vmem:[#allocation11 + $0xfa8] sm:$0xff]
        %v2452 = vld [vmem:[#allocation11 + $0xfb0] sm:$0xff]
        %v2453 = vld [vmem:[#allocation11 + $0xfb8] sm:$0xff]
        %v2454 = vld [vmem:[#allocation11 + $0xfc0] sm:$0xff]
        %v2455 = vld [vmem:[#allocation11 + $0xfc8] sm:$0xff]
        %v2456 = vld [vmem:[#allocation11 + $0xfd0] sm:$0xff]
        %v2457 = vld [vmem:[#allocation11 + $0xfd8] sm:$0xff]
        %v2458 = vld [vmem:[#allocation11 + $0xfe0] sm:$0xff]
        %v2459 = vld [vmem:[#allocation11 + $0xfe8] sm:$0xff]
        %v2460 = vld [vmem:[#allocation11 + $0xff0] sm:$0xff]
        %v2461 = vld [vmem:[#allocation11 + $0xff8] sm:$0xff]
        %2462 = vmatprep.subr.mxu0 %v2191
        %2463 = vmatpush1.msra.mxu0 %v2190
        %2464 = vmatprep.subr.mxu0 %v2175
        %2465 = vmatpush1.msra.mxu0 %v2174
        %2466 = vmatprep.subr.mxu0 %v2159
        %2467 = vmatpush1.msra.mxu0 %v2158
        %2468 = vmatprep.subr.mxu0 %v2143
        %2469 = vmatpush1.msra.mxu0 %v2142
        %2470 = vmatprep.subr.mxu0 %v2127
        %2471 = vmatpush1.msra.mxu0 %v2126
        %2472 = vmatprep.subr.mxu0 %v2111
        %2473 = vmatpush1.msra.mxu0 %v2110
        %2474 = vmatprep.subr.mxu0 %v2095
        %2475 = vmatpush1.msra.mxu0 %v2094
        %2476 = vmatprep.subr.mxu0 %v2079
        %2477 = vmatpush1.msra.mxu0 %v2078
        %2478 = vmatprep.subr.mxu0 %v2063
        %2479 = vmatpush1.msra.mxu0 %v2062
        %2480 = vmatprep.subr.mxu0 %v2047
        %2481 = vmatpush1.msra.mxu0 %v2046
        %2482 = vmatprep.subr.mxu0 %v2031
        %2483 = vmatpush1.msra.mxu0 %v2030
        %2484 = vmatprep.subr.mxu0 %v2015
        %2485 = vmatpush1.msra.mxu0 %v2014
        %2486 = vmatprep.subr.mxu0 %v1999
        %2487 = vmatpush1.msra.mxu0 %v1998
        %2488 = vmatprep.subr.mxu0 %v1983
        %2489 = vmatpush1.msra.mxu0 %v1982
        %2490 = vmatprep.subr.mxu0 %v1967
        %2491 = vmatpush1.msra.mxu0 %v1966
        %2492 = vmatprep.subr.mxu0 %v1951
        %2493 = vmatpush1.msra.mxu0 %v1950
        %2494 = vmatprep.subr.mxu0 %v2447
        %2495 = vmatpush2.msra.mxu0 %v2446
        %2496 = vmatprep.subr.mxu0 %v2431
        %2497 = vmatpush2.msra.mxu0 %v2430
        %2498 = vmatprep.subr.mxu0 %v2415
        %2499 = vmatpush2.msra.mxu0 %v2414
        %2500 = vmatprep.subr.mxu0 %v2399
        %2501 = vmatpush2.msra.mxu0 %v2398
        %2502 = vmatprep.subr.mxu0 %v2383
        %2503 = vmatpush2.msra.mxu0 %v2382
        %2504 = vmatprep.subr.mxu0 %v2367
        %2505 = vmatpush2.msra.mxu0 %v2366
        %2506 = vmatprep.subr.mxu0 %v2351
        %2507 = vmatpush2.msra.mxu0 %v2350
        %2508 = vmatprep.subr.mxu0 %v2335
        %2509 = vmatpush2.msra.mxu0 %v2334
        %2510 = vmatprep.subr.mxu0 %v2319
        %2511 = vmatpush2.msra.mxu0 %v2318
        %2512 = vmatprep.subr.mxu0 %v2303
        %2513 = vmatpush2.msra.mxu0 %v2302
        %2514 = vmatprep.subr.mxu0 %v2287
        %2515 = vmatpush2.msra.mxu0 %v2286
        %2516 = vmatprep.subr.mxu0 %v2271
        %2517 = vmatpush2.msra.mxu0 %v2270
        %2518 = vmatprep.subr.mxu0 %v2255
        %2519 = vmatpush2.msra.mxu0 %v2254
        %2520 = vmatprep.subr.mxu0 %v2239
        %2521 = vmatpush2.msra.mxu0 %v2238
        %2522 = vmatprep.subr.mxu0 %v2223
        %2523 = vmatpush2.msra.mxu0 %v2222
        %2524 = vmatprep.subr.mxu0 %v2207
        %2525 = vmatpush2.msra.mxu0 %v2206
        %2526 = vmatprep.mubr.f32.mxu0 %v1408
        %2527 = vmatmul.mubr.f32.gmra.mxu0 %v1406
        %v2528 = vpop.f32.mrf.mxu0
        %v2529 = vadd.f32 0.0, %v2528
        %v2530 = vpop.f32.mrf.mxu0
        %v2531 = vadd.f32 0.0, %v2530
        %2532 = vdwg.mxu0
        %2533 = vmatprep.subr.mxu0 %v2193
        %2534 = vmatpush1.msra.mxu0 %v2192
        %2535 = vmatprep.subr.mxu0 %v2177
        %2536 = vmatpush1.msra.mxu0 %v2176
        %2537 = vmatprep.subr.mxu0 %v2161
        %2538 = vmatpush1.msra.mxu0 %v2160
        %2539 = vmatprep.subr.mxu0 %v2145
        %2540 = vmatpush1.msra.mxu0 %v2144
        %2541 = vmatprep.subr.mxu0 %v2129
        %2542 = vmatpush1.msra.mxu0 %v2128
        %2543 = vmatprep.subr.mxu0 %v2113
        %2544 = vmatpush1.msra.mxu0 %v2112
        %2545 = vmatprep.subr.mxu0 %v2097
        %2546 = vmatpush1.msra.mxu0 %v2096
        %2547 = vmatprep.subr.mxu0 %v2081
        %2548 = vmatpush1.msra.mxu0 %v2080
        %2549 = vmatprep.subr.mxu0 %v2065
        %2550 = vmatpush1.msra.mxu0 %v2064
        %2551 = vmatprep.subr.mxu0 %v2049
        %2552 = vmatpush1.msra.mxu0 %v2048
        %2553 = vmatprep.subr.mxu0 %v2033
        %2554 = vmatpush1.msra.mxu0 %v2032
        %2555 = vmatprep.subr.mxu0 %v2017
        %2556 = vmatpush1.msra.mxu0 %v2016
        %2557 = vmatprep.subr.mxu0 %v2001
        %2558 = vmatpush1.msra.mxu0 %v2000
        %2559 = vmatprep.subr.mxu0 %v1985
        %2560 = vmatpush1.msra.mxu0 %v1984
        %2561 = vmatprep.subr.mxu0 %v1969
        %2562 = vmatpush1.msra.mxu0 %v1968
        %2563 = vmatprep.subr.mxu0 %v1953
        %2564 = vmatpush1.msra.mxu0 %v1952
        %2565 = vmatprep.subr.mxu0 %v2449
        %2566 = vmatpush2.msra.mxu0 %v2448
        %2567 = vmatprep.subr.mxu0 %v2433
        %2568 = vmatpush2.msra.mxu0 %v2432
        %2569 = vmatprep.subr.mxu0 %v2417
        %2570 = vmatpush2.msra.mxu0 %v2416
        %2571 = vmatprep.subr.mxu0 %v2401
        %2572 = vmatpush2.msra.mxu0 %v2400
        %2573 = vmatprep.subr.mxu0 %v2385
        %2574 = vmatpush2.msra.mxu0 %v2384
        %2575 = vmatprep.subr.mxu0 %v2369
        %2576 = vmatpush2.msra.mxu0 %v2368
        %2577 = vmatprep.subr.mxu0 %v2353
        %2578 = vmatpush2.msra.mxu0 %v2352
        %2579 = vmatprep.subr.mxu0 %v2337
        %2580 = vmatpush2.msra.mxu0 %v2336
        %2581 = vmatprep.subr.mxu0 %v2321
        %2582 = vmatpush2.msra.mxu0 %v2320
        %2583 = vmatprep.subr.mxu0 %v2305
        %2584 = vmatpush2.msra.mxu0 %v2304
        %2585 = vmatprep.subr.mxu0 %v2289
        %2586 = vmatpush2.msra.mxu0 %v2288
        %2587 = vmatprep.subr.mxu0 %v2273
        %2588 = vmatpush2.msra.mxu0 %v2272
        %2589 = vmatprep.subr.mxu0 %v2257
        %2590 = vmatpush2.msra.mxu0 %v2256
        %2591 = vmatprep.subr.mxu0 %v2241
        %2592 = vmatpush2.msra.mxu0 %v2240
        %2593 = vmatprep.subr.mxu0 %v2225
        %2594 = vmatpush2.msra.mxu0 %v2224
        %2595 = vmatprep.subr.mxu0 %v2209
        %2596 = vmatpush2.msra.mxu0 %v2208
        %2597 = vmatprep.mubr.f32.mxu0 %v1408
        %2598 = vmatmul.mubr.f32.gmra.mxu0 %v1406
        %v2599 = vpop.f32.mrf.mxu0
        %v2600 = vadd.f32 0.0, %v2599
        %v2601 = vpop.f32.mrf.mxu0
        %v2602 = vadd.f32 0.0, %v2601
        %2603 = vdwg.mxu0
        %2604 = vmatprep.subr.mxu0 %v2195
        %2605 = vmatpush1.msra.mxu0 %v2194
        %2606 = vmatprep.subr.mxu0 %v2179
        %2607 = vmatpush1.msra.mxu0 %v2178
        %2608 = vmatprep.subr.mxu0 %v2163
        %2609 = vmatpush1.msra.mxu0 %v2162
        %2610 = vmatprep.subr.mxu0 %v2147
        %2611 = vmatpush1.msra.mxu0 %v2146
        %2612 = vmatprep.subr.mxu0 %v2131
        %2613 = vmatpush1.msra.mxu0 %v2130
        %2614 = vmatprep.subr.mxu0 %v2115
        %2615 = vmatpush1.msra.mxu0 %v2114
        %2616 = vmatprep.subr.mxu0 %v2099
        %2617 = vmatpush1.msra.mxu0 %v2098
        %2618 = vmatprep.subr.mxu0 %v2083
        %2619 = vmatpush1.msra.mxu0 %v2082
        %2620 = vmatprep.subr.mxu0 %v2067
        %2621 = vmatpush1.msra.mxu0 %v2066
        %2622 = vmatprep.subr.mxu0 %v2051
        %2623 = vmatpush1.msra.mxu0 %v2050
        %2624 = vmatprep.subr.mxu0 %v2035
        %2625 = vmatpush1.msra.mxu0 %v2034
        %2626 = vmatprep.subr.mxu0 %v2019
        %2627 = vmatpush1.msra.mxu0 %v2018
        %2628 = vmatprep.subr.mxu0 %v2003
        %2629 = vmatpush1.msra.mxu0 %v2002
        %2630 = vmatprep.subr.mxu0 %v1987
        %2631 = vmatpush1.msra.mxu0 %v1986
        %2632 = vmatprep.subr.mxu0 %v1971
        %2633 = vmatpush1.msra.mxu0 %v1970
        %2634 = vmatprep.subr.mxu0 %v1955
        %2635 = vmatpush1.msra.mxu0 %v1954
        %2636 = vmatprep.subr.mxu0 %v2451
        %2637 = vmatpush2.msra.mxu0 %v2450
        %2638 = vmatprep.subr.mxu0 %v2435
        %2639 = vmatpush2.msra.mxu0 %v2434
        %2640 = vmatprep.subr.mxu0 %v2419
        %2641 = vmatpush2.msra.mxu0 %v2418
        %2642 = vmatprep.subr.mxu0 %v2403
        %2643 = vmatpush2.msra.mxu0 %v2402
        %2644 = vmatprep.subr.mxu0 %v2387
        %2645 = vmatpush2.msra.mxu0 %v2386
        %2646 = vmatprep.subr.mxu0 %v2371
        %2647 = vmatpush2.msra.mxu0 %v2370
        %2648 = vmatprep.subr.mxu0 %v2355
        %2649 = vmatpush2.msra.mxu0 %v2354
        %2650 = vmatprep.subr.mxu0 %v2339
        %2651 = vmatpush2.msra.mxu0 %v2338
        %2652 = vmatprep.subr.mxu0 %v2323
        %2653 = vmatpush2.msra.mxu0 %v2322
        %2654 = vmatprep.subr.mxu0 %v2307
        %2655 = vmatpush2.msra.mxu0 %v2306
        %2656 = vmatprep.subr.mxu0 %v2291
        %2657 = vmatpush2.msra.mxu0 %v2290
        %2658 = vmatprep.subr.mxu0 %v2275
        %2659 = vmatpush2.msra.mxu0 %v2274
        %2660 = vmatprep.subr.mxu0 %v2259
        %2661 = vmatpush2.msra.mxu0 %v2258
        %2662 = vmatprep.subr.mxu0 %v2243
        %2663 = vmatpush2.msra.mxu0 %v2242
        %2664 = vmatprep.subr.mxu0 %v2227
        %2665 = vmatpush2.msra.mxu0 %v2226
        %2666 = vmatprep.subr.mxu0 %v2211
        %2667 = vmatpush2.msra.mxu0 %v2210
        %2668 = vmatprep.mubr.f32.mxu0 %v1408
        %2669 = vmatmul.mubr.f32.gmra.mxu0 %v1406
        %v2670 = vpop.f32.mrf.mxu0
        %v2671 = vadd.f32 0.0, %v2670
        %v2672 = vpop.f32.mrf.mxu0
        %v2673 = vadd.f32 0.0, %v2672
        %2674 = vdwg.mxu0
        %2675 = vmatprep.subr.mxu0 %v2197
        %2676 = vmatpush1.msra.mxu0 %v2196
        %2677 = vmatprep.subr.mxu0 %v2181
        %2678 = vmatpush1.msra.mxu0 %v2180
        %2679 = vmatprep.subr.mxu0 %v2165
        %2680 = vmatpush1.msra.mxu0 %v2164
        %2681 = vmatprep.subr.mxu0 %v2149
        %2682 = vmatpush1.msra.mxu0 %v2148
        %2683 = vmatprep.subr.mxu0 %v2133
        %2684 = vmatpush1.msra.mxu0 %v2132
        %2685 = vmatprep.subr.mxu0 %v2117
        %2686 = vmatpush1.msra.mxu0 %v2116
        %2687 = vmatprep.subr.mxu0 %v2101
        %2688 = vmatpush1.msra.mxu0 %v2100
        %2689 = vmatprep.subr.mxu0 %v2085
        %2690 = vmatpush1.msra.mxu0 %v2084
        %2691 = vmatprep.subr.mxu0 %v2069
        %2692 = vmatpush1.msra.mxu0 %v2068
        %2693 = vmatprep.subr.mxu0 %v2053
        %2694 = vmatpush1.msra.mxu0 %v2052
        %2695 = vmatprep.subr.mxu0 %v2037
        %2696 = vmatpush1.msra.mxu0 %v2036
        %2697 = vmatprep.subr.mxu0 %v2021
        %2698 = vmatpush1.msra.mxu0 %v2020
        %2699 = vmatprep.subr.mxu0 %v2005
        %2700 = vmatpush1.msra.mxu0 %v2004
        %2701 = vmatprep.subr.mxu0 %v1989
        %2702 = vmatpush1.msra.mxu0 %v1988
        %2703 = vmatprep.subr.mxu0 %v1973
        %2704 = vmatpush1.msra.mxu0 %v1972
        %2705 = vmatprep.subr.mxu0 %v1957
        %2706 = vmatpush1.msra.mxu0 %v1956
        %2707 = vmatprep.subr.mxu0 %v2453
        %2708 = vmatpush2.msra.mxu0 %v2452
        %2709 = vmatprep.subr.mxu0 %v2437
        %2710 = vmatpush2.msra.mxu0 %v2436
        %2711 = vmatprep.subr.mxu0 %v2421
        %2712 = vmatpush2.msra.mxu0 %v2420
        %2713 = vmatprep.subr.mxu0 %v2405
        %2714 = vmatpush2.msra.mxu0 %v2404
        %2715 = vmatprep.subr.mxu0 %v2389
        %2716 = vmatpush2.msra.mxu0 %v2388
        %2717 = vmatprep.subr.mxu0 %v2373
        %2718 = vmatpush2.msra.mxu0 %v2372
        %2719 = vmatprep.subr.mxu0 %v2357
        %2720 = vmatpush2.msra.mxu0 %v2356
        %2721 = vmatprep.subr.mxu0 %v2341
        %2722 = vmatpush2.msra.mxu0 %v2340
        %2723 = vmatprep.subr.mxu0 %v2325
        %2724 = vmatpush2.msra.mxu0 %v2324
        %2725 = vmatprep.subr.mxu0 %v2309
        %2726 = vmatpush2.msra.mxu0 %v2308
        %2727 = vmatprep.subr.mxu0 %v2293
        %2728 = vmatpush2.msra.mxu0 %v2292
        %2729 = vmatprep.subr.mxu0 %v2277
        %2730 = vmatpush2.msra.mxu0 %v2276
        %2731 = vmatprep.subr.mxu0 %v2261
        %2732 = vmatpush2.msra.mxu0 %v2260
        %2733 = vmatprep.subr.mxu0 %v2245
        %2734 = vmatpush2.msra.mxu0 %v2244
        %2735 = vmatprep.subr.mxu0 %v2229
        %2736 = vmatpush2.msra.mxu0 %v2228
        %2737 = vmatprep.subr.mxu0 %v2213
        %2738 = vmatpush2.msra.mxu0 %v2212
        %2739 = vmatprep.mubr.f32.mxu0 %v1408
        %2740 = vmatmul.mubr.f32.gmra.mxu0 %v1406
        %v2741 = vpop.f32.mrf.mxu0
        %v2742 = vadd.f32 0.0, %v2741
        %v2743 = vpop.f32.mrf.mxu0
        %v2744 = vadd.f32 0.0, %v2743
        %2745 = vdwg.mxu0
        %2746 = vmatprep.subr.mxu0 %v2199
        %2747 = vmatpush1.msra.mxu0 %v2198
        %2748 = vmatprep.subr.mxu0 %v2183
        %2749 = vmatpush1.msra.mxu0 %v2182
        %2750 = vmatprep.subr.mxu0 %v2167
        %2751 = vmatpush1.msra.mxu0 %v2166
        %2752 = vmatprep.subr.mxu0 %v2151
        %2753 = vmatpush1.msra.mxu0 %v2150
        %2754 = vmatprep.subr.mxu0 %v2135
        %2755 = vmatpush1.msra.mxu0 %v2134
        %2756 = vmatprep.subr.mxu0 %v2119
        %2757 = vmatpush1.msra.mxu0 %v2118
        %2758 = vmatprep.subr.mxu0 %v2103
        %2759 = vmatpush1.msra.mxu0 %v2102
        %2760 = vmatprep.subr.mxu0 %v2087
        %2761 = vmatpush1.msra.mxu0 %v2086
        %2762 = vmatprep.subr.mxu0 %v2071
        %2763 = vmatpush1.msra.mxu0 %v2070
        %2764 = vmatprep.subr.mxu0 %v2055
        %2765 = vmatpush1.msra.mxu0 %v2054
        %2766 = vmatprep.subr.mxu0 %v2039
        %2767 = vmatpush1.msra.mxu0 %v2038
        %2768 = vmatprep.subr.mxu0 %v2023
        %2769 = vmatpush1.msra.mxu0 %v2022
        %2770 = vmatprep.subr.mxu0 %v2007
        %2771 = vmatpush1.msra.mxu0 %v2006
        %2772 = vmatprep.subr.mxu0 %v1991
        %2773 = vmatpush1.msra.mxu0 %v1990
        %2774 = vmatprep.subr.mxu0 %v1975
        %2775 = vmatpush1.msra.mxu0 %v1974
        %2776 = vmatprep.subr.mxu0 %v1959
        %2777 = vmatpush1.msra.mxu0 %v1958
        %2778 = vmatprep.subr.mxu0 %v2455
        %2779 = vmatpush2.msra.mxu0 %v2454
        %2780 = vmatprep.subr.mxu0 %v2439
        %2781 = vmatpush2.msra.mxu0 %v2438
        %2782 = vmatprep.subr.mxu0 %v2423
        %2783 = vmatpush2.msra.mxu0 %v2422
        %2784 = vmatprep.subr.mxu0 %v2407
        %2785 = vmatpush2.msra.mxu0 %v2406
        %2786 = vmatprep.subr.mxu0 %v2391
        %2787 = vmatpush2.msra.mxu0 %v2390
        %2788 = vmatprep.subr.mxu0 %v2375
        %2789 = vmatpush2.msra.mxu0 %v2374
        %2790 = vmatprep.subr.mxu0 %v2359
        %2791 = vmatpush2.msra.mxu0 %v2358
        %2792 = vmatprep.subr.mxu0 %v2343
        %2793 = vmatpush2.msra.mxu0 %v2342
        %2794 = vmatprep.subr.mxu0 %v2327
        %2795 = vmatpush2.msra.mxu0 %v2326
        %2796 = vmatprep.subr.mxu0 %v2311
        %2797 = vmatpush2.msra.mxu0 %v2310
        %2798 = vmatprep.subr.mxu0 %v2295
        %2799 = vmatpush2.msra.mxu0 %v2294
        %2800 = vmatprep.subr.mxu0 %v2279
        %2801 = vmatpush2.msra.mxu0 %v2278
        %2802 = vmatprep.subr.mxu0 %v2263
        %2803 = vmatpush2.msra.mxu0 %v2262
        %2804 = vmatprep.subr.mxu0 %v2247
        %2805 = vmatpush2.msra.mxu0 %v2246
        %2806 = vmatprep.subr.mxu0 %v2231
        %2807 = vmatpush2.msra.mxu0 %v2230
        %2808 = vmatprep.subr.mxu0 %v2215
        %2809 = vmatpush2.msra.mxu0 %v2214
        %2810 = vmatprep.mubr.f32.mxu0 %v1408
        %2811 = vmatmul.mubr.f32.gmra.mxu0 %v1406
        %v2812 = vpop.f32.mrf.mxu0
        %v2813 = vadd.f32 0.0, %v2812
        %v2814 = vpop.f32.mrf.mxu0
        %v2815 = vadd.f32 0.0, %v2814
        %2816 = vdwg.mxu0
        %2817 = vmatprep.subr.mxu0 %v2201
        %2818 = vmatpush1.msra.mxu0 %v2200
        %2819 = vmatprep.subr.mxu0 %v2185
        %2820 = vmatpush1.msra.mxu0 %v2184
        %2821 = vmatprep.subr.mxu0 %v2169
        %2822 = vmatpush1.msra.mxu0 %v2168
        %2823 = vmatprep.subr.mxu0 %v2153
        %2824 = vmatpush1.msra.mxu0 %v2152
        %2825 = vmatprep.subr.mxu0 %v2137
        %2826 = vmatpush1.msra.mxu0 %v2136
        %2827 = vmatprep.subr.mxu0 %v2121
        %2828 = vmatpush1.msra.mxu0 %v2120
        %2829 = vmatprep.subr.mxu0 %v2105
        %2830 = vmatpush1.msra.mxu0 %v2104
        %2831 = vmatprep.subr.mxu0 %v2089
        %2832 = vmatpush1.msra.mxu0 %v2088
        %2833 = vmatprep.subr.mxu0 %v2073
        %2834 = vmatpush1.msra.mxu0 %v2072
        %2835 = vmatprep.subr.mxu0 %v2057
        %2836 = vmatpush1.msra.mxu0 %v2056
        %2837 = vmatprep.subr.mxu0 %v2041
        %2838 = vmatpush1.msra.mxu0 %v2040
        %2839 = vmatprep.subr.mxu0 %v2025
        %2840 = vmatpush1.msra.mxu0 %v2024
        %2841 = vmatprep.subr.mxu0 %v2009
        %2842 = vmatpush1.msra.mxu0 %v2008
        %2843 = vmatprep.subr.mxu0 %v1993
        %2844 = vmatpush1.msra.mxu0 %v1992
        %2845 = vmatprep.subr.mxu0 %v1977
        %2846 = vmatpush1.msra.mxu0 %v1976
        %2847 = vmatprep.subr.mxu0 %v1961
        %2848 = vmatpush1.msra.mxu0 %v1960
        %2849 = vmatprep.subr.mxu0 %v2457
        %2850 = vmatpush2.msra.mxu0 %v2456
        %2851 = vmatprep.subr.mxu0 %v2441
        %2852 = vmatpush2.msra.mxu0 %v2440
        %2853 = vmatprep.subr.mxu0 %v2425
        %2854 = vmatpush2.msra.mxu0 %v2424
        %2855 = vmatprep.subr.mxu0 %v2409
        %2856 = vmatpush2.msra.mxu0 %v2408
        %2857 = vmatprep.subr.mxu0 %v2393
        %2858 = vmatpush2.msra.mxu0 %v2392
        %2859 = vmatprep.subr.mxu0 %v2377
        %2860 = vmatpush2.msra.mxu0 %v2376
        %2861 = vmatprep.subr.mxu0 %v2361
        %2862 = vmatpush2.msra.mxu0 %v2360
        %2863 = vmatprep.subr.mxu0 %v2345
        %2864 = vmatpush2.msra.mxu0 %v2344
        %2865 = vmatprep.subr.mxu0 %v2329
        %2866 = vmatpush2.msra.mxu0 %v2328
        %2867 = vmatprep.subr.mxu0 %v2313
        %2868 = vmatpush2.msra.mxu0 %v2312
        %2869 = vmatprep.subr.mxu0 %v2297
        %2870 = vmatpush2.msra.mxu0 %v2296
        %2871 = vmatprep.subr.mxu0 %v2281
        %2872 = vmatpush2.msra.mxu0 %v2280
        %2873 = vmatprep.subr.mxu0 %v2265
        %2874 = vmatpush2.msra.mxu0 %v2264
        %2875 = vmatprep.subr.mxu0 %v2249
        %2876 = vmatpush2.msra.mxu0 %v2248
        %2877 = vmatprep.subr.mxu0 %v2233
        %2878 = vmatpush2.msra.mxu0 %v2232
        %2879 = vmatprep.subr.mxu0 %v2217
        %2880 = vmatpush2.msra.mxu0 %v2216
        %2881 = vmatprep.mubr.f32.mxu0 %v1408
        %2882 = vmatmul.mubr.f32.gmra.mxu0 %v1406
        %v2883 = vpop.f32.mrf.mxu0
        %v2884 = vadd.f32 0.0, %v2883
        %v2885 = vpop.f32.mrf.mxu0
        %v2886 = vadd.f32 0.0, %v2885
        %2887 = vdwg.mxu0
        %2888 = vmatprep.subr.mxu0 %v2203
        %2889 = vmatpush1.msra.mxu0 %v2202
        %2890 = vmatprep.subr.mxu0 %v2187
        %2891 = vmatpush1.msra.mxu0 %v2186
        %2892 = vmatprep.subr.mxu0 %v2171
        %2893 = vmatpush1.msra.mxu0 %v2170
        %2894 = vmatprep.subr.mxu0 %v2155
        %2895 = vmatpush1.msra.mxu0 %v2154
        %2896 = vmatprep.subr.mxu0 %v2139
        %2897 = vmatpush1.msra.mxu0 %v2138
        %2898 = vmatprep.subr.mxu0 %v2123
        %2899 = vmatpush1.msra.mxu0 %v2122
        %2900 = vmatprep.subr.mxu0 %v2107
        %2901 = vmatpush1.msra.mxu0 %v2106
        %2902 = vmatprep.subr.mxu0 %v2091
        %2903 = vmatpush1.msra.mxu0 %v2090
        %2904 = vmatprep.subr.mxu0 %v2075
        %2905 = vmatpush1.msra.mxu0 %v2074
        %2906 = vmatprep.subr.mxu0 %v2059
        %2907 = vmatpush1.msra.mxu0 %v2058
        %2908 = vmatprep.subr.mxu0 %v2043
        %2909 = vmatpush1.msra.mxu0 %v2042
        %2910 = vmatprep.subr.mxu0 %v2027
        %2911 = vmatpush1.msra.mxu0 %v2026
        %2912 = vmatprep.subr.mxu0 %v2011
        %2913 = vmatpush1.msra.mxu0 %v2010
        %2914 = vmatprep.subr.mxu0 %v1995
        %2915 = vmatpush1.msra.mxu0 %v1994
        %2916 = vmatprep.subr.mxu0 %v1979
        %2917 = vmatpush1.msra.mxu0 %v1978
        %2918 = vmatprep.subr.mxu0 %v1963
        %2919 = vmatpush1.msra.mxu0 %v1962
        %2920 = vmatprep.subr.mxu0 %v2459
        %2921 = vmatpush2.msra.mxu0 %v2458
        %2922 = vmatprep.subr.mxu0 %v2443
        %2923 = vmatpush2.msra.mxu0 %v2442
        %2924 = vmatprep.subr.mxu0 %v2427
        %2925 = vmatpush2.msra.mxu0 %v2426
        %2926 = vmatprep.subr.mxu0 %v2411
        %2927 = vmatpush2.msra.mxu0 %v2410
        %2928 = vmatprep.subr.mxu0 %v2395
        %2929 = vmatpush2.msra.mxu0 %v2394
        %2930 = vmatprep.subr.mxu0 %v2379
        %2931 = vmatpush2.msra.mxu0 %v2378
        %2932 = vmatprep.subr.mxu0 %v2363
        %2933 = vmatpush2.msra.mxu0 %v2362
        %2934 = vmatprep.subr.mxu0 %v2347
        %2935 = vmatpush2.msra.mxu0 %v2346
        %2936 = vmatprep.subr.mxu0 %v2331
        %2937 = vmatpush2.msra.mxu0 %v2330
        %2938 = vmatprep.subr.mxu0 %v2315
        %2939 = vmatpush2.msra.mxu0 %v2314
        %2940 = vmatprep.subr.mxu0 %v2299
        %2941 = vmatpush2.msra.mxu0 %v2298
        %2942 = vmatprep.subr.mxu0 %v2283
        %2943 = vmatpush2.msra.mxu0 %v2282
        %2944 = vmatprep.subr.mxu0 %v2267
        %2945 = vmatpush2.msra.mxu0 %v2266
        %2946 = vmatprep.subr.mxu0 %v2251
        %2947 = vmatpush2.msra.mxu0 %v2250
        %2948 = vmatprep.subr.mxu0 %v2235
        %2949 = vmatpush2.msra.mxu0 %v2234
        %2950 = vmatprep.subr.mxu0 %v2219
        %2951 = vmatpush2.msra.mxu0 %v2218
        %2952 = vmatprep.mubr.f32.mxu0 %v1408
        %2953 = vmatmul.mubr.f32.gmra.mxu0 %v1406
        %v2954 = vpop.f32.mrf.mxu0
        %v2955 = vadd.f32 0.0, %v2954
        %v2956 = vpop.f32.mrf.mxu0
        %v2957 = vadd.f32 0.0, %v2956
        %2958 = vdwg.mxu0
        %2959 = vmatprep.subr.mxu0 %v2205
        %2960 = vmatpush1.msra.mxu0 %v2204
        %2961 = vmatprep.subr.mxu0 %v2189
        %2962 = vmatpush1.msra.mxu0 %v2188
        %2963 = vmatprep.subr.mxu0 %v2173
        %2964 = vmatpush1.msra.mxu0 %v2172
        %2965 = vmatprep.subr.mxu0 %v2157
        %2966 = vmatpush1.msra.mxu0 %v2156
        %2967 = vmatprep.subr.mxu0 %v2141
        %2968 = vmatpush1.msra.mxu0 %v2140
        %2969 = vmatprep.subr.mxu0 %v2125
        %2970 = vmatpush1.msra.mxu0 %v2124
        %2971 = vmatprep.subr.mxu0 %v2109
        %2972 = vmatpush1.msra.mxu0 %v2108
        %2973 = vmatprep.subr.mxu0 %v2093
        %2974 = vmatpush1.msra.mxu0 %v2092
        %2975 = vmatprep.subr.mxu0 %v2077
        %2976 = vmatpush1.msra.mxu0 %v2076
        %2977 = vmatprep.subr.mxu0 %v2061
        %2978 = vmatpush1.msra.mxu0 %v2060
        %2979 = vmatprep.subr.mxu0 %v2045
        %2980 = vmatpush1.msra.mxu0 %v2044
        %2981 = vmatprep.subr.mxu0 %v2029
        %2982 = vmatpush1.msra.mxu0 %v2028
        %2983 = vmatprep.subr.mxu0 %v2013
        %2984 = vmatpush1.msra.mxu0 %v2012
        %2985 = vmatprep.subr.mxu0 %v1997
        %2986 = vmatpush1.msra.mxu0 %v1996
        %2987 = vmatprep.subr.mxu0 %v1981
        %2988 = vmatpush1.msra.mxu0 %v1980
        %2989 = vmatprep.subr.mxu0 %v1965
        %2990 = vmatpush1.msra.mxu0 %v1964
        %2991 = vmatprep.subr.mxu0 %v2461
        %2992 = vmatpush2.msra.mxu0 %v2460
        %2993 = vmatprep.subr.mxu0 %v2445
        %2994 = vmatpush2.msra.mxu0 %v2444
        %2995 = vmatprep.subr.mxu0 %v2429
        %2996 = vmatpush2.msra.mxu0 %v2428
        %2997 = vmatprep.subr.mxu0 %v2413
        %2998 = vmatpush2.msra.mxu0 %v2412
        %2999 = vmatprep.subr.mxu0 %v2397
        %3000 = vmatpush2.msra.mxu0 %v2396
        %3001 = vmatprep.subr.mxu0 %v2381
        %3002 = vmatpush2.msra.mxu0 %v2380
        %3003 = vmatprep.subr.mxu0 %v2365
        %3004 = vmatpush2.msra.mxu0 %v2364
        %3005 = vmatprep.subr.mxu0 %v2349
        %3006 = vmatpush2.msra.mxu0 %v2348
        %3007 = vmatprep.subr.mxu0 %v2333
        %3008 = vmatpush2.msra.mxu0 %v2332
        %3009 = vmatprep.subr.mxu0 %v2317
        %3010 = vmatpush2.msra.mxu0 %v2316
        %3011 = vmatprep.subr.mxu0 %v2301
        %3012 = vmatpush2.msra.mxu0 %v2300
        %3013 = vmatprep.subr.mxu0 %v2285
        %3014 = vmatpush2.msra.mxu0 %v2284
        %3015 = vmatprep.subr.mxu0 %v2269
        %3016 = vmatpush2.msra.mxu0 %v2268
        %3017 = vmatprep.subr.mxu0 %v2253
        %3018 = vmatpush2.msra.mxu0 %v2252
        %3019 = vmatprep.subr.mxu0 %v2237
        %3020 = vmatpush2.msra.mxu0 %v2236
        %3021 = vmatprep.subr.mxu0 %v2221
        %3022 = vmatpush2.msra.mxu0 %v2220
        %3023 = vmatprep.mubr.f32.mxu0 %v1408
        %3024 = vmatmul.mubr.f32.gmra.mxu0 %v1406
        %v3025 = vpop.f32.mrf.mxu0
        %v3026 = vadd.f32 0.0, %v3025
        %v3027 = vpop.f32.mrf.mxu0
        %v3028 = vadd.f32 0.0, %v3027
        %3029 = vdwg.mxu0
        %v3030 = vld [vmem:[#allocation13] sm:$0xff]
        %v3031 = vld [vmem:[#allocation13 + $0x8] sm:$0xff]
        %v3032 = vld [vmem:[#allocation13 + $0x10] sm:$0xff]
        %v3033 = vld [vmem:[#allocation13 + $0x18] sm:$0xff]
        %v3034 = vld [vmem:[#allocation13 + $0x20] sm:$0xff]
        %v3035 = vld [vmem:[#allocation13 + $0x28] sm:$0xff]
        %v3036 = vld [vmem:[#allocation13 + $0x30] sm:$0xff]
        %v3037 = vld [vmem:[#allocation13 + $0x38] sm:$0xff]
        %v3038 = vld [vmem:[#allocation13 + $0x40] sm:$0xff]
        %v3039 = vld [vmem:[#allocation13 + $0x48] sm:$0xff]
        %v3040 = vld [vmem:[#allocation13 + $0x50] sm:$0xff]
        %v3041 = vld [vmem:[#allocation13 + $0x58] sm:$0xff]
        %v3042 = vld [vmem:[#allocation13 + $0x60] sm:$0xff]
        %v3043 = vld [vmem:[#allocation13 + $0x68] sm:$0xff]
        %v3044 = vld [vmem:[#allocation13 + $0x70] sm:$0xff]
        %v3045 = vld [vmem:[#allocation13 + $0x78] sm:$0xff]
        %v3046 = vld [vmem:[#allocation13 + $0x80] sm:$0xff]
        %v3047 = vld [vmem:[#allocation13 + $0x88] sm:$0xff]
        %v3048 = vld [vmem:[#allocation13 + $0x90] sm:$0xff]
        %v3049 = vld [vmem:[#allocation13 + $0x98] sm:$0xff]
        %v3050 = vld [vmem:[#allocation13 + $0xa0] sm:$0xff]
        %v3051 = vld [vmem:[#allocation13 + $0xa8] sm:$0xff]
        %v3052 = vld [vmem:[#allocation13 + $0xb0] sm:$0xff]
        %v3053 = vld [vmem:[#allocation13 + $0xb8] sm:$0xff]
        %v3054 = vld [vmem:[#allocation13 + $0xc0] sm:$0xff]
        %v3055 = vld [vmem:[#allocation13 + $0xc8] sm:$0xff]
        %v3056 = vld [vmem:[#allocation13 + $0xd0] sm:$0xff]
        %v3057 = vld [vmem:[#allocation13 + $0xd8] sm:$0xff]
        %v3058 = vld [vmem:[#allocation13 + $0xe0] sm:$0xff]
        %v3059 = vld [vmem:[#allocation13 + $0xe8] sm:$0xff]
        %v3060 = vld [vmem:[#allocation13 + $0xf0] sm:$0xff]
        %v3061 = vld [vmem:[#allocation13 + $0xf8] sm:$0xff]
        %v3062 = vld [vmem:[#allocation13 + $0x100] sm:$0xff]
        %v3063 = vld [vmem:[#allocation13 + $0x108] sm:$0xff]
        %v3064 = vld [vmem:[#allocation13 + $0x110] sm:$0xff]
        %v3065 = vld [vmem:[#allocation13 + $0x118] sm:$0xff]
        %v3066 = vld [vmem:[#allocation13 + $0x120] sm:$0xff]
        %v3067 = vld [vmem:[#allocation13 + $0x128] sm:$0xff]
        %v3068 = vld [vmem:[#allocation13 + $0x130] sm:$0xff]
        %v3069 = vld [vmem:[#allocation13 + $0x138] sm:$0xff]
        %v3070 = vld [vmem:[#allocation13 + $0x140] sm:$0xff]
        %v3071 = vld [vmem:[#allocation13 + $0x148] sm:$0xff]
        %v3072 = vld [vmem:[#allocation13 + $0x150] sm:$0xff]
        %v3073 = vld [vmem:[#allocation13 + $0x158] sm:$0xff]
        %v3074 = vld [vmem:[#allocation13 + $0x160] sm:$0xff]
        %v3075 = vld [vmem:[#allocation13 + $0x168] sm:$0xff]
        %v3076 = vld [vmem:[#allocation13 + $0x170] sm:$0xff]
        %v3077 = vld [vmem:[#allocation13 + $0x178] sm:$0xff]
        %v3078 = vld [vmem:[#allocation13 + $0x180] sm:$0xff]
        %v3079 = vld [vmem:[#allocation13 + $0x188] sm:$0xff]
        %v3080 = vld [vmem:[#allocation13 + $0x190] sm:$0xff]
        %v3081 = vld [vmem:[#allocation13 + $0x198] sm:$0xff]
        %v3082 = vld [vmem:[#allocation13 + $0x1a0] sm:$0xff]
        %v3083 = vld [vmem:[#allocation13 + $0x1a8] sm:$0xff]
        %v3084 = vld [vmem:[#allocation13 + $0x1b0] sm:$0xff]
        %v3085 = vld [vmem:[#allocation13 + $0x1b8] sm:$0xff]
        %v3086 = vld [vmem:[#allocation13 + $0x1c0] sm:$0xff]
        %v3087 = vld [vmem:[#allocation13 + $0x1c8] sm:$0xff]
        %v3088 = vld [vmem:[#allocation13 + $0x1d0] sm:$0xff]
        %v3089 = vld [vmem:[#allocation13 + $0x1d8] sm:$0xff]
        %v3090 = vld [vmem:[#allocation13 + $0x1e0] sm:$0xff]
        %v3091 = vld [vmem:[#allocation13 + $0x1e8] sm:$0xff]
        %v3092 = vld [vmem:[#allocation13 + $0x1f0] sm:$0xff]
        %v3093 = vld [vmem:[#allocation13 + $0x1f8] sm:$0xff]
        %v3094 = vld [vmem:[#allocation13 + $0x200] sm:$0xff]
        %v3095 = vld [vmem:[#allocation13 + $0x208] sm:$0xff]
        %v3096 = vld [vmem:[#allocation13 + $0x210] sm:$0xff]
        %v3097 = vld [vmem:[#allocation13 + $0x218] sm:$0xff]
        %v3098 = vld [vmem:[#allocation13 + $0x220] sm:$0xff]
        %v3099 = vld [vmem:[#allocation13 + $0x228] sm:$0xff]
        %v3100 = vld [vmem:[#allocation13 + $0x230] sm:$0xff]
        %v3101 = vld [vmem:[#allocation13 + $0x238] sm:$0xff]
        %v3102 = vld [vmem:[#allocation13 + $0x240] sm:$0xff]
        %v3103 = vld [vmem:[#allocation13 + $0x248] sm:$0xff]
        %v3104 = vld [vmem:[#allocation13 + $0x250] sm:$0xff]
        %v3105 = vld [vmem:[#allocation13 + $0x258] sm:$0xff]
        %v3106 = vld [vmem:[#allocation13 + $0x260] sm:$0xff]
        %v3107 = vld [vmem:[#allocation13 + $0x268] sm:$0xff]
        %v3108 = vld [vmem:[#allocation13 + $0x270] sm:$0xff]
        %v3109 = vld [vmem:[#allocation13 + $0x278] sm:$0xff]
        %v3110 = vld [vmem:[#allocation13 + $0x280] sm:$0xff]
        %v3111 = vld [vmem:[#allocation13 + $0x288] sm:$0xff]
        %v3112 = vld [vmem:[#allocation13 + $0x290] sm:$0xff]
        %v3113 = vld [vmem:[#allocation13 + $0x298] sm:$0xff]
        %v3114 = vld [vmem:[#allocation13 + $0x2a0] sm:$0xff]
        %v3115 = vld [vmem:[#allocation13 + $0x2a8] sm:$0xff]
        %v3116 = vld [vmem:[#allocation13 + $0x2b0] sm:$0xff]
        %v3117 = vld [vmem:[#allocation13 + $0x2b8] sm:$0xff]
        %v3118 = vld [vmem:[#allocation13 + $0x2c0] sm:$0xff]
        %v3119 = vld [vmem:[#allocation13 + $0x2c8] sm:$0xff]
        %v3120 = vld [vmem:[#allocation13 + $0x2d0] sm:$0xff]
        %v3121 = vld [vmem:[#allocation13 + $0x2d8] sm:$0xff]
        %v3122 = vld [vmem:[#allocation13 + $0x2e0] sm:$0xff]
        %v3123 = vld [vmem:[#allocation13 + $0x2e8] sm:$0xff]
        %v3124 = vld [vmem:[#allocation13 + $0x2f0] sm:$0xff]
        %v3125 = vld [vmem:[#allocation13 + $0x2f8] sm:$0xff]
        %v3126 = vld [vmem:[#allocation13 + $0x300] sm:$0xff]
        %v3127 = vld [vmem:[#allocation13 + $0x308] sm:$0xff]
        %v3128 = vld [vmem:[#allocation13 + $0x310] sm:$0xff]
        %v3129 = vld [vmem:[#allocation13 + $0x318] sm:$0xff]
        %v3130 = vld [vmem:[#allocation13 + $0x320] sm:$0xff]
        %v3131 = vld [vmem:[#allocation13 + $0x328] sm:$0xff]
        %v3132 = vld [vmem:[#allocation13 + $0x330] sm:$0xff]
        %v3133 = vld [vmem:[#allocation13 + $0x338] sm:$0xff]
        %v3134 = vld [vmem:[#allocation13 + $0x340] sm:$0xff]
        %v3135 = vld [vmem:[#allocation13 + $0x348] sm:$0xff]
        %v3136 = vld [vmem:[#allocation13 + $0x350] sm:$0xff]
        %v3137 = vld [vmem:[#allocation13 + $0x358] sm:$0xff]
        %v3138 = vld [vmem:[#allocation13 + $0x360] sm:$0xff]
        %v3139 = vld [vmem:[#allocation13 + $0x368] sm:$0xff]
        %v3140 = vld [vmem:[#allocation13 + $0x370] sm:$0xff]
        %v3141 = vld [vmem:[#allocation13 + $0x378] sm:$0xff]
        %v3142 = vld [vmem:[#allocation13 + $0x380] sm:$0xff]
        %v3143 = vld [vmem:[#allocation13 + $0x388] sm:$0xff]
        %v3144 = vld [vmem:[#allocation13 + $0x390] sm:$0xff]
        %v3145 = vld [vmem:[#allocation13 + $0x398] sm:$0xff]
        %v3146 = vld [vmem:[#allocation13 + $0x3a0] sm:$0xff]
        %v3147 = vld [vmem:[#allocation13 + $0x3a8] sm:$0xff]
        %v3148 = vld [vmem:[#allocation13 + $0x3b0] sm:$0xff]
        %v3149 = vld [vmem:[#allocation13 + $0x3b8] sm:$0xff]
        %v3150 = vld [vmem:[#allocation13 + $0x3c0] sm:$0xff]
        %v3151 = vld [vmem:[#allocation13 + $0x3c8] sm:$0xff]
        %v3152 = vld [vmem:[#allocation13 + $0x3d0] sm:$0xff]
        %v3153 = vld [vmem:[#allocation13 + $0x3d8] sm:$0xff]
        %v3154 = vld [vmem:[#allocation13 + $0x3e0] sm:$0xff]
        %v3155 = vld [vmem:[#allocation13 + $0x3e8] sm:$0xff]
        %v3156 = vld [vmem:[#allocation13 + $0x3f0] sm:$0xff]
        %v3157 = vld [vmem:[#allocation13 + $0x3f8] sm:$0xff]
        %v3158 = vld [vmem:[#allocation13 + $0x400] sm:$0xff]
        %v3159 = vld [vmem:[#allocation13 + $0x408] sm:$0xff]
        %v3160 = vld [vmem:[#allocation13 + $0x410] sm:$0xff]
        %v3161 = vld [vmem:[#allocation13 + $0x418] sm:$0xff]
        %v3162 = vld [vmem:[#allocation13 + $0x420] sm:$0xff]
        %v3163 = vld [vmem:[#allocation13 + $0x428] sm:$0xff]
        %v3164 = vld [vmem:[#allocation13 + $0x430] sm:$0xff]
        %v3165 = vld [vmem:[#allocation13 + $0x438] sm:$0xff]
        %v3166 = vld [vmem:[#allocation13 + $0x440] sm:$0xff]
        %v3167 = vld [vmem:[#allocation13 + $0x448] sm:$0xff]
        %v3168 = vld [vmem:[#allocation13 + $0x450] sm:$0xff]
        %v3169 = vld [vmem:[#allocation13 + $0x458] sm:$0xff]
        %v3170 = vld [vmem:[#allocation13 + $0x460] sm:$0xff]
        %v3171 = vld [vmem:[#allocation13 + $0x468] sm:$0xff]
        %v3172 = vld [vmem:[#allocation13 + $0x470] sm:$0xff]
        %v3173 = vld [vmem:[#allocation13 + $0x478] sm:$0xff]
        %v3174 = vld [vmem:[#allocation13 + $0x480] sm:$0xff]
        %v3175 = vld [vmem:[#allocation13 + $0x488] sm:$0xff]
        %v3176 = vld [vmem:[#allocation13 + $0x490] sm:$0xff]
        %v3177 = vld [vmem:[#allocation13 + $0x498] sm:$0xff]
        %v3178 = vld [vmem:[#allocation13 + $0x4a0] sm:$0xff]
        %v3179 = vld [vmem:[#allocation13 + $0x4a8] sm:$0xff]
        %v3180 = vld [vmem:[#allocation13 + $0x4b0] sm:$0xff]
        %v3181 = vld [vmem:[#allocation13 + $0x4b8] sm:$0xff]
        %v3182 = vld [vmem:[#allocation13 + $0x4c0] sm:$0xff]
        %v3183 = vld [vmem:[#allocation13 + $0x4c8] sm:$0xff]
        %v3184 = vld [vmem:[#allocation13 + $0x4d0] sm:$0xff]
        %v3185 = vld [vmem:[#allocation13 + $0x4d8] sm:$0xff]
        %v3186 = vld [vmem:[#allocation13 + $0x4e0] sm:$0xff]
        %v3187 = vld [vmem:[#allocation13 + $0x4e8] sm:$0xff]
        %v3188 = vld [vmem:[#allocation13 + $0x4f0] sm:$0xff]
        %v3189 = vld [vmem:[#allocation13 + $0x4f8] sm:$0xff]
        %v3190 = vld [vmem:[#allocation13 + $0x500] sm:$0xff]
        %v3191 = vld [vmem:[#allocation13 + $0x508] sm:$0xff]
        %v3192 = vld [vmem:[#allocation13 + $0x510] sm:$0xff]
        %v3193 = vld [vmem:[#allocation13 + $0x518] sm:$0xff]
        %v3194 = vld [vmem:[#allocation13 + $0x520] sm:$0xff]
        %v3195 = vld [vmem:[#allocation13 + $0x528] sm:$0xff]
        %v3196 = vld [vmem:[#allocation13 + $0x530] sm:$0xff]
        %v3197 = vld [vmem:[#allocation13 + $0x538] sm:$0xff]
        %v3198 = vld [vmem:[#allocation13 + $0x540] sm:$0xff]
        %v3199 = vld [vmem:[#allocation13 + $0x548] sm:$0xff]
        %v3200 = vld [vmem:[#allocation13 + $0x550] sm:$0xff]
        %v3201 = vld [vmem:[#allocation13 + $0x558] sm:$0xff]
        %v3202 = vld [vmem:[#allocation13 + $0x560] sm:$0xff]
        %v3203 = vld [vmem:[#allocation13 + $0x568] sm:$0xff]
        %v3204 = vld [vmem:[#allocation13 + $0x570] sm:$0xff]
        %v3205 = vld [vmem:[#allocation13 + $0x578] sm:$0xff]
        %v3206 = vld [vmem:[#allocation13 + $0x580] sm:$0xff]
        %v3207 = vld [vmem:[#allocation13 + $0x588] sm:$0xff]
        %v3208 = vld [vmem:[#allocation13 + $0x590] sm:$0xff]
        %v3209 = vld [vmem:[#allocation13 + $0x598] sm:$0xff]
        %v3210 = vld [vmem:[#allocation13 + $0x5a0] sm:$0xff]
        %v3211 = vld [vmem:[#allocation13 + $0x5a8] sm:$0xff]
        %v3212 = vld [vmem:[#allocation13 + $0x5b0] sm:$0xff]
        %v3213 = vld [vmem:[#allocation13 + $0x5b8] sm:$0xff]
        %v3214 = vld [vmem:[#allocation13 + $0x5c0] sm:$0xff]
        %v3215 = vld [vmem:[#allocation13 + $0x5c8] sm:$0xff]
        %v3216 = vld [vmem:[#allocation13 + $0x5d0] sm:$0xff]
        %v3217 = vld [vmem:[#allocation13 + $0x5d8] sm:$0xff]
        %v3218 = vld [vmem:[#allocation13 + $0x5e0] sm:$0xff]
        %v3219 = vld [vmem:[#allocation13 + $0x5e8] sm:$0xff]
        %v3220 = vld [vmem:[#allocation13 + $0x5f0] sm:$0xff]
        %v3221 = vld [vmem:[#allocation13 + $0x5f8] sm:$0xff]
        %v3222 = vld [vmem:[#allocation13 + $0x600] sm:$0xff]
        %v3223 = vld [vmem:[#allocation13 + $0x608] sm:$0xff]
        %v3224 = vld [vmem:[#allocation13 + $0x610] sm:$0xff]
        %v3225 = vld [vmem:[#allocation13 + $0x618] sm:$0xff]
        %v3226 = vld [vmem:[#allocation13 + $0x620] sm:$0xff]
        %v3227 = vld [vmem:[#allocation13 + $0x628] sm:$0xff]
        %v3228 = vld [vmem:[#allocation13 + $0x630] sm:$0xff]
        %v3229 = vld [vmem:[#allocation13 + $0x638] sm:$0xff]
        %v3230 = vld [vmem:[#allocation13 + $0x640] sm:$0xff]
        %v3231 = vld [vmem:[#allocation13 + $0x648] sm:$0xff]
        %v3232 = vld [vmem:[#allocation13 + $0x650] sm:$0xff]
        %v3233 = vld [vmem:[#allocation13 + $0x658] sm:$0xff]
        %v3234 = vld [vmem:[#allocation13 + $0x660] sm:$0xff]
        %v3235 = vld [vmem:[#allocation13 + $0x668] sm:$0xff]
        %v3236 = vld [vmem:[#allocation13 + $0x670] sm:$0xff]
        %v3237 = vld [vmem:[#allocation13 + $0x678] sm:$0xff]
        %v3238 = vld [vmem:[#allocation13 + $0x680] sm:$0xff]
        %v3239 = vld [vmem:[#allocation13 + $0x688] sm:$0xff]
        %v3240 = vld [vmem:[#allocation13 + $0x690] sm:$0xff]
        %v3241 = vld [vmem:[#allocation13 + $0x698] sm:$0xff]
        %v3242 = vld [vmem:[#allocation13 + $0x6a0] sm:$0xff]
        %v3243 = vld [vmem:[#allocation13 + $0x6a8] sm:$0xff]
        %v3244 = vld [vmem:[#allocation13 + $0x6b0] sm:$0xff]
        %v3245 = vld [vmem:[#allocation13 + $0x6b8] sm:$0xff]
        %v3246 = vld [vmem:[#allocation13 + $0x6c0] sm:$0xff]
        %v3247 = vld [vmem:[#allocation13 + $0x6c8] sm:$0xff]
        %v3248 = vld [vmem:[#allocation13 + $0x6d0] sm:$0xff]
        %v3249 = vld [vmem:[#allocation13 + $0x6d8] sm:$0xff]
        %v3250 = vld [vmem:[#allocation13 + $0x6e0] sm:$0xff]
        %v3251 = vld [vmem:[#allocation13 + $0x6e8] sm:$0xff]
        %v3252 = vld [vmem:[#allocation13 + $0x6f0] sm:$0xff]
        %v3253 = vld [vmem:[#allocation13 + $0x6f8] sm:$0xff]
        %v3254 = vld [vmem:[#allocation13 + $0x700] sm:$0xff]
        %v3255 = vld [vmem:[#allocation13 + $0x708] sm:$0xff]
        %v3256 = vld [vmem:[#allocation13 + $0x710] sm:$0xff]
        %v3257 = vld [vmem:[#allocation13 + $0x718] sm:$0xff]
        %v3258 = vld [vmem:[#allocation13 + $0x720] sm:$0xff]
        %v3259 = vld [vmem:[#allocation13 + $0x728] sm:$0xff]
        %v3260 = vld [vmem:[#allocation13 + $0x730] sm:$0xff]
        %v3261 = vld [vmem:[#allocation13 + $0x738] sm:$0xff]
        %v3262 = vld [vmem:[#allocation13 + $0x740] sm:$0xff]
        %v3263 = vld [vmem:[#allocation13 + $0x748] sm:$0xff]
        %v3264 = vld [vmem:[#allocation13 + $0x750] sm:$0xff]
        %v3265 = vld [vmem:[#allocation13 + $0x758] sm:$0xff]
        %v3266 = vld [vmem:[#allocation13 + $0x760] sm:$0xff]
        %v3267 = vld [vmem:[#allocation13 + $0x768] sm:$0xff]
        %v3268 = vld [vmem:[#allocation13 + $0x770] sm:$0xff]
        %v3269 = vld [vmem:[#allocation13 + $0x778] sm:$0xff]
        %v3270 = vld [vmem:[#allocation13 + $0x780] sm:$0xff]
        %v3271 = vld [vmem:[#allocation13 + $0x788] sm:$0xff]
        %v3272 = vld [vmem:[#allocation13 + $0x790] sm:$0xff]
        %v3273 = vld [vmem:[#allocation13 + $0x798] sm:$0xff]
        %v3274 = vld [vmem:[#allocation13 + $0x7a0] sm:$0xff]
        %v3275 = vld [vmem:[#allocation13 + $0x7a8] sm:$0xff]
        %v3276 = vld [vmem:[#allocation13 + $0x7b0] sm:$0xff]
        %v3277 = vld [vmem:[#allocation13 + $0x7b8] sm:$0xff]
        %v3278 = vld [vmem:[#allocation13 + $0x7c0] sm:$0xff]
        %v3279 = vld [vmem:[#allocation13 + $0x7c8] sm:$0xff]
        %v3280 = vld [vmem:[#allocation13 + $0x7d0] sm:$0xff]
        %v3281 = vld [vmem:[#allocation13 + $0x7d8] sm:$0xff]
        %v3282 = vld [vmem:[#allocation13 + $0x7e0] sm:$0xff]
        %v3283 = vld [vmem:[#allocation13 + $0x7e8] sm:$0xff]
        %v3284 = vld [vmem:[#allocation13 + $0x7f0] sm:$0xff]
        %v3285 = vld [vmem:[#allocation13 + $0x7f8] sm:$0xff]
        %v3286 = vld [vmem:[#allocation13 + $0x800] sm:$0xff]
        %v3287 = vld [vmem:[#allocation13 + $0x808] sm:$0xff]
        %v3288 = vld [vmem:[#allocation13 + $0x810] sm:$0xff]
        %v3289 = vld [vmem:[#allocation13 + $0x818] sm:$0xff]
        %v3290 = vld [vmem:[#allocation13 + $0x820] sm:$0xff]
        %v3291 = vld [vmem:[#allocation13 + $0x828] sm:$0xff]
        %v3292 = vld [vmem:[#allocation13 + $0x830] sm:$0xff]
        %v3293 = vld [vmem:[#allocation13 + $0x838] sm:$0xff]
        %v3294 = vld [vmem:[#allocation13 + $0x840] sm:$0xff]
        %v3295 = vld [vmem:[#allocation13 + $0x848] sm:$0xff]
        %v3296 = vld [vmem:[#allocation13 + $0x850] sm:$0xff]
        %v3297 = vld [vmem:[#allocation13 + $0x858] sm:$0xff]
        %v3298 = vld [vmem:[#allocation13 + $0x860] sm:$0xff]
        %v3299 = vld [vmem:[#allocation13 + $0x868] sm:$0xff]
        %v3300 = vld [vmem:[#allocation13 + $0x870] sm:$0xff]
        %v3301 = vld [vmem:[#allocation13 + $0x878] sm:$0xff]
        %v3302 = vld [vmem:[#allocation13 + $0x880] sm:$0xff]
        %v3303 = vld [vmem:[#allocation13 + $0x888] sm:$0xff]
        %v3304 = vld [vmem:[#allocation13 + $0x890] sm:$0xff]
        %v3305 = vld [vmem:[#allocation13 + $0x898] sm:$0xff]
        %v3306 = vld [vmem:[#allocation13 + $0x8a0] sm:$0xff]
        %v3307 = vld [vmem:[#allocation13 + $0x8a8] sm:$0xff]
        %v3308 = vld [vmem:[#allocation13 + $0x8b0] sm:$0xff]
        %v3309 = vld [vmem:[#allocation13 + $0x8b8] sm:$0xff]
        %v3310 = vld [vmem:[#allocation13 + $0x8c0] sm:$0xff]
        %v3311 = vld [vmem:[#allocation13 + $0x8c8] sm:$0xff]
        %v3312 = vld [vmem:[#allocation13 + $0x8d0] sm:$0xff]
        %v3313 = vld [vmem:[#allocation13 + $0x8d8] sm:$0xff]
        %v3314 = vld [vmem:[#allocation13 + $0x8e0] sm:$0xff]
        %v3315 = vld [vmem:[#allocation13 + $0x8e8] sm:$0xff]
        %v3316 = vld [vmem:[#allocation13 + $0x8f0] sm:$0xff]
        %v3317 = vld [vmem:[#allocation13 + $0x8f8] sm:$0xff]
        %v3318 = vld [vmem:[#allocation13 + $0x900] sm:$0xff]
        %v3319 = vld [vmem:[#allocation13 + $0x908] sm:$0xff]
        %v3320 = vld [vmem:[#allocation13 + $0x910] sm:$0xff]
        %v3321 = vld [vmem:[#allocation13 + $0x918] sm:$0xff]
        %v3322 = vld [vmem:[#allocation13 + $0x920] sm:$0xff]
        %v3323 = vld [vmem:[#allocation13 + $0x928] sm:$0xff]
        %v3324 = vld [vmem:[#allocation13 + $0x930] sm:$0xff]
        %v3325 = vld [vmem:[#allocation13 + $0x938] sm:$0xff]
        %v3326 = vld [vmem:[#allocation13 + $0x940] sm:$0xff]
        %v3327 = vld [vmem:[#allocation13 + $0x948] sm:$0xff]
        %v3328 = vld [vmem:[#allocation13 + $0x950] sm:$0xff]
        %v3329 = vld [vmem:[#allocation13 + $0x958] sm:$0xff]
        %v3330 = vld [vmem:[#allocation13 + $0x960] sm:$0xff]
        %v3331 = vld [vmem:[#allocation13 + $0x968] sm:$0xff]
        %v3332 = vld [vmem:[#allocation13 + $0x970] sm:$0xff]
        %v3333 = vld [vmem:[#allocation13 + $0x978] sm:$0xff]
        %v3334 = vld [vmem:[#allocation13 + $0x980] sm:$0xff]
        %v3335 = vld [vmem:[#allocation13 + $0x988] sm:$0xff]
        %v3336 = vld [vmem:[#allocation13 + $0x990] sm:$0xff]
        %v3337 = vld [vmem:[#allocation13 + $0x998] sm:$0xff]
        %v3338 = vld [vmem:[#allocation13 + $0x9a0] sm:$0xff]
        %v3339 = vld [vmem:[#allocation13 + $0x9a8] sm:$0xff]
        %v3340 = vld [vmem:[#allocation13 + $0x9b0] sm:$0xff]
        %v3341 = vld [vmem:[#allocation13 + $0x9b8] sm:$0xff]
        %v3342 = vld [vmem:[#allocation13 + $0x9c0] sm:$0xff]
        %v3343 = vld [vmem:[#allocation13 + $0x9c8] sm:$0xff]
        %v3344 = vld [vmem:[#allocation13 + $0x9d0] sm:$0xff]
        %v3345 = vld [vmem:[#allocation13 + $0x9d8] sm:$0xff]
        %v3346 = vld [vmem:[#allocation13 + $0x9e0] sm:$0xff]
        %v3347 = vld [vmem:[#allocation13 + $0x9e8] sm:$0xff]
        %v3348 = vld [vmem:[#allocation13 + $0x9f0] sm:$0xff]
        %v3349 = vld [vmem:[#allocation13 + $0x9f8] sm:$0xff]
        %v3350 = vld [vmem:[#allocation13 + $0xa00] sm:$0xff]
        %v3351 = vld [vmem:[#allocation13 + $0xa08] sm:$0xff]
        %v3352 = vld [vmem:[#allocation13 + $0xa10] sm:$0xff]
        %v3353 = vld [vmem:[#allocation13 + $0xa18] sm:$0xff]
        %v3354 = vld [vmem:[#allocation13 + $0xa20] sm:$0xff]
        %v3355 = vld [vmem:[#allocation13 + $0xa28] sm:$0xff]
        %v3356 = vld [vmem:[#allocation13 + $0xa30] sm:$0xff]
        %v3357 = vld [vmem:[#allocation13 + $0xa38] sm:$0xff]
        %v3358 = vld [vmem:[#allocation13 + $0xa40] sm:$0xff]
        %v3359 = vld [vmem:[#allocation13 + $0xa48] sm:$0xff]
        %v3360 = vld [vmem:[#allocation13 + $0xa50] sm:$0xff]
        %v3361 = vld [vmem:[#allocation13 + $0xa58] sm:$0xff]
        %v3362 = vld [vmem:[#allocation13 + $0xa60] sm:$0xff]
        %v3363 = vld [vmem:[#allocation13 + $0xa68] sm:$0xff]
        %v3364 = vld [vmem:[#allocation13 + $0xa70] sm:$0xff]
        %v3365 = vld [vmem:[#allocation13 + $0xa78] sm:$0xff]
        %v3366 = vld [vmem:[#allocation13 + $0xa80] sm:$0xff]
        %v3367 = vld [vmem:[#allocation13 + $0xa88] sm:$0xff]
        %v3368 = vld [vmem:[#allocation13 + $0xa90] sm:$0xff]
        %v3369 = vld [vmem:[#allocation13 + $0xa98] sm:$0xff]
        %v3370 = vld [vmem:[#allocation13 + $0xaa0] sm:$0xff]
        %v3371 = vld [vmem:[#allocation13 + $0xaa8] sm:$0xff]
        %v3372 = vld [vmem:[#allocation13 + $0xab0] sm:$0xff]
        %v3373 = vld [vmem:[#allocation13 + $0xab8] sm:$0xff]
        %v3374 = vld [vmem:[#allocation13 + $0xac0] sm:$0xff]
        %v3375 = vld [vmem:[#allocation13 + $0xac8] sm:$0xff]
        %v3376 = vld [vmem:[#allocation13 + $0xad0] sm:$0xff]
        %v3377 = vld [vmem:[#allocation13 + $0xad8] sm:$0xff]
        %v3378 = vld [vmem:[#allocation13 + $0xae0] sm:$0xff]
        %v3379 = vld [vmem:[#allocation13 + $0xae8] sm:$0xff]
        %v3380 = vld [vmem:[#allocation13 + $0xaf0] sm:$0xff]
        %v3381 = vld [vmem:[#allocation13 + $0xaf8] sm:$0xff]
        %v3382 = vld [vmem:[#allocation13 + $0xb00] sm:$0xff]
        %v3383 = vld [vmem:[#allocation13 + $0xb08] sm:$0xff]
        %v3384 = vld [vmem:[#allocation13 + $0xb10] sm:$0xff]
        %v3385 = vld [vmem:[#allocation13 + $0xb18] sm:$0xff]
        %v3386 = vld [vmem:[#allocation13 + $0xb20] sm:$0xff]
        %v3387 = vld [vmem:[#allocation13 + $0xb28] sm:$0xff]
        %v3388 = vld [vmem:[#allocation13 + $0xb30] sm:$0xff]
        %v3389 = vld [vmem:[#allocation13 + $0xb38] sm:$0xff]
        %v3390 = vld [vmem:[#allocation13 + $0xb40] sm:$0xff]
        %v3391 = vld [vmem:[#allocation13 + $0xb48] sm:$0xff]
        %v3392 = vld [vmem:[#allocation13 + $0xb50] sm:$0xff]
        %v3393 = vld [vmem:[#allocation13 + $0xb58] sm:$0xff]
        %v3394 = vld [vmem:[#allocation13 + $0xb60] sm:$0xff]
        %v3395 = vld [vmem:[#allocation13 + $0xb68] sm:$0xff]
        %v3396 = vld [vmem:[#allocation13 + $0xb70] sm:$0xff]
        %v3397 = vld [vmem:[#allocation13 + $0xb78] sm:$0xff]
        %v3398 = vld [vmem:[#allocation13 + $0xb80] sm:$0xff]
        %v3399 = vld [vmem:[#allocation13 + $0xb88] sm:$0xff]
        %v3400 = vld [vmem:[#allocation13 + $0xb90] sm:$0xff]
        %v3401 = vld [vmem:[#allocation13 + $0xb98] sm:$0xff]
        %v3402 = vld [vmem:[#allocation13 + $0xba0] sm:$0xff]
        %v3403 = vld [vmem:[#allocation13 + $0xba8] sm:$0xff]
        %v3404 = vld [vmem:[#allocation13 + $0xbb0] sm:$0xff]
        %v3405 = vld [vmem:[#allocation13 + $0xbb8] sm:$0xff]
        %v3406 = vld [vmem:[#allocation13 + $0xbc0] sm:$0xff]
        %v3407 = vld [vmem:[#allocation13 + $0xbc8] sm:$0xff]
        %v3408 = vld [vmem:[#allocation13 + $0xbd0] sm:$0xff]
        %v3409 = vld [vmem:[#allocation13 + $0xbd8] sm:$0xff]
        %v3410 = vld [vmem:[#allocation13 + $0xbe0] sm:$0xff]
        %v3411 = vld [vmem:[#allocation13 + $0xbe8] sm:$0xff]
        %v3412 = vld [vmem:[#allocation13 + $0xbf0] sm:$0xff]
        %v3413 = vld [vmem:[#allocation13 + $0xbf8] sm:$0xff]
        %v3414 = vld [vmem:[#allocation13 + $0xc00] sm:$0xff]
        %v3415 = vld [vmem:[#allocation13 + $0xc08] sm:$0xff]
        %v3416 = vld [vmem:[#allocation13 + $0xc10] sm:$0xff]
        %v3417 = vld [vmem:[#allocation13 + $0xc18] sm:$0xff]
        %v3418 = vld [vmem:[#allocation13 + $0xc20] sm:$0xff]
        %v3419 = vld [vmem:[#allocation13 + $0xc28] sm:$0xff]
        %v3420 = vld [vmem:[#allocation13 + $0xc30] sm:$0xff]
        %v3421 = vld [vmem:[#allocation13 + $0xc38] sm:$0xff]
        %v3422 = vld [vmem:[#allocation13 + $0xc40] sm:$0xff]
        %v3423 = vld [vmem:[#allocation13 + $0xc48] sm:$0xff]
        %v3424 = vld [vmem:[#allocation13 + $0xc50] sm:$0xff]
        %v3425 = vld [vmem:[#allocation13 + $0xc58] sm:$0xff]
        %v3426 = vld [vmem:[#allocation13 + $0xc60] sm:$0xff]
        %v3427 = vld [vmem:[#allocation13 + $0xc68] sm:$0xff]
        %v3428 = vld [vmem:[#allocation13 + $0xc70] sm:$0xff]
        %v3429 = vld [vmem:[#allocation13 + $0xc78] sm:$0xff]
        %v3430 = vld [vmem:[#allocation13 + $0xc80] sm:$0xff]
        %v3431 = vld [vmem:[#allocation13 + $0xc88] sm:$0xff]
        %v3432 = vld [vmem:[#allocation13 + $0xc90] sm:$0xff]
        %v3433 = vld [vmem:[#allocation13 + $0xc98] sm:$0xff]
        %v3434 = vld [vmem:[#allocation13 + $0xca0] sm:$0xff]
        %v3435 = vld [vmem:[#allocation13 + $0xca8] sm:$0xff]
        %v3436 = vld [vmem:[#allocation13 + $0xcb0] sm:$0xff]
        %v3437 = vld [vmem:[#allocation13 + $0xcb8] sm:$0xff]
        %v3438 = vld [vmem:[#allocation13 + $0xcc0] sm:$0xff]
        %v3439 = vld [vmem:[#allocation13 + $0xcc8] sm:$0xff]
        %v3440 = vld [vmem:[#allocation13 + $0xcd0] sm:$0xff]
        %v3441 = vld [vmem:[#allocation13 + $0xcd8] sm:$0xff]
        %v3442 = vld [vmem:[#allocation13 + $0xce0] sm:$0xff]
        %v3443 = vld [vmem:[#allocation13 + $0xce8] sm:$0xff]
        %v3444 = vld [vmem:[#allocation13 + $0xcf0] sm:$0xff]
        %v3445 = vld [vmem:[#allocation13 + $0xcf8] sm:$0xff]
        %v3446 = vld [vmem:[#allocation13 + $0xd00] sm:$0xff]
        %v3447 = vld [vmem:[#allocation13 + $0xd08] sm:$0xff]
        %v3448 = vld [vmem:[#allocation13 + $0xd10] sm:$0xff]
        %v3449 = vld [vmem:[#allocation13 + $0xd18] sm:$0xff]
        %v3450 = vld [vmem:[#allocation13 + $0xd20] sm:$0xff]
        %v3451 = vld [vmem:[#allocation13 + $0xd28] sm:$0xff]
        %v3452 = vld [vmem:[#allocation13 + $0xd30] sm:$0xff]
        %v3453 = vld [vmem:[#allocation13 + $0xd38] sm:$0xff]
        %v3454 = vld [vmem:[#allocation13 + $0xd40] sm:$0xff]
        %v3455 = vld [vmem:[#allocation13 + $0xd48] sm:$0xff]
        %v3456 = vld [vmem:[#allocation13 + $0xd50] sm:$0xff]
        %v3457 = vld [vmem:[#allocation13 + $0xd58] sm:$0xff]
        %v3458 = vld [vmem:[#allocation13 + $0xd60] sm:$0xff]
        %v3459 = vld [vmem:[#allocation13 + $0xd68] sm:$0xff]
        %v3460 = vld [vmem:[#allocation13 + $0xd70] sm:$0xff]
        %v3461 = vld [vmem:[#allocation13 + $0xd78] sm:$0xff]
        %v3462 = vld [vmem:[#allocation13 + $0xd80] sm:$0xff]
        %v3463 = vld [vmem:[#allocation13 + $0xd88] sm:$0xff]
        %v3464 = vld [vmem:[#allocation13 + $0xd90] sm:$0xff]
        %v3465 = vld [vmem:[#allocation13 + $0xd98] sm:$0xff]
        %v3466 = vld [vmem:[#allocation13 + $0xda0] sm:$0xff]
        %v3467 = vld [vmem:[#allocation13 + $0xda8] sm:$0xff]
        %v3468 = vld [vmem:[#allocation13 + $0xdb0] sm:$0xff]
        %v3469 = vld [vmem:[#allocation13 + $0xdb8] sm:$0xff]
        %v3470 = vld [vmem:[#allocation13 + $0xdc0] sm:$0xff]
        %v3471 = vld [vmem:[#allocation13 + $0xdc8] sm:$0xff]
        %v3472 = vld [vmem:[#allocation13 + $0xdd0] sm:$0xff]
        %v3473 = vld [vmem:[#allocation13 + $0xdd8] sm:$0xff]
        %v3474 = vld [vmem:[#allocation13 + $0xde0] sm:$0xff]
        %v3475 = vld [vmem:[#allocation13 + $0xde8] sm:$0xff]
        %v3476 = vld [vmem:[#allocation13 + $0xdf0] sm:$0xff]
        %v3477 = vld [vmem:[#allocation13 + $0xdf8] sm:$0xff]
        %v3478 = vld [vmem:[#allocation13 + $0xe00] sm:$0xff]
        %v3479 = vld [vmem:[#allocation13 + $0xe08] sm:$0xff]
        %v3480 = vld [vmem:[#allocation13 + $0xe10] sm:$0xff]
        %v3481 = vld [vmem:[#allocation13 + $0xe18] sm:$0xff]
        %v3482 = vld [vmem:[#allocation13 + $0xe20] sm:$0xff]
        %v3483 = vld [vmem:[#allocation13 + $0xe28] sm:$0xff]
        %v3484 = vld [vmem:[#allocation13 + $0xe30] sm:$0xff]
        %v3485 = vld [vmem:[#allocation13 + $0xe38] sm:$0xff]
        %v3486 = vld [vmem:[#allocation13 + $0xe40] sm:$0xff]
        %v3487 = vld [vmem:[#allocation13 + $0xe48] sm:$0xff]
        %v3488 = vld [vmem:[#allocation13 + $0xe50] sm:$0xff]
        %v3489 = vld [vmem:[#allocation13 + $0xe58] sm:$0xff]
        %v3490 = vld [vmem:[#allocation13 + $0xe60] sm:$0xff]
        %v3491 = vld [vmem:[#allocation13 + $0xe68] sm:$0xff]
        %v3492 = vld [vmem:[#allocation13 + $0xe70] sm:$0xff]
        %v3493 = vld [vmem:[#allocation13 + $0xe78] sm:$0xff]
        %v3494 = vld [vmem:[#allocation13 + $0xe80] sm:$0xff]
        %v3495 = vld [vmem:[#allocation13 + $0xe88] sm:$0xff]
        %v3496 = vld [vmem:[#allocation13 + $0xe90] sm:$0xff]
        %v3497 = vld [vmem:[#allocation13 + $0xe98] sm:$0xff]
        %v3498 = vld [vmem:[#allocation13 + $0xea0] sm:$0xff]
        %v3499 = vld [vmem:[#allocation13 + $0xea8] sm:$0xff]
        %v3500 = vld [vmem:[#allocation13 + $0xeb0] sm:$0xff]
        %v3501 = vld [vmem:[#allocation13 + $0xeb8] sm:$0xff]
        %v3502 = vld [vmem:[#allocation13 + $0xec0] sm:$0xff]
        %v3503 = vld [vmem:[#allocation13 + $0xec8] sm:$0xff]
        %v3504 = vld [vmem:[#allocation13 + $0xed0] sm:$0xff]
        %v3505 = vld [vmem:[#allocation13 + $0xed8] sm:$0xff]
        %v3506 = vld [vmem:[#allocation13 + $0xee0] sm:$0xff]
        %v3507 = vld [vmem:[#allocation13 + $0xee8] sm:$0xff]
        %v3508 = vld [vmem:[#allocation13 + $0xef0] sm:$0xff]
        %v3509 = vld [vmem:[#allocation13 + $0xef8] sm:$0xff]
        %v3510 = vld [vmem:[#allocation13 + $0xf00] sm:$0xff]
        %v3511 = vld [vmem:[#allocation13 + $0xf08] sm:$0xff]
        %v3512 = vld [vmem:[#allocation13 + $0xf10] sm:$0xff]
        %v3513 = vld [vmem:[#allocation13 + $0xf18] sm:$0xff]
        %v3514 = vld [vmem:[#allocation13 + $0xf20] sm:$0xff]
        %v3515 = vld [vmem:[#allocation13 + $0xf28] sm:$0xff]
        %v3516 = vld [vmem:[#allocation13 + $0xf30] sm:$0xff]
        %v3517 = vld [vmem:[#allocation13 + $0xf38] sm:$0xff]
        %v3518 = vld [vmem:[#allocation13 + $0xf40] sm:$0xff]
        %v3519 = vld [vmem:[#allocation13 + $0xf48] sm:$0xff]
        %v3520 = vld [vmem:[#allocation13 + $0xf50] sm:$0xff]
        %v3521 = vld [vmem:[#allocation13 + $0xf58] sm:$0xff]
        %v3522 = vld [vmem:[#allocation13 + $0xf60] sm:$0xff]
        %v3523 = vld [vmem:[#allocation13 + $0xf68] sm:$0xff]
        %v3524 = vld [vmem:[#allocation13 + $0xf70] sm:$0xff]
        %v3525 = vld [vmem:[#allocation13 + $0xf78] sm:$0xff]
        %v3526 = vld [vmem:[#allocation13 + $0xf80] sm:$0xff]
        %v3527 = vld [vmem:[#allocation13 + $0xf88] sm:$0xff]
        %v3528 = vld [vmem:[#allocation13 + $0xf90] sm:$0xff]
        %v3529 = vld [vmem:[#allocation13 + $0xf98] sm:$0xff]
        %v3530 = vld [vmem:[#allocation13 + $0xfa0] sm:$0xff]
        %v3531 = vld [vmem:[#allocation13 + $0xfa8] sm:$0xff]
        %v3532 = vld [vmem:[#allocation13 + $0xfb0] sm:$0xff]
        %v3533 = vld [vmem:[#allocation13 + $0xfb8] sm:$0xff]
        %v3534 = vld [vmem:[#allocation13 + $0xfc0] sm:$0xff]
        %v3535 = vld [vmem:[#allocation13 + $0xfc8] sm:$0xff]
        %v3536 = vld [vmem:[#allocation13 + $0xfd0] sm:$0xff]
        %v3537 = vld [vmem:[#allocation13 + $0xfd8] sm:$0xff]
        %v3538 = vld [vmem:[#allocation13 + $0xfe0] sm:$0xff]
        %v3539 = vld [vmem:[#allocation13 + $0xfe8] sm:$0xff]
        %v3540 = vld [vmem:[#allocation13 + $0xff0] sm:$0xff]
        %v3541 = vld [vmem:[#allocation13 + $0xff8] sm:$0xff]
        %3542 = vmatprep.subr.mxu0 %v3271
        %3543 = vmatpush1.msra.mxu0 %v3270
        %3544 = vmatprep.subr.mxu0 %v3255
        %3545 = vmatpush1.msra.mxu0 %v3254
        %3546 = vmatprep.subr.mxu0 %v3239
        %3547 = vmatpush1.msra.mxu0 %v3238
        %3548 = vmatprep.subr.mxu0 %v3223
        %3549 = vmatpush1.msra.mxu0 %v3222
        %3550 = vmatprep.subr.mxu0 %v3207
        %3551 = vmatpush1.msra.mxu0 %v3206
        %3552 = vmatprep.subr.mxu0 %v3191
        %3553 = vmatpush1.msra.mxu0 %v3190
        %3554 = vmatprep.subr.mxu0 %v3175
        %3555 = vmatpush1.msra.mxu0 %v3174
        %3556 = vmatprep.subr.mxu0 %v3159
        %3557 = vmatpush1.msra.mxu0 %v3158
        %3558 = vmatprep.subr.mxu0 %v3143
        %3559 = vmatpush1.msra.mxu0 %v3142
        %3560 = vmatprep.subr.mxu0 %v3127
        %3561 = vmatpush1.msra.mxu0 %v3126
        %3562 = vmatprep.subr.mxu0 %v3111
        %3563 = vmatpush1.msra.mxu0 %v3110
        %3564 = vmatprep.subr.mxu0 %v3095
        %3565 = vmatpush1.msra.mxu0 %v3094
        %3566 = vmatprep.subr.mxu0 %v3079
        %3567 = vmatpush1.msra.mxu0 %v3078
        %3568 = vmatprep.subr.mxu0 %v3063
        %3569 = vmatpush1.msra.mxu0 %v3062
        %3570 = vmatprep.subr.mxu0 %v3047
        %3571 = vmatpush1.msra.mxu0 %v3046
        %3572 = vmatprep.subr.mxu0 %v3031
        %3573 = vmatpush1.msra.mxu0 %v3030
        %3574 = vmatprep.subr.mxu0 %v3527
        %3575 = vmatpush2.msra.mxu0 %v3526
        %3576 = vmatprep.subr.mxu0 %v3511
        %3577 = vmatpush2.msra.mxu0 %v3510
        %3578 = vmatprep.subr.mxu0 %v3495
        %3579 = vmatpush2.msra.mxu0 %v3494
        %3580 = vmatprep.subr.mxu0 %v3479
        %3581 = vmatpush2.msra.mxu0 %v3478
        %3582 = vmatprep.subr.mxu0 %v3463
        %3583 = vmatpush2.msra.mxu0 %v3462
        %3584 = vmatprep.subr.mxu0 %v3447
        %3585 = vmatpush2.msra.mxu0 %v3446
        %3586 = vmatprep.subr.mxu0 %v3431
        %3587 = vmatpush2.msra.mxu0 %v3430
        %3588 = vmatprep.subr.mxu0 %v3415
        %3589 = vmatpush2.msra.mxu0 %v3414
        %3590 = vmatprep.subr.mxu0 %v3399
        %3591 = vmatpush2.msra.mxu0 %v3398
        %3592 = vmatprep.subr.mxu0 %v3383
        %3593 = vmatpush2.msra.mxu0 %v3382
        %3594 = vmatprep.subr.mxu0 %v3367
        %3595 = vmatpush2.msra.mxu0 %v3366
        %3596 = vmatprep.subr.mxu0 %v3351
        %3597 = vmatpush2.msra.mxu0 %v3350
        %3598 = vmatprep.subr.mxu0 %v3335
        %3599 = vmatpush2.msra.mxu0 %v3334
        %3600 = vmatprep.subr.mxu0 %v3319
        %3601 = vmatpush2.msra.mxu0 %v3318
        %3602 = vmatprep.subr.mxu0 %v3303
        %3603 = vmatpush2.msra.mxu0 %v3302
        %3604 = vmatprep.subr.mxu0 %v3287
        %3605 = vmatpush2.msra.mxu0 %v3286
        %3606 = vmatprep.mubr.f32.mxu0 %v1678
        %3607 = vmatmul.mubr.f32.gmra.mxu0 %v1676
        %v3608 = vpop.f32.mrf.mxu0
        %v3609 = vadd.f32 0.0, %v3608
        %v3610 = vpop.f32.mrf.mxu0
        %v3611 = vadd.f32 0.0, %v3610
        %3612 = vdwg.mxu0
        %3613 = vmatprep.subr.mxu0 %v3273
        %3614 = vmatpush1.msra.mxu0 %v3272
        %3615 = vmatprep.subr.mxu0 %v3257
        %3616 = vmatpush1.msra.mxu0 %v3256
        %3617 = vmatprep.subr.mxu0 %v3241
        %3618 = vmatpush1.msra.mxu0 %v3240
        %3619 = vmatprep.subr.mxu0 %v3225
        %3620 = vmatpush1.msra.mxu0 %v3224
        %3621 = vmatprep.subr.mxu0 %v3209
        %3622 = vmatpush1.msra.mxu0 %v3208
        %3623 = vmatprep.subr.mxu0 %v3193
        %3624 = vmatpush1.msra.mxu0 %v3192
        %3625 = vmatprep.subr.mxu0 %v3177
        %3626 = vmatpush1.msra.mxu0 %v3176
        %3627 = vmatprep.subr.mxu0 %v3161
        %3628 = vmatpush1.msra.mxu0 %v3160
        %3629 = vmatprep.subr.mxu0 %v3145
        %3630 = vmatpush1.msra.mxu0 %v3144
        %3631 = vmatprep.subr.mxu0 %v3129
        %3632 = vmatpush1.msra.mxu0 %v3128
        %3633 = vmatprep.subr.mxu0 %v3113
        %3634 = vmatpush1.msra.mxu0 %v3112
        %3635 = vmatprep.subr.mxu0 %v3097
        %3636 = vmatpush1.msra.mxu0 %v3096
        %3637 = vmatprep.subr.mxu0 %v3081
        %3638 = vmatpush1.msra.mxu0 %v3080
        %3639 = vmatprep.subr.mxu0 %v3065
        %3640 = vmatpush1.msra.mxu0 %v3064
        %3641 = vmatprep.subr.mxu0 %v3049
        %3642 = vmatpush1.msra.mxu0 %v3048
        %3643 = vmatprep.subr.mxu0 %v3033
        %3644 = vmatpush1.msra.mxu0 %v3032
        %3645 = vmatprep.subr.mxu0 %v3529
        %3646 = vmatpush2.msra.mxu0 %v3528
        %3647 = vmatprep.subr.mxu0 %v3513
        %3648 = vmatpush2.msra.mxu0 %v3512
        %3649 = vmatprep.subr.mxu0 %v3497
        %3650 = vmatpush2.msra.mxu0 %v3496
        %3651 = vmatprep.subr.mxu0 %v3481
        %3652 = vmatpush2.msra.mxu0 %v3480
        %3653 = vmatprep.subr.mxu0 %v3465
        %3654 = vmatpush2.msra.mxu0 %v3464
        %3655 = vmatprep.subr.mxu0 %v3449
        %3656 = vmatpush2.msra.mxu0 %v3448
        %3657 = vmatprep.subr.mxu0 %v3433
        %3658 = vmatpush2.msra.mxu0 %v3432
        %3659 = vmatprep.subr.mxu0 %v3417
        %3660 = vmatpush2.msra.mxu0 %v3416
        %3661 = vmatprep.subr.mxu0 %v3401
        %3662 = vmatpush2.msra.mxu0 %v3400
        %3663 = vmatprep.subr.mxu0 %v3385
        %3664 = vmatpush2.msra.mxu0 %v3384
        %3665 = vmatprep.subr.mxu0 %v3369
        %3666 = vmatpush2.msra.mxu0 %v3368
        %3667 = vmatprep.subr.mxu0 %v3353
        %3668 = vmatpush2.msra.mxu0 %v3352
        %3669 = vmatprep.subr.mxu0 %v3337
        %3670 = vmatpush2.msra.mxu0 %v3336
        %3671 = vmatprep.subr.mxu0 %v3321
        %3672 = vmatpush2.msra.mxu0 %v3320
        %3673 = vmatprep.subr.mxu0 %v3305
        %3674 = vmatpush2.msra.mxu0 %v3304
        %3675 = vmatprep.subr.mxu0 %v3289
        %3676 = vmatpush2.msra.mxu0 %v3288
        %3677 = vmatprep.mubr.f32.mxu0 %v1678
        %3678 = vmatmul.mubr.f32.gmra.mxu0 %v1676
        %v3679 = vpop.f32.mrf.mxu0
        %v3680 = vadd.f32 0.0, %v3679
        %v3681 = vpop.f32.mrf.mxu0
        %v3682 = vadd.f32 0.0, %v3681
        %3683 = vdwg.mxu0
        %3684 = vmatprep.subr.mxu0 %v3275
        %3685 = vmatpush1.msra.mxu0 %v3274
        %3686 = vmatprep.subr.mxu0 %v3259
        %3687 = vmatpush1.msra.mxu0 %v3258
        %3688 = vmatprep.subr.mxu0 %v3243
        %3689 = vmatpush1.msra.mxu0 %v3242
        %3690 = vmatprep.subr.mxu0 %v3227
        %3691 = vmatpush1.msra.mxu0 %v3226
        %3692 = vmatprep.subr.mxu0 %v3211
        %3693 = vmatpush1.msra.mxu0 %v3210
        %3694 = vmatprep.subr.mxu0 %v3195
        %3695 = vmatpush1.msra.mxu0 %v3194
        %3696 = vmatprep.subr.mxu0 %v3179
        %3697 = vmatpush1.msra.mxu0 %v3178
        %3698 = vmatprep.subr.mxu0 %v3163
        %3699 = vmatpush1.msra.mxu0 %v3162
        %3700 = vmatprep.subr.mxu0 %v3147
        %3701 = vmatpush1.msra.mxu0 %v3146
        %3702 = vmatprep.subr.mxu0 %v3131
        %3703 = vmatpush1.msra.mxu0 %v3130
        %3704 = vmatprep.subr.mxu0 %v3115
        %3705 = vmatpush1.msra.mxu0 %v3114
        %3706 = vmatprep.subr.mxu0 %v3099
        %3707 = vmatpush1.msra.mxu0 %v3098
        %3708 = vmatprep.subr.mxu0 %v3083
        %3709 = vmatpush1.msra.mxu0 %v3082
        %3710 = vmatprep.subr.mxu0 %v3067
        %3711 = vmatpush1.msra.mxu0 %v3066
        %3712 = vmatprep.subr.mxu0 %v3051
        %3713 = vmatpush1.msra.mxu0 %v3050
        %3714 = vmatprep.subr.mxu0 %v3035
        %3715 = vmatpush1.msra.mxu0 %v3034
        %3716 = vmatprep.subr.mxu0 %v3531
        %3717 = vmatpush2.msra.mxu0 %v3530
        %3718 = vmatprep.subr.mxu0 %v3515
        %3719 = vmatpush2.msra.mxu0 %v3514
        %3720 = vmatprep.subr.mxu0 %v3499
        %3721 = vmatpush2.msra.mxu0 %v3498
        %3722 = vmatprep.subr.mxu0 %v3483
        %3723 = vmatpush2.msra.mxu0 %v3482
        %3724 = vmatprep.subr.mxu0 %v3467
        %3725 = vmatpush2.msra.mxu0 %v3466
        %3726 = vmatprep.subr.mxu0 %v3451
        %3727 = vmatpush2.msra.mxu0 %v3450
        %3728 = vmatprep.subr.mxu0 %v3435
        %3729 = vmatpush2.msra.mxu0 %v3434
        %3730 = vmatprep.subr.mxu0 %v3419
        %3731 = vmatpush2.msra.mxu0 %v3418
        %3732 = vmatprep.subr.mxu0 %v3403
        %3733 = vmatpush2.msra.mxu0 %v3402
        %3734 = vmatprep.subr.mxu0 %v3387
        %3735 = vmatpush2.msra.mxu0 %v3386
        %3736 = vmatprep.subr.mxu0 %v3371
        %3737 = vmatpush2.msra.mxu0 %v3370
        %3738 = vmatprep.subr.mxu0 %v3355
        %3739 = vmatpush2.msra.mxu0 %v3354
        %3740 = vmatprep.subr.mxu0 %v3339
        %3741 = vmatpush2.msra.mxu0 %v3338
        %3742 = vmatprep.subr.mxu0 %v3323
        %3743 = vmatpush2.msra.mxu0 %v3322
        %3744 = vmatprep.subr.mxu0 %v3307
        %3745 = vmatpush2.msra.mxu0 %v3306
        %3746 = vmatprep.subr.mxu0 %v3291
        %3747 = vmatpush2.msra.mxu0 %v3290
        %3748 = vmatprep.mubr.f32.mxu0 %v1678
        %3749 = vmatmul.mubr.f32.gmra.mxu0 %v1676
        %v3750 = vpop.f32.mrf.mxu0
        %v3751 = vadd.f32 0.0, %v3750
        %v3752 = vpop.f32.mrf.mxu0
        %v3753 = vadd.f32 0.0, %v3752
        %3754 = vdwg.mxu0
        %3755 = vmatprep.subr.mxu0 %v3277
        %3756 = vmatpush1.msra.mxu0 %v3276
        %3757 = vmatprep.subr.mxu0 %v3261
        %3758 = vmatpush1.msra.mxu0 %v3260
        %3759 = vmatprep.subr.mxu0 %v3245
        %3760 = vmatpush1.msra.mxu0 %v3244
        %3761 = vmatprep.subr.mxu0 %v3229
        %3762 = vmatpush1.msra.mxu0 %v3228
        %3763 = vmatprep.subr.mxu0 %v3213
        %3764 = vmatpush1.msra.mxu0 %v3212
        %3765 = vmatprep.subr.mxu0 %v3197
        %3766 = vmatpush1.msra.mxu0 %v3196
        %3767 = vmatprep.subr.mxu0 %v3181
        %3768 = vmatpush1.msra.mxu0 %v3180
        %3769 = vmatprep.subr.mxu0 %v3165
        %3770 = vmatpush1.msra.mxu0 %v3164
        %3771 = vmatprep.subr.mxu0 %v3149
        %3772 = vmatpush1.msra.mxu0 %v3148
        %3773 = vmatprep.subr.mxu0 %v3133
        %3774 = vmatpush1.msra.mxu0 %v3132
        %3775 = vmatprep.subr.mxu0 %v3117
        %3776 = vmatpush1.msra.mxu0 %v3116
        %3777 = vmatprep.subr.mxu0 %v3101
        %3778 = vmatpush1.msra.mxu0 %v3100
        %3779 = vmatprep.subr.mxu0 %v3085
        %3780 = vmatpush1.msra.mxu0 %v3084
        %3781 = vmatprep.subr.mxu0 %v3069
        %3782 = vmatpush1.msra.mxu0 %v3068
        %3783 = vmatprep.subr.mxu0 %v3053
        %3784 = vmatpush1.msra.mxu0 %v3052
        %3785 = vmatprep.subr.mxu0 %v3037
        %3786 = vmatpush1.msra.mxu0 %v3036
        %3787 = vmatprep.subr.mxu0 %v3533
        %3788 = vmatpush2.msra.mxu0 %v3532
        %3789 = vmatprep.subr.mxu0 %v3517
        %3790 = vmatpush2.msra.mxu0 %v3516
        %3791 = vmatprep.subr.mxu0 %v3501
        %3792 = vmatpush2.msra.mxu0 %v3500
        %3793 = vmatprep.subr.mxu0 %v3485
        %3794 = vmatpush2.msra.mxu0 %v3484
        %3795 = vmatprep.subr.mxu0 %v3469
        %3796 = vmatpush2.msra.mxu0 %v3468
        %3797 = vmatprep.subr.mxu0 %v3453
        %3798 = vmatpush2.msra.mxu0 %v3452
        %3799 = vmatprep.subr.mxu0 %v3437
        %3800 = vmatpush2.msra.mxu0 %v3436
        %3801 = vmatprep.subr.mxu0 %v3421
        %3802 = vmatpush2.msra.mxu0 %v3420
        %3803 = vmatprep.subr.mxu0 %v3405
        %3804 = vmatpush2.msra.mxu0 %v3404
        %3805 = vmatprep.subr.mxu0 %v3389
        %3806 = vmatpush2.msra.mxu0 %v3388
        %3807 = vmatprep.subr.mxu0 %v3373
        %3808 = vmatpush2.msra.mxu0 %v3372
        %3809 = vmatprep.subr.mxu0 %v3357
        %3810 = vmatpush2.msra.mxu0 %v3356
        %3811 = vmatprep.subr.mxu0 %v3341
        %3812 = vmatpush2.msra.mxu0 %v3340
        %3813 = vmatprep.subr.mxu0 %v3325
        %3814 = vmatpush2.msra.mxu0 %v3324
        %3815 = vmatprep.subr.mxu0 %v3309
        %3816 = vmatpush2.msra.mxu0 %v3308
        %3817 = vmatprep.subr.mxu0 %v3293
        %3818 = vmatpush2.msra.mxu0 %v3292
        %3819 = vmatprep.mubr.f32.mxu0 %v1678
        %3820 = vmatmul.mubr.f32.gmra.mxu0 %v1676
        %v3821 = vpop.f32.mrf.mxu0
        %v3822 = vadd.f32 0.0, %v3821
        %v3823 = vpop.f32.mrf.mxu0
        %v3824 = vadd.f32 0.0, %v3823
        %3825 = vdwg.mxu0
        %3826 = vmatprep.subr.mxu0 %v3279
        %3827 = vmatpush1.msra.mxu0 %v3278
        %3828 = vmatprep.subr.mxu0 %v3263
        %3829 = vmatpush1.msra.mxu0 %v3262
        %3830 = vmatprep.subr.mxu0 %v3247
        %3831 = vmatpush1.msra.mxu0 %v3246
        %3832 = vmatprep.subr.mxu0 %v3231
        %3833 = vmatpush1.msra.mxu0 %v3230
        %3834 = vmatprep.subr.mxu0 %v3215
        %3835 = vmatpush1.msra.mxu0 %v3214
        %3836 = vmatprep.subr.mxu0 %v3199
        %3837 = vmatpush1.msra.mxu0 %v3198
        %3838 = vmatprep.subr.mxu0 %v3183
        %3839 = vmatpush1.msra.mxu0 %v3182
        %3840 = vmatprep.subr.mxu0 %v3167
        %3841 = vmatpush1.msra.mxu0 %v3166
        %3842 = vmatprep.subr.mxu0 %v3151
        %3843 = vmatpush1.msra.mxu0 %v3150
        %3844 = vmatprep.subr.mxu0 %v3135
        %3845 = vmatpush1.msra.mxu0 %v3134
        %3846 = vmatprep.subr.mxu0 %v3119
        %3847 = vmatpush1.msra.mxu0 %v3118
        %3848 = vmatprep.subr.mxu0 %v3103
        %3849 = vmatpush1.msra.mxu0 %v3102
        %3850 = vmatprep.subr.mxu0 %v3087
        %3851 = vmatpush1.msra.mxu0 %v3086
        %3852 = vmatprep.subr.mxu0 %v3071
        %3853 = vmatpush1.msra.mxu0 %v3070
        %3854 = vmatprep.subr.mxu0 %v3055
        %3855 = vmatpush1.msra.mxu0 %v3054
        %3856 = vmatprep.subr.mxu0 %v3039
        %3857 = vmatpush1.msra.mxu0 %v3038
        %3858 = vmatprep.subr.mxu0 %v3535
        %3859 = vmatpush2.msra.mxu0 %v3534
        %3860 = vmatprep.subr.mxu0 %v3519
        %3861 = vmatpush2.msra.mxu0 %v3518
        %3862 = vmatprep.subr.mxu0 %v3503
        %3863 = vmatpush2.msra.mxu0 %v3502
        %3864 = vmatprep.subr.mxu0 %v3487
        %3865 = vmatpush2.msra.mxu0 %v3486
        %3866 = vmatprep.subr.mxu0 %v3471
        %3867 = vmatpush2.msra.mxu0 %v3470
        %3868 = vmatprep.subr.mxu0 %v3455
        %3869 = vmatpush2.msra.mxu0 %v3454
        %3870 = vmatprep.subr.mxu0 %v3439
        %3871 = vmatpush2.msra.mxu0 %v3438
        %3872 = vmatprep.subr.mxu0 %v3423
        %3873 = vmatpush2.msra.mxu0 %v3422
        %3874 = vmatprep.subr.mxu0 %v3407
        %3875 = vmatpush2.msra.mxu0 %v3406
        %3876 = vmatprep.subr.mxu0 %v3391
        %3877 = vmatpush2.msra.mxu0 %v3390
        %3878 = vmatprep.subr.mxu0 %v3375
        %3879 = vmatpush2.msra.mxu0 %v3374
        %3880 = vmatprep.subr.mxu0 %v3359
        %3881 = vmatpush2.msra.mxu0 %v3358
        %3882 = vmatprep.subr.mxu0 %v3343
        %3883 = vmatpush2.msra.mxu0 %v3342
        %3884 = vmatprep.subr.mxu0 %v3327
        %3885 = vmatpush2.msra.mxu0 %v3326
        %3886 = vmatprep.subr.mxu0 %v3311
        %3887 = vmatpush2.msra.mxu0 %v3310
        %3888 = vmatprep.subr.mxu0 %v3295
        %3889 = vmatpush2.msra.mxu0 %v3294
        %3890 = vmatprep.mubr.f32.mxu0 %v1678
        %3891 = vmatmul.mubr.f32.gmra.mxu0 %v1676
        %v3892 = vpop.f32.mrf.mxu0
        %v3893 = vadd.f32 0.0, %v3892
        %v3894 = vpop.f32.mrf.mxu0
        %v3895 = vadd.f32 0.0, %v3894
        %3896 = vdwg.mxu0
        %3897 = vmatprep.subr.mxu0 %v3281
        %3898 = vmatpush1.msra.mxu0 %v3280
        %3899 = vmatprep.subr.mxu0 %v3265
        %3900 = vmatpush1.msra.mxu0 %v3264
        %3901 = vmatprep.subr.mxu0 %v3249
        %3902 = vmatpush1.msra.mxu0 %v3248
        %3903 = vmatprep.subr.mxu0 %v3233
        %3904 = vmatpush1.msra.mxu0 %v3232
        %3905 = vmatprep.subr.mxu0 %v3217
        %3906 = vmatpush1.msra.mxu0 %v3216
        %3907 = vmatprep.subr.mxu0 %v3201
        %3908 = vmatpush1.msra.mxu0 %v3200
        %3909 = vmatprep.subr.mxu0 %v3185
        %3910 = vmatpush1.msra.mxu0 %v3184
        %3911 = vmatprep.subr.mxu0 %v3169
        %3912 = vmatpush1.msra.mxu0 %v3168
        %3913 = vmatprep.subr.mxu0 %v3153
        %3914 = vmatpush1.msra.mxu0 %v3152
        %3915 = vmatprep.subr.mxu0 %v3137
        %3916 = vmatpush1.msra.mxu0 %v3136
        %3917 = vmatprep.subr.mxu0 %v3121
        %3918 = vmatpush1.msra.mxu0 %v3120
        %3919 = vmatprep.subr.mxu0 %v3105
        %3920 = vmatpush1.msra.mxu0 %v3104
        %3921 = vmatprep.subr.mxu0 %v3089
        %3922 = vmatpush1.msra.mxu0 %v3088
        %3923 = vmatprep.subr.mxu0 %v3073
        %3924 = vmatpush1.msra.mxu0 %v3072
        %3925 = vmatprep.subr.mxu0 %v3057
        %3926 = vmatpush1.msra.mxu0 %v3056
        %3927 = vmatprep.subr.mxu0 %v3041
        %3928 = vmatpush1.msra.mxu0 %v3040
        %3929 = vmatprep.subr.mxu0 %v3537
        %3930 = vmatpush2.msra.mxu0 %v3536
        %3931 = vmatprep.subr.mxu0 %v3521
        %3932 = vmatpush2.msra.mxu0 %v3520
        %3933 = vmatprep.subr.mxu0 %v3505
        %3934 = vmatpush2.msra.mxu0 %v3504
        %3935 = vmatprep.subr.mxu0 %v3489
        %3936 = vmatpush2.msra.mxu0 %v3488
        %3937 = vmatprep.subr.mxu0 %v3473
        %3938 = vmatpush2.msra.mxu0 %v3472
        %3939 = vmatprep.subr.mxu0 %v3457
        %3940 = vmatpush2.msra.mxu0 %v3456
        %3941 = vmatprep.subr.mxu0 %v3441
        %3942 = vmatpush2.msra.mxu0 %v3440
        %3943 = vmatprep.subr.mxu0 %v3425
        %3944 = vmatpush2.msra.mxu0 %v3424
        %3945 = vmatprep.subr.mxu0 %v3409
        %3946 = vmatpush2.msra.mxu0 %v3408
        %3947 = vmatprep.subr.mxu0 %v3393
        %3948 = vmatpush2.msra.mxu0 %v3392
        %3949 = vmatprep.subr.mxu0 %v3377
        %3950 = vmatpush2.msra.mxu0 %v3376
        %3951 = vmatprep.subr.mxu0 %v3361
        %3952 = vmatpush2.msra.mxu0 %v3360
        %3953 = vmatprep.subr.mxu0 %v3345
        %3954 = vmatpush2.msra.mxu0 %v3344
        %3955 = vmatprep.subr.mxu0 %v3329
        %3956 = vmatpush2.msra.mxu0 %v3328
        %3957 = vmatprep.subr.mxu0 %v3313
        %3958 = vmatpush2.msra.mxu0 %v3312
        %3959 = vmatprep.subr.mxu0 %v3297
        %3960 = vmatpush2.msra.mxu0 %v3296
        %3961 = vmatprep.mubr.f32.mxu0 %v1678
        %3962 = vmatmul.mubr.f32.gmra.mxu0 %v1676
        %v3963 = vpop.f32.mrf.mxu0
        %v3964 = vadd.f32 0.0, %v3963
        %v3965 = vpop.f32.mrf.mxu0
        %v3966 = vadd.f32 0.0, %v3965
        %3967 = vdwg.mxu0
        %3968 = vmatprep.subr.mxu0 %v3283
        %3969 = vmatpush1.msra.mxu0 %v3282
        %3970 = vmatprep.subr.mxu0 %v3267
        %3971 = vmatpush1.msra.mxu0 %v3266
        %3972 = vmatprep.subr.mxu0 %v3251
        %3973 = vmatpush1.msra.mxu0 %v3250
        %3974 = vmatprep.subr.mxu0 %v3235
        %3975 = vmatpush1.msra.mxu0 %v3234
        %3976 = vmatprep.subr.mxu0 %v3219
        %3977 = vmatpush1.msra.mxu0 %v3218
        %3978 = vmatprep.subr.mxu0 %v3203
        %3979 = vmatpush1.msra.mxu0 %v3202
        %3980 = vmatprep.subr.mxu0 %v3187
        %3981 = vmatpush1.msra.mxu0 %v3186
        %3982 = vmatprep.subr.mxu0 %v3171
        %3983 = vmatpush1.msra.mxu0 %v3170
        %3984 = vmatprep.subr.mxu0 %v3155
        %3985 = vmatpush1.msra.mxu0 %v3154
        %3986 = vmatprep.subr.mxu0 %v3139
        %3987 = vmatpush1.msra.mxu0 %v3138
        %3988 = vmatprep.subr.mxu0 %v3123
        %3989 = vmatpush1.msra.mxu0 %v3122
        %3990 = vmatprep.subr.mxu0 %v3107
        %3991 = vmatpush1.msra.mxu0 %v3106
        %3992 = vmatprep.subr.mxu0 %v3091
        %3993 = vmatpush1.msra.mxu0 %v3090
        %3994 = vmatprep.subr.mxu0 %v3075
        %3995 = vmatpush1.msra.mxu0 %v3074
        %3996 = vmatprep.subr.mxu0 %v3059
        %3997 = vmatpush1.msra.mxu0 %v3058
        %3998 = vmatprep.subr.mxu0 %v3043
        %3999 = vmatpush1.msra.mxu0 %v3042
        %4000 = vmatprep.subr.mxu0 %v3539
        %4001 = vmatpush2.msra.mxu0 %v3538
        %4002 = vmatprep.subr.mxu0 %v3523
        %4003 = vmatpush2.msra.mxu0 %v3522
        %4004 = vmatprep.subr.mxu0 %v3507
        %4005 = vmatpush2.msra.mxu0 %v3506
        %4006 = vmatprep.subr.mxu0 %v3491
        %4007 = vmatpush2.msra.mxu0 %v3490
        %4008 = vmatprep.subr.mxu0 %v3475
        %4009 = vmatpush2.msra.mxu0 %v3474
        %4010 = vmatprep.subr.mxu0 %v3459
        %4011 = vmatpush2.msra.mxu0 %v3458
        %4012 = vmatprep.subr.mxu0 %v3443
        %4013 = vmatpush2.msra.mxu0 %v3442
        %4014 = vmatprep.subr.mxu0 %v3427
        %4015 = vmatpush2.msra.mxu0 %v3426
        %4016 = vmatprep.subr.mxu0 %v3411
        %4017 = vmatpush2.msra.mxu0 %v3410
        %4018 = vmatprep.subr.mxu0 %v3395
        %4019 = vmatpush2.msra.mxu0 %v3394
        %4020 = vmatprep.subr.mxu0 %v3379
        %4021 = vmatpush2.msra.mxu0 %v3378
        %4022 = vmatprep.subr.mxu0 %v3363
        %4023 = vmatpush2.msra.mxu0 %v3362
        %4024 = vmatprep.subr.mxu0 %v3347
        %4025 = vmatpush2.msra.mxu0 %v3346
        %4026 = vmatprep.subr.mxu0 %v3331
        %4027 = vmatpush2.msra.mxu0 %v3330
        %4028 = vmatprep.subr.mxu0 %v3315
        %4029 = vmatpush2.msra.mxu0 %v3314
        %4030 = vmatprep.subr.mxu0 %v3299
        %4031 = vmatpush2.msra.mxu0 %v3298
        %4032 = vmatprep.mubr.f32.mxu0 %v1678
        %4033 = vmatmul.mubr.f32.gmra.mxu0 %v1676
        %v4034 = vpop.f32.mrf.mxu0
        %v4035 = vadd.f32 0.0, %v4034
        %v4036 = vpop.f32.mrf.mxu0
        %v4037 = vadd.f32 0.0, %v4036
        %4038 = vdwg.mxu0
        %4039 = vmatprep.subr.mxu0 %v3285
        %4040 = vmatpush1.msra.mxu0 %v3284
        %4041 = vmatprep.subr.mxu0 %v3269
        %4042 = vmatpush1.msra.mxu0 %v3268
        %4043 = vmatprep.subr.mxu0 %v3253
        %4044 = vmatpush1.msra.mxu0 %v3252
        %4045 = vmatprep.subr.mxu0 %v3237
        %4046 = vmatpush1.msra.mxu0 %v3236
        %4047 = vmatprep.subr.mxu0 %v3221
        %4048 = vmatpush1.msra.mxu0 %v3220
        %4049 = vmatprep.subr.mxu0 %v3205
        %4050 = vmatpush1.msra.mxu0 %v3204
        %4051 = vmatprep.subr.mxu0 %v3189
        %4052 = vmatpush1.msra.mxu0 %v3188
        %4053 = vmatprep.subr.mxu0 %v3173
        %4054 = vmatpush1.msra.mxu0 %v3172
        %4055 = vmatprep.subr.mxu0 %v3157
        %4056 = vmatpush1.msra.mxu0 %v3156
        %4057 = vmatprep.subr.mxu0 %v3141
        %4058 = vmatpush1.msra.mxu0 %v3140
        %4059 = vmatprep.subr.mxu0 %v3125
        %4060 = vmatpush1.msra.mxu0 %v3124
        %4061 = vmatprep.subr.mxu0 %v3109
        %4062 = vmatpush1.msra.mxu0 %v3108
        %4063 = vmatprep.subr.mxu0 %v3093
        %4064 = vmatpush1.msra.mxu0 %v3092
        %4065 = vmatprep.subr.mxu0 %v3077
        %4066 = vmatpush1.msra.mxu0 %v3076
        %4067 = vmatprep.subr.mxu0 %v3061
        %4068 = vmatpush1.msra.mxu0 %v3060
        %4069 = vmatprep.subr.mxu0 %v3045
        %4070 = vmatpush1.msra.mxu0 %v3044
        %4071 = vmatprep.subr.mxu0 %v3541
        %4072 = vmatpush2.msra.mxu0 %v3540
        %4073 = vmatprep.subr.mxu0 %v3525
        %4074 = vmatpush2.msra.mxu0 %v3524
        %4075 = vmatprep.subr.mxu0 %v3509
        %4076 = vmatpush2.msra.mxu0 %v3508
        %4077 = vmatprep.subr.mxu0 %v3493
        %4078 = vmatpush2.msra.mxu0 %v3492
        %4079 = vmatprep.subr.mxu0 %v3477
        %4080 = vmatpush2.msra.mxu0 %v3476
        %4081 = vmatprep.subr.mxu0 %v3461
        %4082 = vmatpush2.msra.mxu0 %v3460
        %4083 = vmatprep.subr.mxu0 %v3445
        %4084 = vmatpush2.msra.mxu0 %v3444
        %4085 = vmatprep.subr.mxu0 %v3429
        %4086 = vmatpush2.msra.mxu0 %v3428
        %4087 = vmatprep.subr.mxu0 %v3413
        %4088 = vmatpush2.msra.mxu0 %v3412
        %4089 = vmatprep.subr.mxu0 %v3397
        %4090 = vmatpush2.msra.mxu0 %v3396
        %4091 = vmatprep.subr.mxu0 %v3381
        %4092 = vmatpush2.msra.mxu0 %v3380
        %4093 = vmatprep.subr.mxu0 %v3365
        %4094 = vmatpush2.msra.mxu0 %v3364
        %4095 = vmatprep.subr.mxu0 %v3349
        %4096 = vmatpush2.msra.mxu0 %v3348
        %4097 = vmatprep.subr.mxu0 %v3333
        %4098 = vmatpush2.msra.mxu0 %v3332
        %4099 = vmatprep.subr.mxu0 %v3317
        %4100 = vmatpush2.msra.mxu0 %v3316
        %4101 = vmatprep.subr.mxu0 %v3301
        %4102 = vmatpush2.msra.mxu0 %v3300
        %4103 = vmatprep.mubr.f32.mxu0 %v1678
        %4104 = vmatmul.mubr.f32.gmra.mxu0 %v1676
        %v4105 = vpop.f32.mrf.mxu0
        %v4106 = vadd.f32 0.0, %v4105
        %v4107 = vpop.f32.mrf.mxu0
        %v4108 = vadd.f32 0.0, %v4107
        %4109 = vdwg.mxu0
        %v4110 = vmul.f32 %v2529, %v3609
        %v4111 = vmul.f32 %v2531, %v3611
        %v4112 = vmul.f32 %v2600, %v3680
        %v4113 = vmul.f32 %v2602, %v3682
        %v4114 = vmul.f32 %v2671, %v3751
        %v4115 = vmul.f32 %v2673, %v3753
        %v4116 = vmul.f32 %v2742, %v3822
        %v4117 = vmul.f32 %v2744, %v3824
        %v4118 = vmul.f32 %v2813, %v3893
        %v4119 = vmul.f32 %v2815, %v3895
        %v4120 = vmul.f32 %v2884, %v3964
        %v4121 = vmul.f32 %v2886, %v3966
        %v4122 = vmul.f32 %v2955, %v4035
        %v4123 = vmul.f32 %v2957, %v4037
        %v4124 = vmul.f32 %v3026, %v4106
        %v4125 = vmul.f32 %v3028, %v4108
        %v4126 = vld [vmem:[#allocation14] sm:$0xff]
        %v4127 = vld [vmem:[#allocation14 + $0x8] sm:$0xff]
        %v4128 = vld [vmem:[#allocation14 + $0x10] sm:$0xff]
        %v4129 = vld [vmem:[#allocation14 + $0x18] sm:$0xff]
        %v4130 = vld [vmem:[#allocation14 + $0x20] sm:$0xff]
        %v4131 = vld [vmem:[#allocation14 + $0x28] sm:$0xff]
        %v4132 = vld [vmem:[#allocation14 + $0x30] sm:$0xff]
        %v4133 = vld [vmem:[#allocation14 + $0x38] sm:$0xff]
        %v4134 = vld [vmem:[#allocation14 + $0x40] sm:$0xff]
        %v4135 = vld [vmem:[#allocation14 + $0x48] sm:$0xff]
        %v4136 = vld [vmem:[#allocation14 + $0x50] sm:$0xff]
        %v4137 = vld [vmem:[#allocation14 + $0x58] sm:$0xff]
        %v4138 = vld [vmem:[#allocation14 + $0x60] sm:$0xff]
        %v4139 = vld [vmem:[#allocation14 + $0x68] sm:$0xff]
        %v4140 = vld [vmem:[#allocation14 + $0x70] sm:$0xff]
        %v4141 = vld [vmem:[#allocation14 + $0x78] sm:$0xff]
        %v4142 = vld [vmem:[#allocation14 + $0x80] sm:$0xff]
        %v4143 = vld [vmem:[#allocation14 + $0x88] sm:$0xff]
        %v4144 = vld [vmem:[#allocation14 + $0x90] sm:$0xff]
        %v4145 = vld [vmem:[#allocation14 + $0x98] sm:$0xff]
        %v4146 = vld [vmem:[#allocation14 + $0xa0] sm:$0xff]
        %v4147 = vld [vmem:[#allocation14 + $0xa8] sm:$0xff]
        %v4148 = vld [vmem:[#allocation14 + $0xb0] sm:$0xff]
        %v4149 = vld [vmem:[#allocation14 + $0xb8] sm:$0xff]
        %v4150 = vld [vmem:[#allocation14 + $0xc0] sm:$0xff]
        %v4151 = vld [vmem:[#allocation14 + $0xc8] sm:$0xff]
        %v4152 = vld [vmem:[#allocation14 + $0xd0] sm:$0xff]
        %v4153 = vld [vmem:[#allocation14 + $0xd8] sm:$0xff]
        %v4154 = vld [vmem:[#allocation14 + $0xe0] sm:$0xff]
        %v4155 = vld [vmem:[#allocation14 + $0xe8] sm:$0xff]
        %v4156 = vld [vmem:[#allocation14 + $0xf0] sm:$0xff]
        %v4157 = vld [vmem:[#allocation14 + $0xf8] sm:$0xff]
        %v4158 = vld [vmem:[#allocation14 + $0x100] sm:$0xff]
        %v4159 = vld [vmem:[#allocation14 + $0x108] sm:$0xff]
        %v4160 = vld [vmem:[#allocation14 + $0x110] sm:$0xff]
        %v4161 = vld [vmem:[#allocation14 + $0x118] sm:$0xff]
        %v4162 = vld [vmem:[#allocation14 + $0x120] sm:$0xff]
        %v4163 = vld [vmem:[#allocation14 + $0x128] sm:$0xff]
        %v4164 = vld [vmem:[#allocation14 + $0x130] sm:$0xff]
        %v4165 = vld [vmem:[#allocation14 + $0x138] sm:$0xff]
        %v4166 = vld [vmem:[#allocation14 + $0x140] sm:$0xff]
        %v4167 = vld [vmem:[#allocation14 + $0x148] sm:$0xff]
        %v4168 = vld [vmem:[#allocation14 + $0x150] sm:$0xff]
        %v4169 = vld [vmem:[#allocation14 + $0x158] sm:$0xff]
        %v4170 = vld [vmem:[#allocation14 + $0x160] sm:$0xff]
        %v4171 = vld [vmem:[#allocation14 + $0x168] sm:$0xff]
        %v4172 = vld [vmem:[#allocation14 + $0x170] sm:$0xff]
        %v4173 = vld [vmem:[#allocation14 + $0x178] sm:$0xff]
        %v4174 = vld [vmem:[#allocation14 + $0x180] sm:$0xff]
        %v4175 = vld [vmem:[#allocation14 + $0x188] sm:$0xff]
        %v4176 = vld [vmem:[#allocation14 + $0x190] sm:$0xff]
        %v4177 = vld [vmem:[#allocation14 + $0x198] sm:$0xff]
        %v4178 = vld [vmem:[#allocation14 + $0x1a0] sm:$0xff]
        %v4179 = vld [vmem:[#allocation14 + $0x1a8] sm:$0xff]
        %v4180 = vld [vmem:[#allocation14 + $0x1b0] sm:$0xff]
        %v4181 = vld [vmem:[#allocation14 + $0x1b8] sm:$0xff]
        %v4182 = vld [vmem:[#allocation14 + $0x1c0] sm:$0xff]
        %v4183 = vld [vmem:[#allocation14 + $0x1c8] sm:$0xff]
        %v4184 = vld [vmem:[#allocation14 + $0x1d0] sm:$0xff]
        %v4185 = vld [vmem:[#allocation14 + $0x1d8] sm:$0xff]
        %v4186 = vld [vmem:[#allocation14 + $0x1e0] sm:$0xff]
        %v4187 = vld [vmem:[#allocation14 + $0x1e8] sm:$0xff]
        %v4188 = vld [vmem:[#allocation14 + $0x1f0] sm:$0xff]
        %v4189 = vld [vmem:[#allocation14 + $0x1f8] sm:$0xff]
        %v4190 = vld [vmem:[#allocation14 + $0x200] sm:$0xff]
        %v4191 = vld [vmem:[#allocation14 + $0x208] sm:$0xff]
        %v4192 = vld [vmem:[#allocation14 + $0x210] sm:$0xff]
        %v4193 = vld [vmem:[#allocation14 + $0x218] sm:$0xff]
        %v4194 = vld [vmem:[#allocation14 + $0x220] sm:$0xff]
        %v4195 = vld [vmem:[#allocation14 + $0x228] sm:$0xff]
        %v4196 = vld [vmem:[#allocation14 + $0x230] sm:$0xff]
        %v4197 = vld [vmem:[#allocation14 + $0x238] sm:$0xff]
        %v4198 = vld [vmem:[#allocation14 + $0x240] sm:$0xff]
        %v4199 = vld [vmem:[#allocation14 + $0x248] sm:$0xff]
        %v4200 = vld [vmem:[#allocation14 + $0x250] sm:$0xff]
        %v4201 = vld [vmem:[#allocation14 + $0x258] sm:$0xff]
        %v4202 = vld [vmem:[#allocation14 + $0x260] sm:$0xff]
        %v4203 = vld [vmem:[#allocation14 + $0x268] sm:$0xff]
        %v4204 = vld [vmem:[#allocation14 + $0x270] sm:$0xff]
        %v4205 = vld [vmem:[#allocation14 + $0x278] sm:$0xff]
        %v4206 = vld [vmem:[#allocation14 + $0x280] sm:$0xff]
        %v4207 = vld [vmem:[#allocation14 + $0x288] sm:$0xff]
        %v4208 = vld [vmem:[#allocation14 + $0x290] sm:$0xff]
        %v4209 = vld [vmem:[#allocation14 + $0x298] sm:$0xff]
        %v4210 = vld [vmem:[#allocation14 + $0x2a0] sm:$0xff]
        %v4211 = vld [vmem:[#allocation14 + $0x2a8] sm:$0xff]
        %v4212 = vld [vmem:[#allocation14 + $0x2b0] sm:$0xff]
        %v4213 = vld [vmem:[#allocation14 + $0x2b8] sm:$0xff]
        %v4214 = vld [vmem:[#allocation14 + $0x2c0] sm:$0xff]
        %v4215 = vld [vmem:[#allocation14 + $0x2c8] sm:$0xff]
        %v4216 = vld [vmem:[#allocation14 + $0x2d0] sm:$0xff]
        %v4217 = vld [vmem:[#allocation14 + $0x2d8] sm:$0xff]
        %v4218 = vld [vmem:[#allocation14 + $0x2e0] sm:$0xff]
        %v4219 = vld [vmem:[#allocation14 + $0x2e8] sm:$0xff]
        %v4220 = vld [vmem:[#allocation14 + $0x2f0] sm:$0xff]
        %v4221 = vld [vmem:[#allocation14 + $0x2f8] sm:$0xff]
        %v4222 = vld [vmem:[#allocation14 + $0x300] sm:$0xff]
        %v4223 = vld [vmem:[#allocation14 + $0x308] sm:$0xff]
        %v4224 = vld [vmem:[#allocation14 + $0x310] sm:$0xff]
        %v4225 = vld [vmem:[#allocation14 + $0x318] sm:$0xff]
        %v4226 = vld [vmem:[#allocation14 + $0x320] sm:$0xff]
        %v4227 = vld [vmem:[#allocation14 + $0x328] sm:$0xff]
        %v4228 = vld [vmem:[#allocation14 + $0x330] sm:$0xff]
        %v4229 = vld [vmem:[#allocation14 + $0x338] sm:$0xff]
        %v4230 = vld [vmem:[#allocation14 + $0x340] sm:$0xff]
        %v4231 = vld [vmem:[#allocation14 + $0x348] sm:$0xff]
        %v4232 = vld [vmem:[#allocation14 + $0x350] sm:$0xff]
        %v4233 = vld [vmem:[#allocation14 + $0x358] sm:$0xff]
        %v4234 = vld [vmem:[#allocation14 + $0x360] sm:$0xff]
        %v4235 = vld [vmem:[#allocation14 + $0x368] sm:$0xff]
        %v4236 = vld [vmem:[#allocation14 + $0x370] sm:$0xff]
        %v4237 = vld [vmem:[#allocation14 + $0x378] sm:$0xff]
        %v4238 = vld [vmem:[#allocation14 + $0x380] sm:$0xff]
        %v4239 = vld [vmem:[#allocation14 + $0x388] sm:$0xff]
        %v4240 = vld [vmem:[#allocation14 + $0x390] sm:$0xff]
        %v4241 = vld [vmem:[#allocation14 + $0x398] sm:$0xff]
        %v4242 = vld [vmem:[#allocation14 + $0x3a0] sm:$0xff]
        %v4243 = vld [vmem:[#allocation14 + $0x3a8] sm:$0xff]
        %v4244 = vld [vmem:[#allocation14 + $0x3b0] sm:$0xff]
        %v4245 = vld [vmem:[#allocation14 + $0x3b8] sm:$0xff]
        %v4246 = vld [vmem:[#allocation14 + $0x3c0] sm:$0xff]
        %v4247 = vld [vmem:[#allocation14 + $0x3c8] sm:$0xff]
        %v4248 = vld [vmem:[#allocation14 + $0x3d0] sm:$0xff]
        %v4249 = vld [vmem:[#allocation14 + $0x3d8] sm:$0xff]
        %v4250 = vld [vmem:[#allocation14 + $0x3e0] sm:$0xff]
        %v4251 = vld [vmem:[#allocation14 + $0x3e8] sm:$0xff]
        %v4252 = vld [vmem:[#allocation14 + $0x3f0] sm:$0xff]
        %v4253 = vld [vmem:[#allocation14 + $0x3f8] sm:$0xff]
        %v4254 = vld [vmem:[#allocation14 + $0x400] sm:$0xff]
        %v4255 = vld [vmem:[#allocation14 + $0x408] sm:$0xff]
        %v4256 = vld [vmem:[#allocation14 + $0x410] sm:$0xff]
        %v4257 = vld [vmem:[#allocation14 + $0x418] sm:$0xff]
        %v4258 = vld [vmem:[#allocation14 + $0x420] sm:$0xff]
        %v4259 = vld [vmem:[#allocation14 + $0x428] sm:$0xff]
        %v4260 = vld [vmem:[#allocation14 + $0x430] sm:$0xff]
        %v4261 = vld [vmem:[#allocation14 + $0x438] sm:$0xff]
        %v4262 = vld [vmem:[#allocation14 + $0x440] sm:$0xff]
        %v4263 = vld [vmem:[#allocation14 + $0x448] sm:$0xff]
        %v4264 = vld [vmem:[#allocation14 + $0x450] sm:$0xff]
        %v4265 = vld [vmem:[#allocation14 + $0x458] sm:$0xff]
        %v4266 = vld [vmem:[#allocation14 + $0x460] sm:$0xff]
        %v4267 = vld [vmem:[#allocation14 + $0x468] sm:$0xff]
        %v4268 = vld [vmem:[#allocation14 + $0x470] sm:$0xff]
        %v4269 = vld [vmem:[#allocation14 + $0x478] sm:$0xff]
        %v4270 = vld [vmem:[#allocation14 + $0x480] sm:$0xff]
        %v4271 = vld [vmem:[#allocation14 + $0x488] sm:$0xff]
        %v4272 = vld [vmem:[#allocation14 + $0x490] sm:$0xff]
        %v4273 = vld [vmem:[#allocation14 + $0x498] sm:$0xff]
        %v4274 = vld [vmem:[#allocation14 + $0x4a0] sm:$0xff]
        %v4275 = vld [vmem:[#allocation14 + $0x4a8] sm:$0xff]
        %v4276 = vld [vmem:[#allocation14 + $0x4b0] sm:$0xff]
        %v4277 = vld [vmem:[#allocation14 + $0x4b8] sm:$0xff]
        %v4278 = vld [vmem:[#allocation14 + $0x4c0] sm:$0xff]
        %v4279 = vld [vmem:[#allocation14 + $0x4c8] sm:$0xff]
        %v4280 = vld [vmem:[#allocation14 + $0x4d0] sm:$0xff]
        %v4281 = vld [vmem:[#allocation14 + $0x4d8] sm:$0xff]
        %v4282 = vld [vmem:[#allocation14 + $0x4e0] sm:$0xff]
        %v4283 = vld [vmem:[#allocation14 + $0x4e8] sm:$0xff]
        %v4284 = vld [vmem:[#allocation14 + $0x4f0] sm:$0xff]
        %v4285 = vld [vmem:[#allocation14 + $0x4f8] sm:$0xff]
        %v4286 = vld [vmem:[#allocation14 + $0x500] sm:$0xff]
        %v4287 = vld [vmem:[#allocation14 + $0x508] sm:$0xff]
        %v4288 = vld [vmem:[#allocation14 + $0x510] sm:$0xff]
        %v4289 = vld [vmem:[#allocation14 + $0x518] sm:$0xff]
        %v4290 = vld [vmem:[#allocation14 + $0x520] sm:$0xff]
        %v4291 = vld [vmem:[#allocation14 + $0x528] sm:$0xff]
        %v4292 = vld [vmem:[#allocation14 + $0x530] sm:$0xff]
        %v4293 = vld [vmem:[#allocation14 + $0x538] sm:$0xff]
        %v4294 = vld [vmem:[#allocation14 + $0x540] sm:$0xff]
        %v4295 = vld [vmem:[#allocation14 + $0x548] sm:$0xff]
        %v4296 = vld [vmem:[#allocation14 + $0x550] sm:$0xff]
        %v4297 = vld [vmem:[#allocation14 + $0x558] sm:$0xff]
        %v4298 = vld [vmem:[#allocation14 + $0x560] sm:$0xff]
        %v4299 = vld [vmem:[#allocation14 + $0x568] sm:$0xff]
        %v4300 = vld [vmem:[#allocation14 + $0x570] sm:$0xff]
        %v4301 = vld [vmem:[#allocation14 + $0x578] sm:$0xff]
        %v4302 = vld [vmem:[#allocation14 + $0x580] sm:$0xff]
        %v4303 = vld [vmem:[#allocation14 + $0x588] sm:$0xff]
        %v4304 = vld [vmem:[#allocation14 + $0x590] sm:$0xff]
        %v4305 = vld [vmem:[#allocation14 + $0x598] sm:$0xff]
        %v4306 = vld [vmem:[#allocation14 + $0x5a0] sm:$0xff]
        %v4307 = vld [vmem:[#allocation14 + $0x5a8] sm:$0xff]
        %v4308 = vld [vmem:[#allocation14 + $0x5b0] sm:$0xff]
        %v4309 = vld [vmem:[#allocation14 + $0x5b8] sm:$0xff]
        %v4310 = vld [vmem:[#allocation14 + $0x5c0] sm:$0xff]
        %v4311 = vld [vmem:[#allocation14 + $0x5c8] sm:$0xff]
        %v4312 = vld [vmem:[#allocation14 + $0x5d0] sm:$0xff]
        %v4313 = vld [vmem:[#allocation14 + $0x5d8] sm:$0xff]
        %v4314 = vld [vmem:[#allocation14 + $0x5e0] sm:$0xff]
        %v4315 = vld [vmem:[#allocation14 + $0x5e8] sm:$0xff]
        %v4316 = vld [vmem:[#allocation14 + $0x5f0] sm:$0xff]
        %v4317 = vld [vmem:[#allocation14 + $0x5f8] sm:$0xff]
        %v4318 = vld [vmem:[#allocation14 + $0x600] sm:$0xff]
        %v4319 = vld [vmem:[#allocation14 + $0x608] sm:$0xff]
        %v4320 = vld [vmem:[#allocation14 + $0x610] sm:$0xff]
        %v4321 = vld [vmem:[#allocation14 + $0x618] sm:$0xff]
        %v4322 = vld [vmem:[#allocation14 + $0x620] sm:$0xff]
        %v4323 = vld [vmem:[#allocation14 + $0x628] sm:$0xff]
        %v4324 = vld [vmem:[#allocation14 + $0x630] sm:$0xff]
        %v4325 = vld [vmem:[#allocation14 + $0x638] sm:$0xff]
        %v4326 = vld [vmem:[#allocation14 + $0x640] sm:$0xff]
        %v4327 = vld [vmem:[#allocation14 + $0x648] sm:$0xff]
        %v4328 = vld [vmem:[#allocation14 + $0x650] sm:$0xff]
        %v4329 = vld [vmem:[#allocation14 + $0x658] sm:$0xff]
        %v4330 = vld [vmem:[#allocation14 + $0x660] sm:$0xff]
        %v4331 = vld [vmem:[#allocation14 + $0x668] sm:$0xff]
        %v4332 = vld [vmem:[#allocation14 + $0x670] sm:$0xff]
        %v4333 = vld [vmem:[#allocation14 + $0x678] sm:$0xff]
        %v4334 = vld [vmem:[#allocation14 + $0x680] sm:$0xff]
        %v4335 = vld [vmem:[#allocation14 + $0x688] sm:$0xff]
        %v4336 = vld [vmem:[#allocation14 + $0x690] sm:$0xff]
        %v4337 = vld [vmem:[#allocation14 + $0x698] sm:$0xff]
        %v4338 = vld [vmem:[#allocation14 + $0x6a0] sm:$0xff]
        %v4339 = vld [vmem:[#allocation14 + $0x6a8] sm:$0xff]
        %v4340 = vld [vmem:[#allocation14 + $0x6b0] sm:$0xff]
        %v4341 = vld [vmem:[#allocation14 + $0x6b8] sm:$0xff]
        %v4342 = vld [vmem:[#allocation14 + $0x6c0] sm:$0xff]
        %v4343 = vld [vmem:[#allocation14 + $0x6c8] sm:$0xff]
        %v4344 = vld [vmem:[#allocation14 + $0x6d0] sm:$0xff]
        %v4345 = vld [vmem:[#allocation14 + $0x6d8] sm:$0xff]
        %v4346 = vld [vmem:[#allocation14 + $0x6e0] sm:$0xff]
        %v4347 = vld [vmem:[#allocation14 + $0x6e8] sm:$0xff]
        %v4348 = vld [vmem:[#allocation14 + $0x6f0] sm:$0xff]
        %v4349 = vld [vmem:[#allocation14 + $0x6f8] sm:$0xff]
        %v4350 = vld [vmem:[#allocation14 + $0x700] sm:$0xff]
        %v4351 = vld [vmem:[#allocation14 + $0x708] sm:$0xff]
        %v4352 = vld [vmem:[#allocation14 + $0x710] sm:$0xff]
        %v4353 = vld [vmem:[#allocation14 + $0x718] sm:$0xff]
        %v4354 = vld [vmem:[#allocation14 + $0x720] sm:$0xff]
        %v4355 = vld [vmem:[#allocation14 + $0x728] sm:$0xff]
        %v4356 = vld [vmem:[#allocation14 + $0x730] sm:$0xff]
        %v4357 = vld [vmem:[#allocation14 + $0x738] sm:$0xff]
        %v4358 = vld [vmem:[#allocation14 + $0x740] sm:$0xff]
        %v4359 = vld [vmem:[#allocation14 + $0x748] sm:$0xff]
        %v4360 = vld [vmem:[#allocation14 + $0x750] sm:$0xff]
        %v4361 = vld [vmem:[#allocation14 + $0x758] sm:$0xff]
        %v4362 = vld [vmem:[#allocation14 + $0x760] sm:$0xff]
        %v4363 = vld [vmem:[#allocation14 + $0x768] sm:$0xff]
        %v4364 = vld [vmem:[#allocation14 + $0x770] sm:$0xff]
        %v4365 = vld [vmem:[#allocation14 + $0x778] sm:$0xff]
        %v4366 = vld [vmem:[#allocation14 + $0x780] sm:$0xff]
        %v4367 = vld [vmem:[#allocation14 + $0x788] sm:$0xff]
        %v4368 = vld [vmem:[#allocation14 + $0x790] sm:$0xff]
        %v4369 = vld [vmem:[#allocation14 + $0x798] sm:$0xff]
        %v4370 = vld [vmem:[#allocation14 + $0x7a0] sm:$0xff]
        %v4371 = vld [vmem:[#allocation14 + $0x7a8] sm:$0xff]
        %v4372 = vld [vmem:[#allocation14 + $0x7b0] sm:$0xff]
        %v4373 = vld [vmem:[#allocation14 + $0x7b8] sm:$0xff]
        %v4374 = vld [vmem:[#allocation14 + $0x7c0] sm:$0xff]
        %v4375 = vld [vmem:[#allocation14 + $0x7c8] sm:$0xff]
        %v4376 = vld [vmem:[#allocation14 + $0x7d0] sm:$0xff]
        %v4377 = vld [vmem:[#allocation14 + $0x7d8] sm:$0xff]
        %v4378 = vld [vmem:[#allocation14 + $0x7e0] sm:$0xff]
        %v4379 = vld [vmem:[#allocation14 + $0x7e8] sm:$0xff]
        %v4380 = vld [vmem:[#allocation14 + $0x7f0] sm:$0xff]
        %v4381 = vld [vmem:[#allocation14 + $0x7f8] sm:$0xff]
        %v4382 = vld [vmem:[#allocation14 + $0x800] sm:$0xff]
        %v4383 = vld [vmem:[#allocation14 + $0x808] sm:$0xff]
        %v4384 = vld [vmem:[#allocation14 + $0x810] sm:$0xff]
        %v4385 = vld [vmem:[#allocation14 + $0x818] sm:$0xff]
        %v4386 = vld [vmem:[#allocation14 + $0x820] sm:$0xff]
        %v4387 = vld [vmem:[#allocation14 + $0x828] sm:$0xff]
        %v4388 = vld [vmem:[#allocation14 + $0x830] sm:$0xff]
        %v4389 = vld [vmem:[#allocation14 + $0x838] sm:$0xff]
        %v4390 = vld [vmem:[#allocation14 + $0x840] sm:$0xff]
        %v4391 = vld [vmem:[#allocation14 + $0x848] sm:$0xff]
        %v4392 = vld [vmem:[#allocation14 + $0x850] sm:$0xff]
        %v4393 = vld [vmem:[#allocation14 + $0x858] sm:$0xff]
        %v4394 = vld [vmem:[#allocation14 + $0x860] sm:$0xff]
        %v4395 = vld [vmem:[#allocation14 + $0x868] sm:$0xff]
        %v4396 = vld [vmem:[#allocation14 + $0x870] sm:$0xff]
        %v4397 = vld [vmem:[#allocation14 + $0x878] sm:$0xff]
        %v4398 = vld [vmem:[#allocation14 + $0x880] sm:$0xff]
        %v4399 = vld [vmem:[#allocation14 + $0x888] sm:$0xff]
        %v4400 = vld [vmem:[#allocation14 + $0x890] sm:$0xff]
        %v4401 = vld [vmem:[#allocation14 + $0x898] sm:$0xff]
        %v4402 = vld [vmem:[#allocation14 + $0x8a0] sm:$0xff]
        %v4403 = vld [vmem:[#allocation14 + $0x8a8] sm:$0xff]
        %v4404 = vld [vmem:[#allocation14 + $0x8b0] sm:$0xff]
        %v4405 = vld [vmem:[#allocation14 + $0x8b8] sm:$0xff]
        %v4406 = vld [vmem:[#allocation14 + $0x8c0] sm:$0xff]
        %v4407 = vld [vmem:[#allocation14 + $0x8c8] sm:$0xff]
        %v4408 = vld [vmem:[#allocation14 + $0x8d0] sm:$0xff]
        %v4409 = vld [vmem:[#allocation14 + $0x8d8] sm:$0xff]
        %v4410 = vld [vmem:[#allocation14 + $0x8e0] sm:$0xff]
        %v4411 = vld [vmem:[#allocation14 + $0x8e8] sm:$0xff]
        %v4412 = vld [vmem:[#allocation14 + $0x8f0] sm:$0xff]
        %v4413 = vld [vmem:[#allocation14 + $0x8f8] sm:$0xff]
        %v4414 = vld [vmem:[#allocation14 + $0x900] sm:$0xff]
        %v4415 = vld [vmem:[#allocation14 + $0x908] sm:$0xff]
        %v4416 = vld [vmem:[#allocation14 + $0x910] sm:$0xff]
        %v4417 = vld [vmem:[#allocation14 + $0x918] sm:$0xff]
        %v4418 = vld [vmem:[#allocation14 + $0x920] sm:$0xff]
        %v4419 = vld [vmem:[#allocation14 + $0x928] sm:$0xff]
        %v4420 = vld [vmem:[#allocation14 + $0x930] sm:$0xff]
        %v4421 = vld [vmem:[#allocation14 + $0x938] sm:$0xff]
        %v4422 = vld [vmem:[#allocation14 + $0x940] sm:$0xff]
        %v4423 = vld [vmem:[#allocation14 + $0x948] sm:$0xff]
        %v4424 = vld [vmem:[#allocation14 + $0x950] sm:$0xff]
        %v4425 = vld [vmem:[#allocation14 + $0x958] sm:$0xff]
        %v4426 = vld [vmem:[#allocation14 + $0x960] sm:$0xff]
        %v4427 = vld [vmem:[#allocation14 + $0x968] sm:$0xff]
        %v4428 = vld [vmem:[#allocation14 + $0x970] sm:$0xff]
        %v4429 = vld [vmem:[#allocation14 + $0x978] sm:$0xff]
        %v4430 = vld [vmem:[#allocation14 + $0x980] sm:$0xff]
        %v4431 = vld [vmem:[#allocation14 + $0x988] sm:$0xff]
        %v4432 = vld [vmem:[#allocation14 + $0x990] sm:$0xff]
        %v4433 = vld [vmem:[#allocation14 + $0x998] sm:$0xff]
        %v4434 = vld [vmem:[#allocation14 + $0x9a0] sm:$0xff]
        %v4435 = vld [vmem:[#allocation14 + $0x9a8] sm:$0xff]
        %v4436 = vld [vmem:[#allocation14 + $0x9b0] sm:$0xff]
        %v4437 = vld [vmem:[#allocation14 + $0x9b8] sm:$0xff]
        %v4438 = vld [vmem:[#allocation14 + $0x9c0] sm:$0xff]
        %v4439 = vld [vmem:[#allocation14 + $0x9c8] sm:$0xff]
        %v4440 = vld [vmem:[#allocation14 + $0x9d0] sm:$0xff]
        %v4441 = vld [vmem:[#allocation14 + $0x9d8] sm:$0xff]
        %v4442 = vld [vmem:[#allocation14 + $0x9e0] sm:$0xff]
        %v4443 = vld [vmem:[#allocation14 + $0x9e8] sm:$0xff]
        %v4444 = vld [vmem:[#allocation14 + $0x9f0] sm:$0xff]
        %v4445 = vld [vmem:[#allocation14 + $0x9f8] sm:$0xff]
        %v4446 = vld [vmem:[#allocation14 + $0xa00] sm:$0xff]
        %v4447 = vld [vmem:[#allocation14 + $0xa08] sm:$0xff]
        %v4448 = vld [vmem:[#allocation14 + $0xa10] sm:$0xff]
        %v4449 = vld [vmem:[#allocation14 + $0xa18] sm:$0xff]
        %v4450 = vld [vmem:[#allocation14 + $0xa20] sm:$0xff]
        %v4451 = vld [vmem:[#allocation14 + $0xa28] sm:$0xff]
        %v4452 = vld [vmem:[#allocation14 + $0xa30] sm:$0xff]
        %v4453 = vld [vmem:[#allocation14 + $0xa38] sm:$0xff]
        %v4454 = vld [vmem:[#allocation14 + $0xa40] sm:$0xff]
        %v4455 = vld [vmem:[#allocation14 + $0xa48] sm:$0xff]
        %v4456 = vld [vmem:[#allocation14 + $0xa50] sm:$0xff]
        %v4457 = vld [vmem:[#allocation14 + $0xa58] sm:$0xff]
        %v4458 = vld [vmem:[#allocation14 + $0xa60] sm:$0xff]
        %v4459 = vld [vmem:[#allocation14 + $0xa68] sm:$0xff]
        %v4460 = vld [vmem:[#allocation14 + $0xa70] sm:$0xff]
        %v4461 = vld [vmem:[#allocation14 + $0xa78] sm:$0xff]
        %v4462 = vld [vmem:[#allocation14 + $0xa80] sm:$0xff]
        %v4463 = vld [vmem:[#allocation14 + $0xa88] sm:$0xff]
        %v4464 = vld [vmem:[#allocation14 + $0xa90] sm:$0xff]
        %v4465 = vld [vmem:[#allocation14 + $0xa98] sm:$0xff]
        %v4466 = vld [vmem:[#allocation14 + $0xaa0] sm:$0xff]
        %v4467 = vld [vmem:[#allocation14 + $0xaa8] sm:$0xff]
        %v4468 = vld [vmem:[#allocation14 + $0xab0] sm:$0xff]
        %v4469 = vld [vmem:[#allocation14 + $0xab8] sm:$0xff]
        %v4470 = vld [vmem:[#allocation14 + $0xac0] sm:$0xff]
        %v4471 = vld [vmem:[#allocation14 + $0xac8] sm:$0xff]
        %v4472 = vld [vmem:[#allocation14 + $0xad0] sm:$0xff]
        %v4473 = vld [vmem:[#allocation14 + $0xad8] sm:$0xff]
        %v4474 = vld [vmem:[#allocation14 + $0xae0] sm:$0xff]
        %v4475 = vld [vmem:[#allocation14 + $0xae8] sm:$0xff]
        %v4476 = vld [vmem:[#allocation14 + $0xaf0] sm:$0xff]
        %v4477 = vld [vmem:[#allocation14 + $0xaf8] sm:$0xff]
        %v4478 = vld [vmem:[#allocation14 + $0xb00] sm:$0xff]
        %v4479 = vld [vmem:[#allocation14 + $0xb08] sm:$0xff]
        %v4480 = vld [vmem:[#allocation14 + $0xb10] sm:$0xff]
        %v4481 = vld [vmem:[#allocation14 + $0xb18] sm:$0xff]
        %v4482 = vld [vmem:[#allocation14 + $0xb20] sm:$0xff]
        %v4483 = vld [vmem:[#allocation14 + $0xb28] sm:$0xff]
        %v4484 = vld [vmem:[#allocation14 + $0xb30] sm:$0xff]
        %v4485 = vld [vmem:[#allocation14 + $0xb38] sm:$0xff]
        %v4486 = vld [vmem:[#allocation14 + $0xb40] sm:$0xff]
        %v4487 = vld [vmem:[#allocation14 + $0xb48] sm:$0xff]
        %v4488 = vld [vmem:[#allocation14 + $0xb50] sm:$0xff]
        %v4489 = vld [vmem:[#allocation14 + $0xb58] sm:$0xff]
        %v4490 = vld [vmem:[#allocation14 + $0xb60] sm:$0xff]
        %v4491 = vld [vmem:[#allocation14 + $0xb68] sm:$0xff]
        %v4492 = vld [vmem:[#allocation14 + $0xb70] sm:$0xff]
        %v4493 = vld [vmem:[#allocation14 + $0xb78] sm:$0xff]
        %v4494 = vld [vmem:[#allocation14 + $0xb80] sm:$0xff]
        %v4495 = vld [vmem:[#allocation14 + $0xb88] sm:$0xff]
        %v4496 = vld [vmem:[#allocation14 + $0xb90] sm:$0xff]
        %v4497 = vld [vmem:[#allocation14 + $0xb98] sm:$0xff]
        %v4498 = vld [vmem:[#allocation14 + $0xba0] sm:$0xff]
        %v4499 = vld [vmem:[#allocation14 + $0xba8] sm:$0xff]
        %v4500 = vld [vmem:[#allocation14 + $0xbb0] sm:$0xff]
        %v4501 = vld [vmem:[#allocation14 + $0xbb8] sm:$0xff]
        %v4502 = vld [vmem:[#allocation14 + $0xbc0] sm:$0xff]
        %v4503 = vld [vmem:[#allocation14 + $0xbc8] sm:$0xff]
        %v4504 = vld [vmem:[#allocation14 + $0xbd0] sm:$0xff]
        %v4505 = vld [vmem:[#allocation14 + $0xbd8] sm:$0xff]
        %v4506 = vld [vmem:[#allocation14 + $0xbe0] sm:$0xff]
        %v4507 = vld [vmem:[#allocation14 + $0xbe8] sm:$0xff]
        %v4508 = vld [vmem:[#allocation14 + $0xbf0] sm:$0xff]
        %v4509 = vld [vmem:[#allocation14 + $0xbf8] sm:$0xff]
        %v4510 = vld [vmem:[#allocation14 + $0xc00] sm:$0xff]
        %v4511 = vld [vmem:[#allocation14 + $0xc08] sm:$0xff]
        %v4512 = vld [vmem:[#allocation14 + $0xc10] sm:$0xff]
        %v4513 = vld [vmem:[#allocation14 + $0xc18] sm:$0xff]
        %v4514 = vld [vmem:[#allocation14 + $0xc20] sm:$0xff]
        %v4515 = vld [vmem:[#allocation14 + $0xc28] sm:$0xff]
        %v4516 = vld [vmem:[#allocation14 + $0xc30] sm:$0xff]
        %v4517 = vld [vmem:[#allocation14 + $0xc38] sm:$0xff]
        %v4518 = vld [vmem:[#allocation14 + $0xc40] sm:$0xff]
        %v4519 = vld [vmem:[#allocation14 + $0xc48] sm:$0xff]
        %v4520 = vld [vmem:[#allocation14 + $0xc50] sm:$0xff]
        %v4521 = vld [vmem:[#allocation14 + $0xc58] sm:$0xff]
        %v4522 = vld [vmem:[#allocation14 + $0xc60] sm:$0xff]
        %v4523 = vld [vmem:[#allocation14 + $0xc68] sm:$0xff]
        %v4524 = vld [vmem:[#allocation14 + $0xc70] sm:$0xff]
        %v4525 = vld [vmem:[#allocation14 + $0xc78] sm:$0xff]
        %v4526 = vld [vmem:[#allocation14 + $0xc80] sm:$0xff]
        %v4527 = vld [vmem:[#allocation14 + $0xc88] sm:$0xff]
        %v4528 = vld [vmem:[#allocation14 + $0xc90] sm:$0xff]
        %v4529 = vld [vmem:[#allocation14 + $0xc98] sm:$0xff]
        %v4530 = vld [vmem:[#allocation14 + $0xca0] sm:$0xff]
        %v4531 = vld [vmem:[#allocation14 + $0xca8] sm:$0xff]
        %v4532 = vld [vmem:[#allocation14 + $0xcb0] sm:$0xff]
        %v4533 = vld [vmem:[#allocation14 + $0xcb8] sm:$0xff]
        %v4534 = vld [vmem:[#allocation14 + $0xcc0] sm:$0xff]
        %v4535 = vld [vmem:[#allocation14 + $0xcc8] sm:$0xff]
        %v4536 = vld [vmem:[#allocation14 + $0xcd0] sm:$0xff]
        %v4537 = vld [vmem:[#allocation14 + $0xcd8] sm:$0xff]
        %v4538 = vld [vmem:[#allocation14 + $0xce0] sm:$0xff]
        %v4539 = vld [vmem:[#allocation14 + $0xce8] sm:$0xff]
        %v4540 = vld [vmem:[#allocation14 + $0xcf0] sm:$0xff]
        %v4541 = vld [vmem:[#allocation14 + $0xcf8] sm:$0xff]
        %v4542 = vld [vmem:[#allocation14 + $0xd00] sm:$0xff]
        %v4543 = vld [vmem:[#allocation14 + $0xd08] sm:$0xff]
        %v4544 = vld [vmem:[#allocation14 + $0xd10] sm:$0xff]
        %v4545 = vld [vmem:[#allocation14 + $0xd18] sm:$0xff]
        %v4546 = vld [vmem:[#allocation14 + $0xd20] sm:$0xff]
        %v4547 = vld [vmem:[#allocation14 + $0xd28] sm:$0xff]
        %v4548 = vld [vmem:[#allocation14 + $0xd30] sm:$0xff]
        %v4549 = vld [vmem:[#allocation14 + $0xd38] sm:$0xff]
        %v4550 = vld [vmem:[#allocation14 + $0xd40] sm:$0xff]
        %v4551 = vld [vmem:[#allocation14 + $0xd48] sm:$0xff]
        %v4552 = vld [vmem:[#allocation14 + $0xd50] sm:$0xff]
        %v4553 = vld [vmem:[#allocation14 + $0xd58] sm:$0xff]
        %v4554 = vld [vmem:[#allocation14 + $0xd60] sm:$0xff]
        %v4555 = vld [vmem:[#allocation14 + $0xd68] sm:$0xff]
        %v4556 = vld [vmem:[#allocation14 + $0xd70] sm:$0xff]
        %v4557 = vld [vmem:[#allocation14 + $0xd78] sm:$0xff]
        %v4558 = vld [vmem:[#allocation14 + $0xd80] sm:$0xff]
        %v4559 = vld [vmem:[#allocation14 + $0xd88] sm:$0xff]
        %v4560 = vld [vmem:[#allocation14 + $0xd90] sm:$0xff]
        %v4561 = vld [vmem:[#allocation14 + $0xd98] sm:$0xff]
        %v4562 = vld [vmem:[#allocation14 + $0xda0] sm:$0xff]
        %v4563 = vld [vmem:[#allocation14 + $0xda8] sm:$0xff]
        %v4564 = vld [vmem:[#allocation14 + $0xdb0] sm:$0xff]
        %v4565 = vld [vmem:[#allocation14 + $0xdb8] sm:$0xff]
        %v4566 = vld [vmem:[#allocation14 + $0xdc0] sm:$0xff]
        %v4567 = vld [vmem:[#allocation14 + $0xdc8] sm:$0xff]
        %v4568 = vld [vmem:[#allocation14 + $0xdd0] sm:$0xff]
        %v4569 = vld [vmem:[#allocation14 + $0xdd8] sm:$0xff]
        %v4570 = vld [vmem:[#allocation14 + $0xde0] sm:$0xff]
        %v4571 = vld [vmem:[#allocation14 + $0xde8] sm:$0xff]
        %v4572 = vld [vmem:[#allocation14 + $0xdf0] sm:$0xff]
        %v4573 = vld [vmem:[#allocation14 + $0xdf8] sm:$0xff]
        %v4574 = vld [vmem:[#allocation14 + $0xe00] sm:$0xff]
        %v4575 = vld [vmem:[#allocation14 + $0xe08] sm:$0xff]
        %v4576 = vld [vmem:[#allocation14 + $0xe10] sm:$0xff]
        %v4577 = vld [vmem:[#allocation14 + $0xe18] sm:$0xff]
        %v4578 = vld [vmem:[#allocation14 + $0xe20] sm:$0xff]
        %v4579 = vld [vmem:[#allocation14 + $0xe28] sm:$0xff]
        %v4580 = vld [vmem:[#allocation14 + $0xe30] sm:$0xff]
        %v4581 = vld [vmem:[#allocation14 + $0xe38] sm:$0xff]
        %v4582 = vld [vmem:[#allocation14 + $0xe40] sm:$0xff]
        %v4583 = vld [vmem:[#allocation14 + $0xe48] sm:$0xff]
        %v4584 = vld [vmem:[#allocation14 + $0xe50] sm:$0xff]
        %v4585 = vld [vmem:[#allocation14 + $0xe58] sm:$0xff]
        %v4586 = vld [vmem:[#allocation14 + $0xe60] sm:$0xff]
        %v4587 = vld [vmem:[#allocation14 + $0xe68] sm:$0xff]
        %v4588 = vld [vmem:[#allocation14 + $0xe70] sm:$0xff]
        %v4589 = vld [vmem:[#allocation14 + $0xe78] sm:$0xff]
        %v4590 = vld [vmem:[#allocation14 + $0xe80] sm:$0xff]
        %v4591 = vld [vmem:[#allocation14 + $0xe88] sm:$0xff]
        %v4592 = vld [vmem:[#allocation14 + $0xe90] sm:$0xff]
        %v4593 = vld [vmem:[#allocation14 + $0xe98] sm:$0xff]
        %v4594 = vld [vmem:[#allocation14 + $0xea0] sm:$0xff]
        %v4595 = vld [vmem:[#allocation14 + $0xea8] sm:$0xff]
        %v4596 = vld [vmem:[#allocation14 + $0xeb0] sm:$0xff]
        %v4597 = vld [vmem:[#allocation14 + $0xeb8] sm:$0xff]
        %v4598 = vld [vmem:[#allocation14 + $0xec0] sm:$0xff]
        %v4599 = vld [vmem:[#allocation14 + $0xec8] sm:$0xff]
        %v4600 = vld [vmem:[#allocation14 + $0xed0] sm:$0xff]
        %v4601 = vld [vmem:[#allocation14 + $0xed8] sm:$0xff]
        %v4602 = vld [vmem:[#allocation14 + $0xee0] sm:$0xff]
        %v4603 = vld [vmem:[#allocation14 + $0xee8] sm:$0xff]
        %v4604 = vld [vmem:[#allocation14 + $0xef0] sm:$0xff]
        %v4605 = vld [vmem:[#allocation14 + $0xef8] sm:$0xff]
        %v4606 = vld [vmem:[#allocation14 + $0xf00] sm:$0xff]
        %v4607 = vld [vmem:[#allocation14 + $0xf08] sm:$0xff]
        %v4608 = vld [vmem:[#allocation14 + $0xf10] sm:$0xff]
        %v4609 = vld [vmem:[#allocation14 + $0xf18] sm:$0xff]
        %v4610 = vld [vmem:[#allocation14 + $0xf20] sm:$0xff]
        %v4611 = vld [vmem:[#allocation14 + $0xf28] sm:$0xff]
        %v4612 = vld [vmem:[#allocation14 + $0xf30] sm:$0xff]
        %v4613 = vld [vmem:[#allocation14 + $0xf38] sm:$0xff]
        %v4614 = vld [vmem:[#allocation14 + $0xf40] sm:$0xff]
        %v4615 = vld [vmem:[#allocation14 + $0xf48] sm:$0xff]
        %v4616 = vld [vmem:[#allocation14 + $0xf50] sm:$0xff]
        %v4617 = vld [vmem:[#allocation14 + $0xf58] sm:$0xff]
        %v4618 = vld [vmem:[#allocation14 + $0xf60] sm:$0xff]
        %v4619 = vld [vmem:[#allocation14 + $0xf68] sm:$0xff]
        %v4620 = vld [vmem:[#allocation14 + $0xf70] sm:$0xff]
        %v4621 = vld [vmem:[#allocation14 + $0xf78] sm:$0xff]
        %v4622 = vld [vmem:[#allocation14 + $0xf80] sm:$0xff]
        %v4623 = vld [vmem:[#allocation14 + $0xf88] sm:$0xff]
        %v4624 = vld [vmem:[#allocation14 + $0xf90] sm:$0xff]
        %v4625 = vld [vmem:[#allocation14 + $0xf98] sm:$0xff]
        %v4626 = vld [vmem:[#allocation14 + $0xfa0] sm:$0xff]
        %v4627 = vld [vmem:[#allocation14 + $0xfa8] sm:$0xff]
        %v4628 = vld [vmem:[#allocation14 + $0xfb0] sm:$0xff]
        %v4629 = vld [vmem:[#allocation14 + $0xfb8] sm:$0xff]
        %v4630 = vld [vmem:[#allocation14 + $0xfc0] sm:$0xff]
        %v4631 = vld [vmem:[#allocation14 + $0xfc8] sm:$0xff]
        %v4632 = vld [vmem:[#allocation14 + $0xfd0] sm:$0xff]
        %v4633 = vld [vmem:[#allocation14 + $0xfd8] sm:$0xff]
        %v4634 = vld [vmem:[#allocation14 + $0xfe0] sm:$0xff]
        %v4635 = vld [vmem:[#allocation14 + $0xfe8] sm:$0xff]
        %v4636 = vld [vmem:[#allocation14 + $0xff0] sm:$0xff]
        %v4637 = vld [vmem:[#allocation14 + $0xff8] sm:$0xff]
        %4638 = vmatprep.subr.mxu0 %v4157
        %4639 = vmatpush1.msra.mxu0 %v4156
        %4640 = vmatprep.subr.mxu0 %v4155
        %4641 = vmatpush1.msra.mxu0 %v4154
        %4642 = vmatprep.subr.mxu0 %v4153
        %4643 = vmatpush1.msra.mxu0 %v4152
        %4644 = vmatprep.subr.mxu0 %v4151
        %4645 = vmatpush1.msra.mxu0 %v4150
        %4646 = vmatprep.subr.mxu0 %v4149
        %4647 = vmatpush1.msra.mxu0 %v4148
        %4648 = vmatprep.subr.mxu0 %v4147
        %4649 = vmatpush1.msra.mxu0 %v4146
        %4650 = vmatprep.subr.mxu0 %v4145
        %4651 = vmatpush1.msra.mxu0 %v4144
        %4652 = vmatprep.subr.mxu0 %v4143
        %4653 = vmatpush1.msra.mxu0 %v4142
        %4654 = vmatprep.subr.mxu0 %v4141
        %4655 = vmatpush1.msra.mxu0 %v4140
        %4656 = vmatprep.subr.mxu0 %v4139
        %4657 = vmatpush1.msra.mxu0 %v4138
        %4658 = vmatprep.subr.mxu0 %v4137
        %4659 = vmatpush1.msra.mxu0 %v4136
        %4660 = vmatprep.subr.mxu0 %v4135
        %4661 = vmatpush1.msra.mxu0 %v4134
        %4662 = vmatprep.subr.mxu0 %v4133
        %4663 = vmatpush1.msra.mxu0 %v4132
        %4664 = vmatprep.subr.mxu0 %v4131
        %4665 = vmatpush1.msra.mxu0 %v4130
        %4666 = vmatprep.subr.mxu0 %v4129
        %4667 = vmatpush1.msra.mxu0 %v4128
        %4668 = vmatprep.subr.mxu0 %v4127
        %4669 = vmatpush1.msra.mxu0 %v4126
        %4670 = vmatprep.subr.mxu0 %v4189
        %4671 = vmatpush2.msra.mxu0 %v4188
        %4672 = vmatprep.subr.mxu0 %v4187
        %4673 = vmatpush2.msra.mxu0 %v4186
        %4674 = vmatprep.subr.mxu0 %v4185
        %4675 = vmatpush2.msra.mxu0 %v4184
        %4676 = vmatprep.subr.mxu0 %v4183
        %4677 = vmatpush2.msra.mxu0 %v4182
        %4678 = vmatprep.subr.mxu0 %v4181
        %4679 = vmatpush2.msra.mxu0 %v4180
        %4680 = vmatprep.subr.mxu0 %v4179
        %4681 = vmatpush2.msra.mxu0 %v4178
        %4682 = vmatprep.subr.mxu0 %v4177
        %4683 = vmatpush2.msra.mxu0 %v4176
        %4684 = vmatprep.subr.mxu0 %v4175
        %4685 = vmatpush2.msra.mxu0 %v4174
        %4686 = vmatprep.subr.mxu0 %v4173
        %4687 = vmatpush2.msra.mxu0 %v4172
        %4688 = vmatprep.subr.mxu0 %v4171
        %4689 = vmatpush2.msra.mxu0 %v4170
        %4690 = vmatprep.subr.mxu0 %v4169
        %4691 = vmatpush2.msra.mxu0 %v4168
        %4692 = vmatprep.subr.mxu0 %v4167
        %4693 = vmatpush2.msra.mxu0 %v4166
        %4694 = vmatprep.subr.mxu0 %v4165
        %4695 = vmatpush2.msra.mxu0 %v4164
        %4696 = vmatprep.subr.mxu0 %v4163
        %4697 = vmatpush2.msra.mxu0 %v4162
        %4698 = vmatprep.subr.mxu0 %v4161
        %4699 = vmatpush2.msra.mxu0 %v4160
        %4700 = vmatprep.subr.mxu0 %v4159
        %4701 = vmatpush2.msra.mxu0 %v4158
        %4702 = vmatprep.mubr.f32.mxu0 %v4111
        %4703 = vmatmul.mubr.f32.gmra.mxu0 %v4110
        %v4704 = vpop.f32.mrf.mxu0
        %v4705 = vadd.f32 0.0, %v4704
        %v4706 = vpop.f32.mrf.mxu0
        %v4707 = vadd.f32 0.0, %v4706
        %4708 = vdwg.mxu0
        %4709 = vmatprep.subr.mxu0 %v4221
        %4710 = vmatpush1.msra.mxu0 %v4220
        %4711 = vmatprep.subr.mxu0 %v4219
        %4712 = vmatpush1.msra.mxu0 %v4218
        %4713 = vmatprep.subr.mxu0 %v4217
        %4714 = vmatpush1.msra.mxu0 %v4216
        %4715 = vmatprep.subr.mxu0 %v4215
        %4716 = vmatpush1.msra.mxu0 %v4214
        %4717 = vmatprep.subr.mxu0 %v4213
        %4718 = vmatpush1.msra.mxu0 %v4212
        %4719 = vmatprep.subr.mxu0 %v4211
        %4720 = vmatpush1.msra.mxu0 %v4210
        %4721 = vmatprep.subr.mxu0 %v4209
        %4722 = vmatpush1.msra.mxu0 %v4208
        %4723 = vmatprep.subr.mxu0 %v4207
        %4724 = vmatpush1.msra.mxu0 %v4206
        %4725 = vmatprep.subr.mxu0 %v4205
        %4726 = vmatpush1.msra.mxu0 %v4204
        %4727 = vmatprep.subr.mxu0 %v4203
        %4728 = vmatpush1.msra.mxu0 %v4202
        %4729 = vmatprep.subr.mxu0 %v4201
        %4730 = vmatpush1.msra.mxu0 %v4200
        %4731 = vmatprep.subr.mxu0 %v4199
        %4732 = vmatpush1.msra.mxu0 %v4198
        %4733 = vmatprep.subr.mxu0 %v4197
        %4734 = vmatpush1.msra.mxu0 %v4196
        %4735 = vmatprep.subr.mxu0 %v4195
        %4736 = vmatpush1.msra.mxu0 %v4194
        %4737 = vmatprep.subr.mxu0 %v4193
        %4738 = vmatpush1.msra.mxu0 %v4192
        %4739 = vmatprep.subr.mxu0 %v4191
        %4740 = vmatpush1.msra.mxu0 %v4190
        %4741 = vmatprep.subr.mxu0 %v4253
        %4742 = vmatpush2.msra.mxu0 %v4252
        %4743 = vmatprep.subr.mxu0 %v4251
        %4744 = vmatpush2.msra.mxu0 %v4250
        %4745 = vmatprep.subr.mxu0 %v4249
        %4746 = vmatpush2.msra.mxu0 %v4248
        %4747 = vmatprep.subr.mxu0 %v4247
        %4748 = vmatpush2.msra.mxu0 %v4246
        %4749 = vmatprep.subr.mxu0 %v4245
        %4750 = vmatpush2.msra.mxu0 %v4244
        %4751 = vmatprep.subr.mxu0 %v4243
        %4752 = vmatpush2.msra.mxu0 %v4242
        %4753 = vmatprep.subr.mxu0 %v4241
        %4754 = vmatpush2.msra.mxu0 %v4240
        %4755 = vmatprep.subr.mxu0 %v4239
        %4756 = vmatpush2.msra.mxu0 %v4238
        %4757 = vmatprep.subr.mxu0 %v4237
        %4758 = vmatpush2.msra.mxu0 %v4236
        %4759 = vmatprep.subr.mxu0 %v4235
        %4760 = vmatpush2.msra.mxu0 %v4234
        %4761 = vmatprep.subr.mxu0 %v4233
        %4762 = vmatpush2.msra.mxu0 %v4232
        %4763 = vmatprep.subr.mxu0 %v4231
        %4764 = vmatpush2.msra.mxu0 %v4230
        %4765 = vmatprep.subr.mxu0 %v4229
        %4766 = vmatpush2.msra.mxu0 %v4228
        %4767 = vmatprep.subr.mxu0 %v4227
        %4768 = vmatpush2.msra.mxu0 %v4226
        %4769 = vmatprep.subr.mxu0 %v4225
        %4770 = vmatpush2.msra.mxu0 %v4224
        %4771 = vmatprep.subr.mxu0 %v4223
        %4772 = vmatpush2.msra.mxu0 %v4222
        %4773 = vmatprep.mubr.f32.mxu0 %v4113
        %4774 = vmatmul.mubr.f32.gmra.mxu0 %v4112
        %v4775 = vpop.f32.mrf.mxu0
        %v4776 = vadd.f32 %v4705, %v4775
        %v4777 = vpop.f32.mrf.mxu0
        %v4778 = vadd.f32 %v4707, %v4777
        %4779 = vdwg.mxu0
        %4780 = vmatprep.subr.mxu0 %v4285
        %4781 = vmatpush1.msra.mxu0 %v4284
        %4782 = vmatprep.subr.mxu0 %v4283
        %4783 = vmatpush1.msra.mxu0 %v4282
        %4784 = vmatprep.subr.mxu0 %v4281
        %4785 = vmatpush1.msra.mxu0 %v4280
        %4786 = vmatprep.subr.mxu0 %v4279
        %4787 = vmatpush1.msra.mxu0 %v4278
        %4788 = vmatprep.subr.mxu0 %v4277
        %4789 = vmatpush1.msra.mxu0 %v4276
        %4790 = vmatprep.subr.mxu0 %v4275
        %4791 = vmatpush1.msra.mxu0 %v4274
        %4792 = vmatprep.subr.mxu0 %v4273
        %4793 = vmatpush1.msra.mxu0 %v4272
        %4794 = vmatprep.subr.mxu0 %v4271
        %4795 = vmatpush1.msra.mxu0 %v4270
        %4796 = vmatprep.subr.mxu0 %v4269
        %4797 = vmatpush1.msra.mxu0 %v4268
        %4798 = vmatprep.subr.mxu0 %v4267
        %4799 = vmatpush1.msra.mxu0 %v4266
        %4800 = vmatprep.subr.mxu0 %v4265
        %4801 = vmatpush1.msra.mxu0 %v4264
        %4802 = vmatprep.subr.mxu0 %v4263
        %4803 = vmatpush1.msra.mxu0 %v4262
        %4804 = vmatprep.subr.mxu0 %v4261
        %4805 = vmatpush1.msra.mxu0 %v4260
        %4806 = vmatprep.subr.mxu0 %v4259
        %4807 = vmatpush1.msra.mxu0 %v4258
        %4808 = vmatprep.subr.mxu0 %v4257
        %4809 = vmatpush1.msra.mxu0 %v4256
        %4810 = vmatprep.subr.mxu0 %v4255
        %4811 = vmatpush1.msra.mxu0 %v4254
        %4812 = vmatprep.subr.mxu0 %v4317
        %4813 = vmatpush2.msra.mxu0 %v4316
        %4814 = vmatprep.subr.mxu0 %v4315
        %4815 = vmatpush2.msra.mxu0 %v4314
        %4816 = vmatprep.subr.mxu0 %v4313
        %4817 = vmatpush2.msra.mxu0 %v4312
        %4818 = vmatprep.subr.mxu0 %v4311
        %4819 = vmatpush2.msra.mxu0 %v4310
        %4820 = vmatprep.subr.mxu0 %v4309
        %4821 = vmatpush2.msra.mxu0 %v4308
        %4822 = vmatprep.subr.mxu0 %v4307
        %4823 = vmatpush2.msra.mxu0 %v4306
        %4824 = vmatprep.subr.mxu0 %v4305
        %4825 = vmatpush2.msra.mxu0 %v4304
        %4826 = vmatprep.subr.mxu0 %v4303
        %4827 = vmatpush2.msra.mxu0 %v4302
        %4828 = vmatprep.subr.mxu0 %v4301
        %4829 = vmatpush2.msra.mxu0 %v4300
        %4830 = vmatprep.subr.mxu0 %v4299
        %4831 = vmatpush2.msra.mxu0 %v4298
        %4832 = vmatprep.subr.mxu0 %v4297
        %4833 = vmatpush2.msra.mxu0 %v4296
        %4834 = vmatprep.subr.mxu0 %v4295
        %4835 = vmatpush2.msra.mxu0 %v4294
        %4836 = vmatprep.subr.mxu0 %v4293
        %4837 = vmatpush2.msra.mxu0 %v4292
        %4838 = vmatprep.subr.mxu0 %v4291
        %4839 = vmatpush2.msra.mxu0 %v4290
        %4840 = vmatprep.subr.mxu0 %v4289
        %4841 = vmatpush2.msra.mxu0 %v4288
        %4842 = vmatprep.subr.mxu0 %v4287
        %4843 = vmatpush2.msra.mxu0 %v4286
        %4844 = vmatprep.mubr.f32.mxu0 %v4115
        %4845 = vmatmul.mubr.f32.gmra.mxu0 %v4114
        %v4846 = vpop.f32.mrf.mxu0
        %v4847 = vadd.f32 %v4776, %v4846
        %v4848 = vpop.f32.mrf.mxu0
        %v4849 = vadd.f32 %v4778, %v4848
        %4850 = vdwg.mxu0
        %4851 = vmatprep.subr.mxu0 %v4349
        %4852 = vmatpush1.msra.mxu0 %v4348
        %4853 = vmatprep.subr.mxu0 %v4347
        %4854 = vmatpush1.msra.mxu0 %v4346
        %4855 = vmatprep.subr.mxu0 %v4345
        %4856 = vmatpush1.msra.mxu0 %v4344
        %4857 = vmatprep.subr.mxu0 %v4343
        %4858 = vmatpush1.msra.mxu0 %v4342
        %4859 = vmatprep.subr.mxu0 %v4341
        %4860 = vmatpush1.msra.mxu0 %v4340
        %4861 = vmatprep.subr.mxu0 %v4339
        %4862 = vmatpush1.msra.mxu0 %v4338
        %4863 = vmatprep.subr.mxu0 %v4337
        %4864 = vmatpush1.msra.mxu0 %v4336
        %4865 = vmatprep.subr.mxu0 %v4335
        %4866 = vmatpush1.msra.mxu0 %v4334
        %4867 = vmatprep.subr.mxu0 %v4333
        %4868 = vmatpush1.msra.mxu0 %v4332
        %4869 = vmatprep.subr.mxu0 %v4331
        %4870 = vmatpush1.msra.mxu0 %v4330
        %4871 = vmatprep.subr.mxu0 %v4329
        %4872 = vmatpush1.msra.mxu0 %v4328
        %4873 = vmatprep.subr.mxu0 %v4327
        %4874 = vmatpush1.msra.mxu0 %v4326
        %4875 = vmatprep.subr.mxu0 %v4325
        %4876 = vmatpush1.msra.mxu0 %v4324
        %4877 = vmatprep.subr.mxu0 %v4323
        %4878 = vmatpush1.msra.mxu0 %v4322
        %4879 = vmatprep.subr.mxu0 %v4321
        %4880 = vmatpush1.msra.mxu0 %v4320
        %4881 = vmatprep.subr.mxu0 %v4319
        %4882 = vmatpush1.msra.mxu0 %v4318
        %4883 = vmatprep.subr.mxu0 %v4381
        %4884 = vmatpush2.msra.mxu0 %v4380
        %4885 = vmatprep.subr.mxu0 %v4379
        %4886 = vmatpush2.msra.mxu0 %v4378
        %4887 = vmatprep.subr.mxu0 %v4377
        %4888 = vmatpush2.msra.mxu0 %v4376
        %4889 = vmatprep.subr.mxu0 %v4375
        %4890 = vmatpush2.msra.mxu0 %v4374
        %4891 = vmatprep.subr.mxu0 %v4373
        %4892 = vmatpush2.msra.mxu0 %v4372
        %4893 = vmatprep.subr.mxu0 %v4371
        %4894 = vmatpush2.msra.mxu0 %v4370
        %4895 = vmatprep.subr.mxu0 %v4369
        %4896 = vmatpush2.msra.mxu0 %v4368
        %4897 = vmatprep.subr.mxu0 %v4367
        %4898 = vmatpush2.msra.mxu0 %v4366
        %4899 = vmatprep.subr.mxu0 %v4365
        %4900 = vmatpush2.msra.mxu0 %v4364
        %4901 = vmatprep.subr.mxu0 %v4363
        %4902 = vmatpush2.msra.mxu0 %v4362
        %4903 = vmatprep.subr.mxu0 %v4361
        %4904 = vmatpush2.msra.mxu0 %v4360
        %4905 = vmatprep.subr.mxu0 %v4359
        %4906 = vmatpush2.msra.mxu0 %v4358
        %4907 = vmatprep.subr.mxu0 %v4357
        %4908 = vmatpush2.msra.mxu0 %v4356
        %4909 = vmatprep.subr.mxu0 %v4355
        %4910 = vmatpush2.msra.mxu0 %v4354
        %4911 = vmatprep.subr.mxu0 %v4353
        %4912 = vmatpush2.msra.mxu0 %v4352
        %4913 = vmatprep.subr.mxu0 %v4351
        %4914 = vmatpush2.msra.mxu0 %v4350
        %4915 = vmatprep.mubr.f32.mxu0 %v4117
        %4916 = vmatmul.mubr.f32.gmra.mxu0 %v4116
        %v4917 = vpop.f32.mrf.mxu0
        %v4918 = vadd.f32 %v4847, %v4917
        %v4919 = vpop.f32.mrf.mxu0
        %v4920 = vadd.f32 %v4849, %v4919
        %4921 = vdwg.mxu0
        %4922 = vmatprep.subr.mxu0 %v4413
        %4923 = vmatpush1.msra.mxu0 %v4412
        %4924 = vmatprep.subr.mxu0 %v4411
        %4925 = vmatpush1.msra.mxu0 %v4410
        %4926 = vmatprep.subr.mxu0 %v4409
        %4927 = vmatpush1.msra.mxu0 %v4408
        %4928 = vmatprep.subr.mxu0 %v4407
        %4929 = vmatpush1.msra.mxu0 %v4406
        %4930 = vmatprep.subr.mxu0 %v4405
        %4931 = vmatpush1.msra.mxu0 %v4404
        %4932 = vmatprep.subr.mxu0 %v4403
        %4933 = vmatpush1.msra.mxu0 %v4402
        %4934 = vmatprep.subr.mxu0 %v4401
        %4935 = vmatpush1.msra.mxu0 %v4400
        %4936 = vmatprep.subr.mxu0 %v4399
        %4937 = vmatpush1.msra.mxu0 %v4398
        %4938 = vmatprep.subr.mxu0 %v4397
        %4939 = vmatpush1.msra.mxu0 %v4396
        %4940 = vmatprep.subr.mxu0 %v4395
        %4941 = vmatpush1.msra.mxu0 %v4394
        %4942 = vmatprep.subr.mxu0 %v4393
        %4943 = vmatpush1.msra.mxu0 %v4392
        %4944 = vmatprep.subr.mxu0 %v4391
        %4945 = vmatpush1.msra.mxu0 %v4390
        %4946 = vmatprep.subr.mxu0 %v4389
        %4947 = vmatpush1.msra.mxu0 %v4388
        %4948 = vmatprep.subr.mxu0 %v4387
        %4949 = vmatpush1.msra.mxu0 %v4386
        %4950 = vmatprep.subr.mxu0 %v4385
        %4951 = vmatpush1.msra.mxu0 %v4384
        %4952 = vmatprep.subr.mxu0 %v4383
        %4953 = vmatpush1.msra.mxu0 %v4382
        %4954 = vmatprep.subr.mxu0 %v4445
        %4955 = vmatpush2.msra.mxu0 %v4444
        %4956 = vmatprep.subr.mxu0 %v4443
        %4957 = vmatpush2.msra.mxu0 %v4442
        %4958 = vmatprep.subr.mxu0 %v4441
        %4959 = vmatpush2.msra.mxu0 %v4440
        %4960 = vmatprep.subr.mxu0 %v4439
        %4961 = vmatpush2.msra.mxu0 %v4438
        %4962 = vmatprep.subr.mxu0 %v4437
        %4963 = vmatpush2.msra.mxu0 %v4436
        %4964 = vmatprep.subr.mxu0 %v4435
        %4965 = vmatpush2.msra.mxu0 %v4434
        %4966 = vmatprep.subr.mxu0 %v4433
        %4967 = vmatpush2.msra.mxu0 %v4432
        %4968 = vmatprep.subr.mxu0 %v4431
        %4969 = vmatpush2.msra.mxu0 %v4430
        %4970 = vmatprep.subr.mxu0 %v4429
        %4971 = vmatpush2.msra.mxu0 %v4428
        %4972 = vmatprep.subr.mxu0 %v4427
        %4973 = vmatpush2.msra.mxu0 %v4426
        %4974 = vmatprep.subr.mxu0 %v4425
        %4975 = vmatpush2.msra.mxu0 %v4424
        %4976 = vmatprep.subr.mxu0 %v4423
        %4977 = vmatpush2.msra.mxu0 %v4422
        %4978 = vmatprep.subr.mxu0 %v4421
        %4979 = vmatpush2.msra.mxu0 %v4420
        %4980 = vmatprep.subr.mxu0 %v4419
        %4981 = vmatpush2.msra.mxu0 %v4418
        %4982 = vmatprep.subr.mxu0 %v4417
        %4983 = vmatpush2.msra.mxu0 %v4416
        %4984 = vmatprep.subr.mxu0 %v4415
        %4985 = vmatpush2.msra.mxu0 %v4414
        %4986 = vmatprep.mubr.f32.mxu0 %v4119
        %4987 = vmatmul.mubr.f32.gmra.mxu0 %v4118
        %v4988 = vpop.f32.mrf.mxu0
        %v4989 = vadd.f32 %v4918, %v4988
        %v4990 = vpop.f32.mrf.mxu0
        %v4991 = vadd.f32 %v4920, %v4990
        %4992 = vdwg.mxu0
        %4993 = vmatprep.subr.mxu0 %v4477
        %4994 = vmatpush1.msra.mxu0 %v4476
        %4995 = vmatprep.subr.mxu0 %v4475
        %4996 = vmatpush1.msra.mxu0 %v4474
        %4997 = vmatprep.subr.mxu0 %v4473
        %4998 = vmatpush1.msra.mxu0 %v4472
        %4999 = vmatprep.subr.mxu0 %v4471
        %5000 = vmatpush1.msra.mxu0 %v4470
        %5001 = vmatprep.subr.mxu0 %v4469
        %5002 = vmatpush1.msra.mxu0 %v4468
        %5003 = vmatprep.subr.mxu0 %v4467
        %5004 = vmatpush1.msra.mxu0 %v4466
        %5005 = vmatprep.subr.mxu0 %v4465
        %5006 = vmatpush1.msra.mxu0 %v4464
        %5007 = vmatprep.subr.mxu0 %v4463
        %5008 = vmatpush1.msra.mxu0 %v4462
        %5009 = vmatprep.subr.mxu0 %v4461
        %5010 = vmatpush1.msra.mxu0 %v4460
        %5011 = vmatprep.subr.mxu0 %v4459
        %5012 = vmatpush1.msra.mxu0 %v4458
        %5013 = vmatprep.subr.mxu0 %v4457
        %5014 = vmatpush1.msra.mxu0 %v4456
        %5015 = vmatprep.subr.mxu0 %v4455
        %5016 = vmatpush1.msra.mxu0 %v4454
        %5017 = vmatprep.subr.mxu0 %v4453
        %5018 = vmatpush1.msra.mxu0 %v4452
        %5019 = vmatprep.subr.mxu0 %v4451
        %5020 = vmatpush1.msra.mxu0 %v4450
        %5021 = vmatprep.subr.mxu0 %v4449
        %5022 = vmatpush1.msra.mxu0 %v4448
        %5023 = vmatprep.subr.mxu0 %v4447
        %5024 = vmatpush1.msra.mxu0 %v4446
        %5025 = vmatprep.subr.mxu0 %v4509
        %5026 = vmatpush2.msra.mxu0 %v4508
        %5027 = vmatprep.subr.mxu0 %v4507
        %5028 = vmatpush2.msra.mxu0 %v4506
        %5029 = vmatprep.subr.mxu0 %v4505
        %5030 = vmatpush2.msra.mxu0 %v4504
        %5031 = vmatprep.subr.mxu0 %v4503
        %5032 = vmatpush2.msra.mxu0 %v4502
        %5033 = vmatprep.subr.mxu0 %v4501
        %5034 = vmatpush2.msra.mxu0 %v4500
        %5035 = vmatprep.subr.mxu0 %v4499
        %5036 = vmatpush2.msra.mxu0 %v4498
        %5037 = vmatprep.subr.mxu0 %v4497
        %5038 = vmatpush2.msra.mxu0 %v4496
        %5039 = vmatprep.subr.mxu0 %v4495
        %5040 = vmatpush2.msra.mxu0 %v4494
        %5041 = vmatprep.subr.mxu0 %v4493
        %5042 = vmatpush2.msra.mxu0 %v4492
        %5043 = vmatprep.subr.mxu0 %v4491
        %5044 = vmatpush2.msra.mxu0 %v4490
        %5045 = vmatprep.subr.mxu0 %v4489
        %5046 = vmatpush2.msra.mxu0 %v4488
        %5047 = vmatprep.subr.mxu0 %v4487
        %5048 = vmatpush2.msra.mxu0 %v4486
        %5049 = vmatprep.subr.mxu0 %v4485
        %5050 = vmatpush2.msra.mxu0 %v4484
        %5051 = vmatprep.subr.mxu0 %v4483
        %5052 = vmatpush2.msra.mxu0 %v4482
        %5053 = vmatprep.subr.mxu0 %v4481
        %5054 = vmatpush2.msra.mxu0 %v4480
        %5055 = vmatprep.subr.mxu0 %v4479
        %5056 = vmatpush2.msra.mxu0 %v4478
        %5057 = vmatprep.mubr.f32.mxu0 %v4121
        %5058 = vmatmul.mubr.f32.gmra.mxu0 %v4120
        %v5059 = vpop.f32.mrf.mxu0
        %v5060 = vadd.f32 %v4989, %v5059
        %v5061 = vpop.f32.mrf.mxu0
        %v5062 = vadd.f32 %v4991, %v5061
        %5063 = vdwg.mxu0
        %5064 = vmatprep.subr.mxu0 %v4541
        %5065 = vmatpush1.msra.mxu0 %v4540
        %5066 = vmatprep.subr.mxu0 %v4539
        %5067 = vmatpush1.msra.mxu0 %v4538
        %5068 = vmatprep.subr.mxu0 %v4537
        %5069 = vmatpush1.msra.mxu0 %v4536
        %5070 = vmatprep.subr.mxu0 %v4535
        %5071 = vmatpush1.msra.mxu0 %v4534
        %5072 = vmatprep.subr.mxu0 %v4533
        %5073 = vmatpush1.msra.mxu0 %v4532
        %5074 = vmatprep.subr.mxu0 %v4531
        %5075 = vmatpush1.msra.mxu0 %v4530
        %5076 = vmatprep.subr.mxu0 %v4529
        %5077 = vmatpush1.msra.mxu0 %v4528
        %5078 = vmatprep.subr.mxu0 %v4527
        %5079 = vmatpush1.msra.mxu0 %v4526
        %5080 = vmatprep.subr.mxu0 %v4525
        %5081 = vmatpush1.msra.mxu0 %v4524
        %5082 = vmatprep.subr.mxu0 %v4523
        %5083 = vmatpush1.msra.mxu0 %v4522
        %5084 = vmatprep.subr.mxu0 %v4521
        %5085 = vmatpush1.msra.mxu0 %v4520
        %5086 = vmatprep.subr.mxu0 %v4519
        %5087 = vmatpush1.msra.mxu0 %v4518
        %5088 = vmatprep.subr.mxu0 %v4517
        %5089 = vmatpush1.msra.mxu0 %v4516
        %5090 = vmatprep.subr.mxu0 %v4515
        %5091 = vmatpush1.msra.mxu0 %v4514
        %5092 = vmatprep.subr.mxu0 %v4513
        %5093 = vmatpush1.msra.mxu0 %v4512
        %5094 = vmatprep.subr.mxu0 %v4511
        %5095 = vmatpush1.msra.mxu0 %v4510
        %5096 = vmatprep.subr.mxu0 %v4573
        %5097 = vmatpush2.msra.mxu0 %v4572
        %5098 = vmatprep.subr.mxu0 %v4571
        %5099 = vmatpush2.msra.mxu0 %v4570
        %5100 = vmatprep.subr.mxu0 %v4569
        %5101 = vmatpush2.msra.mxu0 %v4568
        %5102 = vmatprep.subr.mxu0 %v4567
        %5103 = vmatpush2.msra.mxu0 %v4566
        %5104 = vmatprep.subr.mxu0 %v4565
        %5105 = vmatpush2.msra.mxu0 %v4564
        %5106 = vmatprep.subr.mxu0 %v4563
        %5107 = vmatpush2.msra.mxu0 %v4562
        %5108 = vmatprep.subr.mxu0 %v4561
        %5109 = vmatpush2.msra.mxu0 %v4560
        %5110 = vmatprep.subr.mxu0 %v4559
        %5111 = vmatpush2.msra.mxu0 %v4558
        %5112 = vmatprep.subr.mxu0 %v4557
        %5113 = vmatpush2.msra.mxu0 %v4556
        %5114 = vmatprep.subr.mxu0 %v4555
        %5115 = vmatpush2.msra.mxu0 %v4554
        %5116 = vmatprep.subr.mxu0 %v4553
        %5117 = vmatpush2.msra.mxu0 %v4552
        %5118 = vmatprep.subr.mxu0 %v4551
        %5119 = vmatpush2.msra.mxu0 %v4550
        %5120 = vmatprep.subr.mxu0 %v4549
        %5121 = vmatpush2.msra.mxu0 %v4548
        %5122 = vmatprep.subr.mxu0 %v4547
        %5123 = vmatpush2.msra.mxu0 %v4546
        %5124 = vmatprep.subr.mxu0 %v4545
        %5125 = vmatpush2.msra.mxu0 %v4544
        %5126 = vmatprep.subr.mxu0 %v4543
        %5127 = vmatpush2.msra.mxu0 %v4542
        %5128 = vmatprep.mubr.f32.mxu0 %v4123
        %5129 = vmatmul.mubr.f32.gmra.mxu0 %v4122
        %v5130 = vpop.f32.mrf.mxu0
        %v5131 = vadd.f32 %v5060, %v5130
        %v5132 = vpop.f32.mrf.mxu0
        %v5133 = vadd.f32 %v5062, %v5132
        %5134 = vdwg.mxu0
        %5135 = vmatprep.subr.mxu0 %v4605
        %5136 = vmatpush1.msra.mxu0 %v4604
        %5137 = vmatprep.subr.mxu0 %v4603
        %5138 = vmatpush1.msra.mxu0 %v4602
        %5139 = vmatprep.subr.mxu0 %v4601
        %5140 = vmatpush1.msra.mxu0 %v4600
        %5141 = vmatprep.subr.mxu0 %v4599
        %5142 = vmatpush1.msra.mxu0 %v4598
        %5143 = vmatprep.subr.mxu0 %v4597
        %5144 = vmatpush1.msra.mxu0 %v4596
        %5145 = vmatprep.subr.mxu0 %v4595
        %5146 = vmatpush1.msra.mxu0 %v4594
        %5147 = vmatprep.subr.mxu0 %v4593
        %5148 = vmatpush1.msra.mxu0 %v4592
        %5149 = vmatprep.subr.mxu0 %v4591
        %5150 = vmatpush1.msra.mxu0 %v4590
        %5151 = vmatprep.subr.mxu0 %v4589
        %5152 = vmatpush1.msra.mxu0 %v4588
        %5153 = vmatprep.subr.mxu0 %v4587
        %5154 = vmatpush1.msra.mxu0 %v4586
        %5155 = vmatprep.subr.mxu0 %v4585
        %5156 = vmatpush1.msra.mxu0 %v4584
        %5157 = vmatprep.subr.mxu0 %v4583
        %5158 = vmatpush1.msra.mxu0 %v4582
        %5159 = vmatprep.subr.mxu0 %v4581
        %5160 = vmatpush1.msra.mxu0 %v4580
        %5161 = vmatprep.subr.mxu0 %v4579
        %5162 = vmatpush1.msra.mxu0 %v4578
        %5163 = vmatprep.subr.mxu0 %v4577
        %5164 = vmatpush1.msra.mxu0 %v4576
        %5165 = vmatprep.subr.mxu0 %v4575
        %5166 = vmatpush1.msra.mxu0 %v4574
        %5167 = vmatprep.subr.mxu0 %v4637
        %5168 = vmatpush2.msra.mxu0 %v4636
        %5169 = vmatprep.subr.mxu0 %v4635
        %5170 = vmatpush2.msra.mxu0 %v4634
        %5171 = vmatprep.subr.mxu0 %v4633
        %5172 = vmatpush2.msra.mxu0 %v4632
        %5173 = vmatprep.subr.mxu0 %v4631
        %5174 = vmatpush2.msra.mxu0 %v4630
        %5175 = vmatprep.subr.mxu0 %v4629
        %5176 = vmatpush2.msra.mxu0 %v4628
        %5177 = vmatprep.subr.mxu0 %v4627
        %5178 = vmatpush2.msra.mxu0 %v4626
        %5179 = vmatprep.subr.mxu0 %v4625
        %5180 = vmatpush2.msra.mxu0 %v4624
        %5181 = vmatprep.subr.mxu0 %v4623
        %5182 = vmatpush2.msra.mxu0 %v4622
        %5183 = vmatprep.subr.mxu0 %v4621
        %5184 = vmatpush2.msra.mxu0 %v4620
        %5185 = vmatprep.subr.mxu0 %v4619
        %5186 = vmatpush2.msra.mxu0 %v4618
        %5187 = vmatprep.subr.mxu0 %v4617
        %5188 = vmatpush2.msra.mxu0 %v4616
        %5189 = vmatprep.subr.mxu0 %v4615
        %5190 = vmatpush2.msra.mxu0 %v4614
        %5191 = vmatprep.subr.mxu0 %v4613
        %5192 = vmatpush2.msra.mxu0 %v4612
        %5193 = vmatprep.subr.mxu0 %v4611
        %5194 = vmatpush2.msra.mxu0 %v4610
        %5195 = vmatprep.subr.mxu0 %v4609
        %5196 = vmatpush2.msra.mxu0 %v4608
        %5197 = vmatprep.subr.mxu0 %v4607
        %5198 = vmatpush2.msra.mxu0 %v4606
        %5199 = vmatprep.mubr.f32.mxu0 %v4125
        %5200 = vmatmul.mubr.f32.gmra.mxu0 %v4124
        %v5201 = vpop.f32.mrf.mxu0
        %v5202 = vadd.f32 %v5131, %v5201
        %v5203 = vpop.f32.mrf.mxu0
        %v5204 = vadd.f32 %v5133, %v5203
        %5205 = vdwg.mxu0
        %v5206 = vrcp.pop 2.828427
        %v5207 = vmul.f32 %v5202, %v5206
        %v5208 = vmul.f32 %v5204, %v5206
        %v5209 = vmax.f32 %v5207, %v5208
        %5210 = vmax.xlane.f32.xlu0 %v5209
        %v5211 = vpop.xlane.xlu0 %5210
        %v5212 = vsub.f32 %v5207, %v5211
        %v5213 = vsub.f32 %v5208, %v5211
        %v5214 = vmul.f32 %v5212, 1.442695
        %v5215 = vpow.pop %v5214
        %v5216 = vmul.f32 %v5213, 1.442695
        %v5217 = vpow.pop %v5216
        %v5218 = vld [vmem:[#allocation16] sm:$0xff]
        %v5219 = vld [vmem:[#allocation16 + $0x8] sm:$0xff]
        %v5220 = vld [vmem:[#allocation16 + $0x10] sm:$0xff]
        %v5221 = vld [vmem:[#allocation16 + $0x18] sm:$0xff]
        %v5222 = vld [vmem:[#allocation16 + $0x20] sm:$0xff]
        %v5223 = vld [vmem:[#allocation16 + $0x28] sm:$0xff]
        %v5224 = vld [vmem:[#allocation16 + $0x30] sm:$0xff]
        %v5225 = vld [vmem:[#allocation16 + $0x38] sm:$0xff]
        %v5226 = vld [vmem:[#allocation16 + $0x40] sm:$0xff]
        %v5227 = vld [vmem:[#allocation16 + $0x48] sm:$0xff]
        %v5228 = vld [vmem:[#allocation16 + $0x50] sm:$0xff]
        %v5229 = vld [vmem:[#allocation16 + $0x58] sm:$0xff]
        %v5230 = vld [vmem:[#allocation16 + $0x60] sm:$0xff]
        %v5231 = vld [vmem:[#allocation16 + $0x68] sm:$0xff]
        %v5232 = vld [vmem:[#allocation16 + $0x70] sm:$0xff]
        %v5233 = vld [vmem:[#allocation16 + $0x78] sm:$0xff]
        %v5234 = vld [vmem:[#allocation16 + $0x80] sm:$0xff]
        %v5235 = vld [vmem:[#allocation16 + $0x88] sm:$0xff]
        %v5236 = vld [vmem:[#allocation16 + $0x90] sm:$0xff]
        %v5237 = vld [vmem:[#allocation16 + $0x98] sm:$0xff]
        %v5238 = vld [vmem:[#allocation16 + $0xa0] sm:$0xff]
        %v5239 = vld [vmem:[#allocation16 + $0xa8] sm:$0xff]
        %v5240 = vld [vmem:[#allocation16 + $0xb0] sm:$0xff]
        %v5241 = vld [vmem:[#allocation16 + $0xb8] sm:$0xff]
        %v5242 = vld [vmem:[#allocation16 + $0xc0] sm:$0xff]
        %v5243 = vld [vmem:[#allocation16 + $0xc8] sm:$0xff]
        %v5244 = vld [vmem:[#allocation16 + $0xd0] sm:$0xff]
        %v5245 = vld [vmem:[#allocation16 + $0xd8] sm:$0xff]
        %v5246 = vld [vmem:[#allocation16 + $0xe0] sm:$0xff]
        %v5247 = vld [vmem:[#allocation16 + $0xe8] sm:$0xff]
        %v5248 = vld [vmem:[#allocation16 + $0xf0] sm:$0xff]
        %v5249 = vld [vmem:[#allocation16 + $0xf8] sm:$0xff]
        %v5250 = vld [vmem:[#allocation16 + $0x100] sm:$0xff]
        %v5251 = vld [vmem:[#allocation16 + $0x108] sm:$0xff]
        %v5252 = vld [vmem:[#allocation16 + $0x110] sm:$0xff]
        %v5253 = vld [vmem:[#allocation16 + $0x118] sm:$0xff]
        %v5254 = vld [vmem:[#allocation16 + $0x120] sm:$0xff]
        %v5255 = vld [vmem:[#allocation16 + $0x128] sm:$0xff]
        %v5256 = vld [vmem:[#allocation16 + $0x130] sm:$0xff]
        %v5257 = vld [vmem:[#allocation16 + $0x138] sm:$0xff]
        %v5258 = vld [vmem:[#allocation16 + $0x140] sm:$0xff]
        %v5259 = vld [vmem:[#allocation16 + $0x148] sm:$0xff]
        %v5260 = vld [vmem:[#allocation16 + $0x150] sm:$0xff]
        %v5261 = vld [vmem:[#allocation16 + $0x158] sm:$0xff]
        %v5262 = vld [vmem:[#allocation16 + $0x160] sm:$0xff]
        %v5263 = vld [vmem:[#allocation16 + $0x168] sm:$0xff]
        %v5264 = vld [vmem:[#allocation16 + $0x170] sm:$0xff]
        %v5265 = vld [vmem:[#allocation16 + $0x178] sm:$0xff]
        %v5266 = vld [vmem:[#allocation16 + $0x180] sm:$0xff]
        %v5267 = vld [vmem:[#allocation16 + $0x188] sm:$0xff]
        %v5268 = vld [vmem:[#allocation16 + $0x190] sm:$0xff]
        %v5269 = vld [vmem:[#allocation16 + $0x198] sm:$0xff]
        %v5270 = vld [vmem:[#allocation16 + $0x1a0] sm:$0xff]
        %v5271 = vld [vmem:[#allocation16 + $0x1a8] sm:$0xff]
        %v5272 = vld [vmem:[#allocation16 + $0x1b0] sm:$0xff]
        %v5273 = vld [vmem:[#allocation16 + $0x1b8] sm:$0xff]
        %v5274 = vld [vmem:[#allocation16 + $0x1c0] sm:$0xff]
        %v5275 = vld [vmem:[#allocation16 + $0x1c8] sm:$0xff]
        %v5276 = vld [vmem:[#allocation16 + $0x1d0] sm:$0xff]
        %v5277 = vld [vmem:[#allocation16 + $0x1d8] sm:$0xff]
        %v5278 = vld [vmem:[#allocation16 + $0x1e0] sm:$0xff]
        %v5279 = vld [vmem:[#allocation16 + $0x1e8] sm:$0xff]
        %v5280 = vld [vmem:[#allocation16 + $0x1f0] sm:$0xff]
        %v5281 = vld [vmem:[#allocation16 + $0x1f8] sm:$0xff]
        %5282 = vmatprep.subr.mxu0 %v5249
        %5283 = vmatpush1.msra.mxu0 %v5248
        %5284 = vmatprep.subr.mxu0 %v5247
        %5285 = vmatpush1.msra.mxu0 %v5246
        %5286 = vmatprep.subr.mxu0 %v5245
        %5287 = vmatpush1.msra.mxu0 %v5244
        %5288 = vmatprep.subr.mxu0 %v5243
        %5289 = vmatpush1.msra.mxu0 %v5242
        %5290 = vmatprep.subr.mxu0 %v5241
        %5291 = vmatpush1.msra.mxu0 %v5240
        %5292 = vmatprep.subr.mxu0 %v5239
        %5293 = vmatpush1.msra.mxu0 %v5238
        %5294 = vmatprep.subr.mxu0 %v5237
        %5295 = vmatpush1.msra.mxu0 %v5236
        %5296 = vmatprep.subr.mxu0 %v5235
        %5297 = vmatpush1.msra.mxu0 %v5234
        %5298 = vmatprep.subr.mxu0 %v5233
        %5299 = vmatpush1.msra.mxu0 %v5232
        %5300 = vmatprep.subr.mxu0 %v5231
        %5301 = vmatpush1.msra.mxu0 %v5230
        %5302 = vmatprep.subr.mxu0 %v5229
        %5303 = vmatpush1.msra.mxu0 %v5228
        %5304 = vmatprep.subr.mxu0 %v5227
        %5305 = vmatpush1.msra.mxu0 %v5226
        %5306 = vmatprep.subr.mxu0 %v5225
        %5307 = vmatpush1.msra.mxu0 %v5224
        %5308 = vmatprep.subr.mxu0 %v5223
        %5309 = vmatpush1.msra.mxu0 %v5222
        %5310 = vmatprep.subr.mxu0 %v5221
        %5311 = vmatpush1.msra.mxu0 %v5220
        %5312 = vmatprep.subr.mxu0 %v5219
        %5313 = vmatpush1.msra.mxu0 %v5218
        %5314 = vmatprep.subr.mxu0 %v5281
        %5315 = vmatpush2.msra.mxu0 %v5280
        %5316 = vmatprep.subr.mxu0 %v5279
        %5317 = vmatpush2.msra.mxu0 %v5278
        %5318 = vmatprep.subr.mxu0 %v5277
        %5319 = vmatpush2.msra.mxu0 %v5276
        %5320 = vmatprep.subr.mxu0 %v5275
        %5321 = vmatpush2.msra.mxu0 %v5274
        %5322 = vmatprep.subr.mxu0 %v5273
        %5323 = vmatpush2.msra.mxu0 %v5272
        %5324 = vmatprep.subr.mxu0 %v5271
        %5325 = vmatpush2.msra.mxu0 %v5270
        %5326 = vmatprep.subr.mxu0 %v5269
        %5327 = vmatpush2.msra.mxu0 %v5268
        %5328 = vmatprep.subr.mxu0 %v5267
        %5329 = vmatpush2.msra.mxu0 %v5266
        %5330 = vmatprep.subr.mxu0 %v5265
        %5331 = vmatpush2.msra.mxu0 %v5264
        %5332 = vmatprep.subr.mxu0 %v5263
        %5333 = vmatpush2.msra.mxu0 %v5262
        %5334 = vmatprep.subr.mxu0 %v5261
        %5335 = vmatpush2.msra.mxu0 %v5260
        %5336 = vmatprep.subr.mxu0 %v5259
        %5337 = vmatpush2.msra.mxu0 %v5258
        %5338 = vmatprep.subr.mxu0 %v5257
        %5339 = vmatpush2.msra.mxu0 %v5256
        %5340 = vmatprep.subr.mxu0 %v5255
        %5341 = vmatpush2.msra.mxu0 %v5254
        %5342 = vmatprep.subr.mxu0 %v5253
        %5343 = vmatpush2.msra.mxu0 %v5252
        %5344 = vmatprep.subr.mxu0 %v5251
        %5345 = vmatpush2.msra.mxu0 %v5250
        %5346 = vmatprep.mubr.f32.mxu0 %v5217
        %5347 = vmatmul.mubr.f32.gmra.mxu0 %v5215
        %v5348 = vpop.f32.mrf.mxu0
        %v5349 = vadd.f32 0.0, %v5348
        %v5350 = vpop.f32.mrf.mxu0
        %v5351 = vadd.f32 0.0, %v5350
        %5352 = vdwg.mxu0
        %v5353 = vrcp.pop %v5349
        %v5354 = vrcp.pop %v5351
        %v5355 = vmul.f32 %v5215, %v5353
        %v5356 = vmul.f32 %v5217, %v5354
        %5357 = vmatprep.subr.mxu0 %v2191
        %5358 = vmatpush1.msra.mxu0 %v2190
        %5359 = vmatprep.subr.mxu0 %v2175
        %5360 = vmatpush1.msra.mxu0 %v2174
        %5361 = vmatprep.subr.mxu0 %v2159
        %5362 = vmatpush1.msra.mxu0 %v2158
        %5363 = vmatprep.subr.mxu0 %v2143
        %5364 = vmatpush1.msra.mxu0 %v2142
        %5365 = vmatprep.subr.mxu0 %v2127
        %5366 = vmatpush1.msra.mxu0 %v2126
        %5367 = vmatprep.subr.mxu0 %v2111
        %5368 = vmatpush1.msra.mxu0 %v2110
        %5369 = vmatprep.subr.mxu0 %v2095
        %5370 = vmatpush1.msra.mxu0 %v2094
        %5371 = vmatprep.subr.mxu0 %v2079
        %5372 = vmatpush1.msra.mxu0 %v2078
        %5373 = vmatprep.subr.mxu0 %v2063
        %5374 = vmatpush1.msra.mxu0 %v2062
        %5375 = vmatprep.subr.mxu0 %v2047
        %5376 = vmatpush1.msra.mxu0 %v2046
        %5377 = vmatprep.subr.mxu0 %v2031
        %5378 = vmatpush1.msra.mxu0 %v2030
        %5379 = vmatprep.subr.mxu0 %v2015
        %5380 = vmatpush1.msra.mxu0 %v2014
        %5381 = vmatprep.subr.mxu0 %v1999
        %5382 = vmatpush1.msra.mxu0 %v1998
        %5383 = vmatprep.subr.mxu0 %v1983
        %5384 = vmatpush1.msra.mxu0 %v1982
        %5385 = vmatprep.subr.mxu0 %v1967
        %5386 = vmatpush1.msra.mxu0 %v1966
        %5387 = vmatprep.subr.mxu0 %v1951
        %5388 = vmatpush1.msra.mxu0 %v1950
        %5389 = vmatprep.subr.mxu0 %v2447
        %5390 = vmatpush2.msra.mxu0 %v2446
        %5391 = vmatprep.subr.mxu0 %v2431
        %5392 = vmatpush2.msra.mxu0 %v2430
        %5393 = vmatprep.subr.mxu0 %v2415
        %5394 = vmatpush2.msra.mxu0 %v2414
        %5395 = vmatprep.subr.mxu0 %v2399
        %5396 = vmatpush2.msra.mxu0 %v2398
        %5397 = vmatprep.subr.mxu0 %v2383
        %5398 = vmatpush2.msra.mxu0 %v2382
        %5399 = vmatprep.subr.mxu0 %v2367
        %5400 = vmatpush2.msra.mxu0 %v2366
        %5401 = vmatprep.subr.mxu0 %v2351
        %5402 = vmatpush2.msra.mxu0 %v2350
        %5403 = vmatprep.subr.mxu0 %v2335
        %5404 = vmatpush2.msra.mxu0 %v2334
        %5405 = vmatprep.subr.mxu0 %v2319
        %5406 = vmatpush2.msra.mxu0 %v2318
        %5407 = vmatprep.subr.mxu0 %v2303
        %5408 = vmatpush2.msra.mxu0 %v2302
        %5409 = vmatprep.subr.mxu0 %v2287
        %5410 = vmatpush2.msra.mxu0 %v2286
        %5411 = vmatprep.subr.mxu0 %v2271
        %5412 = vmatpush2.msra.mxu0 %v2270
        %5413 = vmatprep.subr.mxu0 %v2255
        %5414 = vmatpush2.msra.mxu0 %v2254
        %5415 = vmatprep.subr.mxu0 %v2239
        %5416 = vmatpush2.msra.mxu0 %v2238
        %5417 = vmatprep.subr.mxu0 %v2223
        %5418 = vmatpush2.msra.mxu0 %v2222
        %5419 = vmatprep.subr.mxu0 %v2207
        %5420 = vmatpush2.msra.mxu0 %v2206
        %5421 = vmatprep.mubr.f32.mxu0 %v5356
        %5422 = vmatmul.mubr.f32.gmra.mxu0 %v5355
        %v5423 = vpop.f32.mrf.mxu0
        %v5424 = vadd.f32 0.0, %v5423
        %v5425 = vpop.f32.mrf.mxu0
        %v5426 = vadd.f32 0.0, %v5425
        %5427 = vdwg.mxu0
        %5428 = vmatprep.subr.mxu0 %v2193
        %5429 = vmatpush1.msra.mxu0 %v2192
        %5430 = vmatprep.subr.mxu0 %v2177
        %5431 = vmatpush1.msra.mxu0 %v2176
        %5432 = vmatprep.subr.mxu0 %v2161
        %5433 = vmatpush1.msra.mxu0 %v2160
        %5434 = vmatprep.subr.mxu0 %v2145
        %5435 = vmatpush1.msra.mxu0 %v2144
        %5436 = vmatprep.subr.mxu0 %v2129
        %5437 = vmatpush1.msra.mxu0 %v2128
        %5438 = vmatprep.subr.mxu0 %v2113
        %5439 = vmatpush1.msra.mxu0 %v2112
        %5440 = vmatprep.subr.mxu0 %v2097
        %5441 = vmatpush1.msra.mxu0 %v2096
        %5442 = vmatprep.subr.mxu0 %v2081
        %5443 = vmatpush1.msra.mxu0 %v2080
        %5444 = vmatprep.subr.mxu0 %v2065
        %5445 = vmatpush1.msra.mxu0 %v2064
        %5446 = vmatprep.subr.mxu0 %v2049
        %5447 = vmatpush1.msra.mxu0 %v2048
        %5448 = vmatprep.subr.mxu0 %v2033
        %5449 = vmatpush1.msra.mxu0 %v2032
        %5450 = vmatprep.subr.mxu0 %v2017
        %5451 = vmatpush1.msra.mxu0 %v2016
        %5452 = vmatprep.subr.mxu0 %v2001
        %5453 = vmatpush1.msra.mxu0 %v2000
        %5454 = vmatprep.subr.mxu0 %v1985
        %5455 = vmatpush1.msra.mxu0 %v1984
        %5456 = vmatprep.subr.mxu0 %v1969
        %5457 = vmatpush1.msra.mxu0 %v1968
        %5458 = vmatprep.subr.mxu0 %v1953
        %5459 = vmatpush1.msra.mxu0 %v1952
        %5460 = vmatprep.subr.mxu0 %v2449
        %5461 = vmatpush2.msra.mxu0 %v2448
        %5462 = vmatprep.subr.mxu0 %v2433
        %5463 = vmatpush2.msra.mxu0 %v2432
        %5464 = vmatprep.subr.mxu0 %v2417
        %5465 = vmatpush2.msra.mxu0 %v2416
        %5466 = vmatprep.subr.mxu0 %v2401
        %5467 = vmatpush2.msra.mxu0 %v2400
        %5468 = vmatprep.subr.mxu0 %v2385
        %5469 = vmatpush2.msra.mxu0 %v2384
        %5470 = vmatprep.subr.mxu0 %v2369
        %5471 = vmatpush2.msra.mxu0 %v2368
        %5472 = vmatprep.subr.mxu0 %v2353
        %5473 = vmatpush2.msra.mxu0 %v2352
        %5474 = vmatprep.subr.mxu0 %v2337
        %5475 = vmatpush2.msra.mxu0 %v2336
        %5476 = vmatprep.subr.mxu0 %v2321
        %5477 = vmatpush2.msra.mxu0 %v2320
        %5478 = vmatprep.subr.mxu0 %v2305
        %5479 = vmatpush2.msra.mxu0 %v2304
        %5480 = vmatprep.subr.mxu0 %v2289
        %5481 = vmatpush2.msra.mxu0 %v2288
        %5482 = vmatprep.subr.mxu0 %v2273
        %5483 = vmatpush2.msra.mxu0 %v2272
        %5484 = vmatprep.subr.mxu0 %v2257
        %5485 = vmatpush2.msra.mxu0 %v2256
        %5486 = vmatprep.subr.mxu0 %v2241
        %5487 = vmatpush2.msra.mxu0 %v2240
        %5488 = vmatprep.subr.mxu0 %v2225
        %5489 = vmatpush2.msra.mxu0 %v2224
        %5490 = vmatprep.subr.mxu0 %v2209
        %5491 = vmatpush2.msra.mxu0 %v2208
        %5492 = vmatprep.mubr.f32.mxu0 %v5356
        %5493 = vmatmul.mubr.f32.gmra.mxu0 %v5355
        %v5494 = vpop.f32.mrf.mxu0
        %v5495 = vadd.f32 0.0, %v5494
        %v5496 = vpop.f32.mrf.mxu0
        %v5497 = vadd.f32 0.0, %v5496
        %5498 = vdwg.mxu0
        %5499 = vmatprep.subr.mxu0 %v2195
        %5500 = vmatpush1.msra.mxu0 %v2194
        %5501 = vmatprep.subr.mxu0 %v2179
        %5502 = vmatpush1.msra.mxu0 %v2178
        %5503 = vmatprep.subr.mxu0 %v2163
        %5504 = vmatpush1.msra.mxu0 %v2162
        %5505 = vmatprep.subr.mxu0 %v2147
        %5506 = vmatpush1.msra.mxu0 %v2146
        %5507 = vmatprep.subr.mxu0 %v2131
        %5508 = vmatpush1.msra.mxu0 %v2130
        %5509 = vmatprep.subr.mxu0 %v2115
        %5510 = vmatpush1.msra.mxu0 %v2114
        %5511 = vmatprep.subr.mxu0 %v2099
        %5512 = vmatpush1.msra.mxu0 %v2098
        %5513 = vmatprep.subr.mxu0 %v2083
        %5514 = vmatpush1.msra.mxu0 %v2082
        %5515 = vmatprep.subr.mxu0 %v2067
        %5516 = vmatpush1.msra.mxu0 %v2066
        %5517 = vmatprep.subr.mxu0 %v2051
        %5518 = vmatpush1.msra.mxu0 %v2050
        %5519 = vmatprep.subr.mxu0 %v2035
        %5520 = vmatpush1.msra.mxu0 %v2034
        %5521 = vmatprep.subr.mxu0 %v2019
        %5522 = vmatpush1.msra.mxu0 %v2018
        %5523 = vmatprep.subr.mxu0 %v2003
        %5524 = vmatpush1.msra.mxu0 %v2002
        %5525 = vmatprep.subr.mxu0 %v1987
        %5526 = vmatpush1.msra.mxu0 %v1986
        %5527 = vmatprep.subr.mxu0 %v1971
        %5528 = vmatpush1.msra.mxu0 %v1970
        %5529 = vmatprep.subr.mxu0 %v1955
        %5530 = vmatpush1.msra.mxu0 %v1954
        %5531 = vmatprep.subr.mxu0 %v2451
        %5532 = vmatpush2.msra.mxu0 %v2450
        %5533 = vmatprep.subr.mxu0 %v2435
        %5534 = vmatpush2.msra.mxu0 %v2434
        %5535 = vmatprep.subr.mxu0 %v2419
        %5536 = vmatpush2.msra.mxu0 %v2418
        %5537 = vmatprep.subr.mxu0 %v2403
        %5538 = vmatpush2.msra.mxu0 %v2402
        %5539 = vmatprep.subr.mxu0 %v2387
        %5540 = vmatpush2.msra.mxu0 %v2386
        %5541 = vmatprep.subr.mxu0 %v2371
        %5542 = vmatpush2.msra.mxu0 %v2370
        %5543 = vmatprep.subr.mxu0 %v2355
        %5544 = vmatpush2.msra.mxu0 %v2354
        %5545 = vmatprep.subr.mxu0 %v2339
        %5546 = vmatpush2.msra.mxu0 %v2338
        %5547 = vmatprep.subr.mxu0 %v2323
        %5548 = vmatpush2.msra.mxu0 %v2322
        %5549 = vmatprep.subr.mxu0 %v2307
        %5550 = vmatpush2.msra.mxu0 %v2306
        %5551 = vmatprep.subr.mxu0 %v2291
        %5552 = vmatpush2.msra.mxu0 %v2290
        %5553 = vmatprep.subr.mxu0 %v2275
        %5554 = vmatpush2.msra.mxu0 %v2274
        %5555 = vmatprep.subr.mxu0 %v2259
        %5556 = vmatpush2.msra.mxu0 %v2258
        %5557 = vmatprep.subr.mxu0 %v2243
        %5558 = vmatpush2.msra.mxu0 %v2242
        %5559 = vmatprep.subr.mxu0 %v2227
        %5560 = vmatpush2.msra.mxu0 %v2226
        %5561 = vmatprep.subr.mxu0 %v2211
        %5562 = vmatpush2.msra.mxu0 %v2210
        %5563 = vmatprep.mubr.f32.mxu0 %v5356
        %5564 = vmatmul.mubr.f32.gmra.mxu0 %v5355
        %v5565 = vpop.f32.mrf.mxu0
        %v5566 = vadd.f32 0.0, %v5565
        %v5567 = vpop.f32.mrf.mxu0
        %v5568 = vadd.f32 0.0, %v5567
        %5569 = vdwg.mxu0
        %5570 = vmatprep.subr.mxu0 %v2197
        %5571 = vmatpush1.msra.mxu0 %v2196
        %5572 = vmatprep.subr.mxu0 %v2181
        %5573 = vmatpush1.msra.mxu0 %v2180
        %5574 = vmatprep.subr.mxu0 %v2165
        %5575 = vmatpush1.msra.mxu0 %v2164
        %5576 = vmatprep.subr.mxu0 %v2149
        %5577 = vmatpush1.msra.mxu0 %v2148
        %5578 = vmatprep.subr.mxu0 %v2133
        %5579 = vmatpush1.msra.mxu0 %v2132
        %5580 = vmatprep.subr.mxu0 %v2117
        %5581 = vmatpush1.msra.mxu0 %v2116
        %5582 = vmatprep.subr.mxu0 %v2101
        %5583 = vmatpush1.msra.mxu0 %v2100
        %5584 = vmatprep.subr.mxu0 %v2085
        %5585 = vmatpush1.msra.mxu0 %v2084
        %5586 = vmatprep.subr.mxu0 %v2069
        %5587 = vmatpush1.msra.mxu0 %v2068
        %5588 = vmatprep.subr.mxu0 %v2053
        %5589 = vmatpush1.msra.mxu0 %v2052
        %5590 = vmatprep.subr.mxu0 %v2037
        %5591 = vmatpush1.msra.mxu0 %v2036
        %5592 = vmatprep.subr.mxu0 %v2021
        %5593 = vmatpush1.msra.mxu0 %v2020
        %5594 = vmatprep.subr.mxu0 %v2005
        %5595 = vmatpush1.msra.mxu0 %v2004
        %5596 = vmatprep.subr.mxu0 %v1989
        %5597 = vmatpush1.msra.mxu0 %v1988
        %5598 = vmatprep.subr.mxu0 %v1973
        %5599 = vmatpush1.msra.mxu0 %v1972
        %5600 = vmatprep.subr.mxu0 %v1957
        %5601 = vmatpush1.msra.mxu0 %v1956
        %5602 = vmatprep.subr.mxu0 %v2453
        %5603 = vmatpush2.msra.mxu0 %v2452
        %5604 = vmatprep.subr.mxu0 %v2437
        %5605 = vmatpush2.msra.mxu0 %v2436
        %5606 = vmatprep.subr.mxu0 %v2421
        %5607 = vmatpush2.msra.mxu0 %v2420
        %5608 = vmatprep.subr.mxu0 %v2405
        %5609 = vmatpush2.msra.mxu0 %v2404
        %5610 = vmatprep.subr.mxu0 %v2389
        %5611 = vmatpush2.msra.mxu0 %v2388
        %5612 = vmatprep.subr.mxu0 %v2373
        %5613 = vmatpush2.msra.mxu0 %v2372
        %5614 = vmatprep.subr.mxu0 %v2357
        %5615 = vmatpush2.msra.mxu0 %v2356
        %5616 = vmatprep.subr.mxu0 %v2341
        %5617 = vmatpush2.msra.mxu0 %v2340
        %5618 = vmatprep.subr.mxu0 %v2325
        %5619 = vmatpush2.msra.mxu0 %v2324
        %5620 = vmatprep.subr.mxu0 %v2309
        %5621 = vmatpush2.msra.mxu0 %v2308
        %5622 = vmatprep.subr.mxu0 %v2293
        %5623 = vmatpush2.msra.mxu0 %v2292
        %5624 = vmatprep.subr.mxu0 %v2277
        %5625 = vmatpush2.msra.mxu0 %v2276
        %5626 = vmatprep.subr.mxu0 %v2261
        %5627 = vmatpush2.msra.mxu0 %v2260
        %5628 = vmatprep.subr.mxu0 %v2245
        %5629 = vmatpush2.msra.mxu0 %v2244
        %5630 = vmatprep.subr.mxu0 %v2229
        %5631 = vmatpush2.msra.mxu0 %v2228
        %5632 = vmatprep.subr.mxu0 %v2213
        %5633 = vmatpush2.msra.mxu0 %v2212
        %5634 = vmatprep.mubr.f32.mxu0 %v5356
        %5635 = vmatmul.mubr.f32.gmra.mxu0 %v5355
        %v5636 = vpop.f32.mrf.mxu0
        %v5637 = vadd.f32 0.0, %v5636
        %v5638 = vpop.f32.mrf.mxu0
        %v5639 = vadd.f32 0.0, %v5638
        %5640 = vdwg.mxu0
        %5641 = vmatprep.subr.mxu0 %v2199
        %5642 = vmatpush1.msra.mxu0 %v2198
        %5643 = vmatprep.subr.mxu0 %v2183
        %5644 = vmatpush1.msra.mxu0 %v2182
        %5645 = vmatprep.subr.mxu0 %v2167
        %5646 = vmatpush1.msra.mxu0 %v2166
        %5647 = vmatprep.subr.mxu0 %v2151
        %5648 = vmatpush1.msra.mxu0 %v2150
        %5649 = vmatprep.subr.mxu0 %v2135
        %5650 = vmatpush1.msra.mxu0 %v2134
        %5651 = vmatprep.subr.mxu0 %v2119
        %5652 = vmatpush1.msra.mxu0 %v2118
        %5653 = vmatprep.subr.mxu0 %v2103
        %5654 = vmatpush1.msra.mxu0 %v2102
        %5655 = vmatprep.subr.mxu0 %v2087
        %5656 = vmatpush1.msra.mxu0 %v2086
        %5657 = vmatprep.subr.mxu0 %v2071
        %5658 = vmatpush1.msra.mxu0 %v2070
        %5659 = vmatprep.subr.mxu0 %v2055
        %5660 = vmatpush1.msra.mxu0 %v2054
        %5661 = vmatprep.subr.mxu0 %v2039
        %5662 = vmatpush1.msra.mxu0 %v2038
        %5663 = vmatprep.subr.mxu0 %v2023
        %5664 = vmatpush1.msra.mxu0 %v2022
        %5665 = vmatprep.subr.mxu0 %v2007
        %5666 = vmatpush1.msra.mxu0 %v2006
        %5667 = vmatprep.subr.mxu0 %v1991
        %5668 = vmatpush1.msra.mxu0 %v1990
        %5669 = vmatprep.subr.mxu0 %v1975
        %5670 = vmatpush1.msra.mxu0 %v1974
        %5671 = vmatprep.subr.mxu0 %v1959
        %5672 = vmatpush1.msra.mxu0 %v1958
        %5673 = vmatprep.subr.mxu0 %v2455
        %5674 = vmatpush2.msra.mxu0 %v2454
        %5675 = vmatprep.subr.mxu0 %v2439
        %5676 = vmatpush2.msra.mxu0 %v2438
        %5677 = vmatprep.subr.mxu0 %v2423
        %5678 = vmatpush2.msra.mxu0 %v2422
        %5679 = vmatprep.subr.mxu0 %v2407
        %5680 = vmatpush2.msra.mxu0 %v2406
        %5681 = vmatprep.subr.mxu0 %v2391
        %5682 = vmatpush2.msra.mxu0 %v2390
        %5683 = vmatprep.subr.mxu0 %v2375
        %5684 = vmatpush2.msra.mxu0 %v2374
        %5685 = vmatprep.subr.mxu0 %v2359
        %5686 = vmatpush2.msra.mxu0 %v2358
        %5687 = vmatprep.subr.mxu0 %v2343
        %5688 = vmatpush2.msra.mxu0 %v2342
        %5689 = vmatprep.subr.mxu0 %v2327
        %5690 = vmatpush2.msra.mxu0 %v2326
        %5691 = vmatprep.subr.mxu0 %v2311
        %5692 = vmatpush2.msra.mxu0 %v2310
        %5693 = vmatprep.subr.mxu0 %v2295
        %5694 = vmatpush2.msra.mxu0 %v2294
        %5695 = vmatprep.subr.mxu0 %v2279
        %5696 = vmatpush2.msra.mxu0 %v2278
        %5697 = vmatprep.subr.mxu0 %v2263
        %5698 = vmatpush2.msra.mxu0 %v2262
        %5699 = vmatprep.subr.mxu0 %v2247
        %5700 = vmatpush2.msra.mxu0 %v2246
        %5701 = vmatprep.subr.mxu0 %v2231
        %5702 = vmatpush2.msra.mxu0 %v2230
        %5703 = vmatprep.subr.mxu0 %v2215
        %5704 = vmatpush2.msra.mxu0 %v2214
        %5705 = vmatprep.mubr.f32.mxu0 %v5356
        %5706 = vmatmul.mubr.f32.gmra.mxu0 %v5355
        %v5707 = vpop.f32.mrf.mxu0
        %v5708 = vadd.f32 0.0, %v5707
        %v5709 = vpop.f32.mrf.mxu0
        %v5710 = vadd.f32 0.0, %v5709
        %5711 = vdwg.mxu0
        %5712 = vmatprep.subr.mxu0 %v2201
        %5713 = vmatpush1.msra.mxu0 %v2200
        %5714 = vmatprep.subr.mxu0 %v2185
        %5715 = vmatpush1.msra.mxu0 %v2184
        %5716 = vmatprep.subr.mxu0 %v2169
        %5717 = vmatpush1.msra.mxu0 %v2168
        %5718 = vmatprep.subr.mxu0 %v2153
        %5719 = vmatpush1.msra.mxu0 %v2152
        %5720 = vmatprep.subr.mxu0 %v2137
        %5721 = vmatpush1.msra.mxu0 %v2136
        %5722 = vmatprep.subr.mxu0 %v2121
        %5723 = vmatpush1.msra.mxu0 %v2120
        %5724 = vmatprep.subr.mxu0 %v2105
        %5725 = vmatpush1.msra.mxu0 %v2104
        %5726 = vmatprep.subr.mxu0 %v2089
        %5727 = vmatpush1.msra.mxu0 %v2088
        %5728 = vmatprep.subr.mxu0 %v2073
        %5729 = vmatpush1.msra.mxu0 %v2072
        %5730 = vmatprep.subr.mxu0 %v2057
        %5731 = vmatpush1.msra.mxu0 %v2056
        %5732 = vmatprep.subr.mxu0 %v2041
        %5733 = vmatpush1.msra.mxu0 %v2040
        %5734 = vmatprep.subr.mxu0 %v2025
        %5735 = vmatpush1.msra.mxu0 %v2024
        %5736 = vmatprep.subr.mxu0 %v2009
        %5737 = vmatpush1.msra.mxu0 %v2008
        %5738 = vmatprep.subr.mxu0 %v1993
        %5739 = vmatpush1.msra.mxu0 %v1992
        %5740 = vmatprep.subr.mxu0 %v1977
        %5741 = vmatpush1.msra.mxu0 %v1976
        %5742 = vmatprep.subr.mxu0 %v1961
        %5743 = vmatpush1.msra.mxu0 %v1960
        %5744 = vmatprep.subr.mxu0 %v2457
        %5745 = vmatpush2.msra.mxu0 %v2456
        %5746 = vmatprep.subr.mxu0 %v2441
        %5747 = vmatpush2.msra.mxu0 %v2440
        %5748 = vmatprep.subr.mxu0 %v2425
        %5749 = vmatpush2.msra.mxu0 %v2424
        %5750 = vmatprep.subr.mxu0 %v2409
        %5751 = vmatpush2.msra.mxu0 %v2408
        %5752 = vmatprep.subr.mxu0 %v2393
        %5753 = vmatpush2.msra.mxu0 %v2392
        %5754 = vmatprep.subr.mxu0 %v2377
        %5755 = vmatpush2.msra.mxu0 %v2376
        %5756 = vmatprep.subr.mxu0 %v2361
        %5757 = vmatpush2.msra.mxu0 %v2360
        %5758 = vmatprep.subr.mxu0 %v2345
        %5759 = vmatpush2.msra.mxu0 %v2344
        %5760 = vmatprep.subr.mxu0 %v2329
        %5761 = vmatpush2.msra.mxu0 %v2328
        %5762 = vmatprep.subr.mxu0 %v2313
        %5763 = vmatpush2.msra.mxu0 %v2312
        %5764 = vmatprep.subr.mxu0 %v2297
        %5765 = vmatpush2.msra.mxu0 %v2296
        %5766 = vmatprep.subr.mxu0 %v2281
        %5767 = vmatpush2.msra.mxu0 %v2280
        %5768 = vmatprep.subr.mxu0 %v2265
        %5769 = vmatpush2.msra.mxu0 %v2264
        %5770 = vmatprep.subr.mxu0 %v2249
        %5771 = vmatpush2.msra.mxu0 %v2248
        %5772 = vmatprep.subr.mxu0 %v2233
        %5773 = vmatpush2.msra.mxu0 %v2232
        %5774 = vmatprep.subr.mxu0 %v2217
        %5775 = vmatpush2.msra.mxu0 %v2216
        %5776 = vmatprep.mubr.f32.mxu0 %v5356
        %5777 = vmatmul.mubr.f32.gmra.mxu0 %v5355
        %v5778 = vpop.f32.mrf.mxu0
        %v5779 = vadd.f32 0.0, %v5778
        %v5780 = vpop.f32.mrf.mxu0
        %v5781 = vadd.f32 0.0, %v5780
        %5782 = vdwg.mxu0
        %5783 = vmatprep.subr.mxu0 %v2203
        %5784 = vmatpush1.msra.mxu0 %v2202
        %5785 = vmatprep.subr.mxu0 %v2187
        %5786 = vmatpush1.msra.mxu0 %v2186
        %5787 = vmatprep.subr.mxu0 %v2171
        %5788 = vmatpush1.msra.mxu0 %v2170
        %5789 = vmatprep.subr.mxu0 %v2155
        %5790 = vmatpush1.msra.mxu0 %v2154
        %5791 = vmatprep.subr.mxu0 %v2139
        %5792 = vmatpush1.msra.mxu0 %v2138
        %5793 = vmatprep.subr.mxu0 %v2123
        %5794 = vmatpush1.msra.mxu0 %v2122
        %5795 = vmatprep.subr.mxu0 %v2107
        %5796 = vmatpush1.msra.mxu0 %v2106
        %5797 = vmatprep.subr.mxu0 %v2091
        %5798 = vmatpush1.msra.mxu0 %v2090
        %5799 = vmatprep.subr.mxu0 %v2075
        %5800 = vmatpush1.msra.mxu0 %v2074
        %5801 = vmatprep.subr.mxu0 %v2059
        %5802 = vmatpush1.msra.mxu0 %v2058
        %5803 = vmatprep.subr.mxu0 %v2043
        %5804 = vmatpush1.msra.mxu0 %v2042
        %5805 = vmatprep.subr.mxu0 %v2027
        %5806 = vmatpush1.msra.mxu0 %v2026
        %5807 = vmatprep.subr.mxu0 %v2011
        %5808 = vmatpush1.msra.mxu0 %v2010
        %5809 = vmatprep.subr.mxu0 %v1995
        %5810 = vmatpush1.msra.mxu0 %v1994
        %5811 = vmatprep.subr.mxu0 %v1979
        %5812 = vmatpush1.msra.mxu0 %v1978
        %5813 = vmatprep.subr.mxu0 %v1963
        %5814 = vmatpush1.msra.mxu0 %v1962
        %5815 = vmatprep.subr.mxu0 %v2459
        %5816 = vmatpush2.msra.mxu0 %v2458
        %5817 = vmatprep.subr.mxu0 %v2443
        %5818 = vmatpush2.msra.mxu0 %v2442
        %5819 = vmatprep.subr.mxu0 %v2427
        %5820 = vmatpush2.msra.mxu0 %v2426
        %5821 = vmatprep.subr.mxu0 %v2411
        %5822 = vmatpush2.msra.mxu0 %v2410
        %5823 = vmatprep.subr.mxu0 %v2395
        %5824 = vmatpush2.msra.mxu0 %v2394
        %5825 = vmatprep.subr.mxu0 %v2379
        %5826 = vmatpush2.msra.mxu0 %v2378
        %5827 = vmatprep.subr.mxu0 %v2363
        %5828 = vmatpush2.msra.mxu0 %v2362
        %5829 = vmatprep.subr.mxu0 %v2347
        %5830 = vmatpush2.msra.mxu0 %v2346
        %5831 = vmatprep.subr.mxu0 %v2331
        %5832 = vmatpush2.msra.mxu0 %v2330
        %5833 = vmatprep.subr.mxu0 %v2315
        %5834 = vmatpush2.msra.mxu0 %v2314
        %5835 = vmatprep.subr.mxu0 %v2299
        %5836 = vmatpush2.msra.mxu0 %v2298
        %5837 = vmatprep.subr.mxu0 %v2283
        %5838 = vmatpush2.msra.mxu0 %v2282
        %5839 = vmatprep.subr.mxu0 %v2267
        %5840 = vmatpush2.msra.mxu0 %v2266
        %5841 = vmatprep.subr.mxu0 %v2251
        %5842 = vmatpush2.msra.mxu0 %v2250
        %5843 = vmatprep.subr.mxu0 %v2235
        %5844 = vmatpush2.msra.mxu0 %v2234
        %5845 = vmatprep.subr.mxu0 %v2219
        %5846 = vmatpush2.msra.mxu0 %v2218
        %5847 = vmatprep.mubr.f32.mxu0 %v5356
        %5848 = vmatmul.mubr.f32.gmra.mxu0 %v5355
        %v5849 = vpop.f32.mrf.mxu0
        %v5850 = vadd.f32 0.0, %v5849
        %v5851 = vpop.f32.mrf.mxu0
        %v5852 = vadd.f32 0.0, %v5851
        %5853 = vdwg.mxu0
        %5854 = vmatprep.subr.mxu0 %v2205
        %5855 = vmatpush1.msra.mxu0 %v2204
        %5856 = vmatprep.subr.mxu0 %v2189
        %5857 = vmatpush1.msra.mxu0 %v2188
        %5858 = vmatprep.subr.mxu0 %v2173
        %5859 = vmatpush1.msra.mxu0 %v2172
        %5860 = vmatprep.subr.mxu0 %v2157
        %5861 = vmatpush1.msra.mxu0 %v2156
        %5862 = vmatprep.subr.mxu0 %v2141
        %5863 = vmatpush1.msra.mxu0 %v2140
        %5864 = vmatprep.subr.mxu0 %v2125
        %5865 = vmatpush1.msra.mxu0 %v2124
        %5866 = vmatprep.subr.mxu0 %v2109
        %5867 = vmatpush1.msra.mxu0 %v2108
        %5868 = vmatprep.subr.mxu0 %v2093
        %5869 = vmatpush1.msra.mxu0 %v2092
        %5870 = vmatprep.subr.mxu0 %v2077
        %5871 = vmatpush1.msra.mxu0 %v2076
        %5872 = vmatprep.subr.mxu0 %v2061
        %5873 = vmatpush1.msra.mxu0 %v2060
        %5874 = vmatprep.subr.mxu0 %v2045
        %5875 = vmatpush1.msra.mxu0 %v2044
        %5876 = vmatprep.subr.mxu0 %v2029
        %5877 = vmatpush1.msra.mxu0 %v2028
        %5878 = vmatprep.subr.mxu0 %v2013
        %5879 = vmatpush1.msra.mxu0 %v2012
        %5880 = vmatprep.subr.mxu0 %v1997
        %5881 = vmatpush1.msra.mxu0 %v1996
        %5882 = vmatprep.subr.mxu0 %v1981
        %5883 = vmatpush1.msra.mxu0 %v1980
        %5884 = vmatprep.subr.mxu0 %v1965
        %5885 = vmatpush1.msra.mxu0 %v1964
        %5886 = vmatprep.subr.mxu0 %v2461
        %5887 = vmatpush2.msra.mxu0 %v2460
        %5888 = vmatprep.subr.mxu0 %v2445
        %5889 = vmatpush2.msra.mxu0 %v2444
        %5890 = vmatprep.subr.mxu0 %v2429
        %5891 = vmatpush2.msra.mxu0 %v2428
        %5892 = vmatprep.subr.mxu0 %v2413
        %5893 = vmatpush2.msra.mxu0 %v2412
        %5894 = vmatprep.subr.mxu0 %v2397
        %5895 = vmatpush2.msra.mxu0 %v2396
        %5896 = vmatprep.subr.mxu0 %v2381
        %5897 = vmatpush2.msra.mxu0 %v2380
        %5898 = vmatprep.subr.mxu0 %v2365
        %5899 = vmatpush2.msra.mxu0 %v2364
        %5900 = vmatprep.subr.mxu0 %v2349
        %5901 = vmatpush2.msra.mxu0 %v2348
        %5902 = vmatprep.subr.mxu0 %v2333
        %5903 = vmatpush2.msra.mxu0 %v2332
        %5904 = vmatprep.subr.mxu0 %v2317
        %5905 = vmatpush2.msra.mxu0 %v2316
        %5906 = vmatprep.subr.mxu0 %v2301
        %5907 = vmatpush2.msra.mxu0 %v2300
        %5908 = vmatprep.subr.mxu0 %v2285
        %5909 = vmatpush2.msra.mxu0 %v2284
        %5910 = vmatprep.subr.mxu0 %v2269
        %5911 = vmatpush2.msra.mxu0 %v2268
        %5912 = vmatprep.subr.mxu0 %v2253
        %5913 = vmatpush2.msra.mxu0 %v2252
        %5914 = vmatprep.subr.mxu0 %v2237
        %5915 = vmatpush2.msra.mxu0 %v2236
        %5916 = vmatprep.subr.mxu0 %v2221
        %5917 = vmatpush2.msra.mxu0 %v2220
        %5918 = vmatprep.mubr.f32.mxu0 %v5356
        %5919 = vmatmul.mubr.f32.gmra.mxu0 %v5355
        %v5920 = vpop.f32.mrf.mxu0
        %v5921 = vadd.f32 0.0, %v5920
        %v5922 = vpop.f32.mrf.mxu0
        %v5923 = vadd.f32 0.0, %v5922
        %5924 = vdwg.mxu0
        %5925 = vmatprep.subr.mxu0 %v3271
        %5926 = vmatpush1.msra.mxu0 %v3270
        %5927 = vmatprep.subr.mxu0 %v3255
        %5928 = vmatpush1.msra.mxu0 %v3254
        %5929 = vmatprep.subr.mxu0 %v3239
        %5930 = vmatpush1.msra.mxu0 %v3238
        %5931 = vmatprep.subr.mxu0 %v3223
        %5932 = vmatpush1.msra.mxu0 %v3222
        %5933 = vmatprep.subr.mxu0 %v3207
        %5934 = vmatpush1.msra.mxu0 %v3206
        %5935 = vmatprep.subr.mxu0 %v3191
        %5936 = vmatpush1.msra.mxu0 %v3190
        %5937 = vmatprep.subr.mxu0 %v3175
        %5938 = vmatpush1.msra.mxu0 %v3174
        %5939 = vmatprep.subr.mxu0 %v3159
        %5940 = vmatpush1.msra.mxu0 %v3158
        %5941 = vmatprep.subr.mxu0 %v3143
        %5942 = vmatpush1.msra.mxu0 %v3142
        %5943 = vmatprep.subr.mxu0 %v3127
        %5944 = vmatpush1.msra.mxu0 %v3126
        %5945 = vmatprep.subr.mxu0 %v3111
        %5946 = vmatpush1.msra.mxu0 %v3110
        %5947 = vmatprep.subr.mxu0 %v3095
        %5948 = vmatpush1.msra.mxu0 %v3094
        %5949 = vmatprep.subr.mxu0 %v3079
        %5950 = vmatpush1.msra.mxu0 %v3078
        %5951 = vmatprep.subr.mxu0 %v3063
        %5952 = vmatpush1.msra.mxu0 %v3062
        %5953 = vmatprep.subr.mxu0 %v3047
        %5954 = vmatpush1.msra.mxu0 %v3046
        %5955 = vmatprep.subr.mxu0 %v3031
        %5956 = vmatpush1.msra.mxu0 %v3030
        %5957 = vmatprep.subr.mxu0 %v3527
        %5958 = vmatpush2.msra.mxu0 %v3526
        %5959 = vmatprep.subr.mxu0 %v3511
        %5960 = vmatpush2.msra.mxu0 %v3510
        %5961 = vmatprep.subr.mxu0 %v3495
        %5962 = vmatpush2.msra.mxu0 %v3494
        %5963 = vmatprep.subr.mxu0 %v3479
        %5964 = vmatpush2.msra.mxu0 %v3478
        %5965 = vmatprep.subr.mxu0 %v3463
        %5966 = vmatpush2.msra.mxu0 %v3462
        %5967 = vmatprep.subr.mxu0 %v3447
        %5968 = vmatpush2.msra.mxu0 %v3446
        %5969 = vmatprep.subr.mxu0 %v3431
        %5970 = vmatpush2.msra.mxu0 %v3430
        %5971 = vmatprep.subr.mxu0 %v3415
        %5972 = vmatpush2.msra.mxu0 %v3414
        %5973 = vmatprep.subr.mxu0 %v3399
        %5974 = vmatpush2.msra.mxu0 %v3398
        %5975 = vmatprep.subr.mxu0 %v3383
        %5976 = vmatpush2.msra.mxu0 %v3382
        %5977 = vmatprep.subr.mxu0 %v3367
        %5978 = vmatpush2.msra.mxu0 %v3366
        %5979 = vmatprep.subr.mxu0 %v3351
        %5980 = vmatpush2.msra.mxu0 %v3350
        %5981 = vmatprep.subr.mxu0 %v3335
        %5982 = vmatpush2.msra.mxu0 %v3334
        %5983 = vmatprep.subr.mxu0 %v3319
        %5984 = vmatpush2.msra.mxu0 %v3318
        %5985 = vmatprep.subr.mxu0 %v3303
        %5986 = vmatpush2.msra.mxu0 %v3302
        %5987 = vmatprep.subr.mxu0 %v3287
        %5988 = vmatpush2.msra.mxu0 %v3286
        %5989 = vmatprep.mubr.f32.mxu0 %v1948
        %5990 = vmatmul.mubr.f32.gmra.mxu0 %v1946
        %v5991 = vpop.f32.mrf.mxu0
        %v5992 = vadd.f32 0.0, %v5991
        %v5993 = vpop.f32.mrf.mxu0
        %v5994 = vadd.f32 0.0, %v5993
        %5995 = vdwg.mxu0
        %5996 = vmatprep.subr.mxu0 %v3273
        %5997 = vmatpush1.msra.mxu0 %v3272
        %5998 = vmatprep.subr.mxu0 %v3257
        %5999 = vmatpush1.msra.mxu0 %v3256
        %6000 = vmatprep.subr.mxu0 %v3241
        %6001 = vmatpush1.msra.mxu0 %v3240
        %6002 = vmatprep.subr.mxu0 %v3225
        %6003 = vmatpush1.msra.mxu0 %v3224
        %6004 = vmatprep.subr.mxu0 %v3209
        %6005 = vmatpush1.msra.mxu0 %v3208
        %6006 = vmatprep.subr.mxu0 %v3193
        %6007 = vmatpush1.msra.mxu0 %v3192
        %6008 = vmatprep.subr.mxu0 %v3177
        %6009 = vmatpush1.msra.mxu0 %v3176
        %6010 = vmatprep.subr.mxu0 %v3161
        %6011 = vmatpush1.msra.mxu0 %v3160
        %6012 = vmatprep.subr.mxu0 %v3145
        %6013 = vmatpush1.msra.mxu0 %v3144
        %6014 = vmatprep.subr.mxu0 %v3129
        %6015 = vmatpush1.msra.mxu0 %v3128
        %6016 = vmatprep.subr.mxu0 %v3113
        %6017 = vmatpush1.msra.mxu0 %v3112
        %6018 = vmatprep.subr.mxu0 %v3097
        %6019 = vmatpush1.msra.mxu0 %v3096
        %6020 = vmatprep.subr.mxu0 %v3081
        %6021 = vmatpush1.msra.mxu0 %v3080
        %6022 = vmatprep.subr.mxu0 %v3065
        %6023 = vmatpush1.msra.mxu0 %v3064
        %6024 = vmatprep.subr.mxu0 %v3049
        %6025 = vmatpush1.msra.mxu0 %v3048
        %6026 = vmatprep.subr.mxu0 %v3033
        %6027 = vmatpush1.msra.mxu0 %v3032
        %6028 = vmatprep.subr.mxu0 %v3529
        %6029 = vmatpush2.msra.mxu0 %v3528
        %6030 = vmatprep.subr.mxu0 %v3513
        %6031 = vmatpush2.msra.mxu0 %v3512
        %6032 = vmatprep.subr.mxu0 %v3497
        %6033 = vmatpush2.msra.mxu0 %v3496
        %6034 = vmatprep.subr.mxu0 %v3481
        %6035 = vmatpush2.msra.mxu0 %v3480
        %6036 = vmatprep.subr.mxu0 %v3465
        %6037 = vmatpush2.msra.mxu0 %v3464
        %6038 = vmatprep.subr.mxu0 %v3449
        %6039 = vmatpush2.msra.mxu0 %v3448
        %6040 = vmatprep.subr.mxu0 %v3433
        %6041 = vmatpush2.msra.mxu0 %v3432
        %6042 = vmatprep.subr.mxu0 %v3417
        %6043 = vmatpush2.msra.mxu0 %v3416
        %6044 = vmatprep.subr.mxu0 %v3401
        %6045 = vmatpush2.msra.mxu0 %v3400
        %6046 = vmatprep.subr.mxu0 %v3385
        %6047 = vmatpush2.msra.mxu0 %v3384
        %6048 = vmatprep.subr.mxu0 %v3369
        %6049 = vmatpush2.msra.mxu0 %v3368
        %6050 = vmatprep.subr.mxu0 %v3353
        %6051 = vmatpush2.msra.mxu0 %v3352
        %6052 = vmatprep.subr.mxu0 %v3337
        %6053 = vmatpush2.msra.mxu0 %v3336
        %6054 = vmatprep.subr.mxu0 %v3321
        %6055 = vmatpush2.msra.mxu0 %v3320
        %6056 = vmatprep.subr.mxu0 %v3305
        %6057 = vmatpush2.msra.mxu0 %v3304
        %6058 = vmatprep.subr.mxu0 %v3289
        %6059 = vmatpush2.msra.mxu0 %v3288
        %6060 = vmatprep.mubr.f32.mxu0 %v1948
        %6061 = vmatmul.mubr.f32.gmra.mxu0 %v1946
        %v6062 = vpop.f32.mrf.mxu0
        %v6063 = vadd.f32 0.0, %v6062
        %v6064 = vpop.f32.mrf.mxu0
        %v6065 = vadd.f32 0.0, %v6064
        %6066 = vdwg.mxu0
        %6067 = vmatprep.subr.mxu0 %v3275
        %6068 = vmatpush1.msra.mxu0 %v3274
        %6069 = vmatprep.subr.mxu0 %v3259
        %6070 = vmatpush1.msra.mxu0 %v3258
        %6071 = vmatprep.subr.mxu0 %v3243
        %6072 = vmatpush1.msra.mxu0 %v3242
        %6073 = vmatprep.subr.mxu0 %v3227
        %6074 = vmatpush1.msra.mxu0 %v3226
        %6075 = vmatprep.subr.mxu0 %v3211
        %6076 = vmatpush1.msra.mxu0 %v3210
        %6077 = vmatprep.subr.mxu0 %v3195
        %6078 = vmatpush1.msra.mxu0 %v3194
        %6079 = vmatprep.subr.mxu0 %v3179
        %6080 = vmatpush1.msra.mxu0 %v3178
        %6081 = vmatprep.subr.mxu0 %v3163
        %6082 = vmatpush1.msra.mxu0 %v3162
        %6083 = vmatprep.subr.mxu0 %v3147
        %6084 = vmatpush1.msra.mxu0 %v3146
        %6085 = vmatprep.subr.mxu0 %v3131
        %6086 = vmatpush1.msra.mxu0 %v3130
        %6087 = vmatprep.subr.mxu0 %v3115
        %6088 = vmatpush1.msra.mxu0 %v3114
        %6089 = vmatprep.subr.mxu0 %v3099
        %6090 = vmatpush1.msra.mxu0 %v3098
        %6091 = vmatprep.subr.mxu0 %v3083
        %6092 = vmatpush1.msra.mxu0 %v3082
        %6093 = vmatprep.subr.mxu0 %v3067
        %6094 = vmatpush1.msra.mxu0 %v3066
        %6095 = vmatprep.subr.mxu0 %v3051
        %6096 = vmatpush1.msra.mxu0 %v3050
        %6097 = vmatprep.subr.mxu0 %v3035
        %6098 = vmatpush1.msra.mxu0 %v3034
        %6099 = vmatprep.subr.mxu0 %v3531
        %6100 = vmatpush2.msra.mxu0 %v3530
        %6101 = vmatprep.subr.mxu0 %v3515
        %6102 = vmatpush2.msra.mxu0 %v3514
        %6103 = vmatprep.subr.mxu0 %v3499
        %6104 = vmatpush2.msra.mxu0 %v3498
        %6105 = vmatprep.subr.mxu0 %v3483
        %6106 = vmatpush2.msra.mxu0 %v3482
        %6107 = vmatprep.subr.mxu0 %v3467
        %6108 = vmatpush2.msra.mxu0 %v3466
        %6109 = vmatprep.subr.mxu0 %v3451
        %6110 = vmatpush2.msra.mxu0 %v3450
        %6111 = vmatprep.subr.mxu0 %v3435
        %6112 = vmatpush2.msra.mxu0 %v3434
        %6113 = vmatprep.subr.mxu0 %v3419
        %6114 = vmatpush2.msra.mxu0 %v3418
        %6115 = vmatprep.subr.mxu0 %v3403
        %6116 = vmatpush2.msra.mxu0 %v3402
        %6117 = vmatprep.subr.mxu0 %v3387
        %6118 = vmatpush2.msra.mxu0 %v3386
        %6119 = vmatprep.subr.mxu0 %v3371
        %6120 = vmatpush2.msra.mxu0 %v3370
        %6121 = vmatprep.subr.mxu0 %v3355
        %6122 = vmatpush2.msra.mxu0 %v3354
        %6123 = vmatprep.subr.mxu0 %v3339
        %6124 = vmatpush2.msra.mxu0 %v3338
        %6125 = vmatprep.subr.mxu0 %v3323
        %6126 = vmatpush2.msra.mxu0 %v3322
        %6127 = vmatprep.subr.mxu0 %v3307
        %6128 = vmatpush2.msra.mxu0 %v3306
        %6129 = vmatprep.subr.mxu0 %v3291
        %6130 = vmatpush2.msra.mxu0 %v3290
        %6131 = vmatprep.mubr.f32.mxu0 %v1948
        %6132 = vmatmul.mubr.f32.gmra.mxu0 %v1946
        %v6133 = vpop.f32.mrf.mxu0
        %v6134 = vadd.f32 0.0, %v6133
        %v6135 = vpop.f32.mrf.mxu0
        %v6136 = vadd.f32 0.0, %v6135
        %6137 = vdwg.mxu0
        %6138 = vmatprep.subr.mxu0 %v3277
        %6139 = vmatpush1.msra.mxu0 %v3276
        %6140 = vmatprep.subr.mxu0 %v3261
        %6141 = vmatpush1.msra.mxu0 %v3260
        %6142 = vmatprep.subr.mxu0 %v3245
        %6143 = vmatpush1.msra.mxu0 %v3244
        %6144 = vmatprep.subr.mxu0 %v3229
        %6145 = vmatpush1.msra.mxu0 %v3228
        %6146 = vmatprep.subr.mxu0 %v3213
        %6147 = vmatpush1.msra.mxu0 %v3212
        %6148 = vmatprep.subr.mxu0 %v3197
        %6149 = vmatpush1.msra.mxu0 %v3196
        %6150 = vmatprep.subr.mxu0 %v3181
        %6151 = vmatpush1.msra.mxu0 %v3180
        %6152 = vmatprep.subr.mxu0 %v3165
        %6153 = vmatpush1.msra.mxu0 %v3164
        %6154 = vmatprep.subr.mxu0 %v3149
        %6155 = vmatpush1.msra.mxu0 %v3148
        %6156 = vmatprep.subr.mxu0 %v3133
        %6157 = vmatpush1.msra.mxu0 %v3132
        %6158 = vmatprep.subr.mxu0 %v3117
        %6159 = vmatpush1.msra.mxu0 %v3116
        %6160 = vmatprep.subr.mxu0 %v3101
        %6161 = vmatpush1.msra.mxu0 %v3100
        %6162 = vmatprep.subr.mxu0 %v3085
        %6163 = vmatpush1.msra.mxu0 %v3084
        %6164 = vmatprep.subr.mxu0 %v3069
        %6165 = vmatpush1.msra.mxu0 %v3068
        %6166 = vmatprep.subr.mxu0 %v3053
        %6167 = vmatpush1.msra.mxu0 %v3052
        %6168 = vmatprep.subr.mxu0 %v3037
        %6169 = vmatpush1.msra.mxu0 %v3036
        %6170 = vmatprep.subr.mxu0 %v3533
        %6171 = vmatpush2.msra.mxu0 %v3532
        %6172 = vmatprep.subr.mxu0 %v3517
        %6173 = vmatpush2.msra.mxu0 %v3516
        %6174 = vmatprep.subr.mxu0 %v3501
        %6175 = vmatpush2.msra.mxu0 %v3500
        %6176 = vmatprep.subr.mxu0 %v3485
        %6177 = vmatpush2.msra.mxu0 %v3484
        %6178 = vmatprep.subr.mxu0 %v3469
        %6179 = vmatpush2.msra.mxu0 %v3468
        %6180 = vmatprep.subr.mxu0 %v3453
        %6181 = vmatpush2.msra.mxu0 %v3452
        %6182 = vmatprep.subr.mxu0 %v3437
        %6183 = vmatpush2.msra.mxu0 %v3436
        %6184 = vmatprep.subr.mxu0 %v3421
        %6185 = vmatpush2.msra.mxu0 %v3420
        %6186 = vmatprep.subr.mxu0 %v3405
        %6187 = vmatpush2.msra.mxu0 %v3404
        %6188 = vmatprep.subr.mxu0 %v3389
        %6189 = vmatpush2.msra.mxu0 %v3388
        %6190 = vmatprep.subr.mxu0 %v3373
        %6191 = vmatpush2.msra.mxu0 %v3372
        %6192 = vmatprep.subr.mxu0 %v3357
        %6193 = vmatpush2.msra.mxu0 %v3356
        %6194 = vmatprep.subr.mxu0 %v3341
        %6195 = vmatpush2.msra.mxu0 %v3340
        %6196 = vmatprep.subr.mxu0 %v3325
        %6197 = vmatpush2.msra.mxu0 %v3324
        %6198 = vmatprep.subr.mxu0 %v3309
        %6199 = vmatpush2.msra.mxu0 %v3308
        %6200 = vmatprep.subr.mxu0 %v3293
        %6201 = vmatpush2.msra.mxu0 %v3292
        %6202 = vmatprep.mubr.f32.mxu0 %v1948
        %6203 = vmatmul.mubr.f32.gmra.mxu0 %v1946
        %v6204 = vpop.f32.mrf.mxu0
        %v6205 = vadd.f32 0.0, %v6204
        %v6206 = vpop.f32.mrf.mxu0
        %v6207 = vadd.f32 0.0, %v6206
        %6208 = vdwg.mxu0
        %6209 = vmatprep.subr.mxu0 %v3279
        %6210 = vmatpush1.msra.mxu0 %v3278
        %6211 = vmatprep.subr.mxu0 %v3263
        %6212 = vmatpush1.msra.mxu0 %v3262
        %6213 = vmatprep.subr.mxu0 %v3247
        %6214 = vmatpush1.msra.mxu0 %v3246
        %6215 = vmatprep.subr.mxu0 %v3231
        %6216 = vmatpush1.msra.mxu0 %v3230
        %6217 = vmatprep.subr.mxu0 %v3215
        %6218 = vmatpush1.msra.mxu0 %v3214
        %6219 = vmatprep.subr.mxu0 %v3199
        %6220 = vmatpush1.msra.mxu0 %v3198
        %6221 = vmatprep.subr.mxu0 %v3183
        %6222 = vmatpush1.msra.mxu0 %v3182
        %6223 = vmatprep.subr.mxu0 %v3167
        %6224 = vmatpush1.msra.mxu0 %v3166
        %6225 = vmatprep.subr.mxu0 %v3151
        %6226 = vmatpush1.msra.mxu0 %v3150
        %6227 = vmatprep.subr.mxu0 %v3135
        %6228 = vmatpush1.msra.mxu0 %v3134
        %6229 = vmatprep.subr.mxu0 %v3119
        %6230 = vmatpush1.msra.mxu0 %v3118
        %6231 = vmatprep.subr.mxu0 %v3103
        %6232 = vmatpush1.msra.mxu0 %v3102
        %6233 = vmatprep.subr.mxu0 %v3087
        %6234 = vmatpush1.msra.mxu0 %v3086
        %6235 = vmatprep.subr.mxu0 %v3071
        %6236 = vmatpush1.msra.mxu0 %v3070
        %6237 = vmatprep.subr.mxu0 %v3055
        %6238 = vmatpush1.msra.mxu0 %v3054
        %6239 = vmatprep.subr.mxu0 %v3039
        %6240 = vmatpush1.msra.mxu0 %v3038
        %6241 = vmatprep.subr.mxu0 %v3535
        %6242 = vmatpush2.msra.mxu0 %v3534
        %6243 = vmatprep.subr.mxu0 %v3519
        %6244 = vmatpush2.msra.mxu0 %v3518
        %6245 = vmatprep.subr.mxu0 %v3503
        %6246 = vmatpush2.msra.mxu0 %v3502
        %6247 = vmatprep.subr.mxu0 %v3487
        %6248 = vmatpush2.msra.mxu0 %v3486
        %6249 = vmatprep.subr.mxu0 %v3471
        %6250 = vmatpush2.msra.mxu0 %v3470
        %6251 = vmatprep.subr.mxu0 %v3455
        %6252 = vmatpush2.msra.mxu0 %v3454
        %6253 = vmatprep.subr.mxu0 %v3439
        %6254 = vmatpush2.msra.mxu0 %v3438
        %6255 = vmatprep.subr.mxu0 %v3423
        %6256 = vmatpush2.msra.mxu0 %v3422
        %6257 = vmatprep.subr.mxu0 %v3407
        %6258 = vmatpush2.msra.mxu0 %v3406
        %6259 = vmatprep.subr.mxu0 %v3391
        %6260 = vmatpush2.msra.mxu0 %v3390
        %6261 = vmatprep.subr.mxu0 %v3375
        %6262 = vmatpush2.msra.mxu0 %v3374
        %6263 = vmatprep.subr.mxu0 %v3359
        %6264 = vmatpush2.msra.mxu0 %v3358
        %6265 = vmatprep.subr.mxu0 %v3343
        %6266 = vmatpush2.msra.mxu0 %v3342
        %6267 = vmatprep.subr.mxu0 %v3327
        %6268 = vmatpush2.msra.mxu0 %v3326
        %6269 = vmatprep.subr.mxu0 %v3311
        %6270 = vmatpush2.msra.mxu0 %v3310
        %6271 = vmatprep.subr.mxu0 %v3295
        %6272 = vmatpush2.msra.mxu0 %v3294
        %6273 = vmatprep.mubr.f32.mxu0 %v1948
        %6274 = vmatmul.mubr.f32.gmra.mxu0 %v1946
        %v6275 = vpop.f32.mrf.mxu0
        %v6276 = vadd.f32 0.0, %v6275
        %v6277 = vpop.f32.mrf.mxu0
        %v6278 = vadd.f32 0.0, %v6277
        %6279 = vdwg.mxu0
        %6280 = vmatprep.subr.mxu0 %v3281
        %6281 = vmatpush1.msra.mxu0 %v3280
        %6282 = vmatprep.subr.mxu0 %v3265
        %6283 = vmatpush1.msra.mxu0 %v3264
        %6284 = vmatprep.subr.mxu0 %v3249
        %6285 = vmatpush1.msra.mxu0 %v3248
        %6286 = vmatprep.subr.mxu0 %v3233
        %6287 = vmatpush1.msra.mxu0 %v3232
        %6288 = vmatprep.subr.mxu0 %v3217
        %6289 = vmatpush1.msra.mxu0 %v3216
        %6290 = vmatprep.subr.mxu0 %v3201
        %6291 = vmatpush1.msra.mxu0 %v3200
        %6292 = vmatprep.subr.mxu0 %v3185
        %6293 = vmatpush1.msra.mxu0 %v3184
        %6294 = vmatprep.subr.mxu0 %v3169
        %6295 = vmatpush1.msra.mxu0 %v3168
        %6296 = vmatprep.subr.mxu0 %v3153
        %6297 = vmatpush1.msra.mxu0 %v3152
        %6298 = vmatprep.subr.mxu0 %v3137
        %6299 = vmatpush1.msra.mxu0 %v3136
        %6300 = vmatprep.subr.mxu0 %v3121
        %6301 = vmatpush1.msra.mxu0 %v3120
        %6302 = vmatprep.subr.mxu0 %v3105
        %6303 = vmatpush1.msra.mxu0 %v3104
        %6304 = vmatprep.subr.mxu0 %v3089
        %6305 = vmatpush1.msra.mxu0 %v3088
        %6306 = vmatprep.subr.mxu0 %v3073
        %6307 = vmatpush1.msra.mxu0 %v3072
        %6308 = vmatprep.subr.mxu0 %v3057
        %6309 = vmatpush1.msra.mxu0 %v3056
        %6310 = vmatprep.subr.mxu0 %v3041
        %6311 = vmatpush1.msra.mxu0 %v3040
        %6312 = vmatprep.subr.mxu0 %v3537
        %6313 = vmatpush2.msra.mxu0 %v3536
        %6314 = vmatprep.subr.mxu0 %v3521
        %6315 = vmatpush2.msra.mxu0 %v3520
        %6316 = vmatprep.subr.mxu0 %v3505
        %6317 = vmatpush2.msra.mxu0 %v3504
        %6318 = vmatprep.subr.mxu0 %v3489
        %6319 = vmatpush2.msra.mxu0 %v3488
        %6320 = vmatprep.subr.mxu0 %v3473
        %6321 = vmatpush2.msra.mxu0 %v3472
        %6322 = vmatprep.subr.mxu0 %v3457
        %6323 = vmatpush2.msra.mxu0 %v3456
        %6324 = vmatprep.subr.mxu0 %v3441
        %6325 = vmatpush2.msra.mxu0 %v3440
        %6326 = vmatprep.subr.mxu0 %v3425
        %6327 = vmatpush2.msra.mxu0 %v3424
        %6328 = vmatprep.subr.mxu0 %v3409
        %6329 = vmatpush2.msra.mxu0 %v3408
        %6330 = vmatprep.subr.mxu0 %v3393
        %6331 = vmatpush2.msra.mxu0 %v3392
        %6332 = vmatprep.subr.mxu0 %v3377
        %6333 = vmatpush2.msra.mxu0 %v3376
        %6334 = vmatprep.subr.mxu0 %v3361
        %6335 = vmatpush2.msra.mxu0 %v3360
        %6336 = vmatprep.subr.mxu0 %v3345
        %6337 = vmatpush2.msra.mxu0 %v3344
        %6338 = vmatprep.subr.mxu0 %v3329
        %6339 = vmatpush2.msra.mxu0 %v3328
        %6340 = vmatprep.subr.mxu0 %v3313
        %6341 = vmatpush2.msra.mxu0 %v3312
        %6342 = vmatprep.subr.mxu0 %v3297
        %6343 = vmatpush2.msra.mxu0 %v3296
        %6344 = vmatprep.mubr.f32.mxu0 %v1948
        %6345 = vmatmul.mubr.f32.gmra.mxu0 %v1946
        %v6346 = vpop.f32.mrf.mxu0
        %v6347 = vadd.f32 0.0, %v6346
        %v6348 = vpop.f32.mrf.mxu0
        %v6349 = vadd.f32 0.0, %v6348
        %6350 = vdwg.mxu0
        %6351 = vmatprep.subr.mxu0 %v3283
        %6352 = vmatpush1.msra.mxu0 %v3282
        %6353 = vmatprep.subr.mxu0 %v3267
        %6354 = vmatpush1.msra.mxu0 %v3266
        %6355 = vmatprep.subr.mxu0 %v3251
        %6356 = vmatpush1.msra.mxu0 %v3250
        %6357 = vmatprep.subr.mxu0 %v3235
        %6358 = vmatpush1.msra.mxu0 %v3234
        %6359 = vmatprep.subr.mxu0 %v3219
        %6360 = vmatpush1.msra.mxu0 %v3218
        %6361 = vmatprep.subr.mxu0 %v3203
        %6362 = vmatpush1.msra.mxu0 %v3202
        %6363 = vmatprep.subr.mxu0 %v3187
        %6364 = vmatpush1.msra.mxu0 %v3186
        %6365 = vmatprep.subr.mxu0 %v3171
        %6366 = vmatpush1.msra.mxu0 %v3170
        %6367 = vmatprep.subr.mxu0 %v3155
        %6368 = vmatpush1.msra.mxu0 %v3154
        %6369 = vmatprep.subr.mxu0 %v3139
        %6370 = vmatpush1.msra.mxu0 %v3138
        %6371 = vmatprep.subr.mxu0 %v3123
        %6372 = vmatpush1.msra.mxu0 %v3122
        %6373 = vmatprep.subr.mxu0 %v3107
        %6374 = vmatpush1.msra.mxu0 %v3106
        %6375 = vmatprep.subr.mxu0 %v3091
        %6376 = vmatpush1.msra.mxu0 %v3090
        %6377 = vmatprep.subr.mxu0 %v3075
        %6378 = vmatpush1.msra.mxu0 %v3074
        %6379 = vmatprep.subr.mxu0 %v3059
        %6380 = vmatpush1.msra.mxu0 %v3058
        %6381 = vmatprep.subr.mxu0 %v3043
        %6382 = vmatpush1.msra.mxu0 %v3042
        %6383 = vmatprep.subr.mxu0 %v3539
        %6384 = vmatpush2.msra.mxu0 %v3538
        %6385 = vmatprep.subr.mxu0 %v3523
        %6386 = vmatpush2.msra.mxu0 %v3522
        %6387 = vmatprep.subr.mxu0 %v3507
        %6388 = vmatpush2.msra.mxu0 %v3506
        %6389 = vmatprep.subr.mxu0 %v3491
        %6390 = vmatpush2.msra.mxu0 %v3490
        %6391 = vmatprep.subr.mxu0 %v3475
        %6392 = vmatpush2.msra.mxu0 %v3474
        %6393 = vmatprep.subr.mxu0 %v3459
        %6394 = vmatpush2.msra.mxu0 %v3458
        %6395 = vmatprep.subr.mxu0 %v3443
        %6396 = vmatpush2.msra.mxu0 %v3442
        %6397 = vmatprep.subr.mxu0 %v3427
        %6398 = vmatpush2.msra.mxu0 %v3426
        %6399 = vmatprep.subr.mxu0 %v3411
        %6400 = vmatpush2.msra.mxu0 %v3410
        %6401 = vmatprep.subr.mxu0 %v3395
        %6402 = vmatpush2.msra.mxu0 %v3394
        %6403 = vmatprep.subr.mxu0 %v3379
        %6404 = vmatpush2.msra.mxu0 %v3378
        %6405 = vmatprep.subr.mxu0 %v3363
        %6406 = vmatpush2.msra.mxu0 %v3362
        %6407 = vmatprep.subr.mxu0 %v3347
        %6408 = vmatpush2.msra.mxu0 %v3346
        %6409 = vmatprep.subr.mxu0 %v3331
        %6410 = vmatpush2.msra.mxu0 %v3330
        %6411 = vmatprep.subr.mxu0 %v3315
        %6412 = vmatpush2.msra.mxu0 %v3314
        %6413 = vmatprep.subr.mxu0 %v3299
        %6414 = vmatpush2.msra.mxu0 %v3298
        %6415 = vmatprep.mubr.f32.mxu0 %v1948
        %6416 = vmatmul.mubr.f32.gmra.mxu0 %v1946
        %v6417 = vpop.f32.mrf.mxu0
        %v6418 = vadd.f32 0.0, %v6417
        %v6419 = vpop.f32.mrf.mxu0
        %v6420 = vadd.f32 0.0, %v6419
        %6421 = vdwg.mxu0
        %6422 = vmatprep.subr.mxu0 %v3285
        %6423 = vmatpush1.msra.mxu0 %v3284
        %6424 = vmatprep.subr.mxu0 %v3269
        %6425 = vmatpush1.msra.mxu0 %v3268
        %6426 = vmatprep.subr.mxu0 %v3253
        %6427 = vmatpush1.msra.mxu0 %v3252
        %6428 = vmatprep.subr.mxu0 %v3237
        %6429 = vmatpush1.msra.mxu0 %v3236
        %6430 = vmatprep.subr.mxu0 %v3221
        %6431 = vmatpush1.msra.mxu0 %v3220
        %6432 = vmatprep.subr.mxu0 %v3205
        %6433 = vmatpush1.msra.mxu0 %v3204
        %6434 = vmatprep.subr.mxu0 %v3189
        %6435 = vmatpush1.msra.mxu0 %v3188
        %6436 = vmatprep.subr.mxu0 %v3173
        %6437 = vmatpush1.msra.mxu0 %v3172
        %6438 = vmatprep.subr.mxu0 %v3157
        %6439 = vmatpush1.msra.mxu0 %v3156
        %6440 = vmatprep.subr.mxu0 %v3141
        %6441 = vmatpush1.msra.mxu0 %v3140
        %6442 = vmatprep.subr.mxu0 %v3125
        %6443 = vmatpush1.msra.mxu0 %v3124
        %6444 = vmatprep.subr.mxu0 %v3109
        %6445 = vmatpush1.msra.mxu0 %v3108
        %6446 = vmatprep.subr.mxu0 %v3093
        %6447 = vmatpush1.msra.mxu0 %v3092
        %6448 = vmatprep.subr.mxu0 %v3077
        %6449 = vmatpush1.msra.mxu0 %v3076
        %6450 = vmatprep.subr.mxu0 %v3061
        %6451 = vmatpush1.msra.mxu0 %v3060
        %6452 = vmatprep.subr.mxu0 %v3045
        %6453 = vmatpush1.msra.mxu0 %v3044
        %6454 = vmatprep.subr.mxu0 %v3541
        %6455 = vmatpush2.msra.mxu0 %v3540
        %6456 = vmatprep.subr.mxu0 %v3525
        %6457 = vmatpush2.msra.mxu0 %v3524
        %6458 = vmatprep.subr.mxu0 %v3509
        %6459 = vmatpush2.msra.mxu0 %v3508
        %6460 = vmatprep.subr.mxu0 %v3493
        %6461 = vmatpush2.msra.mxu0 %v3492
        %6462 = vmatprep.subr.mxu0 %v3477
        %6463 = vmatpush2.msra.mxu0 %v3476
        %6464 = vmatprep.subr.mxu0 %v3461
        %6465 = vmatpush2.msra.mxu0 %v3460
        %6466 = vmatprep.subr.mxu0 %v3445
        %6467 = vmatpush2.msra.mxu0 %v3444
        %6468 = vmatprep.subr.mxu0 %v3429
        %6469 = vmatpush2.msra.mxu0 %v3428
        %6470 = vmatprep.subr.mxu0 %v3413
        %6471 = vmatpush2.msra.mxu0 %v3412
        %6472 = vmatprep.subr.mxu0 %v3397
        %6473 = vmatpush2.msra.mxu0 %v3396
        %6474 = vmatprep.subr.mxu0 %v3381
        %6475 = vmatpush2.msra.mxu0 %v3380
        %6476 = vmatprep.subr.mxu0 %v3365
        %6477 = vmatpush2.msra.mxu0 %v3364
        %6478 = vmatprep.subr.mxu0 %v3349
        %6479 = vmatpush2.msra.mxu0 %v3348
        %6480 = vmatprep.subr.mxu0 %v3333
        %6481 = vmatpush2.msra.mxu0 %v3332
        %6482 = vmatprep.subr.mxu0 %v3317
        %6483 = vmatpush2.msra.mxu0 %v3316
        %6484 = vmatprep.subr.mxu0 %v3301
        %6485 = vmatpush2.msra.mxu0 %v3300
        %6486 = vmatprep.mubr.f32.mxu0 %v1948
        %6487 = vmatmul.mubr.f32.gmra.mxu0 %v1946
        %v6488 = vpop.f32.mrf.mxu0
        %v6489 = vadd.f32 0.0, %v6488
        %v6490 = vpop.f32.mrf.mxu0
        %v6491 = vadd.f32 0.0, %v6490
        %6492 = vdwg.mxu0
        %v6493 = vmul.f32 %v5424, %v5992
        %v6494 = vmul.f32 %v5426, %v5994
        %v6495 = vmul.f32 %v5495, %v6063
        %v6496 = vmul.f32 %v5497, %v6065
        %v6497 = vmul.f32 %v5566, %v6134
        %v6498 = vmul.f32 %v5568, %v6136
        %v6499 = vmul.f32 %v5637, %v6205
        %v6500 = vmul.f32 %v5639, %v6207
        %v6501 = vmul.f32 %v5708, %v6276
        %v6502 = vmul.f32 %v5710, %v6278
        %v6503 = vmul.f32 %v5779, %v6347
        %v6504 = vmul.f32 %v5781, %v6349
        %v6505 = vmul.f32 %v5850, %v6418
        %v6506 = vmul.f32 %v5852, %v6420
        %v6507 = vmul.f32 %v5921, %v6489
        %v6508 = vmul.f32 %v5923, %v6491
        %6509 = vmatprep.subr.mxu0 %v4157
        %6510 = vmatpush1.msra.mxu0 %v4156
        %6511 = vmatprep.subr.mxu0 %v4155
        %6512 = vmatpush1.msra.mxu0 %v4154
        %6513 = vmatprep.subr.mxu0 %v4153
        %6514 = vmatpush1.msra.mxu0 %v4152
        %6515 = vmatprep.subr.mxu0 %v4151
        %6516 = vmatpush1.msra.mxu0 %v4150
        %6517 = vmatprep.subr.mxu0 %v4149
        %6518 = vmatpush1.msra.mxu0 %v4148
        %6519 = vmatprep.subr.mxu0 %v4147
        %6520 = vmatpush1.msra.mxu0 %v4146
        %6521 = vmatprep.subr.mxu0 %v4145
        %6522 = vmatpush1.msra.mxu0 %v4144
        %6523 = vmatprep.subr.mxu0 %v4143
        %6524 = vmatpush1.msra.mxu0 %v4142
        %6525 = vmatprep.subr.mxu0 %v4141
        %6526 = vmatpush1.msra.mxu0 %v4140
        %6527 = vmatprep.subr.mxu0 %v4139
        %6528 = vmatpush1.msra.mxu0 %v4138
        %6529 = vmatprep.subr.mxu0 %v4137
        %6530 = vmatpush1.msra.mxu0 %v4136
        %6531 = vmatprep.subr.mxu0 %v4135
        %6532 = vmatpush1.msra.mxu0 %v4134
        %6533 = vmatprep.subr.mxu0 %v4133
        %6534 = vmatpush1.msra.mxu0 %v4132
        %6535 = vmatprep.subr.mxu0 %v4131
        %6536 = vmatpush1.msra.mxu0 %v4130
        %6537 = vmatprep.subr.mxu0 %v4129
        %6538 = vmatpush1.msra.mxu0 %v4128
        %6539 = vmatprep.subr.mxu0 %v4127
        %6540 = vmatpush1.msra.mxu0 %v4126
        %6541 = vmatprep.subr.mxu0 %v4189
        %6542 = vmatpush2.msra.mxu0 %v4188
        %6543 = vmatprep.subr.mxu0 %v4187
        %6544 = vmatpush2.msra.mxu0 %v4186
        %6545 = vmatprep.subr.mxu0 %v4185
        %6546 = vmatpush2.msra.mxu0 %v4184
        %6547 = vmatprep.subr.mxu0 %v4183
        %6548 = vmatpush2.msra.mxu0 %v4182
        %6549 = vmatprep.subr.mxu0 %v4181
        %6550 = vmatpush2.msra.mxu0 %v4180
        %6551 = vmatprep.subr.mxu0 %v4179
        %6552 = vmatpush2.msra.mxu0 %v4178
        %6553 = vmatprep.subr.mxu0 %v4177
        %6554 = vmatpush2.msra.mxu0 %v4176
        %6555 = vmatprep.subr.mxu0 %v4175
        %6556 = vmatpush2.msra.mxu0 %v4174
        %6557 = vmatprep.subr.mxu0 %v4173
        %6558 = vmatpush2.msra.mxu0 %v4172
        %6559 = vmatprep.subr.mxu0 %v4171
        %6560 = vmatpush2.msra.mxu0 %v4170
        %6561 = vmatprep.subr.mxu0 %v4169
        %6562 = vmatpush2.msra.mxu0 %v4168
        %6563 = vmatprep.subr.mxu0 %v4167
        %6564 = vmatpush2.msra.mxu0 %v4166
        %6565 = vmatprep.subr.mxu0 %v4165
        %6566 = vmatpush2.msra.mxu0 %v4164
        %6567 = vmatprep.subr.mxu0 %v4163
        %6568 = vmatpush2.msra.mxu0 %v4162
        %6569 = vmatprep.subr.mxu0 %v4161
        %6570 = vmatpush2.msra.mxu0 %v4160
        %6571 = vmatprep.subr.mxu0 %v4159
        %6572 = vmatpush2.msra.mxu0 %v4158
        %6573 = vmatprep.mubr.f32.mxu0 %v6494
        %6574 = vmatmul.mubr.f32.gmra.mxu0 %v6493
        %v6575 = vpop.f32.mrf.mxu0
        %v6576 = vadd.f32 0.0, %v6575
        %v6577 = vpop.f32.mrf.mxu0
        %v6578 = vadd.f32 0.0, %v6577
        %6579 = vdwg.mxu0
        %6580 = vmatprep.subr.mxu0 %v4221
        %6581 = vmatpush1.msra.mxu0 %v4220
        %6582 = vmatprep.subr.mxu0 %v4219
        %6583 = vmatpush1.msra.mxu0 %v4218
        %6584 = vmatprep.subr.mxu0 %v4217
        %6585 = vmatpush1.msra.mxu0 %v4216
        %6586 = vmatprep.subr.mxu0 %v4215
        %6587 = vmatpush1.msra.mxu0 %v4214
        %6588 = vmatprep.subr.mxu0 %v4213
        %6589 = vmatpush1.msra.mxu0 %v4212
        %6590 = vmatprep.subr.mxu0 %v4211
        %6591 = vmatpush1.msra.mxu0 %v4210
        %6592 = vmatprep.subr.mxu0 %v4209
        %6593 = vmatpush1.msra.mxu0 %v4208
        %6594 = vmatprep.subr.mxu0 %v4207
        %6595 = vmatpush1.msra.mxu0 %v4206
        %6596 = vmatprep.subr.mxu0 %v4205
        %6597 = vmatpush1.msra.mxu0 %v4204
        %6598 = vmatprep.subr.mxu0 %v4203
        %6599 = vmatpush1.msra.mxu0 %v4202
        %6600 = vmatprep.subr.mxu0 %v4201
        %6601 = vmatpush1.msra.mxu0 %v4200
        %6602 = vmatprep.subr.mxu0 %v4199
        %6603 = vmatpush1.msra.mxu0 %v4198
        %6604 = vmatprep.subr.mxu0 %v4197
        %6605 = vmatpush1.msra.mxu0 %v4196
        %6606 = vmatprep.subr.mxu0 %v4195
        %6607 = vmatpush1.msra.mxu0 %v4194
        %6608 = vmatprep.subr.mxu0 %v4193
        %6609 = vmatpush1.msra.mxu0 %v4192
        %6610 = vmatprep.subr.mxu0 %v4191
        %6611 = vmatpush1.msra.mxu0 %v4190
        %6612 = vmatprep.subr.mxu0 %v4253
        %6613 = vmatpush2.msra.mxu0 %v4252
        %6614 = vmatprep.subr.mxu0 %v4251
        %6615 = vmatpush2.msra.mxu0 %v4250
        %6616 = vmatprep.subr.mxu0 %v4249
        %6617 = vmatpush2.msra.mxu0 %v4248
        %6618 = vmatprep.subr.mxu0 %v4247
        %6619 = vmatpush2.msra.mxu0 %v4246
        %6620 = vmatprep.subr.mxu0 %v4245
        %6621 = vmatpush2.msra.mxu0 %v4244
        %6622 = vmatprep.subr.mxu0 %v4243
        %6623 = vmatpush2.msra.mxu0 %v4242
        %6624 = vmatprep.subr.mxu0 %v4241
        %6625 = vmatpush2.msra.mxu0 %v4240
        %6626 = vmatprep.subr.mxu0 %v4239
        %6627 = vmatpush2.msra.mxu0 %v4238
        %6628 = vmatprep.subr.mxu0 %v4237
        %6629 = vmatpush2.msra.mxu0 %v4236
        %6630 = vmatprep.subr.mxu0 %v4235
        %6631 = vmatpush2.msra.mxu0 %v4234
        %6632 = vmatprep.subr.mxu0 %v4233
        %6633 = vmatpush2.msra.mxu0 %v4232
        %6634 = vmatprep.subr.mxu0 %v4231
        %6635 = vmatpush2.msra.mxu0 %v4230
        %6636 = vmatprep.subr.mxu0 %v4229
        %6637 = vmatpush2.msra.mxu0 %v4228
        %6638 = vmatprep.subr.mxu0 %v4227
        %6639 = vmatpush2.msra.mxu0 %v4226
        %6640 = vmatprep.subr.mxu0 %v4225
        %6641 = vmatpush2.msra.mxu0 %v4224
        %6642 = vmatprep.subr.mxu0 %v4223
        %6643 = vmatpush2.msra.mxu0 %v4222
        %6644 = vmatprep.mubr.f32.mxu0 %v6496
        %6645 = vmatmul.mubr.f32.gmra.mxu0 %v6495
        %v6646 = vpop.f32.mrf.mxu0
        %v6647 = vadd.f32 %v6576, %v6646
        %v6648 = vpop.f32.mrf.mxu0
        %v6649 = vadd.f32 %v6578, %v6648
        %6650 = vdwg.mxu0
        %6651 = vmatprep.subr.mxu0 %v4285
        %6652 = vmatpush1.msra.mxu0 %v4284
        %6653 = vmatprep.subr.mxu0 %v4283
        %6654 = vmatpush1.msra.mxu0 %v4282
        %6655 = vmatprep.subr.mxu0 %v4281
        %6656 = vmatpush1.msra.mxu0 %v4280
        %6657 = vmatprep.subr.mxu0 %v4279
        %6658 = vmatpush1.msra.mxu0 %v4278
        %6659 = vmatprep.subr.mxu0 %v4277
        %6660 = vmatpush1.msra.mxu0 %v4276
        %6661 = vmatprep.subr.mxu0 %v4275
        %6662 = vmatpush1.msra.mxu0 %v4274
        %6663 = vmatprep.subr.mxu0 %v4273
        %6664 = vmatpush1.msra.mxu0 %v4272
        %6665 = vmatprep.subr.mxu0 %v4271
        %6666 = vmatpush1.msra.mxu0 %v4270
        %6667 = vmatprep.subr.mxu0 %v4269
        %6668 = vmatpush1.msra.mxu0 %v4268
        %6669 = vmatprep.subr.mxu0 %v4267
        %6670 = vmatpush1.msra.mxu0 %v4266
        %6671 = vmatprep.subr.mxu0 %v4265
        %6672 = vmatpush1.msra.mxu0 %v4264
        %6673 = vmatprep.subr.mxu0 %v4263
        %6674 = vmatpush1.msra.mxu0 %v4262
        %6675 = vmatprep.subr.mxu0 %v4261
        %6676 = vmatpush1.msra.mxu0 %v4260
        %6677 = vmatprep.subr.mxu0 %v4259
        %6678 = vmatpush1.msra.mxu0 %v4258
        %6679 = vmatprep.subr.mxu0 %v4257
        %6680 = vmatpush1.msra.mxu0 %v4256
        %6681 = vmatprep.subr.mxu0 %v4255
        %6682 = vmatpush1.msra.mxu0 %v4254
        %6683 = vmatprep.subr.mxu0 %v4317
        %6684 = vmatpush2.msra.mxu0 %v4316
        %6685 = vmatprep.subr.mxu0 %v4315
        %6686 = vmatpush2.msra.mxu0 %v4314
        %6687 = vmatprep.subr.mxu0 %v4313
        %6688 = vmatpush2.msra.mxu0 %v4312
        %6689 = vmatprep.subr.mxu0 %v4311
        %6690 = vmatpush2.msra.mxu0 %v4310
        %6691 = vmatprep.subr.mxu0 %v4309
        %6692 = vmatpush2.msra.mxu0 %v4308
        %6693 = vmatprep.subr.mxu0 %v4307
        %6694 = vmatpush2.msra.mxu0 %v4306
        %6695 = vmatprep.subr.mxu0 %v4305
        %6696 = vmatpush2.msra.mxu0 %v4304
        %6697 = vmatprep.subr.mxu0 %v4303
        %6698 = vmatpush2.msra.mxu0 %v4302
        %6699 = vmatprep.subr.mxu0 %v4301
        %6700 = vmatpush2.msra.mxu0 %v4300
        %6701 = vmatprep.subr.mxu0 %v4299
        %6702 = vmatpush2.msra.mxu0 %v4298
        %6703 = vmatprep.subr.mxu0 %v4297
        %6704 = vmatpush2.msra.mxu0 %v4296
        %6705 = vmatprep.subr.mxu0 %v4295
        %6706 = vmatpush2.msra.mxu0 %v4294
        %6707 = vmatprep.subr.mxu0 %v4293
        %6708 = vmatpush2.msra.mxu0 %v4292
        %6709 = vmatprep.subr.mxu0 %v4291
        %6710 = vmatpush2.msra.mxu0 %v4290
        %6711 = vmatprep.subr.mxu0 %v4289
        %6712 = vmatpush2.msra.mxu0 %v4288
        %6713 = vmatprep.subr.mxu0 %v4287
        %6714 = vmatpush2.msra.mxu0 %v4286
        %6715 = vmatprep.mubr.f32.mxu0 %v6498
        %6716 = vmatmul.mubr.f32.gmra.mxu0 %v6497
        %v6717 = vpop.f32.mrf.mxu0
        %v6718 = vadd.f32 %v6647, %v6717
        %v6719 = vpop.f32.mrf.mxu0
        %v6720 = vadd.f32 %v6649, %v6719
        %6721 = vdwg.mxu0
        %6722 = vmatprep.subr.mxu0 %v4349
        %6723 = vmatpush1.msra.mxu0 %v4348
        %6724 = vmatprep.subr.mxu0 %v4347
        %6725 = vmatpush1.msra.mxu0 %v4346
        %6726 = vmatprep.subr.mxu0 %v4345
        %6727 = vmatpush1.msra.mxu0 %v4344
        %6728 = vmatprep.subr.mxu0 %v4343
        %6729 = vmatpush1.msra.mxu0 %v4342
        %6730 = vmatprep.subr.mxu0 %v4341
        %6731 = vmatpush1.msra.mxu0 %v4340
        %6732 = vmatprep.subr.mxu0 %v4339
        %6733 = vmatpush1.msra.mxu0 %v4338
        %6734 = vmatprep.subr.mxu0 %v4337
        %6735 = vmatpush1.msra.mxu0 %v4336
        %6736 = vmatprep.subr.mxu0 %v4335
        %6737 = vmatpush1.msra.mxu0 %v4334
        %6738 = vmatprep.subr.mxu0 %v4333
        %6739 = vmatpush1.msra.mxu0 %v4332
        %6740 = vmatprep.subr.mxu0 %v4331
        %6741 = vmatpush1.msra.mxu0 %v4330
        %6742 = vmatprep.subr.mxu0 %v4329
        %6743 = vmatpush1.msra.mxu0 %v4328
        %6744 = vmatprep.subr.mxu0 %v4327
        %6745 = vmatpush1.msra.mxu0 %v4326
        %6746 = vmatprep.subr.mxu0 %v4325
        %6747 = vmatpush1.msra.mxu0 %v4324
        %6748 = vmatprep.subr.mxu0 %v4323
        %6749 = vmatpush1.msra.mxu0 %v4322
        %6750 = vmatprep.subr.mxu0 %v4321
        %6751 = vmatpush1.msra.mxu0 %v4320
        %6752 = vmatprep.subr.mxu0 %v4319
        %6753 = vmatpush1.msra.mxu0 %v4318
        %6754 = vmatprep.subr.mxu0 %v4381
        %6755 = vmatpush2.msra.mxu0 %v4380
        %6756 = vmatprep.subr.mxu0 %v4379
        %6757 = vmatpush2.msra.mxu0 %v4378
        %6758 = vmatprep.subr.mxu0 %v4377
        %6759 = vmatpush2.msra.mxu0 %v4376
        %6760 = vmatprep.subr.mxu0 %v4375
        %6761 = vmatpush2.msra.mxu0 %v4374
        %6762 = vmatprep.subr.mxu0 %v4373
        %6763 = vmatpush2.msra.mxu0 %v4372
        %6764 = vmatprep.subr.mxu0 %v4371
        %6765 = vmatpush2.msra.mxu0 %v4370
        %6766 = vmatprep.subr.mxu0 %v4369
        %6767 = vmatpush2.msra.mxu0 %v4368
        %6768 = vmatprep.subr.mxu0 %v4367
        %6769 = vmatpush2.msra.mxu0 %v4366
        %6770 = vmatprep.subr.mxu0 %v4365
        %6771 = vmatpush2.msra.mxu0 %v4364
        %6772 = vmatprep.subr.mxu0 %v4363
        %6773 = vmatpush2.msra.mxu0 %v4362
        %6774 = vmatprep.subr.mxu0 %v4361
        %6775 = vmatpush2.msra.mxu0 %v4360
        %6776 = vmatprep.subr.mxu0 %v4359
        %6777 = vmatpush2.msra.mxu0 %v4358
        %6778 = vmatprep.subr.mxu0 %v4357
        %6779 = vmatpush2.msra.mxu0 %v4356
        %6780 = vmatprep.subr.mxu0 %v4355
        %6781 = vmatpush2.msra.mxu0 %v4354
        %6782 = vmatprep.subr.mxu0 %v4353
        %6783 = vmatpush2.msra.mxu0 %v4352
        %6784 = vmatprep.subr.mxu0 %v4351
        %6785 = vmatpush2.msra.mxu0 %v4350
        %6786 = vmatprep.mubr.f32.mxu0 %v6500
        %6787 = vmatmul.mubr.f32.gmra.mxu0 %v6499
        %v6788 = vpop.f32.mrf.mxu0
        %v6789 = vadd.f32 %v6718, %v6788
        %v6790 = vpop.f32.mrf.mxu0
        %v6791 = vadd.f32 %v6720, %v6790
        %6792 = vdwg.mxu0
        %6793 = vmatprep.subr.mxu0 %v4413
        %6794 = vmatpush1.msra.mxu0 %v4412
        %6795 = vmatprep.subr.mxu0 %v4411
        %6796 = vmatpush1.msra.mxu0 %v4410
        %6797 = vmatprep.subr.mxu0 %v4409
        %6798 = vmatpush1.msra.mxu0 %v4408
        %6799 = vmatprep.subr.mxu0 %v4407
        %6800 = vmatpush1.msra.mxu0 %v4406
        %6801 = vmatprep.subr.mxu0 %v4405
        %6802 = vmatpush1.msra.mxu0 %v4404
        %6803 = vmatprep.subr.mxu0 %v4403
        %6804 = vmatpush1.msra.mxu0 %v4402
        %6805 = vmatprep.subr.mxu0 %v4401
        %6806 = vmatpush1.msra.mxu0 %v4400
        %6807 = vmatprep.subr.mxu0 %v4399
        %6808 = vmatpush1.msra.mxu0 %v4398
        %6809 = vmatprep.subr.mxu0 %v4397
        %6810 = vmatpush1.msra.mxu0 %v4396
        %6811 = vmatprep.subr.mxu0 %v4395
        %6812 = vmatpush1.msra.mxu0 %v4394
        %6813 = vmatprep.subr.mxu0 %v4393
        %6814 = vmatpush1.msra.mxu0 %v4392
        %6815 = vmatprep.subr.mxu0 %v4391
        %6816 = vmatpush1.msra.mxu0 %v4390
        %6817 = vmatprep.subr.mxu0 %v4389
        %6818 = vmatpush1.msra.mxu0 %v4388
        %6819 = vmatprep.subr.mxu0 %v4387
        %6820 = vmatpush1.msra.mxu0 %v4386
        %6821 = vmatprep.subr.mxu0 %v4385
        %6822 = vmatpush1.msra.mxu0 %v4384
        %6823 = vmatprep.subr.mxu0 %v4383
        %6824 = vmatpush1.msra.mxu0 %v4382
        %6825 = vmatprep.subr.mxu0 %v4445
        %6826 = vmatpush2.msra.mxu0 %v4444
        %6827 = vmatprep.subr.mxu0 %v4443
        %6828 = vmatpush2.msra.mxu0 %v4442
        %6829 = vmatprep.subr.mxu0 %v4441
        %6830 = vmatpush2.msra.mxu0 %v4440
        %6831 = vmatprep.subr.mxu0 %v4439
        %6832 = vmatpush2.msra.mxu0 %v4438
        %6833 = vmatprep.subr.mxu0 %v4437
        %6834 = vmatpush2.msra.mxu0 %v4436
        %6835 = vmatprep.subr.mxu0 %v4435
        %6836 = vmatpush2.msra.mxu0 %v4434
        %6837 = vmatprep.subr.mxu0 %v4433
        %6838 = vmatpush2.msra.mxu0 %v4432
        %6839 = vmatprep.subr.mxu0 %v4431
        %6840 = vmatpush2.msra.mxu0 %v4430
        %6841 = vmatprep.subr.mxu0 %v4429
        %6842 = vmatpush2.msra.mxu0 %v4428
        %6843 = vmatprep.subr.mxu0 %v4427
        %6844 = vmatpush2.msra.mxu0 %v4426
        %6845 = vmatprep.subr.mxu0 %v4425
        %6846 = vmatpush2.msra.mxu0 %v4424
        %6847 = vmatprep.subr.mxu0 %v4423
        %6848 = vmatpush2.msra.mxu0 %v4422
        %6849 = vmatprep.subr.mxu0 %v4421
        %6850 = vmatpush2.msra.mxu0 %v4420
        %6851 = vmatprep.subr.mxu0 %v4419
        %6852 = vmatpush2.msra.mxu0 %v4418
        %6853 = vmatprep.subr.mxu0 %v4417
        %6854 = vmatpush2.msra.mxu0 %v4416
        %6855 = vmatprep.subr.mxu0 %v4415
        %6856 = vmatpush2.msra.mxu0 %v4414
        %6857 = vmatprep.mubr.f32.mxu0 %v6502
        %6858 = vmatmul.mubr.f32.gmra.mxu0 %v6501
        %v6859 = vpop.f32.mrf.mxu0
        %v6860 = vadd.f32 %v6789, %v6859
        %v6861 = vpop.f32.mrf.mxu0
        %v6862 = vadd.f32 %v6791, %v6861
        %6863 = vdwg.mxu0
        %6864 = vmatprep.subr.mxu0 %v4477
        %6865 = vmatpush1.msra.mxu0 %v4476
        %6866 = vmatprep.subr.mxu0 %v4475
        %6867 = vmatpush1.msra.mxu0 %v4474
        %6868 = vmatprep.subr.mxu0 %v4473
        %6869 = vmatpush1.msra.mxu0 %v4472
        %6870 = vmatprep.subr.mxu0 %v4471
        %6871 = vmatpush1.msra.mxu0 %v4470
        %6872 = vmatprep.subr.mxu0 %v4469
        %6873 = vmatpush1.msra.mxu0 %v4468
        %6874 = vmatprep.subr.mxu0 %v4467
        %6875 = vmatpush1.msra.mxu0 %v4466
        %6876 = vmatprep.subr.mxu0 %v4465
        %6877 = vmatpush1.msra.mxu0 %v4464
        %6878 = vmatprep.subr.mxu0 %v4463
        %6879 = vmatpush1.msra.mxu0 %v4462
        %6880 = vmatprep.subr.mxu0 %v4461
        %6881 = vmatpush1.msra.mxu0 %v4460
        %6882 = vmatprep.subr.mxu0 %v4459
        %6883 = vmatpush1.msra.mxu0 %v4458
        %6884 = vmatprep.subr.mxu0 %v4457
        %6885 = vmatpush1.msra.mxu0 %v4456
        %6886 = vmatprep.subr.mxu0 %v4455
        %6887 = vmatpush1.msra.mxu0 %v4454
        %6888 = vmatprep.subr.mxu0 %v4453
        %6889 = vmatpush1.msra.mxu0 %v4452
        %6890 = vmatprep.subr.mxu0 %v4451
        %6891 = vmatpush1.msra.mxu0 %v4450
        %6892 = vmatprep.subr.mxu0 %v4449
        %6893 = vmatpush1.msra.mxu0 %v4448
        %6894 = vmatprep.subr.mxu0 %v4447
        %6895 = vmatpush1.msra.mxu0 %v4446
        %6896 = vmatprep.subr.mxu0 %v4509
        %6897 = vmatpush2.msra.mxu0 %v4508
        %6898 = vmatprep.subr.mxu0 %v4507
        %6899 = vmatpush2.msra.mxu0 %v4506
        %6900 = vmatprep.subr.mxu0 %v4505
        %6901 = vmatpush2.msra.mxu0 %v4504
        %6902 = vmatprep.subr.mxu0 %v4503
        %6903 = vmatpush2.msra.mxu0 %v4502
        %6904 = vmatprep.subr.mxu0 %v4501
        %6905 = vmatpush2.msra.mxu0 %v4500
        %6906 = vmatprep.subr.mxu0 %v4499
        %6907 = vmatpush2.msra.mxu0 %v4498
        %6908 = vmatprep.subr.mxu0 %v4497
        %6909 = vmatpush2.msra.mxu0 %v4496
        %6910 = vmatprep.subr.mxu0 %v4495
        %6911 = vmatpush2.msra.mxu0 %v4494
        %6912 = vmatprep.subr.mxu0 %v4493
        %6913 = vmatpush2.msra.mxu0 %v4492
        %6914 = vmatprep.subr.mxu0 %v4491
        %6915 = vmatpush2.msra.mxu0 %v4490
        %6916 = vmatprep.subr.mxu0 %v4489
        %6917 = vmatpush2.msra.mxu0 %v4488
        %6918 = vmatprep.subr.mxu0 %v4487
        %6919 = vmatpush2.msra.mxu0 %v4486
        %6920 = vmatprep.subr.mxu0 %v4485
        %6921 = vmatpush2.msra.mxu0 %v4484
        %6922 = vmatprep.subr.mxu0 %v4483
        %6923 = vmatpush2.msra.mxu0 %v4482
        %6924 = vmatprep.subr.mxu0 %v4481
        %6925 = vmatpush2.msra.mxu0 %v4480
        %6926 = vmatprep.subr.mxu0 %v4479
        %6927 = vmatpush2.msra.mxu0 %v4478
        %6928 = vmatprep.mubr.f32.mxu0 %v6504
        %6929 = vmatmul.mubr.f32.gmra.mxu0 %v6503
        %v6930 = vpop.f32.mrf.mxu0
        %v6931 = vadd.f32 %v6860, %v6930
        %v6932 = vpop.f32.mrf.mxu0
        %v6933 = vadd.f32 %v6862, %v6932
        %6934 = vdwg.mxu0
        %6935 = vmatprep.subr.mxu0 %v4541
        %6936 = vmatpush1.msra.mxu0 %v4540
        %6937 = vmatprep.subr.mxu0 %v4539
        %6938 = vmatpush1.msra.mxu0 %v4538
        %6939 = vmatprep.subr.mxu0 %v4537
        %6940 = vmatpush1.msra.mxu0 %v4536
        %6941 = vmatprep.subr.mxu0 %v4535
        %6942 = vmatpush1.msra.mxu0 %v4534
        %6943 = vmatprep.subr.mxu0 %v4533
        %6944 = vmatpush1.msra.mxu0 %v4532
        %6945 = vmatprep.subr.mxu0 %v4531
        %6946 = vmatpush1.msra.mxu0 %v4530
        %6947 = vmatprep.subr.mxu0 %v4529
        %6948 = vmatpush1.msra.mxu0 %v4528
        %6949 = vmatprep.subr.mxu0 %v4527
        %6950 = vmatpush1.msra.mxu0 %v4526
        %6951 = vmatprep.subr.mxu0 %v4525
        %6952 = vmatpush1.msra.mxu0 %v4524
        %6953 = vmatprep.subr.mxu0 %v4523
        %6954 = vmatpush1.msra.mxu0 %v4522
        %6955 = vmatprep.subr.mxu0 %v4521
        %6956 = vmatpush1.msra.mxu0 %v4520
        %6957 = vmatprep.subr.mxu0 %v4519
        %6958 = vmatpush1.msra.mxu0 %v4518
        %6959 = vmatprep.subr.mxu0 %v4517
        %6960 = vmatpush1.msra.mxu0 %v4516
        %6961 = vmatprep.subr.mxu0 %v4515
        %6962 = vmatpush1.msra.mxu0 %v4514
        %6963 = vmatprep.subr.mxu0 %v4513
        %6964 = vmatpush1.msra.mxu0 %v4512
        %6965 = vmatprep.subr.mxu0 %v4511
        %6966 = vmatpush1.msra.mxu0 %v4510
        %6967 = vmatprep.subr.mxu0 %v4573
        %6968 = vmatpush2.msra.mxu0 %v4572
        %6969 = vmatprep.subr.mxu0 %v4571
        %6970 = vmatpush2.msra.mxu0 %v4570
        %6971 = vmatprep.subr.mxu0 %v4569
        %6972 = vmatpush2.msra.mxu0 %v4568
        %6973 = vmatprep.subr.mxu0 %v4567
        %6974 = vmatpush2.msra.mxu0 %v4566
        %6975 = vmatprep.subr.mxu0 %v4565
        %6976 = vmatpush2.msra.mxu0 %v4564
        %6977 = vmatprep.subr.mxu0 %v4563
        %6978 = vmatpush2.msra.mxu0 %v4562
        %6979 = vmatprep.subr.mxu0 %v4561
        %6980 = vmatpush2.msra.mxu0 %v4560
        %6981 = vmatprep.subr.mxu0 %v4559
        %6982 = vmatpush2.msra.mxu0 %v4558
        %6983 = vmatprep.subr.mxu0 %v4557
        %6984 = vmatpush2.msra.mxu0 %v4556
        %6985 = vmatprep.subr.mxu0 %v4555
        %6986 = vmatpush2.msra.mxu0 %v4554
        %6987 = vmatprep.subr.mxu0 %v4553
        %6988 = vmatpush2.msra.mxu0 %v4552
        %6989 = vmatprep.subr.mxu0 %v4551
        %6990 = vmatpush2.msra.mxu0 %v4550
        %6991 = vmatprep.subr.mxu0 %v4549
        %6992 = vmatpush2.msra.mxu0 %v4548
        %6993 = vmatprep.subr.mxu0 %v4547
        %6994 = vmatpush2.msra.mxu0 %v4546
        %6995 = vmatprep.subr.mxu0 %v4545
        %6996 = vmatpush2.msra.mxu0 %v4544
        %6997 = vmatprep.subr.mxu0 %v4543
        %6998 = vmatpush2.msra.mxu0 %v4542
        %6999 = vmatprep.mubr.f32.mxu0 %v6506
        %7000 = vmatmul.mubr.f32.gmra.mxu0 %v6505
        %v7001 = vpop.f32.mrf.mxu0
        %v7002 = vadd.f32 %v6931, %v7001
        %v7003 = vpop.f32.mrf.mxu0
        %v7004 = vadd.f32 %v6933, %v7003
        %7005 = vdwg.mxu0
        %7006 = vmatprep.subr.mxu0 %v4605
        %7007 = vmatpush1.msra.mxu0 %v4604
        %7008 = vmatprep.subr.mxu0 %v4603
        %7009 = vmatpush1.msra.mxu0 %v4602
        %7010 = vmatprep.subr.mxu0 %v4601
        %7011 = vmatpush1.msra.mxu0 %v4600
        %7012 = vmatprep.subr.mxu0 %v4599
        %7013 = vmatpush1.msra.mxu0 %v4598
        %7014 = vmatprep.subr.mxu0 %v4597
        %7015 = vmatpush1.msra.mxu0 %v4596
        %7016 = vmatprep.subr.mxu0 %v4595
        %7017 = vmatpush1.msra.mxu0 %v4594
        %7018 = vmatprep.subr.mxu0 %v4593
        %7019 = vmatpush1.msra.mxu0 %v4592
        %7020 = vmatprep.subr.mxu0 %v4591
        %7021 = vmatpush1.msra.mxu0 %v4590
        %7022 = vmatprep.subr.mxu0 %v4589
        %7023 = vmatpush1.msra.mxu0 %v4588
        %7024 = vmatprep.subr.mxu0 %v4587
        %7025 = vmatpush1.msra.mxu0 %v4586
        %7026 = vmatprep.subr.mxu0 %v4585
        %7027 = vmatpush1.msra.mxu0 %v4584
        %7028 = vmatprep.subr.mxu0 %v4583
        %7029 = vmatpush1.msra.mxu0 %v4582
        %7030 = vmatprep.subr.mxu0 %v4581
        %7031 = vmatpush1.msra.mxu0 %v4580
        %7032 = vmatprep.subr.mxu0 %v4579
        %7033 = vmatpush1.msra.mxu0 %v4578
        %7034 = vmatprep.subr.mxu0 %v4577
        %7035 = vmatpush1.msra.mxu0 %v4576
        %7036 = vmatprep.subr.mxu0 %v4575
        %7037 = vmatpush1.msra.mxu0 %v4574
        %7038 = vmatprep.subr.mxu0 %v4637
        %7039 = vmatpush2.msra.mxu0 %v4636
        %7040 = vmatprep.subr.mxu0 %v4635
        %7041 = vmatpush2.msra.mxu0 %v4634
        %7042 = vmatprep.subr.mxu0 %v4633
        %7043 = vmatpush2.msra.mxu0 %v4632
        %7044 = vmatprep.subr.mxu0 %v4631
        %7045 = vmatpush2.msra.mxu0 %v4630
        %7046 = vmatprep.subr.mxu0 %v4629
        %7047 = vmatpush2.msra.mxu0 %v4628
        %7048 = vmatprep.subr.mxu0 %v4627
        %7049 = vmatpush2.msra.mxu0 %v4626
        %7050 = vmatprep.subr.mxu0 %v4625
        %7051 = vmatpush2.msra.mxu0 %v4624
        %7052 = vmatprep.subr.mxu0 %v4623
        %7053 = vmatpush2.msra.mxu0 %v4622
        %7054 = vmatprep.subr.mxu0 %v4621
        %7055 = vmatpush2.msra.mxu0 %v4620
        %7056 = vmatprep.subr.mxu0 %v4619
        %7057 = vmatpush2.msra.mxu0 %v4618
        %7058 = vmatprep.subr.mxu0 %v4617
        %7059 = vmatpush2.msra.mxu0 %v4616
        %7060 = vmatprep.subr.mxu0 %v4615
        %7061 = vmatpush2.msra.mxu0 %v4614
        %7062 = vmatprep.subr.mxu0 %v4613
        %7063 = vmatpush2.msra.mxu0 %v4612
        %7064 = vmatprep.subr.mxu0 %v4611
        %7065 = vmatpush2.msra.mxu0 %v4610
        %7066 = vmatprep.subr.mxu0 %v4609
        %7067 = vmatpush2.msra.mxu0 %v4608
        %7068 = vmatprep.subr.mxu0 %v4607
        %7069 = vmatpush2.msra.mxu0 %v4606
        %7070 = vmatprep.mubr.f32.mxu0 %v6508
        %7071 = vmatmul.mubr.f32.gmra.mxu0 %v6507
        %v7072 = vpop.f32.mrf.mxu0
        %v7073 = vadd.f32 %v7002, %v7072
        %v7074 = vpop.f32.mrf.mxu0
        %v7075 = vadd.f32 %v7004, %v7074
        %7076 = vdwg.mxu0
        %v7077 = vld [vmem:[#allocation17] sm:$0xff]
        %v7078 = vld [vmem:[#allocation17 + $0x8] sm:$0xff]
        %v7079 = vld [vmem:[#allocation17 + $0x10] sm:$0xff]
        %v7080 = vld [vmem:[#allocation17 + $0x18] sm:$0xff]
        %v7081 = vld [vmem:[#allocation17 + $0x20] sm:$0xff]
        %v7082 = vld [vmem:[#allocation17 + $0x28] sm:$0xff]
        %v7083 = vld [vmem:[#allocation17 + $0x30] sm:$0xff]
        %v7084 = vld [vmem:[#allocation17 + $0x38] sm:$0xff]
        %v7085 = vld [vmem:[#allocation17 + $0x40] sm:$0xff]
        %v7086 = vld [vmem:[#allocation17 + $0x48] sm:$0xff]
        %v7087 = vld [vmem:[#allocation17 + $0x50] sm:$0xff]
        %v7088 = vld [vmem:[#allocation17 + $0x58] sm:$0xff]
        %v7089 = vld [vmem:[#allocation17 + $0x60] sm:$0xff]
        %v7090 = vld [vmem:[#allocation17 + $0x68] sm:$0xff]
        %v7091 = vld [vmem:[#allocation17 + $0x70] sm:$0xff]
        %v7092 = vld [vmem:[#allocation17 + $0x78] sm:$0xff]
        %v7093 = vld [vmem:[#allocation17 + $0x80] sm:$0xff]
        %v7094 = vld [vmem:[#allocation17 + $0x88] sm:$0xff]
        %v7095 = vld [vmem:[#allocation17 + $0x90] sm:$0xff]
        %v7096 = vld [vmem:[#allocation17 + $0x98] sm:$0xff]
        %v7097 = vld [vmem:[#allocation17 + $0xa0] sm:$0xff]
        %v7098 = vld [vmem:[#allocation17 + $0xa8] sm:$0xff]
        %v7099 = vld [vmem:[#allocation17 + $0xb0] sm:$0xff]
        %v7100 = vld [vmem:[#allocation17 + $0xb8] sm:$0xff]
        %v7101 = vld [vmem:[#allocation17 + $0xc0] sm:$0xff]
        %v7102 = vld [vmem:[#allocation17 + $0xc8] sm:$0xff]
        %v7103 = vld [vmem:[#allocation17 + $0xd0] sm:$0xff]
        %v7104 = vld [vmem:[#allocation17 + $0xd8] sm:$0xff]
        %v7105 = vld [vmem:[#allocation17 + $0xe0] sm:$0xff]
        %v7106 = vld [vmem:[#allocation17 + $0xe8] sm:$0xff]
        %v7107 = vld [vmem:[#allocation17 + $0xf0] sm:$0xff]
        %v7108 = vld [vmem:[#allocation17 + $0xf8] sm:$0xff]
        %v7109 = vld [vmem:[#allocation17 + $0x100] sm:$0xff]
        %v7110 = vld [vmem:[#allocation17 + $0x108] sm:$0xff]
        %v7111 = vld [vmem:[#allocation17 + $0x110] sm:$0xff]
        %v7112 = vld [vmem:[#allocation17 + $0x118] sm:$0xff]
        %v7113 = vld [vmem:[#allocation17 + $0x120] sm:$0xff]
        %v7114 = vld [vmem:[#allocation17 + $0x128] sm:$0xff]
        %v7115 = vld [vmem:[#allocation17 + $0x130] sm:$0xff]
        %v7116 = vld [vmem:[#allocation17 + $0x138] sm:$0xff]
        %v7117 = vld [vmem:[#allocation17 + $0x140] sm:$0xff]
        %v7118 = vld [vmem:[#allocation17 + $0x148] sm:$0xff]
        %v7119 = vld [vmem:[#allocation17 + $0x150] sm:$0xff]
        %v7120 = vld [vmem:[#allocation17 + $0x158] sm:$0xff]
        %v7121 = vld [vmem:[#allocation17 + $0x160] sm:$0xff]
        %v7122 = vld [vmem:[#allocation17 + $0x168] sm:$0xff]
        %v7123 = vld [vmem:[#allocation17 + $0x170] sm:$0xff]
        %v7124 = vld [vmem:[#allocation17 + $0x178] sm:$0xff]
        %v7125 = vld [vmem:[#allocation17 + $0x180] sm:$0xff]
        %v7126 = vld [vmem:[#allocation17 + $0x188] sm:$0xff]
        %v7127 = vld [vmem:[#allocation17 + $0x190] sm:$0xff]
        %v7128 = vld [vmem:[#allocation17 + $0x198] sm:$0xff]
        %v7129 = vld [vmem:[#allocation17 + $0x1a0] sm:$0xff]
        %v7130 = vld [vmem:[#allocation17 + $0x1a8] sm:$0xff]
        %v7131 = vld [vmem:[#allocation17 + $0x1b0] sm:$0xff]
        %v7132 = vld [vmem:[#allocation17 + $0x1b8] sm:$0xff]
        %v7133 = vld [vmem:[#allocation17 + $0x1c0] sm:$0xff]
        %v7134 = vld [vmem:[#allocation17 + $0x1c8] sm:$0xff]
        %v7135 = vld [vmem:[#allocation17 + $0x1d0] sm:$0xff]
        %v7136 = vld [vmem:[#allocation17 + $0x1d8] sm:$0xff]
        %v7137 = vld [vmem:[#allocation17 + $0x1e0] sm:$0xff]
        %v7138 = vld [vmem:[#allocation17 + $0x1e8] sm:$0xff]
        %v7139 = vld [vmem:[#allocation17 + $0x1f0] sm:$0xff]
        %v7140 = vld [vmem:[#allocation17 + $0x1f8] sm:$0xff]
        %7141 = vmatprep.subr.mxu0 %v7108
        %7142 = vmatpush1.msra.mxu0 %v7107
        %7143 = vmatprep.subr.mxu0 %v7106
        %7144 = vmatpush1.msra.mxu0 %v7105
        %7145 = vmatprep.subr.mxu0 %v7104
        %7146 = vmatpush1.msra.mxu0 %v7103
        %7147 = vmatprep.subr.mxu0 %v7102
        %7148 = vmatpush1.msra.mxu0 %v7101
        %7149 = vmatprep.subr.mxu0 %v7100
        %7150 = vmatpush1.msra.mxu0 %v7099
        %7151 = vmatprep.subr.mxu0 %v7098
        %7152 = vmatpush1.msra.mxu0 %v7097
        %7153 = vmatprep.subr.mxu0 %v7096
        %7154 = vmatpush1.msra.mxu0 %v7095
        %7155 = vmatprep.subr.mxu0 %v7094
        %7156 = vmatpush1.msra.mxu0 %v7093
        %7157 = vmatprep.subr.mxu0 %v7092
        %7158 = vmatpush1.msra.mxu0 %v7091
        %7159 = vmatprep.subr.mxu0 %v7090
        %7160 = vmatpush1.msra.mxu0 %v7089
        %7161 = vmatprep.subr.mxu0 %v7088
        %7162 = vmatpush1.msra.mxu0 %v7087
        %7163 = vmatprep.subr.mxu0 %v7086
        %7164 = vmatpush1.msra.mxu0 %v7085
        %7165 = vmatprep.subr.mxu0 %v7084
        %7166 = vmatpush1.msra.mxu0 %v7083
        %7167 = vmatprep.subr.mxu0 %v7082
        %7168 = vmatpush1.msra.mxu0 %v7081
        %7169 = vmatprep.subr.mxu0 %v7080
        %7170 = vmatpush1.msra.mxu0 %v7079
        %7171 = vmatprep.subr.mxu0 %v7078
        %7172 = vmatpush1.msra.mxu0 %v7077
        %7173 = vmatprep.subr.mxu0 %v7140
        %7174 = vmatpush2.msra.mxu0 %v7139
        %7175 = vmatprep.subr.mxu0 %v7138
        %7176 = vmatpush2.msra.mxu0 %v7137
        %7177 = vmatprep.subr.mxu0 %v7136
        %7178 = vmatpush2.msra.mxu0 %v7135
        %7179 = vmatprep.subr.mxu0 %v7134
        %7180 = vmatpush2.msra.mxu0 %v7133
        %7181 = vmatprep.subr.mxu0 %v7132
        %7182 = vmatpush2.msra.mxu0 %v7131
        %7183 = vmatprep.subr.mxu0 %v7130
        %7184 = vmatpush2.msra.mxu0 %v7129
        %7185 = vmatprep.subr.mxu0 %v7128
        %7186 = vmatpush2.msra.mxu0 %v7127
        %7187 = vmatprep.subr.mxu0 %v7126
        %7188 = vmatpush2.msra.mxu0 %v7125
        %7189 = vmatprep.subr.mxu0 %v7124
        %7190 = vmatpush2.msra.mxu0 %v7123
        %7191 = vmatprep.subr.mxu0 %v7122
        %7192 = vmatpush2.msra.mxu0 %v7121
        %7193 = vmatprep.subr.mxu0 %v7120
        %7194 = vmatpush2.msra.mxu0 %v7119
        %7195 = vmatprep.subr.mxu0 %v7118
        %7196 = vmatpush2.msra.mxu0 %v7117
        %7197 = vmatprep.subr.mxu0 %v7116
        %7198 = vmatpush2.msra.mxu0 %v7115
        %7199 = vmatprep.subr.mxu0 %v7114
        %7200 = vmatpush2.msra.mxu0 %v7113
        %7201 = vmatprep.subr.mxu0 %v7112
        %7202 = vmatpush2.msra.mxu0 %v7111
        %7203 = vmatprep.subr.mxu0 %v7110
        %7204 = vmatpush2.msra.mxu0 %v7109
        %7205 = vmatprep.mubr.f32.mxu0 %v7075
        %7206 = vmatmul.mubr.f32.gmra.mxu0 %v7073
        %v7207 = vpop.f32.mrf.mxu0
        %v7208 = vadd.f32 %v868, %v7207
        %v7209 = vpop.f32.mrf.mxu0
        %v7210 = vadd.f32 %v869, %v7209
        %7211 = vdwg.mxu0
        %v7212 = vld [vmem:[#allocation19] sm:$0xff]
        %v7213 = vld [vmem:[#allocation19 + $0x8] sm:$0xff]
        %v7214 = vld [vmem:[#allocation19 + $0x10] sm:$0xff]
        %v7215 = vld [vmem:[#allocation19 + $0x18] sm:$0xff]
        %v7216 = vld [vmem:[#allocation19 + $0x20] sm:$0xff]
        %v7217 = vld [vmem:[#allocation19 + $0x28] sm:$0xff]
        %v7218 = vld [vmem:[#allocation19 + $0x30] sm:$0xff]
        %v7219 = vld [vmem:[#allocation19 + $0x38] sm:$0xff]
        %v7220 = vld [vmem:[#allocation19 + $0x40] sm:$0xff]
        %v7221 = vld [vmem:[#allocation19 + $0x48] sm:$0xff]
        %v7222 = vld [vmem:[#allocation19 + $0x50] sm:$0xff]
        %v7223 = vld [vmem:[#allocation19 + $0x58] sm:$0xff]
        %v7224 = vld [vmem:[#allocation19 + $0x60] sm:$0xff]
        %v7225 = vld [vmem:[#allocation19 + $0x68] sm:$0xff]
        %v7226 = vld [vmem:[#allocation19 + $0x70] sm:$0xff]
        %v7227 = vld [vmem:[#allocation19 + $0x78] sm:$0xff]
        %v7228 = vld [vmem:[#allocation19 + $0x80] sm:$0xff]
        %v7229 = vld [vmem:[#allocation19 + $0x88] sm:$0xff]
        %v7230 = vld [vmem:[#allocation19 + $0x90] sm:$0xff]
        %v7231 = vld [vmem:[#allocation19 + $0x98] sm:$0xff]
        %v7232 = vld [vmem:[#allocation19 + $0xa0] sm:$0xff]
        %v7233 = vld [vmem:[#allocation19 + $0xa8] sm:$0xff]
        %v7234 = vld [vmem:[#allocation19 + $0xb0] sm:$0xff]
        %v7235 = vld [vmem:[#allocation19 + $0xb8] sm:$0xff]
        %v7236 = vld [vmem:[#allocation19 + $0xc0] sm:$0xff]
        %v7237 = vld [vmem:[#allocation19 + $0xc8] sm:$0xff]
        %v7238 = vld [vmem:[#allocation19 + $0xd0] sm:$0xff]
        %v7239 = vld [vmem:[#allocation19 + $0xd8] sm:$0xff]
        %v7240 = vld [vmem:[#allocation19 + $0xe0] sm:$0xff]
        %v7241 = vld [vmem:[#allocation19 + $0xe8] sm:$0xff]
        %v7242 = vld [vmem:[#allocation19 + $0xf0] sm:$0xff]
        %v7243 = vld [vmem:[#allocation19 + $0xf8] sm:$0xff]
        %v7244 = vld [vmem:[#allocation19 + $0x100] sm:$0xff]
        %v7245 = vld [vmem:[#allocation19 + $0x108] sm:$0xff]
        %v7246 = vld [vmem:[#allocation19 + $0x110] sm:$0xff]
        %v7247 = vld [vmem:[#allocation19 + $0x118] sm:$0xff]
        %v7248 = vld [vmem:[#allocation19 + $0x120] sm:$0xff]
        %v7249 = vld [vmem:[#allocation19 + $0x128] sm:$0xff]
        %v7250 = vld [vmem:[#allocation19 + $0x130] sm:$0xff]
        %v7251 = vld [vmem:[#allocation19 + $0x138] sm:$0xff]
        %v7252 = vld [vmem:[#allocation19 + $0x140] sm:$0xff]
        %v7253 = vld [vmem:[#allocation19 + $0x148] sm:$0xff]
        %v7254 = vld [vmem:[#allocation19 + $0x150] sm:$0xff]
        %v7255 = vld [vmem:[#allocation19 + $0x158] sm:$0xff]
        %v7256 = vld [vmem:[#allocation19 + $0x160] sm:$0xff]
        %v7257 = vld [vmem:[#allocation19 + $0x168] sm:$0xff]
        %v7258 = vld [vmem:[#allocation19 + $0x170] sm:$0xff]
        %v7259 = vld [vmem:[#allocation19 + $0x178] sm:$0xff]
        %v7260 = vld [vmem:[#allocation19 + $0x180] sm:$0xff]
        %v7261 = vld [vmem:[#allocation19 + $0x188] sm:$0xff]
        %v7262 = vld [vmem:[#allocation19 + $0x190] sm:$0xff]
        %v7263 = vld [vmem:[#allocation19 + $0x198] sm:$0xff]
        %v7264 = vld [vmem:[#allocation19 + $0x1a0] sm:$0xff]
        %v7265 = vld [vmem:[#allocation19 + $0x1a8] sm:$0xff]
        %v7266 = vld [vmem:[#allocation19 + $0x1b0] sm:$0xff]
        %v7267 = vld [vmem:[#allocation19 + $0x1b8] sm:$0xff]
        %v7268 = vld [vmem:[#allocation19 + $0x1c0] sm:$0xff]
        %v7269 = vld [vmem:[#allocation19 + $0x1c8] sm:$0xff]
        %v7270 = vld [vmem:[#allocation19 + $0x1d0] sm:$0xff]
        %v7271 = vld [vmem:[#allocation19 + $0x1d8] sm:$0xff]
        %v7272 = vld [vmem:[#allocation19 + $0x1e0] sm:$0xff]
        %v7273 = vld [vmem:[#allocation19 + $0x1e8] sm:$0xff]
        %v7274 = vld [vmem:[#allocation19 + $0x1f0] sm:$0xff]
        %v7275 = vld [vmem:[#allocation19 + $0x1f8] sm:$0xff]
        %7276 = vmatprep.subr.mxu0 %v7243
        %7277 = vmatpush1.msra.mxu0 %v7242
        %7278 = vmatprep.subr.mxu0 %v7241
        %7279 = vmatpush1.msra.mxu0 %v7240
        %7280 = vmatprep.subr.mxu0 %v7239
        %7281 = vmatpush1.msra.mxu0 %v7238
        %7282 = vmatprep.subr.mxu0 %v7237
        %7283 = vmatpush1.msra.mxu0 %v7236
        %7284 = vmatprep.subr.mxu0 %v7235
        %7285 = vmatpush1.msra.mxu0 %v7234
        %7286 = vmatprep.subr.mxu0 %v7233
        %7287 = vmatpush1.msra.mxu0 %v7232
        %7288 = vmatprep.subr.mxu0 %v7231
        %7289 = vmatpush1.msra.mxu0 %v7230
        %7290 = vmatprep.subr.mxu0 %v7229
        %7291 = vmatpush1.msra.mxu0 %v7228
        %7292 = vmatprep.subr.mxu0 %v7227
        %7293 = vmatpush1.msra.mxu0 %v7226
        %7294 = vmatprep.subr.mxu0 %v7225
        %7295 = vmatpush1.msra.mxu0 %v7224
        %7296 = vmatprep.subr.mxu0 %v7223
        %7297 = vmatpush1.msra.mxu0 %v7222
        %7298 = vmatprep.subr.mxu0 %v7221
        %7299 = vmatpush1.msra.mxu0 %v7220
        %7300 = vmatprep.subr.mxu0 %v7219
        %7301 = vmatpush1.msra.mxu0 %v7218
        %7302 = vmatprep.subr.mxu0 %v7217
        %7303 = vmatpush1.msra.mxu0 %v7216
        %7304 = vmatprep.subr.mxu0 %v7215
        %7305 = vmatpush1.msra.mxu0 %v7214
        %7306 = vmatprep.subr.mxu0 %v7213
        %7307 = vmatpush1.msra.mxu0 %v7212
        %7308 = vmatprep.subr.mxu0 %v7275
        %7309 = vmatpush2.msra.mxu0 %v7274
        %7310 = vmatprep.subr.mxu0 %v7273
        %7311 = vmatpush2.msra.mxu0 %v7272
        %7312 = vmatprep.subr.mxu0 %v7271
        %7313 = vmatpush2.msra.mxu0 %v7270
        %7314 = vmatprep.subr.mxu0 %v7269
        %7315 = vmatpush2.msra.mxu0 %v7268
        %7316 = vmatprep.subr.mxu0 %v7267
        %7317 = vmatpush2.msra.mxu0 %v7266
        %7318 = vmatprep.subr.mxu0 %v7265
        %7319 = vmatpush2.msra.mxu0 %v7264
        %7320 = vmatprep.subr.mxu0 %v7263
        %7321 = vmatpush2.msra.mxu0 %v7262
        %7322 = vmatprep.subr.mxu0 %v7261
        %7323 = vmatpush2.msra.mxu0 %v7260
        %7324 = vmatprep.subr.mxu0 %v7259
        %7325 = vmatpush2.msra.mxu0 %v7258
        %7326 = vmatprep.subr.mxu0 %v7257
        %7327 = vmatpush2.msra.mxu0 %v7256
        %7328 = vmatprep.subr.mxu0 %v7255
        %7329 = vmatpush2.msra.mxu0 %v7254
        %7330 = vmatprep.subr.mxu0 %v7253
        %7331 = vmatpush2.msra.mxu0 %v7252
        %7332 = vmatprep.subr.mxu0 %v7251
        %7333 = vmatpush2.msra.mxu0 %v7250
        %7334 = vmatprep.subr.mxu0 %v7249
        %7335 = vmatpush2.msra.mxu0 %v7248
        %7336 = vmatprep.subr.mxu0 %v7247
        %7337 = vmatpush2.msra.mxu0 %v7246
        %7338 = vmatprep.subr.mxu0 %v7245
        %7339 = vmatpush2.msra.mxu0 %v7244
        %7340 = vmatprep.mubr.f32.mxu0 %v7210
        %7341 = vmatmul.mubr.f32.gmra.mxu0 %v7208
        %v7342 = vpop.f32.mrf.mxu0
        %v7343 = vadd.f32 0.0, %v7342
        %v7344 = vpop.f32.mrf.mxu0
        %v7345 = vadd.f32 0.0, %v7344
        %7346 = vdwg.mxu0
        %v7347 = vsub.f32 %v7208, %v7343
        %v7348 = vsub.f32 %v7210, %v7345
        %v7349 = vmul.f32 %v7347, %v7347
        %v7350 = vmul.f32 %v7348, %v7348
        %7351 = vmatprep.subr.mxu0 %v7243
        %7352 = vmatpush1.msra.mxu0 %v7242
        %7353 = vmatprep.subr.mxu0 %v7241
        %7354 = vmatpush1.msra.mxu0 %v7240
        %7355 = vmatprep.subr.mxu0 %v7239
        %7356 = vmatpush1.msra.mxu0 %v7238
        %7357 = vmatprep.subr.mxu0 %v7237
        %7358 = vmatpush1.msra.mxu0 %v7236
        %7359 = vmatprep.subr.mxu0 %v7235
        %7360 = vmatpush1.msra.mxu0 %v7234
        %7361 = vmatprep.subr.mxu0 %v7233
        %7362 = vmatpush1.msra.mxu0 %v7232
        %7363 = vmatprep.subr.mxu0 %v7231
        %7364 = vmatpush1.msra.mxu0 %v7230
        %7365 = vmatprep.subr.mxu0 %v7229
        %7366 = vmatpush1.msra.mxu0 %v7228
        %7367 = vmatprep.subr.mxu0 %v7227
        %7368 = vmatpush1.msra.mxu0 %v7226
        %7369 = vmatprep.subr.mxu0 %v7225
        %7370 = vmatpush1.msra.mxu0 %v7224
        %7371 = vmatprep.subr.mxu0 %v7223
        %7372 = vmatpush1.msra.mxu0 %v7222
        %7373 = vmatprep.subr.mxu0 %v7221
        %7374 = vmatpush1.msra.mxu0 %v7220
        %7375 = vmatprep.subr.mxu0 %v7219
        %7376 = vmatpush1.msra.mxu0 %v7218
        %7377 = vmatprep.subr.mxu0 %v7217
        %7378 = vmatpush1.msra.mxu0 %v7216
        %7379 = vmatprep.subr.mxu0 %v7215
        %7380 = vmatpush1.msra.mxu0 %v7214
        %7381 = vmatprep.subr.mxu0 %v7213
        %7382 = vmatpush1.msra.mxu0 %v7212
        %7383 = vmatprep.subr.mxu0 %v7275
        %7384 = vmatpush2.msra.mxu0 %v7274
        %7385 = vmatprep.subr.mxu0 %v7273
        %7386 = vmatpush2.msra.mxu0 %v7272
        %7387 = vmatprep.subr.mxu0 %v7271
        %7388 = vmatpush2.msra.mxu0 %v7270
        %7389 = vmatprep.subr.mxu0 %v7269
        %7390 = vmatpush2.msra.mxu0 %v7268
        %7391 = vmatprep.subr.mxu0 %v7267
        %7392 = vmatpush2.msra.mxu0 %v7266
        %7393 = vmatprep.subr.mxu0 %v7265
        %7394 = vmatpush2.msra.mxu0 %v7264
        %7395 = vmatprep.subr.mxu0 %v7263
        %7396 = vmatpush2.msra.mxu0 %v7262
        %7397 = vmatprep.subr.mxu0 %v7261
        %7398 = vmatpush2.msra.mxu0 %v7260
        %7399 = vmatprep.subr.mxu0 %v7259
        %7400 = vmatpush2.msra.mxu0 %v7258
        %7401 = vmatprep.subr.mxu0 %v7257
        %7402 = vmatpush2.msra.mxu0 %v7256
        %7403 = vmatprep.subr.mxu0 %v7255
        %7404 = vmatpush2.msra.mxu0 %v7254
        %7405 = vmatprep.subr.mxu0 %v7253
        %7406 = vmatpush2.msra.mxu0 %v7252
        %7407 = vmatprep.subr.mxu0 %v7251
        %7408 = vmatpush2.msra.mxu0 %v7250
        %7409 = vmatprep.subr.mxu0 %v7249
        %7410 = vmatpush2.msra.mxu0 %v7248
        %7411 = vmatprep.subr.mxu0 %v7247
        %7412 = vmatpush2.msra.mxu0 %v7246
        %7413 = vmatprep.subr.mxu0 %v7245
        %7414 = vmatpush2.msra.mxu0 %v7244
        %7415 = vmatprep.mubr.f32.mxu0 %v7350
        %7416 = vmatmul.mubr.f32.gmra.mxu0 %v7349
        %v7417 = vpop.f32.mrf.mxu0
        %v7418 = vadd.f32 1e-05, %v7417
        %v7419 = vpop.f32.mrf.mxu0
        %v7420 = vadd.f32 1e-05, %v7419
        %7421 = vdwg.mxu0
        %v7422 = vrsqrt.pop %v7418
        %v7423 = vrsqrt.pop %v7420
        %v7424 = vmul.f32 %v7347, %v7422
        %v7425 = vmul.f32 %v7348, %v7423
        %v7426 = vld [vmem:[#allocation26] sm:$0x3]
        %v7428 = vlaneseq
        %v7429 = vshrl.u32 %v7428, 7
        %v7430 = vsub.s32 0, %v7429
        %v7431 = vrot.slane %v7426, %v7430
        %v7432 = vlaneseq
        %v7433 = vshrl.u32 %v7432, 7
        %v7434 = vsub.s32 1, %v7433
        %v7435 = vrot.slane %v7426, %v7434
        %v7438 = vmul.f32 %v7424, %v7431
        %v7439 = vmul.f32 %v7425, %v7435
        %v7440 = vld [vmem:[#allocation28] sm:$0x3]
        %v7442 = vlaneseq
        %v7443 = vshrl.u32 %v7442, 7
        %v7444 = vsub.s32 0, %v7443
        %v7445 = vrot.slane %v7440, %v7444
        %v7446 = vlaneseq
        %v7447 = vshrl.u32 %v7446, 7
        %v7448 = vsub.s32 1, %v7447
        %v7449 = vrot.slane %v7440, %v7448
        %v7452 = vadd.f32 %v7438, %v7445
        %v7453 = vadd.f32 %v7439, %v7449
        %v7454 = vld [vmem:[#allocation20] sm:$0xff]
        %v7455 = vld [vmem:[#allocation20 + $0x8] sm:$0xff]
        %v7456 = vld [vmem:[#allocation20 + $0x10] sm:$0xff]
        %v7457 = vld [vmem:[#allocation20 + $0x18] sm:$0xff]
        %v7458 = vld [vmem:[#allocation20 + $0x20] sm:$0xff]
        %v7459 = vld [vmem:[#allocation20 + $0x28] sm:$0xff]
        %v7460 = vld [vmem:[#allocation20 + $0x30] sm:$0xff]
        %v7461 = vld [vmem:[#allocation20 + $0x38] sm:$0xff]
        %v7462 = vld [vmem:[#allocation20 + $0x40] sm:$0xff]
        %v7463 = vld [vmem:[#allocation20 + $0x48] sm:$0xff]
        %v7464 = vld [vmem:[#allocation20 + $0x50] sm:$0xff]
        %v7465 = vld [vmem:[#allocation20 + $0x58] sm:$0xff]
        %v7466 = vld [vmem:[#allocation20 + $0x60] sm:$0xff]
        %v7467 = vld [vmem:[#allocation20 + $0x68] sm:$0xff]
        %v7468 = vld [vmem:[#allocation20 + $0x70] sm:$0xff]
        %v7469 = vld [vmem:[#allocation20 + $0x78] sm:$0xff]
        %v7470 = vld [vmem:[#allocation20 + $0x80] sm:$0xff]
        %v7471 = vld [vmem:[#allocation20 + $0x88] sm:$0xff]
        %v7472 = vld [vmem:[#allocation20 + $0x90] sm:$0xff]
        %v7473 = vld [vmem:[#allocation20 + $0x98] sm:$0xff]
        %v7474 = vld [vmem:[#allocation20 + $0xa0] sm:$0xff]
        %v7475 = vld [vmem:[#allocation20 + $0xa8] sm:$0xff]
        %v7476 = vld [vmem:[#allocation20 + $0xb0] sm:$0xff]
        %v7477 = vld [vmem:[#allocation20 + $0xb8] sm:$0xff]
        %v7478 = vld [vmem:[#allocation20 + $0xc0] sm:$0xff]
        %v7479 = vld [vmem:[#allocation20 + $0xc8] sm:$0xff]
        %v7480 = vld [vmem:[#allocation20 + $0xd0] sm:$0xff]
        %v7481 = vld [vmem:[#allocation20 + $0xd8] sm:$0xff]
        %v7482 = vld [vmem:[#allocation20 + $0xe0] sm:$0xff]
        %v7483 = vld [vmem:[#allocation20 + $0xe8] sm:$0xff]
        %v7484 = vld [vmem:[#allocation20 + $0xf0] sm:$0xff]
        %v7485 = vld [vmem:[#allocation20 + $0xf8] sm:$0xff]
        %v7486 = vld [vmem:[#allocation20 + $0x100] sm:$0xff]
        %v7487 = vld [vmem:[#allocation20 + $0x108] sm:$0xff]
        %v7488 = vld [vmem:[#allocation20 + $0x110] sm:$0xff]
        %v7489 = vld [vmem:[#allocation20 + $0x118] sm:$0xff]
        %v7490 = vld [vmem:[#allocation20 + $0x120] sm:$0xff]
        %v7491 = vld [vmem:[#allocation20 + $0x128] sm:$0xff]
        %v7492 = vld [vmem:[#allocation20 + $0x130] sm:$0xff]
        %v7493 = vld [vmem:[#allocation20 + $0x138] sm:$0xff]
        %v7494 = vld [vmem:[#allocation20 + $0x140] sm:$0xff]
        %v7495 = vld [vmem:[#allocation20 + $0x148] sm:$0xff]
        %v7496 = vld [vmem:[#allocation20 + $0x150] sm:$0xff]
        %v7497 = vld [vmem:[#allocation20 + $0x158] sm:$0xff]
        %v7498 = vld [vmem:[#allocation20 + $0x160] sm:$0xff]
        %v7499 = vld [vmem:[#allocation20 + $0x168] sm:$0xff]
        %v7500 = vld [vmem:[#allocation20 + $0x170] sm:$0xff]
        %v7501 = vld [vmem:[#allocation20 + $0x178] sm:$0xff]
        %v7502 = vld [vmem:[#allocation20 + $0x180] sm:$0xff]
        %v7503 = vld [vmem:[#allocation20 + $0x188] sm:$0xff]
        %v7504 = vld [vmem:[#allocation20 + $0x190] sm:$0xff]
        %v7505 = vld [vmem:[#allocation20 + $0x198] sm:$0xff]
        %v7506 = vld [vmem:[#allocation20 + $0x1a0] sm:$0xff]
        %v7507 = vld [vmem:[#allocation20 + $0x1a8] sm:$0xff]
        %v7508 = vld [vmem:[#allocation20 + $0x1b0] sm:$0xff]
        %v7509 = vld [vmem:[#allocation20 + $0x1b8] sm:$0xff]
        %v7510 = vld [vmem:[#allocation20 + $0x1c0] sm:$0xff]
        %v7511 = vld [vmem:[#allocation20 + $0x1c8] sm:$0xff]
        %v7512 = vld [vmem:[#allocation20 + $0x1d0] sm:$0xff]
        %v7513 = vld [vmem:[#allocation20 + $0x1d8] sm:$0xff]
        %v7514 = vld [vmem:[#allocation20 + $0x1e0] sm:$0xff]
        %v7515 = vld [vmem:[#allocation20 + $0x1e8] sm:$0xff]
        %v7516 = vld [vmem:[#allocation20 + $0x1f0] sm:$0xff]
        %v7517 = vld [vmem:[#allocation20 + $0x1f8] sm:$0xff]
        %v7518 = vld [vmem:[#allocation20 + $0x200] sm:$0xff]
        %v7519 = vld [vmem:[#allocation20 + $0x208] sm:$0xff]
        %v7520 = vld [vmem:[#allocation20 + $0x210] sm:$0xff]
        %v7521 = vld [vmem:[#allocation20 + $0x218] sm:$0xff]
        %v7522 = vld [vmem:[#allocation20 + $0x220] sm:$0xff]
        %v7523 = vld [vmem:[#allocation20 + $0x228] sm:$0xff]
        %v7524 = vld [vmem:[#allocation20 + $0x230] sm:$0xff]
        %v7525 = vld [vmem:[#allocation20 + $0x238] sm:$0xff]
        %v7526 = vld [vmem:[#allocation20 + $0x240] sm:$0xff]
        %v7527 = vld [vmem:[#allocation20 + $0x248] sm:$0xff]
        %v7528 = vld [vmem:[#allocation20 + $0x250] sm:$0xff]
        %v7529 = vld [vmem:[#allocation20 + $0x258] sm:$0xff]
        %v7530 = vld [vmem:[#allocation20 + $0x260] sm:$0xff]
        %v7531 = vld [vmem:[#allocation20 + $0x268] sm:$0xff]
        %v7532 = vld [vmem:[#allocation20 + $0x270] sm:$0xff]
        %v7533 = vld [vmem:[#allocation20 + $0x278] sm:$0xff]
        %v7534 = vld [vmem:[#allocation20 + $0x280] sm:$0xff]
        %v7535 = vld [vmem:[#allocation20 + $0x288] sm:$0xff]
        %v7536 = vld [vmem:[#allocation20 + $0x290] sm:$0xff]
        %v7537 = vld [vmem:[#allocation20 + $0x298] sm:$0xff]
        %v7538 = vld [vmem:[#allocation20 + $0x2a0] sm:$0xff]
        %v7539 = vld [vmem:[#allocation20 + $0x2a8] sm:$0xff]
        %v7540 = vld [vmem:[#allocation20 + $0x2b0] sm:$0xff]
        %v7541 = vld [vmem:[#allocation20 + $0x2b8] sm:$0xff]
        %v7542 = vld [vmem:[#allocation20 + $0x2c0] sm:$0xff]
        %v7543 = vld [vmem:[#allocation20 + $0x2c8] sm:$0xff]
        %v7544 = vld [vmem:[#allocation20 + $0x2d0] sm:$0xff]
        %v7545 = vld [vmem:[#allocation20 + $0x2d8] sm:$0xff]
        %v7546 = vld [vmem:[#allocation20 + $0x2e0] sm:$0xff]
        %v7547 = vld [vmem:[#allocation20 + $0x2e8] sm:$0xff]
        %v7548 = vld [vmem:[#allocation20 + $0x2f0] sm:$0xff]
        %v7549 = vld [vmem:[#allocation20 + $0x2f8] sm:$0xff]
        %v7550 = vld [vmem:[#allocation20 + $0x300] sm:$0xff]
        %v7551 = vld [vmem:[#allocation20 + $0x308] sm:$0xff]
        %v7552 = vld [vmem:[#allocation20 + $0x310] sm:$0xff]
        %v7553 = vld [vmem:[#allocation20 + $0x318] sm:$0xff]
        %v7554 = vld [vmem:[#allocation20 + $0x320] sm:$0xff]
        %v7555 = vld [vmem:[#allocation20 + $0x328] sm:$0xff]
        %v7556 = vld [vmem:[#allocation20 + $0x330] sm:$0xff]
        %v7557 = vld [vmem:[#allocation20 + $0x338] sm:$0xff]
        %v7558 = vld [vmem:[#allocation20 + $0x340] sm:$0xff]
        %v7559 = vld [vmem:[#allocation20 + $0x348] sm:$0xff]
        %v7560 = vld [vmem:[#allocation20 + $0x350] sm:$0xff]
        %v7561 = vld [vmem:[#allocation20 + $0x358] sm:$0xff]
        %v7562 = vld [vmem:[#allocation20 + $0x360] sm:$0xff]
        %v7563 = vld [vmem:[#allocation20 + $0x368] sm:$0xff]
        %v7564 = vld [vmem:[#allocation20 + $0x370] sm:$0xff]
        %v7565 = vld [vmem:[#allocation20 + $0x378] sm:$0xff]
        %v7566 = vld [vmem:[#allocation20 + $0x380] sm:$0xff]
        %v7567 = vld [vmem:[#allocation20 + $0x388] sm:$0xff]
        %v7568 = vld [vmem:[#allocation20 + $0x390] sm:$0xff]
        %v7569 = vld [vmem:[#allocation20 + $0x398] sm:$0xff]
        %v7570 = vld [vmem:[#allocation20 + $0x3a0] sm:$0xff]
        %v7571 = vld [vmem:[#allocation20 + $0x3a8] sm:$0xff]
        %v7572 = vld [vmem:[#allocation20 + $0x3b0] sm:$0xff]
        %v7573 = vld [vmem:[#allocation20 + $0x3b8] sm:$0xff]
        %v7574 = vld [vmem:[#allocation20 + $0x3c0] sm:$0xff]
        %v7575 = vld [vmem:[#allocation20 + $0x3c8] sm:$0xff]
        %v7576 = vld [vmem:[#allocation20 + $0x3d0] sm:$0xff]
        %v7577 = vld [vmem:[#allocation20 + $0x3d8] sm:$0xff]
        %v7578 = vld [vmem:[#allocation20 + $0x3e0] sm:$0xff]
        %v7579 = vld [vmem:[#allocation20 + $0x3e8] sm:$0xff]
        %v7580 = vld [vmem:[#allocation20 + $0x3f0] sm:$0xff]
        %v7581 = vld [vmem:[#allocation20 + $0x3f8] sm:$0xff]
        %v7582 = vld [vmem:[#allocation22] sm:$0xf]
        %v7584 = vlaneseq
        %v7585 = vshrl.u32 %v7584, 7
        %v7586 = vsub.s32 0, %v7585
        %v7587 = vrot.slane %v7582, %v7586
        %v7588 = vlaneseq
        %v7589 = vshrl.u32 %v7588, 7
        %v7590 = vsub.s32 1, %v7589
        %v7591 = vrot.slane %v7582, %v7590
        %v7592 = vlaneseq
        %v7593 = vshrl.u32 %v7592, 7
        %v7594 = vsub.s32 2, %v7593
        %v7595 = vrot.slane %v7582, %v7594
        %v7596 = vlaneseq
        %v7597 = vshrl.u32 %v7596, 7
        %v7598 = vsub.s32 3, %v7597
        %v7599 = vrot.slane %v7582, %v7598
        %7604 = vmatprep.subr.mxu0 %v7515
        %7605 = vmatpush1.msra.mxu0 %v7514
        %7606 = vmatprep.subr.mxu0 %v7511
        %7607 = vmatpush1.msra.mxu0 %v7510
        %7608 = vmatprep.subr.mxu0 %v7507
        %7609 = vmatpush1.msra.mxu0 %v7506
        %7610 = vmatprep.subr.mxu0 %v7503
        %7611 = vmatpush1.msra.mxu0 %v7502
        %7612 = vmatprep.subr.mxu0 %v7499
        %7613 = vmatpush1.msra.mxu0 %v7498
        %7614 = vmatprep.subr.mxu0 %v7495
        %7615 = vmatpush1.msra.mxu0 %v7494
        %7616 = vmatprep.subr.mxu0 %v7491
        %7617 = vmatpush1.msra.mxu0 %v7490
        %7618 = vmatprep.subr.mxu0 %v7487
        %7619 = vmatpush1.msra.mxu0 %v7486
        %7620 = vmatprep.subr.mxu0 %v7483
        %7621 = vmatpush1.msra.mxu0 %v7482
        %7622 = vmatprep.subr.mxu0 %v7479
        %7623 = vmatpush1.msra.mxu0 %v7478
        %7624 = vmatprep.subr.mxu0 %v7475
        %7625 = vmatpush1.msra.mxu0 %v7474
        %7626 = vmatprep.subr.mxu0 %v7471
        %7627 = vmatpush1.msra.mxu0 %v7470
        %7628 = vmatprep.subr.mxu0 %v7467
        %7629 = vmatpush1.msra.mxu0 %v7466
        %7630 = vmatprep.subr.mxu0 %v7463
        %7631 = vmatpush1.msra.mxu0 %v7462
        %7632 = vmatprep.subr.mxu0 %v7459
        %7633 = vmatpush1.msra.mxu0 %v7458
        %7634 = vmatprep.subr.mxu0 %v7455
        %7635 = vmatpush1.msra.mxu0 %v7454
        %7636 = vmatprep.subr.mxu0 %v7579
        %7637 = vmatpush2.msra.mxu0 %v7578
        %7638 = vmatprep.subr.mxu0 %v7575
        %7639 = vmatpush2.msra.mxu0 %v7574
        %7640 = vmatprep.subr.mxu0 %v7571
        %7641 = vmatpush2.msra.mxu0 %v7570
        %7642 = vmatprep.subr.mxu0 %v7567
        %7643 = vmatpush2.msra.mxu0 %v7566
        %7644 = vmatprep.subr.mxu0 %v7563
        %7645 = vmatpush2.msra.mxu0 %v7562
        %7646 = vmatprep.subr.mxu0 %v7559
        %7647 = vmatpush2.msra.mxu0 %v7558
        %7648 = vmatprep.subr.mxu0 %v7555
        %7649 = vmatpush2.msra.mxu0 %v7554
        %7650 = vmatprep.subr.mxu0 %v7551
        %7651 = vmatpush2.msra.mxu0 %v7550
        %7652 = vmatprep.subr.mxu0 %v7547
        %7653 = vmatpush2.msra.mxu0 %v7546
        %7654 = vmatprep.subr.mxu0 %v7543
        %7655 = vmatpush2.msra.mxu0 %v7542
        %7656 = vmatprep.subr.mxu0 %v7539
        %7657 = vmatpush2.msra.mxu0 %v7538
        %7658 = vmatprep.subr.mxu0 %v7535
        %7659 = vmatpush2.msra.mxu0 %v7534
        %7660 = vmatprep.subr.mxu0 %v7531
        %7661 = vmatpush2.msra.mxu0 %v7530
        %7662 = vmatprep.subr.mxu0 %v7527
        %7663 = vmatpush2.msra.mxu0 %v7526
        %7664 = vmatprep.subr.mxu0 %v7523
        %7665 = vmatpush2.msra.mxu0 %v7522
        %7666 = vmatprep.subr.mxu0 %v7519
        %7667 = vmatpush2.msra.mxu0 %v7518
        %7668 = vmatprep.mubr.f32.mxu0 %v7453
        %7669 = vmatmul.mubr.f32.gmra.mxu0 %v7452
        %v7670 = vpop.f32.mrf.mxu0
        %v7671 = vadd.f32 %v7587, %v7670
        %v7672 = vpop.f32.mrf.mxu0
        %v7673 = vadd.f32 %v7591, %v7672
        %7674 = vdwg.mxu0
        %7675 = vmatprep.subr.mxu0 %v7517
        %7676 = vmatpush1.msra.mxu0 %v7516
        %7677 = vmatprep.subr.mxu0 %v7513
        %7678 = vmatpush1.msra.mxu0 %v7512
        %7679 = vmatprep.subr.mxu0 %v7509
        %7680 = vmatpush1.msra.mxu0 %v7508
        %7681 = vmatprep.subr.mxu0 %v7505
        %7682 = vmatpush1.msra.mxu0 %v7504
        %7683 = vmatprep.subr.mxu0 %v7501
        %7684 = vmatpush1.msra.mxu0 %v7500
        %7685 = vmatprep.subr.mxu0 %v7497
        %7686 = vmatpush1.msra.mxu0 %v7496
        %7687 = vmatprep.subr.mxu0 %v7493
        %7688 = vmatpush1.msra.mxu0 %v7492
        %7689 = vmatprep.subr.mxu0 %v7489
        %7690 = vmatpush1.msra.mxu0 %v7488
        %7691 = vmatprep.subr.mxu0 %v7485
        %7692 = vmatpush1.msra.mxu0 %v7484
        %7693 = vmatprep.subr.mxu0 %v7481
        %7694 = vmatpush1.msra.mxu0 %v7480
        %7695 = vmatprep.subr.mxu0 %v7477
        %7696 = vmatpush1.msra.mxu0 %v7476
        %7697 = vmatprep.subr.mxu0 %v7473
        %7698 = vmatpush1.msra.mxu0 %v7472
        %7699 = vmatprep.subr.mxu0 %v7469
        %7700 = vmatpush1.msra.mxu0 %v7468
        %7701 = vmatprep.subr.mxu0 %v7465
        %7702 = vmatpush1.msra.mxu0 %v7464
        %7703 = vmatprep.subr.mxu0 %v7461
        %7704 = vmatpush1.msra.mxu0 %v7460
        %7705 = vmatprep.subr.mxu0 %v7457
        %7706 = vmatpush1.msra.mxu0 %v7456
        %7707 = vmatprep.subr.mxu0 %v7581
        %7708 = vmatpush2.msra.mxu0 %v7580
        %7709 = vmatprep.subr.mxu0 %v7577
        %7710 = vmatpush2.msra.mxu0 %v7576
        %7711 = vmatprep.subr.mxu0 %v7573
        %7712 = vmatpush2.msra.mxu0 %v7572
        %7713 = vmatprep.subr.mxu0 %v7569
        %7714 = vmatpush2.msra.mxu0 %v7568
        %7715 = vmatprep.subr.mxu0 %v7565
        %7716 = vmatpush2.msra.mxu0 %v7564
        %7717 = vmatprep.subr.mxu0 %v7561
        %7718 = vmatpush2.msra.mxu0 %v7560
        %7719 = vmatprep.subr.mxu0 %v7557
        %7720 = vmatpush2.msra.mxu0 %v7556
        %7721 = vmatprep.subr.mxu0 %v7553
        %7722 = vmatpush2.msra.mxu0 %v7552
        %7723 = vmatprep.subr.mxu0 %v7549
        %7724 = vmatpush2.msra.mxu0 %v7548
        %7725 = vmatprep.subr.mxu0 %v7545
        %7726 = vmatpush2.msra.mxu0 %v7544
        %7727 = vmatprep.subr.mxu0 %v7541
        %7728 = vmatpush2.msra.mxu0 %v7540
        %7729 = vmatprep.subr.mxu0 %v7537
        %7730 = vmatpush2.msra.mxu0 %v7536
        %7731 = vmatprep.subr.mxu0 %v7533
        %7732 = vmatpush2.msra.mxu0 %v7532
        %7733 = vmatprep.subr.mxu0 %v7529
        %7734 = vmatpush2.msra.mxu0 %v7528
        %7735 = vmatprep.subr.mxu0 %v7525
        %7736 = vmatpush2.msra.mxu0 %v7524
        %7737 = vmatprep.subr.mxu0 %v7521
        %7738 = vmatpush2.msra.mxu0 %v7520
        %7739 = vmatprep.mubr.f32.mxu0 %v7453
        %7740 = vmatmul.mubr.f32.gmra.mxu0 %v7452
        %v7741 = vpop.f32.mrf.mxu0
        %v7742 = vadd.f32 %v7595, %v7741
        %v7743 = vpop.f32.mrf.mxu0
        %v7744 = vadd.f32 %v7599, %v7743
        %7745 = vdwg.mxu0
        %v7746 = vmax.f32 %v7671, 0.0
        %v7747 = vmax.f32 %v7673, 0.0
        %v7748 = vmax.f32 %v7742, 0.0
        %v7749 = vmax.f32 %v7744, 0.0
        %v7750 = vld [vmem:[#allocation23] sm:$0xff]
        %v7751 = vld [vmem:[#allocation23 + $0x8] sm:$0xff]
        %v7752 = vld [vmem:[#allocation23 + $0x10] sm:$0xff]
        %v7753 = vld [vmem:[#allocation23 + $0x18] sm:$0xff]
        %v7754 = vld [vmem:[#allocation23 + $0x20] sm:$0xff]
        %v7755 = vld [vmem:[#allocation23 + $0x28] sm:$0xff]
        %v7756 = vld [vmem:[#allocation23 + $0x30] sm:$0xff]
        %v7757 = vld [vmem:[#allocation23 + $0x38] sm:$0xff]
        %v7758 = vld [vmem:[#allocation23 + $0x40] sm:$0xff]
        %v7759 = vld [vmem:[#allocation23 + $0x48] sm:$0xff]
        %v7760 = vld [vmem:[#allocation23 + $0x50] sm:$0xff]
        %v7761 = vld [vmem:[#allocation23 + $0x58] sm:$0xff]
        %v7762 = vld [vmem:[#allocation23 + $0x60] sm:$0xff]
        %v7763 = vld [vmem:[#allocation23 + $0x68] sm:$0xff]
        %v7764 = vld [vmem:[#allocation23 + $0x70] sm:$0xff]
        %v7765 = vld [vmem:[#allocation23 + $0x78] sm:$0xff]
        %v7766 = vld [vmem:[#allocation23 + $0x80] sm:$0xff]
        %v7767 = vld [vmem:[#allocation23 + $0x88] sm:$0xff]
        %v7768 = vld [vmem:[#allocation23 + $0x90] sm:$0xff]
        %v7769 = vld [vmem:[#allocation23 + $0x98] sm:$0xff]
        %v7770 = vld [vmem:[#allocation23 + $0xa0] sm:$0xff]
        %v7771 = vld [vmem:[#allocation23 + $0xa8] sm:$0xff]
        %v7772 = vld [vmem:[#allocation23 + $0xb0] sm:$0xff]
        %v7773 = vld [vmem:[#allocation23 + $0xb8] sm:$0xff]
        %v7774 = vld [vmem:[#allocation23 + $0xc0] sm:$0xff]
        %v7775 = vld [vmem:[#allocation23 + $0xc8] sm:$0xff]
        %v7776 = vld [vmem:[#allocation23 + $0xd0] sm:$0xff]
        %v7777 = vld [vmem:[#allocation23 + $0xd8] sm:$0xff]
        %v7778 = vld [vmem:[#allocation23 + $0xe0] sm:$0xff]
        %v7779 = vld [vmem:[#allocation23 + $0xe8] sm:$0xff]
        %v7780 = vld [vmem:[#allocation23 + $0xf0] sm:$0xff]
        %v7781 = vld [vmem:[#allocation23 + $0xf8] sm:$0xff]
        %v7782 = vld [vmem:[#allocation23 + $0x100] sm:$0xff]
        %v7783 = vld [vmem:[#allocation23 + $0x108] sm:$0xff]
        %v7784 = vld [vmem:[#allocation23 + $0x110] sm:$0xff]
        %v7785 = vld [vmem:[#allocation23 + $0x118] sm:$0xff]
        %v7786 = vld [vmem:[#allocation23 + $0x120] sm:$0xff]
        %v7787 = vld [vmem:[#allocation23 + $0x128] sm:$0xff]
        %v7788 = vld [vmem:[#allocation23 + $0x130] sm:$0xff]
        %v7789 = vld [vmem:[#allocation23 + $0x138] sm:$0xff]
        %v7790 = vld [vmem:[#allocation23 + $0x140] sm:$0xff]
        %v7791 = vld [vmem:[#allocation23 + $0x148] sm:$0xff]
        %v7792 = vld [vmem:[#allocation23 + $0x150] sm:$0xff]
        %v7793 = vld [vmem:[#allocation23 + $0x158] sm:$0xff]
        %v7794 = vld [vmem:[#allocation23 + $0x160] sm:$0xff]
        %v7795 = vld [vmem:[#allocation23 + $0x168] sm:$0xff]
        %v7796 = vld [vmem:[#allocation23 + $0x170] sm:$0xff]
        %v7797 = vld [vmem:[#allocation23 + $0x178] sm:$0xff]
        %v7798 = vld [vmem:[#allocation23 + $0x180] sm:$0xff]
        %v7799 = vld [vmem:[#allocation23 + $0x188] sm:$0xff]
        %v7800 = vld [vmem:[#allocation23 + $0x190] sm:$0xff]
        %v7801 = vld [vmem:[#allocation23 + $0x198] sm:$0xff]
        %v7802 = vld [vmem:[#allocation23 + $0x1a0] sm:$0xff]
        %v7803 = vld [vmem:[#allocation23 + $0x1a8] sm:$0xff]
        %v7804 = vld [vmem:[#allocation23 + $0x1b0] sm:$0xff]
        %v7805 = vld [vmem:[#allocation23 + $0x1b8] sm:$0xff]
        %v7806 = vld [vmem:[#allocation23 + $0x1c0] sm:$0xff]
        %v7807 = vld [vmem:[#allocation23 + $0x1c8] sm:$0xff]
        %v7808 = vld [vmem:[#allocation23 + $0x1d0] sm:$0xff]
        %v7809 = vld [vmem:[#allocation23 + $0x1d8] sm:$0xff]
        %v7810 = vld [vmem:[#allocation23 + $0x1e0] sm:$0xff]
        %v7811 = vld [vmem:[#allocation23 + $0x1e8] sm:$0xff]
        %v7812 = vld [vmem:[#allocation23 + $0x1f0] sm:$0xff]
        %v7813 = vld [vmem:[#allocation23 + $0x1f8] sm:$0xff]
        %v7814 = vld [vmem:[#allocation23 + $0x200] sm:$0xff]
        %v7815 = vld [vmem:[#allocation23 + $0x208] sm:$0xff]
        %v7816 = vld [vmem:[#allocation23 + $0x210] sm:$0xff]
        %v7817 = vld [vmem:[#allocation23 + $0x218] sm:$0xff]
        %v7818 = vld [vmem:[#allocation23 + $0x220] sm:$0xff]
        %v7819 = vld [vmem:[#allocation23 + $0x228] sm:$0xff]
        %v7820 = vld [vmem:[#allocation23 + $0x230] sm:$0xff]
        %v7821 = vld [vmem:[#allocation23 + $0x238] sm:$0xff]
        %v7822 = vld [vmem:[#allocation23 + $0x240] sm:$0xff]
        %v7823 = vld [vmem:[#allocation23 + $0x248] sm:$0xff]
        %v7824 = vld [vmem:[#allocation23 + $0x250] sm:$0xff]
        %v7825 = vld [vmem:[#allocation23 + $0x258] sm:$0xff]
        %v7826 = vld [vmem:[#allocation23 + $0x260] sm:$0xff]
        %v7827 = vld [vmem:[#allocation23 + $0x268] sm:$0xff]
        %v7828 = vld [vmem:[#allocation23 + $0x270] sm:$0xff]
        %v7829 = vld [vmem:[#allocation23 + $0x278] sm:$0xff]
        %v7830 = vld [vmem:[#allocation23 + $0x280] sm:$0xff]
        %v7831 = vld [vmem:[#allocation23 + $0x288] sm:$0xff]
        %v7832 = vld [vmem:[#allocation23 + $0x290] sm:$0xff]
        %v7833 = vld [vmem:[#allocation23 + $0x298] sm:$0xff]
        %v7834 = vld [vmem:[#allocation23 + $0x2a0] sm:$0xff]
        %v7835 = vld [vmem:[#allocation23 + $0x2a8] sm:$0xff]
        %v7836 = vld [vmem:[#allocation23 + $0x2b0] sm:$0xff]
        %v7837 = vld [vmem:[#allocation23 + $0x2b8] sm:$0xff]
        %v7838 = vld [vmem:[#allocation23 + $0x2c0] sm:$0xff]
        %v7839 = vld [vmem:[#allocation23 + $0x2c8] sm:$0xff]
        %v7840 = vld [vmem:[#allocation23 + $0x2d0] sm:$0xff]
        %v7841 = vld [vmem:[#allocation23 + $0x2d8] sm:$0xff]
        %v7842 = vld [vmem:[#allocation23 + $0x2e0] sm:$0xff]
        %v7843 = vld [vmem:[#allocation23 + $0x2e8] sm:$0xff]
        %v7844 = vld [vmem:[#allocation23 + $0x2f0] sm:$0xff]
        %v7845 = vld [vmem:[#allocation23 + $0x2f8] sm:$0xff]
        %v7846 = vld [vmem:[#allocation23 + $0x300] sm:$0xff]
        %v7847 = vld [vmem:[#allocation23 + $0x308] sm:$0xff]
        %v7848 = vld [vmem:[#allocation23 + $0x310] sm:$0xff]
        %v7849 = vld [vmem:[#allocation23 + $0x318] sm:$0xff]
        %v7850 = vld [vmem:[#allocation23 + $0x320] sm:$0xff]
        %v7851 = vld [vmem:[#allocation23 + $0x328] sm:$0xff]
        %v7852 = vld [vmem:[#allocation23 + $0x330] sm:$0xff]
        %v7853 = vld [vmem:[#allocation23 + $0x338] sm:$0xff]
        %v7854 = vld [vmem:[#allocation23 + $0x340] sm:$0xff]
        %v7855 = vld [vmem:[#allocation23 + $0x348] sm:$0xff]
        %v7856 = vld [vmem:[#allocation23 + $0x350] sm:$0xff]
        %v7857 = vld [vmem:[#allocation23 + $0x358] sm:$0xff]
        %v7858 = vld [vmem:[#allocation23 + $0x360] sm:$0xff]
        %v7859 = vld [vmem:[#allocation23 + $0x368] sm:$0xff]
        %v7860 = vld [vmem:[#allocation23 + $0x370] sm:$0xff]
        %v7861 = vld [vmem:[#allocation23 + $0x378] sm:$0xff]
        %v7862 = vld [vmem:[#allocation23 + $0x380] sm:$0xff]
        %v7863 = vld [vmem:[#allocation23 + $0x388] sm:$0xff]
        %v7864 = vld [vmem:[#allocation23 + $0x390] sm:$0xff]
        %v7865 = vld [vmem:[#allocation23 + $0x398] sm:$0xff]
        %v7866 = vld [vmem:[#allocation23 + $0x3a0] sm:$0xff]
        %v7867 = vld [vmem:[#allocation23 + $0x3a8] sm:$0xff]
        %v7868 = vld [vmem:[#allocation23 + $0x3b0] sm:$0xff]
        %v7869 = vld [vmem:[#allocation23 + $0x3b8] sm:$0xff]
        %v7870 = vld [vmem:[#allocation23 + $0x3c0] sm:$0xff]
        %v7871 = vld [vmem:[#allocation23 + $0x3c8] sm:$0xff]
        %v7872 = vld [vmem:[#allocation23 + $0x3d0] sm:$0xff]
        %v7873 = vld [vmem:[#allocation23 + $0x3d8] sm:$0xff]
        %v7874 = vld [vmem:[#allocation23 + $0x3e0] sm:$0xff]
        %v7875 = vld [vmem:[#allocation23 + $0x3e8] sm:$0xff]
        %v7876 = vld [vmem:[#allocation23 + $0x3f0] sm:$0xff]
        %v7877 = vld [vmem:[#allocation23 + $0x3f8] sm:$0xff]
        %v7878 = vld [vmem:[#allocation25] sm:$0x3]
        %v7880 = vlaneseq
        %v7881 = vshrl.u32 %v7880, 7
        %v7882 = vsub.s32 0, %v7881
        %v7883 = vrot.slane %v7878, %v7882
        %v7884 = vlaneseq
        %v7885 = vshrl.u32 %v7884, 7
        %v7886 = vsub.s32 1, %v7885
        %v7887 = vrot.slane %v7878, %v7886
        %7890 = vmatprep.subr.mxu0 %v7781
        %7891 = vmatpush1.msra.mxu0 %v7780
        %7892 = vmatprep.subr.mxu0 %v7779
        %7893 = vmatpush1.msra.mxu0 %v7778
        %7894 = vmatprep.subr.mxu0 %v7777
        %7895 = vmatpush1.msra.mxu0 %v7776
        %7896 = vmatprep.subr.mxu0 %v7775
        %7897 = vmatpush1.msra.mxu0 %v7774
        %7898 = vmatprep.subr.mxu0 %v7773
        %7899 = vmatpush1.msra.mxu0 %v7772
        %7900 = vmatprep.subr.mxu0 %v7771
        %7901 = vmatpush1.msra.mxu0 %v7770
        %7902 = vmatprep.subr.mxu0 %v7769
        %7903 = vmatpush1.msra.mxu0 %v7768
        %7904 = vmatprep.subr.mxu0 %v7767
        %7905 = vmatpush1.msra.mxu0 %v7766
        %7906 = vmatprep.subr.mxu0 %v7765
        %7907 = vmatpush1.msra.mxu0 %v7764
        %7908 = vmatprep.subr.mxu0 %v7763
        %7909 = vmatpush1.msra.mxu0 %v7762
        %7910 = vmatprep.subr.mxu0 %v7761
        %7911 = vmatpush1.msra.mxu0 %v7760
        %7912 = vmatprep.subr.mxu0 %v7759
        %7913 = vmatpush1.msra.mxu0 %v7758
        %7914 = vmatprep.subr.mxu0 %v7757
        %7915 = vmatpush1.msra.mxu0 %v7756
        %7916 = vmatprep.subr.mxu0 %v7755
        %7917 = vmatpush1.msra.mxu0 %v7754
        %7918 = vmatprep.subr.mxu0 %v7753
        %7919 = vmatpush1.msra.mxu0 %v7752
        %7920 = vmatprep.subr.mxu0 %v7751
        %7921 = vmatpush1.msra.mxu0 %v7750
        %7922 = vmatprep.subr.mxu0 %v7813
        %7923 = vmatpush2.msra.mxu0 %v7812
        %7924 = vmatprep.subr.mxu0 %v7811
        %7925 = vmatpush2.msra.mxu0 %v7810
        %7926 = vmatprep.subr.mxu0 %v7809
        %7927 = vmatpush2.msra.mxu0 %v7808
        %7928 = vmatprep.subr.mxu0 %v7807
        %7929 = vmatpush2.msra.mxu0 %v7806
        %7930 = vmatprep.subr.mxu0 %v7805
        %7931 = vmatpush2.msra.mxu0 %v7804
        %7932 = vmatprep.subr.mxu0 %v7803
        %7933 = vmatpush2.msra.mxu0 %v7802
        %7934 = vmatprep.subr.mxu0 %v7801
        %7935 = vmatpush2.msra.mxu0 %v7800
        %7936 = vmatprep.subr.mxu0 %v7799
        %7937 = vmatpush2.msra.mxu0 %v7798
        %7938 = vmatprep.subr.mxu0 %v7797
        %7939 = vmatpush2.msra.mxu0 %v7796
        %7940 = vmatprep.subr.mxu0 %v7795
        %7941 = vmatpush2.msra.mxu0 %v7794
        %7942 = vmatprep.subr.mxu0 %v7793
        %7943 = vmatpush2.msra.mxu0 %v7792
        %7944 = vmatprep.subr.mxu0 %v7791
        %7945 = vmatpush2.msra.mxu0 %v7790
        %7946 = vmatprep.subr.mxu0 %v7789
        %7947 = vmatpush2.msra.mxu0 %v7788
        %7948 = vmatprep.subr.mxu0 %v7787
        %7949 = vmatpush2.msra.mxu0 %v7786
        %7950 = vmatprep.subr.mxu0 %v7785
        %7951 = vmatpush2.msra.mxu0 %v7784
        %7952 = vmatprep.subr.mxu0 %v7783
        %7953 = vmatpush2.msra.mxu0 %v7782
        %7954 = vmatprep.mubr.f32.mxu0 %v7747
        %7955 = vmatmul.mubr.f32.gmra.mxu0 %v7746
        %v7956 = vpop.f32.mrf.mxu0
        %v7957 = vadd.f32 %v7883, %v7956
        %v7958 = vpop.f32.mrf.mxu0
        %v7959 = vadd.f32 %v7887, %v7958
        %7960 = vdwg.mxu0
        %7961 = vmatprep.subr.mxu0 %v7845
        %7962 = vmatpush1.msra.mxu0 %v7844
        %7963 = vmatprep.subr.mxu0 %v7843
        %7964 = vmatpush1.msra.mxu0 %v7842
        %7965 = vmatprep.subr.mxu0 %v7841
        %7966 = vmatpush1.msra.mxu0 %v7840
        %7967 = vmatprep.subr.mxu0 %v7839
        %7968 = vmatpush1.msra.mxu0 %v7838
        %7969 = vmatprep.subr.mxu0 %v7837
        %7970 = vmatpush1.msra.mxu0 %v7836
        %7971 = vmatprep.subr.mxu0 %v7835
        %7972 = vmatpush1.msra.mxu0 %v7834
        %7973 = vmatprep.subr.mxu0 %v7833
        %7974 = vmatpush1.msra.mxu0 %v7832
        %7975 = vmatprep.subr.mxu0 %v7831
        %7976 = vmatpush1.msra.mxu0 %v7830
        %7977 = vmatprep.subr.mxu0 %v7829
        %7978 = vmatpush1.msra.mxu0 %v7828
        %7979 = vmatprep.subr.mxu0 %v7827
        %7980 = vmatpush1.msra.mxu0 %v7826
        %7981 = vmatprep.subr.mxu0 %v7825
        %7982 = vmatpush1.msra.mxu0 %v7824
        %7983 = vmatprep.subr.mxu0 %v7823
        %7984 = vmatpush1.msra.mxu0 %v7822
        %7985 = vmatprep.subr.mxu0 %v7821
        %7986 = vmatpush1.msra.mxu0 %v7820
        %7987 = vmatprep.subr.mxu0 %v7819
        %7988 = vmatpush1.msra.mxu0 %v7818
        %7989 = vmatprep.subr.mxu0 %v7817
        %7990 = vmatpush1.msra.mxu0 %v7816
        %7991 = vmatprep.subr.mxu0 %v7815
        %7992 = vmatpush1.msra.mxu0 %v7814
        %7993 = vmatprep.subr.mxu0 %v7877
        %7994 = vmatpush2.msra.mxu0 %v7876
        %7995 = vmatprep.subr.mxu0 %v7875
        %7996 = vmatpush2.msra.mxu0 %v7874
        %7997 = vmatprep.subr.mxu0 %v7873
        %7998 = vmatpush2.msra.mxu0 %v7872
        %7999 = vmatprep.subr.mxu0 %v7871
        %8000 = vmatpush2.msra.mxu0 %v7870
        %8001 = vmatprep.subr.mxu0 %v7869
        %8002 = vmatpush2.msra.mxu0 %v7868
        %8003 = vmatprep.subr.mxu0 %v7867
        %8004 = vmatpush2.msra.mxu0 %v7866
        %8005 = vmatprep.subr.mxu0 %v7865
        %8006 = vmatpush2.msra.mxu0 %v7864
        %8007 = vmatprep.subr.mxu0 %v7863
        %8008 = vmatpush2.msra.mxu0 %v7862
        %8009 = vmatprep.subr.mxu0 %v7861
        %8010 = vmatpush2.msra.mxu0 %v7860
        %8011 = vmatprep.subr.mxu0 %v7859
        %8012 = vmatpush2.msra.mxu0 %v7858
        %8013 = vmatprep.subr.mxu0 %v7857
        %8014 = vmatpush2.msra.mxu0 %v7856
        %8015 = vmatprep.subr.mxu0 %v7855
        %8016 = vmatpush2.msra.mxu0 %v7854
        %8017 = vmatprep.subr.mxu0 %v7853
        %8018 = vmatpush2.msra.mxu0 %v7852
        %8019 = vmatprep.subr.mxu0 %v7851
        %8020 = vmatpush2.msra.mxu0 %v7850
        %8021 = vmatprep.subr.mxu0 %v7849
        %8022 = vmatpush2.msra.mxu0 %v7848
        %8023 = vmatprep.subr.mxu0 %v7847
        %8024 = vmatpush2.msra.mxu0 %v7846
        %8025 = vmatprep.mubr.f32.mxu0 %v7749
        %8026 = vmatmul.mubr.f32.gmra.mxu0 %v7748
        %v8027 = vpop.f32.mrf.mxu0
        %v8028 = vadd.f32 %v7957, %v8027
        %v8029 = vpop.f32.mrf.mxu0
        %v8030 = vadd.f32 %v7959, %v8029
        %8031 = vdwg.mxu0
        %v8032 = vadd.f32 %v8028, %v7452
        %v8033 = vadd.f32 %v8030, %v7453
        %8034 = vmatprep.subr.mxu0 %v7243
        %8035 = vmatpush1.msra.mxu0 %v7242
        %8036 = vmatprep.subr.mxu0 %v7241
        %8037 = vmatpush1.msra.mxu0 %v7240
        %8038 = vmatprep.subr.mxu0 %v7239
        %8039 = vmatpush1.msra.mxu0 %v7238
        %8040 = vmatprep.subr.mxu0 %v7237
        %8041 = vmatpush1.msra.mxu0 %v7236
        %8042 = vmatprep.subr.mxu0 %v7235
        %8043 = vmatpush1.msra.mxu0 %v7234
        %8044 = vmatprep.subr.mxu0 %v7233
        %8045 = vmatpush1.msra.mxu0 %v7232
        %8046 = vmatprep.subr.mxu0 %v7231
        %8047 = vmatpush1.msra.mxu0 %v7230
        %8048 = vmatprep.subr.mxu0 %v7229
        %8049 = vmatpush1.msra.mxu0 %v7228
        %8050 = vmatprep.subr.mxu0 %v7227
        %8051 = vmatpush1.msra.mxu0 %v7226
        %8052 = vmatprep.subr.mxu0 %v7225
        %8053 = vmatpush1.msra.mxu0 %v7224
        %8054 = vmatprep.subr.mxu0 %v7223
        %8055 = vmatpush1.msra.mxu0 %v7222
        %8056 = vmatprep.subr.mxu0 %v7221
        %8057 = vmatpush1.msra.mxu0 %v7220
        %8058 = vmatprep.subr.mxu0 %v7219
        %8059 = vmatpush1.msra.mxu0 %v7218
        %8060 = vmatprep.subr.mxu0 %v7217
        %8061 = vmatpush1.msra.mxu0 %v7216
        %8062 = vmatprep.subr.mxu0 %v7215
        %8063 = vmatpush1.msra.mxu0 %v7214
        %8064 = vmatprep.subr.mxu0 %v7213
        %8065 = vmatpush1.msra.mxu0 %v7212
        %8066 = vmatprep.subr.mxu0 %v7275
        %8067 = vmatpush2.msra.mxu0 %v7274
        %8068 = vmatprep.subr.mxu0 %v7273
        %8069 = vmatpush2.msra.mxu0 %v7272
        %8070 = vmatprep.subr.mxu0 %v7271
        %8071 = vmatpush2.msra.mxu0 %v7270
        %8072 = vmatprep.subr.mxu0 %v7269
        %8073 = vmatpush2.msra.mxu0 %v7268
        %8074 = vmatprep.subr.mxu0 %v7267
        %8075 = vmatpush2.msra.mxu0 %v7266
        %8076 = vmatprep.subr.mxu0 %v7265
        %8077 = vmatpush2.msra.mxu0 %v7264
        %8078 = vmatprep.subr.mxu0 %v7263
        %8079 = vmatpush2.msra.mxu0 %v7262
        %8080 = vmatprep.subr.mxu0 %v7261
        %8081 = vmatpush2.msra.mxu0 %v7260
        %8082 = vmatprep.subr.mxu0 %v7259
        %8083 = vmatpush2.msra.mxu0 %v7258
        %8084 = vmatprep.subr.mxu0 %v7257
        %8085 = vmatpush2.msra.mxu0 %v7256
        %8086 = vmatprep.subr.mxu0 %v7255
        %8087 = vmatpush2.msra.mxu0 %v7254
        %8088 = vmatprep.subr.mxu0 %v7253
        %8089 = vmatpush2.msra.mxu0 %v7252
        %8090 = vmatprep.subr.mxu0 %v7251
        %8091 = vmatpush2.msra.mxu0 %v7250
        %8092 = vmatprep.subr.mxu0 %v7249
        %8093 = vmatpush2.msra.mxu0 %v7248
        %8094 = vmatprep.subr.mxu0 %v7247
        %8095 = vmatpush2.msra.mxu0 %v7246
        %8096 = vmatprep.subr.mxu0 %v7245
        %8097 = vmatpush2.msra.mxu0 %v7244
        %8098 = vmatprep.mubr.f32.mxu0 %v8033
        %8099 = vmatmul.mubr.f32.gmra.mxu0 %v8032
        %v8100 = vpop.f32.mrf.mxu0
        %v8101 = vadd.f32 0.0, %v8100
        %v8102 = vpop.f32.mrf.mxu0
        %v8103 = vadd.f32 0.0, %v8102
        %8104 = vdwg.mxu0
        %v8105 = vsub.f32 %v8032, %v8101
        %v8106 = vsub.f32 %v8033, %v8103
        %v8107 = vmul.f32 %v8105, %v8105
        %v8108 = vmul.f32 %v8106, %v8106
        %8109 = vmatprep.subr.mxu0 %v7243
        %8110 = vmatpush1.msra.mxu0 %v7242
        %8111 = vmatprep.subr.mxu0 %v7241
        %8112 = vmatpush1.msra.mxu0 %v7240
        %8113 = vmatprep.subr.mxu0 %v7239
        %8114 = vmatpush1.msra.mxu0 %v7238
        %8115 = vmatprep.subr.mxu0 %v7237
        %8116 = vmatpush1.msra.mxu0 %v7236
        %8117 = vmatprep.subr.mxu0 %v7235
        %8118 = vmatpush1.msra.mxu0 %v7234
        %8119 = vmatprep.subr.mxu0 %v7233
        %8120 = vmatpush1.msra.mxu0 %v7232
        %8121 = vmatprep.subr.mxu0 %v7231
        %8122 = vmatpush1.msra.mxu0 %v7230
        %8123 = vmatprep.subr.mxu0 %v7229
        %8124 = vmatpush1.msra.mxu0 %v7228
        %8125 = vmatprep.subr.mxu0 %v7227
        %8126 = vmatpush1.msra.mxu0 %v7226
        %8127 = vmatprep.subr.mxu0 %v7225
        %8128 = vmatpush1.msra.mxu0 %v7224
        %8129 = vmatprep.subr.mxu0 %v7223
        %8130 = vmatpush1.msra.mxu0 %v7222
        %8131 = vmatprep.subr.mxu0 %v7221
        %8132 = vmatpush1.msra.mxu0 %v7220
        %8133 = vmatprep.subr.mxu0 %v7219
        %8134 = vmatpush1.msra.mxu0 %v7218
        %8135 = vmatprep.subr.mxu0 %v7217
        %8136 = vmatpush1.msra.mxu0 %v7216
        %8137 = vmatprep.subr.mxu0 %v7215
        %8138 = vmatpush1.msra.mxu0 %v7214
        %8139 = vmatprep.subr.mxu0 %v7213
        %8140 = vmatpush1.msra.mxu0 %v7212
        %8141 = vmatprep.subr.mxu0 %v7275
        %8142 = vmatpush2.msra.mxu0 %v7274
        %8143 = vmatprep.subr.mxu0 %v7273
        %8144 = vmatpush2.msra.mxu0 %v7272
        %8145 = vmatprep.subr.mxu0 %v7271
        %8146 = vmatpush2.msra.mxu0 %v7270
        %8147 = vmatprep.subr.mxu0 %v7269
        %8148 = vmatpush2.msra.mxu0 %v7268
        %8149 = vmatprep.subr.mxu0 %v7267
        %8150 = vmatpush2.msra.mxu0 %v7266
        %8151 = vmatprep.subr.mxu0 %v7265
        %8152 = vmatpush2.msra.mxu0 %v7264
        %8153 = vmatprep.subr.mxu0 %v7263
        %8154 = vmatpush2.msra.mxu0 %v7262
        %8155 = vmatprep.subr.mxu0 %v7261
        %8156 = vmatpush2.msra.mxu0 %v7260
        %8157 = vmatprep.subr.mxu0 %v7259
        %8158 = vmatpush2.msra.mxu0 %v7258
        %8159 = vmatprep.subr.mxu0 %v7257
        %8160 = vmatpush2.msra.mxu0 %v7256
        %8161 = vmatprep.subr.mxu0 %v7255
        %8162 = vmatpush2.msra.mxu0 %v7254
        %8163 = vmatprep.subr.mxu0 %v7253
        %8164 = vmatpush2.msra.mxu0 %v7252
        %8165 = vmatprep.subr.mxu0 %v7251
        %8166 = vmatpush2.msra.mxu0 %v7250
        %8167 = vmatprep.subr.mxu0 %v7249
        %8168 = vmatpush2.msra.mxu0 %v7248
        %8169 = vmatprep.subr.mxu0 %v7247
        %8170 = vmatpush2.msra.mxu0 %v7246
        %8171 = vmatprep.subr.mxu0 %v7245
        %8172 = vmatpush2.msra.mxu0 %v7244
        %8173 = vmatprep.mubr.f32.mxu0 %v8108
        %8174 = vmatmul.mubr.f32.gmra.mxu0 %v8107
        %v8175 = vpop.f32.mrf.mxu0
        %v8176 = vadd.f32 1e-05, %v8175
        %v8177 = vpop.f32.mrf.mxu0
        %v8178 = vadd.f32 1e-05, %v8177
        %8179 = vdwg.mxu0
        %v8180 = vrsqrt.pop %v8176
        %v8181 = vrsqrt.pop %v8178
        %v8182 = vmul.f32 %v8105, %v8180
        %v8183 = vmul.f32 %v8106, %v8181
        %v8184 = vld [vmem:[#allocation29] sm:$0x3]
        %v8186 = vlaneseq
        %v8187 = vshrl.u32 %v8186, 7
        %v8188 = vsub.s32 0, %v8187
        %v8189 = vrot.slane %v8184, %v8188
        %v8190 = vlaneseq
        %v8191 = vshrl.u32 %v8190, 7
        %v8192 = vsub.s32 1, %v8191
        %v8193 = vrot.slane %v8184, %v8192
        %v8196 = vmul.f32 %v8182, %v8189
        %v8197 = vmul.f32 %v8183, %v8193
        %v8198 = vld [vmem:[#allocation31] sm:$0x3]
        %v8200 = vlaneseq
        %v8201 = vshrl.u32 %v8200, 7
        %v8202 = vsub.s32 0, %v8201
        %v8203 = vrot.slane %v8198, %v8202
        %v8204 = vlaneseq
        %v8205 = vshrl.u32 %v8204, 7
        %v8206 = vsub.s32 1, %v8205
        %v8207 = vrot.slane %v8198, %v8206
        %v8210 = vadd.f32 %v8196, %v8203
        %v8211 = vadd.f32 %v8197, %v8207
        %8212 = vst [vmem:[%s867] sm:$0xff] %v8210
        %8213 = vst [vmem:[%s867 + $0x8] sm:$0xff] %v8211
        %s8214 = sand.u32 %s457, 1
        %s8215 = scalar_lea.sflag [#allocation4], %s8214
        %s8216 = sand.u32 %s457, 1
        %s8217 = smul.addr %s8216, 16
        %s8218 = scalar_lea.vmem [#allocation32], %s8217
        // Predicated region
        $region173: #{tpu_custom_call.1} parent=95 // pred_check
          %p8219 = pneg %p467
        $region174: #{tpu_custom_call.1} parent=95 // pred_check_branch
          %8221 = sbr.rel (%p8219) target = $region176
        $region175: #{tpu_custom_call.1} parent=95 // pred_region
          %s8223 = ssub.s32 256, 256
          %8224 = vsyncadd %s8215, %s8223
          %s8225 = smul.addr %s45, 2
          %s8226 = smul.addr %s8225, 128
          %s8227 = scalar_lea.hbm %s19, %s8226
          %s8229 = sshll.u32 %s8218, 4
          %s8230 = int_to_ptr.vmem [resolvable:$true] %s8229
          %8232 = dma.vmem_to_hbm [thread:$0]  %s8230, 256, %s8227, %s8215
        $region176: #{tpu_custom_call.1} parent=95 // pred_fallthru
          _
      $region96: #{tpu_custom_call.1} parent=5 // pred_fallthru
        _
      %p8233 = scmp.le.s32.totalorder 2, %s40
      // Predicated region
      $region177: #{tpu_custom_call.1} parent=5 // pred_check
        %p8234 = pneg %p8233
      $region178: #{tpu_custom_call.1} parent=5 // pred_check_branch
        %8236 = sbr.rel (%p8234) target = $region180
      $region179: #{tpu_custom_call.1} parent=5 // pred_region
        %s8237 = ssub.s32 %s40, 2
        // Predicated region
        $region181: #{tpu_custom_call.1} parent=179 // pred_check
          %p8238 = pneg %p473
        $region182: #{tpu_custom_call.1} parent=179 // pred_check_branch
          %8240 = sbr.rel (%p8238) target = $region184
        $region183: #{tpu_custom_call.1} parent=179 // pred_region
          %s8241 = sand.u32 %s458, 1
          %s8242 = scalar_lea.sflag [#allocation4], %s8241
          %s8243 = sand.u32 %s458, 1
          %s8244 = smul.addr %s8243, 16
          %s8245 = scalar_lea.vmem [#allocation32], %s8244
          %8246 = dma.done %s8242, 256
        $region184: #{tpu_custom_call.1} parent=179 // pred_fallthru
          _
      $region180: #{tpu_custom_call.1} parent=5 // pred_fallthru
        _
    $region6: #{tpu_custom_call.1} parent=1 // loop_footer
      %s44 = sadd.s32 1, %s40
    $region7: #{tpu_custom_call.1} parent=1 // loop_footer_branch
      %39 = sbr.rel target = $region3
    $region8: #{tpu_custom_call.1} parent=1 // loop_exit
      _
    %8247 = vsyncpa [#allocation3], 1
    %s8248 = scalar_lea.sflag [#allocation3], 1
    %8249 = vsyncpa %s8248, 1
    %8250 = vsyncpa [#allocation6], 1
    %8251 = vsyncpa [#allocation9], 1
    %8252 = vsyncpa [#allocation12], 1
    %8253 = vsyncpa [#allocation15], 1
    %8254 = vsyncpa [#allocation18], 1
    %8255 = vsyncpa [#allocation21], 1
    %8256 = vsyncpa [#allocation24], 1
    %8257 = vsyncpa [#allocation27], 1
    %8258 = vsyncpa [#allocation30], 1
    %8259 = vsyncpa [#allocation4], 1
    %s8260 = scalar_lea.sflag [#allocation4], 1
    %8261 = vsyncpa %s8260, 1

</llo_original>
